<compile_context>
chip_gen: v5e
topology: v5e:2x2
jax: 0.10.0
libtpu: 0.0.40
codegen_flags: <defaults>
</compile_context>

<pallas_src>
import functools

import jax
import jax.numpy as jnp
from jax.experimental import pallas as pl
from jax.experimental.pallas import tpu as pltpu

_MAX_TILE_M = 1024                 # upper bound on matmul M-tile (multiple of 16)
_VMEM_BUDGET = 20 * 1024 * 1024    # working-set budget used to pick the tile
_VMEM_LIMIT = 48 * 1024 * 1024     # scoped VMEM limit handed to Mosaic


# ---------------------------------------------------------------------------
# Fused conv-as-matmul Pallas kernel
#   o_tile = [res_tile +] PReLU( sum_i x_i_tile @ w_i + bias )
# ---------------------------------------------------------------------------
def _fused_matmul_kernel(*refs, n_ops, apply_prelu, has_res):
    xs = refs[:n_ops]                       # each (tile_m, K_i)  bf16
    ws = refs[n_ops:2 * n_ops]              # each (K_i, Cout)    bf16
    b_ref = refs[2 * n_ops]                 # (1, Cout)           f32
    idx = 2 * n_ops + 1
    if apply_prelu:
        a_ref = refs[idx]                   # (1, 1) f32 scalar in SMEM
        idx += 1
    if has_res:
        res_ref = refs[idx]                 # (tile_m, Cout)      f32
    o_ref = refs[-1]                        # (tile_m, Cout)      f32

    acc = jnp.dot(xs[0][...], ws[0][...], preferred_element_type=jnp.float32)
    for x_r, w_r in zip(xs[1:], ws[1:]):
        acc = acc + jnp.dot(x_r[...], w_r[...], preferred_element_type=jnp.float32)
    acc = acc + b_ref[...]                          # broadcast bias add (f32)
    if apply_prelu:
        a = a_ref[0, 0]                             # scalar from SMEM
        acc = jnp.where(acc >= 0, acc, a * acc)
    if has_res:
        acc = acc + res_ref[...]                    # fused residual add (f32)
    o_ref[...] = acc.astype(o_ref.dtype)


def _round_up(x, m):
    return (x + m - 1) // m * m


def _choose_tiling(m, ks, cout, has_res):
    """Largest M-tile (multiple of 16, <= _MAX_TILE_M) whose working set
    (double-buffered activations/output/residual + resident weights) fits the
    VMEM budget; then shrink so padded-M waste is at most one tile's rows."""
    ksum = sum(ks)
    w_bytes = ksum * cout * 2 + cout * 4                       # weights + bias, resident
    per_row = 2 * (ksum * 2) + 2 * (cout * 4)                  # x (bf16) + out (f32), 2-buffered
    if has_res:
        per_row += 2 * (cout * 4)
    avail = max(_VMEM_BUDGET - w_bytes, 16 * per_row)
    fit = max(16, min(_MAX_TILE_M, (avail // per_row) // 16 * 16))
    fit = min(fit, _round_up(m, 16))
    n_tiles = pl.cdiv(m, fit)
    tile = _round_up(pl.cdiv(m, n_tiles), 16)
    return tile, n_tiles * tile


def fused_matmul(xs, ws, b, alpha=None, residual=None):
    """xs: list of (M, K_i); ws: list of (K_i, Cout); b: (Cout,);
    alpha: PReLU slope (single value) or None; residual: (M, Cout) or None.
    Returns (M, Cout) float32."""
    m = xs[0].shape[0]
    cout = ws[0].shape[1]
    n_ops = len(xs)
    apply_prelu = alpha is not None
    has_res = residual is not None

    tile, m_pad = _choose_tiling(m, [w.shape[0] for w in ws], cout, has_res)

    def pad_rows(a):
        return a if a.shape[0] == m_pad else jnp.pad(a, ((0, m_pad - a.shape[0]), (0, 0)))

    xs = [pad_rows(x.astype(jnp.bfloat16)) for x in xs]
    ws = [w.astype(jnp.bfloat16) for w in ws]

    args = xs + ws + [b.reshape(1, cout).astype(jnp.float32)]
    in_specs = (
        [pl.BlockSpec((tile, x.shape[1]), lambda i: (i, 0)) for x in xs]
        + [pl.BlockSpec(w.shape, lambda i: (0, 0)) for w in ws]      # resident weights
        + [pl.BlockSpec((1, cout), lambda i: (0, 0))]
    )
    if apply_prelu:
        args.append(jnp.asarray(alpha, jnp.float32).reshape(1, 1))
        in_specs.append(pl.BlockSpec(memory_space=pltpu.MemorySpace.SMEM))
    if has_res:
        args.append(pad_rows(residual.astype(jnp.float32)))
        in_specs.append(pl.BlockSpec((tile, cout), lambda i: (i, 0)))

    kernel = functools.partial(_fused_matmul_kernel, n_ops=n_ops,
                               apply_prelu=apply_prelu, has_res=has_res)
    out = pl.pallas_call(
        kernel,
        out_shape=jax.ShapeDtypeStruct((m_pad, cout), jnp.float32),
        grid=(m_pad // tile,),
        in_specs=in_specs,
        out_specs=pl.BlockSpec((tile, cout), lambda i: (i, 0)),
        compiler_params=pltpu.CompilerParams(
            dimension_semantics=("parallel",),
            vmem_limit_bytes=_VMEM_LIMIT),
    )(*args)
    return out[:m]


# ---------------------------------------------------------------------------
# Convolution wrappers (im2col / weight reshaping is layout glue in JAX)
# ---------------------------------------------------------------------------
def _im2col(x, kh, kw, stride, padding):
    """x: (N, H, W, Cin) -> patches (N, Ho, Wo, KH*KW*Cin), exact bounds, stride-aware."""
    if padding:
        x = jnp.pad(x, ((0, 0), (padding, padding), (padding, padding), (0, 0)))
    n, hp, wp, cin = x.shape
    ho = (hp - kh) // stride + 1
    wo = (wp - kw) // stride + 1
    if kh == 1 and kw == 1 and stride == 1:
        return x, ho, wo
    cols = []
    for i in range(kh):
        for j in range(kw):
            cols.append(x[:, i:i + stride * (ho - 1) + 1:stride,
                          j:j + stride * (wo - 1) + 1:stride, :])
    patches = jnp.concatenate(cols, axis=-1)
    return patches, ho, wo


def conv(x, p, *, stride=1, padding=0, residual=None):
    """Conv2d (+bias, +optional PReLU, +optional fused residual add) as one Pallas matmul."""
    n = x.shape[0]
    kh, kw, cin, cout = p['w'].shape
    patches, ho, wo = _im2col(x.astype(jnp.bfloat16), kh, kw, stride, padding)
    m = n * ho * wo
    res2d = None
    if residual is not None:
        assert residual.shape == (n, ho, wo, cout), (residual.shape, (n, ho, wo, cout))
        res2d = residual.reshape(m, cout)
    out = fused_matmul([patches.reshape(m, kh * kw * cin)],
                       [p['w'].reshape(kh * kw * cin, cout)],
                       p['b'], p.get('a'), res2d)
    return out.reshape(n, ho, wo, cout)


def conv1x1_multi(xs, p, *, residual=None):
    """1x1 conv applied to the channel-concat of xs WITHOUT materializing the concat:
    the kernel computes sum_i xs[i] @ W_slice[i]."""
    n, h, w, _ = xs[0].shape
    cout = p['w'].shape[-1]
    cins = [x.shape[-1] for x in xs]
    wfull = p['w'].reshape(sum(cins), cout)
    ws, off = [], 0
    for c in cins:
        ws.append(wfull[off:off + c, :])
        off += c
    m = n * h * w
    xs2d = [x.astype(jnp.bfloat16).reshape(m, x.shape[-1]) for x in xs]
    res2d = residual.reshape(m, cout) if residual is not None else None
    out = fused_matmul(xs2d, ws, p['b'], p.get('a'), res2d)
    return out.reshape(n, h, w, cout)


# ---------------------------------------------------------------------------
# Layout glue (plain JAX)
# ---------------------------------------------------------------------------
def pixel_shuffle(x, r):
    # matches torch.nn.PixelShuffle channel ordering: c_in = c*r*r + i*r + j
    n, h, w, c = x.shape
    co = c // (r * r)
    x = x.reshape(n, h, w, co, r, r)
    x = x.transpose(0, 1, 4, 2, 5, 3)
    return x.reshape(n, h * r, w * r, co)


def crop_to_shape(x, hw):
    return x[:, :hw[0], :hw[1], :]


def dub_pad(x):
    ph = x.shape[1] % 2
    pw = x.shape[2] % 2
    if ph or pw:
        x = jnp.pad(x, ((0, 0), (0, ph), (0, pw), (0, 0)), mode='reflect')
    return x


# ---------------------------------------------------------------------------
# Module forwards
# ---------------------------------------------------------------------------
def recon_block_forward(x, plist):
    out = x
    for p in plist[:-1]:
        out = conv(out, p, padding=1)
    # last conv has no PReLU; residual (input_data + ...) fused into the kernel
    return conv(out, plist[-1], padding=1, residual=x)


def dub_forward(x, p):
    x1 = dub_pad(x)
    # conv1_1: the PyTorch module reuses the SAME (conv, PReLU) pair twice ([m]*2);
    # the outer residual add is fused into the second application.
    t = conv(x1, p['c11'], padding=1)
    x1 = conv(t, p['c11'], padding=1, residual=x1)
    x2 = conv(x1, p['down1'], stride=2, padding=1)
    x2 = conv(x2, p['c21'], padding=1, residual=x2)
    out = conv(x2, p['down2'], stride=2, padding=1)
    out = conv(out, p['c31'], padding=1, residual=out)
    out = pixel_shuffle(conv(out, p['up1'], padding=0), 2)
    # conv_agg_1 over torch.cat([x2, up], dim=C): fused two-operand 1x1 conv
    out = conv1x1_multi([x2, crop_to_shape(out, x2.shape[1:3])], p['agg1'])
    out = conv(out, p['c22'], padding=1, residual=out)
    out = pixel_shuffle(conv(out, p['up2'], padding=0), 2)
    out = conv1x1_multi([x1, crop_to_shape(out, x1.shape[1:3])], p['agg2'])
    # conv1_2: shared (conv, PReLU) pair applied twice; residual fused into 2nd.
    t = conv(out, p['c12'], padding=1)
    out = conv(t, p['c12'], padding=1, residual=out)
    # conv_out (+PReLU) then x + crop(...): fuse the residual when no crop is needed
    if x1.shape[1:3] == x.shape[1:3]:
        return conv(out, p['cout'], padding=1, residual=x)
    co = conv(out, p['cout'], padding=1)
    return x + crop_to_shape(co, x.shape[1:3])


def didn_forward(x_nchw, params, skip_connection=False):
    x = jnp.transpose(x_nchw, (0, 2, 3, 1)).astype(jnp.float32)   # NCHW -> NHWC
    out = conv(x, params['conv_in'], padding=1)
    out = conv(out, params['down'], stride=2, padding=1)
    dub_outs = []
    for dp in params['dubs']:
        out = dub_forward(out, dp)
        dub_outs.append(out)
    # single shared-weight ReconBlock applied to every DUB output: batch all DUB
    # outputs along M so each recon conv is ONE big Pallas matmul instead of
    # num_dubs small ones.
    num_dubs = len(dub_outs)
    stacked = dub_outs[0] if num_dubs == 1 else jnp.concatenate(dub_outs, axis=0)
    recon_stacked = recon_block_forward(stacked, params['recon'])
    recon_outs = (jnp.split(recon_stacked, num_dubs, axis=0)
                  if num_dubs > 1 else [recon_stacked])
    # recon_agg over torch.cat(recon_outs, dim=C): fused multi-operand 1x1 conv
    out = conv1x1_multi(recon_outs, params['recon_agg'])
    out = conv(out, params['conv'], padding=1)
    out = pixel_shuffle(conv(out, params['up2'], padding=0), 2)
    out = conv(out, params['conv_out'], padding=1)
    out = crop_to_shape(out, x.shape[1:3])
    if skip_connection:
        out = x + out
    return jnp.transpose(out, (0, 3, 1, 2))   # NHWC -> NCHW


# ---------------------------------------------------------------------------
# Deterministic parameter initialization
# ---------------------------------------------------------------------------
class KeyGen:
    def __init__(self, seed=0):
        self._key = jax.random.PRNGKey(seed)

    def __call__(self):
        self._key, sub = jax.random.split(self._key)
        return sub


def init_conv(kg, kh, kw, cin, cout, prelu=False):
    fan_in = kh * kw * cin
    s = 1.0 / (fan_in ** 0.5)
    p = {'w': jax.random.uniform(kg(), (kh, kw, cin, cout), jnp.float32, -s, s),
         'b': jax.random.uniform(kg(), (cout,), jnp.float32, -s, s)}
    if prelu:
        p['a'] = jnp.full((1, 1), 0.25, jnp.float32)   # nn.PReLU() default init
    return p


def init_dub(kg, c):
    return {
        'c11':   init_conv(kg, 3, 3, c, c, prelu=True),
        'down1': init_conv(kg, 3, 3, c, 2 * c),
        'c21':   init_conv(kg, 3, 3, 2 * c, 2 * c, prelu=True),
        'down2': init_conv(kg, 3, 3, 2 * c, 4 * c),
        'c31':   init_conv(kg, 3, 3, 4 * c, 4 * c, prelu=True),
        'up1':   init_conv(kg, 1, 1, 4 * c, 2 * c * 4),
        'agg1':  init_conv(kg, 1, 1, 4 * c, 2 * c),
        'c22':   init_conv(kg, 3, 3, 2 * c, 2 * c, prelu=True),
        'up2':   init_conv(kg, 1, 1, 2 * c, c * 4),
        'agg2':  init_conv(kg, 1, 1, 2 * c, c),
        'c12':   init_conv(kg, 3, 3, c, c, prelu=True),
        'cout':  init_conv(kg, 3, 3, c, c, prelu=True),
    }


def init_didn(kg, cin, cout, hidden, num_dubs, num_convs_recon):
    return {
        'conv_in':  init_conv(kg, 3, 3, cin, hidden, prelu=True),
        'down':     init_conv(kg, 3, 3, hidden, hidden),
        'dubs':     [init_dub(kg, hidden) for _ in range(num_dubs)],
        'recon':    [init_conv(kg, 3, 3, hidden, hidden,
                               prelu=(i < num_convs_recon - 1))
                     for i in range(num_convs_recon)],
        'recon_agg': init_conv(kg, 1, 1, hidden * num_dubs, hidden),
        'conv':     init_conv(kg, 3, 3, hidden, hidden, prelu=True),
        'up2':      init_conv(kg, 1, 1, hidden, hidden * 4),
        'conv_out': init_conv(kg, 3, 3, hidden, cout),
    }


# ---------------------------------------------------------------------------
if __name__ == "__main__":
    in_ch, out_ch, hidden = 2, 2, 16
    num_dubs, num_convs_recon = 2, 3

    kg = KeyGen(seed=0)
    params = init_didn(kg, in_ch, out_ch, hidden, num_dubs, num_convs_recon)

    x = jax.random.normal(jax.random.PRNGKey(0), (2, in_ch, 16, 16), jnp.float32)

    fwd = jax.jit(functools.partial(didn_forward, skip_connection=False))
    y = jax.block_until_ready(fwd(x, params))

    assert y.shape == (2, out_ch, 16, 16), y.shape
    assert bool(jnp.isfinite(y).all())
    print("KERNEL_OK")
</pallas_src>

<mosaic_0001>
module attributes {stable_mosaic.version = 11 : i64} {
  func.func @_fused_matmul_kernel(%arg0: i32, %arg1: memref<512x18xbf16, #tpu.memory_space<vmem>>, %arg2: memref<18x16xbf16, #tpu.memory_space<vmem>>, %arg3: memref<1x16xf32, #tpu.memory_space<vmem>>, %arg4: memref<1x1xf32, #tpu.memory_space<smem>>, %arg5: memref<512x16xf32, #tpu.memory_space<vmem>>) attributes {dimension_semantics = [#tpu.dimension_semantics<parallel>], iteration_bounds = array<i64: 1>, scalar_prefetch = 0 : i64, scratch_operands = 0 : i64, tpu.core_type = #tpu.core_type<tc>, window_params = [{transform_indices = @transform_0, window_bounds = array<i64: 512, 18>}, {pipeline_mode = #tpu.pipeline_mode<synchronous>, transform_indices = @transform_1, window_bounds = array<i64: 18, 16>}, {pipeline_mode = #tpu.pipeline_mode<synchronous>, transform_indices = @transform_2, window_bounds = array<i64: 1, 16>}, {transform_indices = @transform_3, window_bounds = array<i64: 1, 1>}, {transform_indices = @transform_4, window_bounds = array<i64: 512, 16>}]} {
    %c0 = arith.constant 0 : index
    %c0_0 = arith.constant 0 : index
    %0 = vector.load %arg1[%c0, %c0_0] : memref<512x18xbf16, #tpu.memory_space<vmem>>, vector<512x18xbf16>
    %c0_1 = arith.constant 0 : index
    %c0_2 = arith.constant 0 : index
    %1 = vector.load %arg2[%c0_1, %c0_2] : memref<18x16xbf16, #tpu.memory_space<vmem>>, vector<18x16xbf16>
    %cst = arith.constant dense<0.000000e+00> : vector<512x16xf32>
    %2 = tpu.matmul %0, %1, %cst {dimension_numbers = #tpu.dot_dimension_numbers<[1], [0], [0], [1], [0, 0, 1, 1], [], []>} : vector<512x18xbf16>, vector<18x16xbf16>, vector<512x16xf32> -> vector<512x16xf32>
    %c0_3 = arith.constant 0 : index
    %c0_4 = arith.constant 0 : index
    %3 = vector.load %arg3[%c0_3, %c0_4] : memref<1x16xf32, #tpu.memory_space<vmem>>, vector<1x16xf32>
    %4 = vector.broadcast %3 : vector<1x16xf32> to vector<512x16xf32>
    %5 = arith.addf %2, %4 : vector<512x16xf32>
    %c0_5 = arith.constant 0 : index
    %c0_6 = arith.constant 0 : index
    %6 = memref.load %arg4[%c0_5, %c0_6] : memref<1x1xf32, #tpu.memory_space<smem>>
    %cst_7 = arith.constant 0.000000e+00 : f32
    %7 = vector.broadcast %cst_7 : f32 to vector<512x16xf32>
    %8 = arith.cmpf oge, %5, %7 : vector<512x16xf32>
    %9 = vector.broadcast %6 : f32 to vector<512x16xf32>
    %10 = arith.mulf %9, %5 : vector<512x16xf32>
    %11 = arith.select %8, %5, %10 : vector<512x16xi1>, vector<512x16xf32>
    %c0_8 = arith.constant 0 : index
    %c0_9 = arith.constant 0 : index
    %12 = vector.load %arg5[%c0_8, %c0_9] : memref<512x16xf32, #tpu.memory_space<vmem>>, vector<512x16xf32>
    tpu.vector_store %arg5[%c0_8, %c0_9], %11 {strides = array<i32>} : memref<512x16xf32, #tpu.memory_space<vmem>>, vector<512x16xf32>,
    return
  }
  func.func @transform_0(%arg0: i32) -> (i32, i32) {
    %c0_i32 = arith.constant 0 : i32
    %c0_i32_0 = arith.constant 0 : i32
    return %arg0, %c0_i32 : i32, i32
  }
  func.func @transform_1(%arg0: i32) -> (i32, i32) {
    %c0_i32 = arith.constant 0 : i32
    %c0_i32_0 = arith.constant 0 : i32
    %c0_i32_1 = arith.constant 0 : i32
    return %c0_i32, %c0_i32_0 : i32, i32
  }
  func.func @transform_2(%arg0: i32) -> (i32, i32) {
    %c0_i32 = arith.constant 0 : i32
    %c0_i32_0 = arith.constant 0 : i32
    %c0_i32_1 = arith.constant 0 : i32
    return %c0_i32, %c0_i32_0 : i32, i32
  }
  func.func @transform_3(%arg0: i32) -> (i32, i32) {
    %c0_i32 = arith.constant 0 : i32
    %c0_i32_0 = arith.constant 0 : i32
    %c0_i32_1 = arith.constant 0 : i32
    return %c0_i32, %c0_i32_0 : i32, i32
  }
  func.func @transform_4(%arg0: i32) -> (i32, i32) {
    %c0_i32 = arith.constant 0 : i32
    %c0_i32_0 = arith.constant 0 : i32
    return %arg0, %c0_i32 : i32, i32
  }
}

module attributes {stable_mosaic.version = 11 : i64} {
  func.func @_fused_matmul_kernel(%arg0: i32, %arg1: memref<128x144xbf16, #tpu.memory_space<vmem>>, %arg2: memref<144x16xbf16, #tpu.memory_space<vmem>>, %arg3: memref<1x16xf32, #tpu.memory_space<vmem>>, %arg4: memref<128x16xf32, #tpu.memory_space<vmem>>) attributes {dimension_semantics = [#tpu.dimension_semantics<parallel>], iteration_bounds = array<i64: 1>, scalar_prefetch = 0 : i64, scratch_operands = 0 : i64, tpu.core_type = #tpu.core_type<tc>, window_params = [{transform_indices = @transform_0, window_bounds = array<i64: 128, 144>}, {pipeline_mode = #tpu.pipeline_mode<synchronous>, transform_indices = @transform_1, window_bounds = array<i64: 144, 16>}, {pipeline_mode = #tpu.pipeline_mode<synchronous>, transform_indices = @transform_2, window_bounds = array<i64: 1, 16>}, {transform_indices = @transform_3, window_bounds = array<i64: 128, 16>}]} {
    %c0 = arith.constant 0 : index
    %c0_0 = arith.constant 0 : index
    %0 = vector.load %arg1[%c0, %c0_0] : memref<128x144xbf16, #tpu.memory_space<vmem>>, vector<128x144xbf16>
    %c0_1 = arith.constant 0 : index
    %c0_2 = arith.constant 0 : index
    %1 = vector.load %arg2[%c0_1, %c0_2] : memref<144x16xbf16, #tpu.memory_space<vmem>>, vector<144x16xbf16>
    %cst = arith.constant dense<0.000000e+00> : vector<128x16xf32>
    %2 = tpu.matmul %0, %1, %cst {dimension_numbers = #tpu.dot_dimension_numbers<[1], [0], [0], [1], [0, 0, 1, 1], [], []>} : vector<128x144xbf16>, vector<144x16xbf16>, vector<128x16xf32> -> vector<128x16xf32>
    %c0_3 = arith.constant 0 : index
    %c0_4 = arith.constant 0 : index
    %3 = vector.load %arg3[%c0_3, %c0_4] : memref<1x16xf32, #tpu.memory_space<vmem>>, vector<1x16xf32>
    %4 = vector.broadcast %3 : vector<1x16xf32> to vector<128x16xf32>
    %5 = arith.addf %2, %4 : vector<128x16xf32>
    %c0_5 = arith.constant 0 : index
    %c0_6 = arith.constant 0 : index
    %6 = vector.load %arg4[%c0_5, %c0_6] : memref<128x16xf32, #tpu.memory_space<vmem>>, vector<128x16xf32>
    tpu.vector_store %arg4[%c0_5, %c0_6], %5 {strides = array<i32>} : memref<128x16xf32, #tpu.memory_space<vmem>>, vector<128x16xf32>,
    return
  }
  func.func @transform_0(%arg0: i32) -> (i32, i32) {
    %c0_i32 = arith.constant 0 : i32
    %c0_i32_0 = arith.constant 0 : i32
    return %arg0, %c0_i32 : i32, i32
  }
  func.func @transform_1(%arg0: i32) -> (i32, i32) {
    %c0_i32 = arith.constant 0 : i32
    %c0_i32_0 = arith.constant 0 : i32
    %c0_i32_1 = arith.constant 0 : i32
    return %c0_i32, %c0_i32_0 : i32, i32
  }
  func.func @transform_2(%arg0: i32) -> (i32, i32) {
    %c0_i32 = arith.constant 0 : i32
    %c0_i32_0 = arith.constant 0 : i32
    %c0_i32_1 = arith.constant 0 : i32
    return %c0_i32, %c0_i32_0 : i32, i32
  }
  func.func @transform_3(%arg0: i32) -> (i32, i32) {
    %c0_i32 = arith.constant 0 : i32
    %c0_i32_0 = arith.constant 0 : i32
    return %arg0, %c0_i32 : i32, i32
  }
}

module attributes {stable_mosaic.version = 11 : i64} {
  func.func @_fused_matmul_kernel(%arg0: i32, %arg1: memref<128x144xbf16, #tpu.memory_space<vmem>>, %arg2: memref<144x16xbf16, #tpu.memory_space<vmem>>, %arg3: memref<1x16xf32, #tpu.memory_space<vmem>>, %arg4: memref<1x1xf32, #tpu.memory_space<smem>>, %arg5: memref<128x16xf32, #tpu.memory_space<vmem>>, %arg6: memref<128x16xf32, #tpu.memory_space<vmem>>) attributes {dimension_semantics = [#tpu.dimension_semantics<parallel>], iteration_bounds = array<i64: 1>, scalar_prefetch = 0 : i64, scratch_operands = 0 : i64, tpu.core_type = #tpu.core_type<tc>, window_params = [{transform_indices = @transform_0, window_bounds = array<i64: 128, 144>}, {pipeline_mode = #tpu.pipeline_mode<synchronous>, transform_indices = @transform_1, window_bounds = array<i64: 144, 16>}, {pipeline_mode = #tpu.pipeline_mode<synchronous>, transform_indices = @transform_2, window_bounds = array<i64: 1, 16>}, {transform_indices = @transform_3, window_bounds = array<i64: 1, 1>}, {transform_indices = @transform_4, window_bounds = array<i64: 128, 16>}, {transform_indices = @transform_5, window_bounds = array<i64: 128, 16>}]} {
    %c0 = arith.constant 0 : index
    %c0_0 = arith.constant 0 : index
    %0 = vector.load %arg1[%c0, %c0_0] : memref<128x144xbf16, #tpu.memory_space<vmem>>, vector<128x144xbf16>
    %c0_1 = arith.constant 0 : index
    %c0_2 = arith.constant 0 : index
    %1 = vector.load %arg2[%c0_1, %c0_2] : memref<144x16xbf16, #tpu.memory_space<vmem>>, vector<144x16xbf16>
    %cst = arith.constant dense<0.000000e+00> : vector<128x16xf32>
    %2 = tpu.matmul %0, %1, %cst {dimension_numbers = #tpu.dot_dimension_numbers<[1], [0], [0], [1], [0, 0, 1, 1], [], []>} : vector<128x144xbf16>, vector<144x16xbf16>, vector<128x16xf32> -> vector<128x16xf32>
    %c0_3 = arith.constant 0 : index
    %c0_4 = arith.constant 0 : index
    %3 = vector.load %arg3[%c0_3, %c0_4] : memref<1x16xf32, #tpu.memory_space<vmem>>, vector<1x16xf32>
    %4 = vector.broadcast %3 : vector<1x16xf32> to vector<128x16xf32>
    %5 = arith.addf %2, %4 : vector<128x16xf32>
    %c0_5 = arith.constant 0 : index
    %c0_6 = arith.constant 0 : index
    %6 = memref.load %arg4[%c0_5, %c0_6] : memref<1x1xf32, #tpu.memory_space<smem>>
    %cst_7 = arith.constant 0.000000e+00 : f32
    %7 = vector.broadcast %cst_7 : f32 to vector<128x16xf32>
    %8 = arith.cmpf oge, %5, %7 : vector<128x16xf32>
    %9 = vector.broadcast %6 : f32 to vector<128x16xf32>
    %10 = arith.mulf %9, %5 : vector<128x16xf32>
    %11 = arith.select %8, %5, %10 : vector<128x16xi1>, vector<128x16xf32>
    %c0_8 = arith.constant 0 : index
    %c0_9 = arith.constant 0 : index
    %12 = vector.load %arg5[%c0_8, %c0_9] : memref<128x16xf32, #tpu.memory_space<vmem>>, vector<128x16xf32>
    %13 = arith.addf %11, %12 : vector<128x16xf32>
    %c0_10 = arith.constant 0 : index
    %c0_11 = arith.constant 0 : index
    %14 = vector.load %arg6[%c0_10, %c0_11] : memref<128x16xf32, #tpu.memory_space<vmem>>, vector<128x16xf32>
    tpu.vector_store %arg6[%c0_10, %c0_11], %13 {strides = array<i32>} : memref<128x16xf32, #tpu.memory_space<vmem>>, vector<128x16xf32>,
    return
  }
  func.func @transform_0(%arg0: i32) -> (i32, i32) {
    %c0_i32 = arith.constant 0 : i32
    %c0_i32_0 = arith.constant 0 : i32
    return %arg0, %c0_i32 : i32, i32
  }
  func.func @transform_1(%arg0: i32) -> (i32, i32) {
    %c0_i32 = arith.constant 0 : i32
    %c0_i32_0 = arith.constant 0 : i32
    %c0_i32_1 = arith.constant 0 : i32
    return %c0_i32, %c0_i32_0 : i32, i32
  }
  func.func @transform_2(%arg0: i32) -> (i32, i32) {
    %c0_i32 = arith.constant 0 : i32
    %c0_i32_0 = arith.constant 0 : i32
    %c0_i32_1 = arith.constant 0 : i32
    return %c0_i32, %c0_i32_0 : i32, i32
  }
  func.func @transform_3(%arg0: i32) -> (i32, i32) {
    %c0_i32 = arith.constant 0 : i32
    %c0_i32_0 = arith.constant 0 : i32
    %c0_i32_1 = arith.constant 0 : i32
    return %c0_i32, %c0_i32_0 : i32, i32
  }
  func.func @transform_4(%arg0: i32) -> (i32, i32) {
    %c0_i32 = arith.constant 0 : i32
    %c0_i32_0 = arith.constant 0 : i32
    return %arg0, %c0_i32 : i32, i32
  }
  func.func @transform_5(%arg0: i32) -> (i32, i32) {
    %c0_i32 = arith.constant 0 : i32
    %c0_i32_0 = arith.constant 0 : i32
    return %arg0, %c0_i32 : i32, i32
  }
}

module attributes {stable_mosaic.version = 11 : i64} {
  func.func @_fused_matmul_kernel(%arg0: i32, %arg1: memref<128x144xbf16, #tpu.memory_space<vmem>>, %arg2: memref<144x16xbf16, #tpu.memory_space<vmem>>, %arg3: memref<1x16xf32, #tpu.memory_space<vmem>>, %arg4: memref<1x1xf32, #tpu.memory_space<smem>>, %arg5: memref<128x16xf32, #tpu.memory_space<vmem>>) attributes {dimension_semantics = [#tpu.dimension_semantics<parallel>], iteration_bounds = array<i64: 1>, scalar_prefetch = 0 : i64, scratch_operands = 0 : i64, tpu.core_type = #tpu.core_type<tc>, window_params = [{transform_indices = @transform_0, window_bounds = array<i64: 128, 144>}, {pipeline_mode = #tpu.pipeline_mode<synchronous>, transform_indices = @transform_1, window_bounds = array<i64: 144, 16>}, {pipeline_mode = #tpu.pipeline_mode<synchronous>, transform_indices = @transform_2, window_bounds = array<i64: 1, 16>}, {transform_indices = @transform_3, window_bounds = array<i64: 1, 1>}, {transform_indices = @transform_4, window_bounds = array<i64: 128, 16>}]} {
    %c0 = arith.constant 0 : index
    %c0_0 = arith.constant 0 : index
    %0 = vector.load %arg1[%c0, %c0_0] : memref<128x144xbf16, #tpu.memory_space<vmem>>, vector<128x144xbf16>
    %c0_1 = arith.constant 0 : index
    %c0_2 = arith.constant 0 : index
    %1 = vector.load %arg2[%c0_1, %c0_2] : memref<144x16xbf16, #tpu.memory_space<vmem>>, vector<144x16xbf16>
    %cst = arith.constant dense<0.000000e+00> : vector<128x16xf32>
    %2 = tpu.matmul %0, %1, %cst {dimension_numbers = #tpu.dot_dimension_numbers<[1], [0], [0], [1], [0, 0, 1, 1], [], []>} : vector<128x144xbf16>, vector<144x16xbf16>, vector<128x16xf32> -> vector<128x16xf32>
    %c0_3 = arith.constant 0 : index
    %c0_4 = arith.constant 0 : index
    %3 = vector.load %arg3[%c0_3, %c0_4] : memref<1x16xf32, #tpu.memory_space<vmem>>, vector<1x16xf32>
    %4 = vector.broadcast %3 : vector<1x16xf32> to vector<128x16xf32>
    %5 = arith.addf %2, %4 : vector<128x16xf32>
    %c0_5 = arith.constant 0 : index
    %c0_6 = arith.constant 0 : index
    %6 = memref.load %arg4[%c0_5, %c0_6] : memref<1x1xf32, #tpu.memory_space<smem>>
    %cst_7 = arith.constant 0.000000e+00 : f32
    %7 = vector.broadcast %cst_7 : f32 to vector<128x16xf32>
    %8 = arith.cmpf oge, %5, %7 : vector<128x16xf32>
    %9 = vector.broadcast %6 : f32 to vector<128x16xf32>
    %10 = arith.mulf %9, %5 : vector<128x16xf32>
    %11 = arith.select %8, %5, %10 : vector<128x16xi1>, vector<128x16xf32>
    %c0_8 = arith.constant 0 : index
    %c0_9 = arith.constant 0 : index
    %12 = vector.load %arg5[%c0_8, %c0_9] : memref<128x16xf32, #tpu.memory_space<vmem>>, vector<128x16xf32>
    tpu.vector_store %arg5[%c0_8, %c0_9], %11 {strides = array<i32>} : memref<128x16xf32, #tpu.memory_space<vmem>>, vector<128x16xf32>,
    return
  }
  func.func @transform_0(%arg0: i32) -> (i32, i32) {
    %c0_i32 = arith.constant 0 : i32
    %c0_i32_0 = arith.constant 0 : i32
    return %arg0, %c0_i32 : i32, i32
  }
  func.func @transform_1(%arg0: i32) -> (i32, i32) {
    %c0_i32 = arith.constant 0 : i32
    %c0_i32_0 = arith.constant 0 : i32
    %c0_i32_1 = arith.constant 0 : i32
    return %c0_i32, %c0_i32_0 : i32, i32
  }
  func.func @transform_2(%arg0: i32) -> (i32, i32) {
    %c0_i32 = arith.constant 0 : i32
    %c0_i32_0 = arith.constant 0 : i32
    %c0_i32_1 = arith.constant 0 : i32
    return %c0_i32, %c0_i32_0 : i32, i32
  }
  func.func @transform_3(%arg0: i32) -> (i32, i32) {
    %c0_i32 = arith.constant 0 : i32
    %c0_i32_0 = arith.constant 0 : i32
    %c0_i32_1 = arith.constant 0 : i32
    return %c0_i32, %c0_i32_0 : i32, i32
  }
  func.func @transform_4(%arg0: i32) -> (i32, i32) {
    %c0_i32 = arith.constant 0 : i32
    %c0_i32_0 = arith.constant 0 : i32
    return %arg0, %c0_i32 : i32, i32
  }
}

module attributes {stable_mosaic.version = 11 : i64} {
  func.func @_fused_matmul_kernel(%arg0: i32, %arg1: memref<32x144xbf16, #tpu.memory_space<vmem>>, %arg2: memref<144x32xbf16, #tpu.memory_space<vmem>>, %arg3: memref<1x32xf32, #tpu.memory_space<vmem>>, %arg4: memref<32x32xf32, #tpu.memory_space<vmem>>) attributes {dimension_semantics = [#tpu.dimension_semantics<parallel>], iteration_bounds = array<i64: 1>, scalar_prefetch = 0 : i64, scratch_operands = 0 : i64, tpu.core_type = #tpu.core_type<tc>, window_params = [{transform_indices = @transform_0, window_bounds = array<i64: 32, 144>}, {pipeline_mode = #tpu.pipeline_mode<synchronous>, transform_indices = @transform_1, window_bounds = array<i64: 144, 32>}, {pipeline_mode = #tpu.pipeline_mode<synchronous>, transform_indices = @transform_2, window_bounds = array<i64: 1, 32>}, {transform_indices = @transform_3, window_bounds = array<i64: 32, 32>}]} {
    %c0 = arith.constant 0 : index
    %c0_0 = arith.constant 0 : index
    %0 = vector.load %arg1[%c0, %c0_0] : memref<32x144xbf16, #tpu.memory_space<vmem>>, vector<32x144xbf16>
    %c0_1 = arith.constant 0 : index
    %c0_2 = arith.constant 0 : index
    %1 = vector.load %arg2[%c0_1, %c0_2] : memref<144x32xbf16, #tpu.memory_space<vmem>>, vector<144x32xbf16>
    %cst = arith.constant dense<0.000000e+00> : vector<32x32xf32>
    %2 = tpu.matmul %0, %1, %cst {dimension_numbers = #tpu.dot_dimension_numbers<[1], [0], [0], [1], [0, 0, 1, 1], [], []>} : vector<32x144xbf16>, vector<144x32xbf16>, vector<32x32xf32> -> vector<32x32xf32>
    %c0_3 = arith.constant 0 : index
    %c0_4 = arith.constant 0 : index
    %3 = vector.load %arg3[%c0_3, %c0_4] : memref<1x32xf32, #tpu.memory_space<vmem>>, vector<1x32xf32>
    %4 = vector.broadcast %3 : vector<1x32xf32> to vector<32x32xf32>
    %5 = arith.addf %2, %4 : vector<32x32xf32>
    %c0_5 = arith.constant 0 : index
    %c0_6 = arith.constant 0 : index
    %6 = vector.load %arg4[%c0_5, %c0_6] : memref<32x32xf32, #tpu.memory_space<vmem>>, vector<32x32xf32>
    tpu.vector_store %arg4[%c0_5, %c0_6], %5 {strides = array<i32>} : memref<32x32xf32, #tpu.memory_space<vmem>>, vector<32x32xf32>,
    return
  }
  func.func @transform_0(%arg0: i32) -> (i32, i32) {
    %c0_i32 = arith.constant 0 : i32
    %c0_i32_0 = arith.constant 0 : i32
    return %arg0, %c0_i32 : i32, i32
  }
  func.func @transform_1(%arg0: i32) -> (i32, i32) {
    %c0_i32 = arith.constant 0 : i32
    %c0_i32_0 = arith.constant 0 : i32
    %c0_i32_1 = arith.constant 0 : i32
    return %c0_i32, %c0_i32_0 : i32, i32
  }
  func.func @transform_2(%arg0: i32) -> (i32, i32) {
    %c0_i32 = arith.constant 0 : i32
    %c0_i32_0 = arith.constant 0 : i32
    %c0_i32_1 = arith.constant 0 : i32
    return %c0_i32, %c0_i32_0 : i32, i32
  }
  func.func @transform_3(%arg0: i32) -> (i32, i32) {
    %c0_i32 = arith.constant 0 : i32
    %c0_i32_0 = arith.constant 0 : i32
    return %arg0, %c0_i32 : i32, i32
  }
}

module attributes {stable_mosaic.version = 11 : i64} {
  func.func @_fused_matmul_kernel(%arg0: i32, %arg1: memref<32x288xbf16, #tpu.memory_space<vmem>>, %arg2: memref<288x32xbf16, #tpu.memory_space<vmem>>, %arg3: memref<1x32xf32, #tpu.memory_space<vmem>>, %arg4: memref<1x1xf32, #tpu.memory_space<smem>>, %arg5: memref<32x32xf32, #tpu.memory_space<vmem>>, %arg6: memref<32x32xf32, #tpu.memory_space<vmem>>) attributes {dimension_semantics = [#tpu.dimension_semantics<parallel>], iteration_bounds = array<i64: 1>, scalar_prefetch = 0 : i64, scratch_operands = 0 : i64, tpu.core_type = #tpu.core_type<tc>, window_params = [{transform_indices = @transform_0, window_bounds = array<i64: 32, 288>}, {pipeline_mode = #tpu.pipeline_mode<synchronous>, transform_indices = @transform_1, window_bounds = array<i64: 288, 32>}, {pipeline_mode = #tpu.pipeline_mode<synchronous>, transform_indices = @transform_2, window_bounds = array<i64: 1, 32>}, {transform_indices = @transform_3, window_bounds = array<i64: 1, 1>}, {transform_indices = @transform_4, window_bounds = array<i64: 32, 32>}, {transform_indices = @transform_5, window_bounds = array<i64: 32, 32>}]} {
    %c0 = arith.constant 0 : index
    %c0_0 = arith.constant 0 : index
    %0 = vector.load %arg1[%c0, %c0_0] : memref<32x288xbf16, #tpu.memory_space<vmem>>, vector<32x288xbf16>
    %c0_1 = arith.constant 0 : index
    %c0_2 = arith.constant 0 : index
    %1 = vector.load %arg2[%c0_1, %c0_2] : memref<288x32xbf16, #tpu.memory_space<vmem>>, vector<288x32xbf16>
    %cst = arith.constant dense<0.000000e+00> : vector<32x32xf32>
    %2 = tpu.matmul %0, %1, %cst {dimension_numbers = #tpu.dot_dimension_numbers<[1], [0], [0], [1], [0, 0, 1, 1], [], []>} : vector<32x288xbf16>, vector<288x32xbf16>, vector<32x32xf32> -> vector<32x32xf32>
    %c0_3 = arith.constant 0 : index
    %c0_4 = arith.constant 0 : index
    %3 = vector.load %arg3[%c0_3, %c0_4] : memref<1x32xf32, #tpu.memory_space<vmem>>, vector<1x32xf32>
    %4 = vector.broadcast %3 : vector<1x32xf32> to vector<32x32xf32>
    %5 = arith.addf %2, %4 : vector<32x32xf32>
    %c0_5 = arith.constant 0 : index
    %c0_6 = arith.constant 0 : index
    %6 = memref.load %arg4[%c0_5, %c0_6] : memref<1x1xf32, #tpu.memory_space<smem>>
    %cst_7 = arith.constant 0.000000e+00 : f32
    %7 = vector.broadcast %cst_7 : f32 to vector<32x32xf32>
    %8 = arith.cmpf oge, %5, %7 : vector<32x32xf32>
    %9 = vector.broadcast %6 : f32 to vector<32x32xf32>
    %10 = arith.mulf %9, %5 : vector<32x32xf32>
    %11 = arith.select %8, %5, %10 : vector<32x32xi1>, vector<32x32xf32>
    %c0_8 = arith.constant 0 : index
    %c0_9 = arith.constant 0 : index
    %12 = vector.load %arg5[%c0_8, %c0_9] : memref<32x32xf32, #tpu.memory_space<vmem>>, vector<32x32xf32>
    %13 = arith.addf %11, %12 : vector<32x32xf32>
    %c0_10 = arith.constant 0 : index
    %c0_11 = arith.constant 0 : index
    %14 = vector.load %arg6[%c0_10, %c0_11] : memref<32x32xf32, #tpu.memory_space<vmem>>, vector<32x32xf32>
    tpu.vector_store %arg6[%c0_10, %c0_11], %13 {strides = array<i32>} : memref<32x32xf32, #tpu.memory_space<vmem>>, vector<32x32xf32>,
    return
  }
  func.func @transform_0(%arg0: i32) -> (i32, i32) {
    %c0_i32 = arith.constant 0 : i32
    %c0_i32_0 = arith.constant 0 : i32
    return %arg0, %c0_i32 : i32, i32
  }
  func.func @transform_1(%arg0: i32) -> (i32, i32) {
    %c0_i32 = arith.constant 0 : i32
    %c0_i32_0 = arith.constant 0 : i32
    %c0_i32_1 = arith.constant 0 : i32
    return %c0_i32, %c0_i32_0 : i32, i32
  }
  func.func @transform_2(%arg0: i32) -> (i32, i32) {
    %c0_i32 = arith.constant 0 : i32
    %c0_i32_0 = arith.constant 0 : i32
    %c0_i32_1 = arith.constant 0 : i32
    return %c0_i32, %c0_i32_0 : i32, i32
  }
  func.func @transform_3(%arg0: i32) -> (i32, i32) {
    %c0_i32 = arith.constant 0 : i32
    %c0_i32_0 = arith.constant 0 : i32
    %c0_i32_1 = arith.constant 0 : i32
    return %c0_i32, %c0_i32_0 : i32, i32
  }
  func.func @transform_4(%arg0: i32) -> (i32, i32) {
    %c0_i32 = arith.constant 0 : i32
    %c0_i32_0 = arith.constant 0 : i32
    return %arg0, %c0_i32 : i32, i32
  }
  func.func @transform_5(%arg0: i32) -> (i32, i32) {
    %c0_i32 = arith.constant 0 : i32
    %c0_i32_0 = arith.constant 0 : i32
    return %arg0, %c0_i32 : i32, i32
  }
}

module attributes {stable_mosaic.version = 11 : i64} {
  func.func @_fused_matmul_kernel(%arg0: i32, %arg1: memref<16x288xbf16, #tpu.memory_space<vmem>>, %arg2: memref<288x64xbf16, #tpu.memory_space<vmem>>, %arg3: memref<1x64xf32, #tpu.memory_space<vmem>>, %arg4: memref<16x64xf32, #tpu.memory_space<vmem>>) attributes {dimension_semantics = [#tpu.dimension_semantics<parallel>], iteration_bounds = array<i64: 1>, scalar_prefetch = 0 : i64, scratch_operands = 0 : i64, tpu.core_type = #tpu.core_type<tc>, window_params = [{transform_indices = @transform_0, window_bounds = array<i64: 16, 288>}, {pipeline_mode = #tpu.pipeline_mode<synchronous>, transform_indices = @transform_1, window_bounds = array<i64: 288, 64>}, {pipeline_mode = #tpu.pipeline_mode<synchronous>, transform_indices = @transform_2, window_bounds = array<i64: 1, 64>}, {transform_indices = @transform_3, window_bounds = array<i64: 16, 64>}]} {
    %c0 = arith.constant 0 : index
    %c0_0 = arith.constant 0 : index
    %0 = vector.load %arg1[%c0, %c0_0] : memref<16x288xbf16, #tpu.memory_space<vmem>>, vector<16x288xbf16>
    %c0_1 = arith.constant 0 : index
    %c0_2 = arith.constant 0 : index
    %1 = vector.load %arg2[%c0_1, %c0_2] : memref<288x64xbf16, #tpu.memory_space<vmem>>, vector<288x64xbf16>
    %cst = arith.constant dense<0.000000e+00> : vector<16x64xf32>
    %2 = tpu.matmul %0, %1, %cst {dimension_numbers = #tpu.dot_dimension_numbers<[1], [0], [0], [1], [0, 0, 1, 1], [], []>} : vector<16x288xbf16>, vector<288x64xbf16>, vector<16x64xf32> -> vector<16x64xf32>
    %c0_3 = arith.constant 0 : index
    %c0_4 = arith.constant 0 : index
    %3 = vector.load %arg3[%c0_3, %c0_4] : memref<1x64xf32, #tpu.memory_space<vmem>>, vector<1x64xf32>
    %4 = vector.broadcast %3 : vector<1x64xf32> to vector<16x64xf32>
    %5 = arith.addf %2, %4 : vector<16x64xf32>
    %c0_5 = arith.constant 0 : index
    %c0_6 = arith.constant 0 : index
    %6 = vector.load %arg4[%c0_5, %c0_6] : memref<16x64xf32, #tpu.memory_space<vmem>>, vector<16x64xf32>
    tpu.vector_store %arg4[%c0_5, %c0_6], %5 {strides = array<i32>} : memref<16x64xf32, #tpu.memory_space<vmem>>, vector<16x64xf32>,
    return
  }
  func.func @transform_0(%arg0: i32) -> (i32, i32) {
    %c0_i32 = arith.constant 0 : i32
    %c0_i32_0 = arith.constant 0 : i32
    return %arg0, %c0_i32 : i32, i32
  }
  func.func @transform_1(%arg0: i32) -> (i32, i32) {
    %c0_i32 = arith.constant 0 : i32
    %c0_i32_0 = arith.constant 0 : i32
    %c0_i32_1 = arith.constant 0 : i32
    return %c0_i32, %c0_i32_0 : i32, i32
  }
  func.func @transform_2(%arg0: i32) -> (i32, i32) {
    %c0_i32 = arith.constant 0 : i32
    %c0_i32_0 = arith.constant 0 : i32
    %c0_i32_1 = arith.constant 0 : i32
    return %c0_i32, %c0_i32_0 : i32, i32
  }
  func.func @transform_3(%arg0: i32) -> (i32, i32) {
    %c0_i32 = arith.constant 0 : i32
    %c0_i32_0 = arith.constant 0 : i32
    return %arg0, %c0_i32 : i32, i32
  }
}

module attributes {stable_mosaic.version = 11 : i64} {
  func.func @_fused_matmul_kernel(%arg0: i32, %arg1: memref<16x64xbf16, #tpu.memory_space<vmem>>, %arg2: memref<64x128xbf16, #tpu.memory_space<vmem>>, %arg3: memref<1x128xf32, #tpu.memory_space<vmem>>, %arg4: memref<16x128xf32, #tpu.memory_space<vmem>>) attributes {dimension_semantics = [#tpu.dimension_semantics<parallel>], iteration_bounds = array<i64: 1>, scalar_prefetch = 0 : i64, scratch_operands = 0 : i64, tpu.core_type = #tpu.core_type<tc>, window_params = [{transform_indices = @transform_0, window_bounds = array<i64: 16, 64>}, {pipeline_mode = #tpu.pipeline_mode<synchronous>, transform_indices = @transform_1, window_bounds = array<i64: 64, 128>}, {pipeline_mode = #tpu.pipeline_mode<synchronous>, transform_indices = @transform_2, window_bounds = array<i64: 1, 128>}, {transform_indices = @transform_3, window_bounds = array<i64: 16, 128>}]} {
    %c0 = arith.constant 0 : index
    %c0_0 = arith.constant 0 : index
    %0 = vector.load %arg1[%c0, %c0_0] : memref<16x64xbf16, #tpu.memory_space<vmem>>, vector<16x64xbf16>
    %c0_1 = arith.constant 0 : index
    %c0_2 = arith.constant 0 : index
    %1 = vector.load %arg2[%c0_1, %c0_2] : memref<64x128xbf16, #tpu.memory_space<vmem>>, vector<64x128xbf16>
    %cst = arith.constant dense<0.000000e+00> : vector<16x128xf32>
    %2 = tpu.matmul %0, %1, %cst {dimension_numbers = #tpu.dot_dimension_numbers<[1], [0], [0], [1], [0, 0, 1, 1], [], []>} : vector<16x64xbf16>, vector<64x128xbf16>, vector<16x128xf32> -> vector<16x128xf32>
    %c0_3 = arith.constant 0 : index
    %c0_4 = arith.constant 0 : index
    %3 = vector.load %arg3[%c0_3, %c0_4] : memref<1x128xf32, #tpu.memory_space<vmem>>, vector<1x128xf32>
    %4 = vector.broadcast %3 : vector<1x128xf32> to vector<16x128xf32>
    %5 = arith.addf %2, %4 : vector<16x128xf32>
    %c0_5 = arith.constant 0 : index
    %c0_6 = arith.constant 0 : index
    %6 = vector.load %arg4[%c0_5, %c0_6] : memref<16x128xf32, #tpu.memory_space<vmem>>, vector<16x128xf32>
    tpu.vector_store %arg4[%c0_5, %c0_6], %5 {strides = array<i32>} : memref<16x128xf32, #tpu.memory_space<vmem>>, vector<16x128xf32>,
    return
  }
  func.func @transform_0(%arg0: i32) -> (i32, i32) {
    %c0_i32 = arith.constant 0 : i32
    %c0_i32_0 = arith.constant 0 : i32
    return %arg0, %c0_i32 : i32, i32
  }
  func.func @transform_1(%arg0: i32) -> (i32, i32) {
    %c0_i32 = arith.constant 0 : i32
    %c0_i32_0 = arith.constant 0 : i32
    %c0_i32_1 = arith.constant 0 : i32
    return %c0_i32, %c0_i32_0 : i32, i32
  }
  func.func @transform_2(%arg0: i32) -> (i32, i32) {
    %c0_i32 = arith.constant 0 : i32
    %c0_i32_0 = arith.constant 0 : i32
    %c0_i32_1 = arith.constant 0 : i32
    return %c0_i32, %c0_i32_0 : i32, i32
  }
  func.func @transform_3(%arg0: i32) -> (i32, i32) {
    %c0_i32 = arith.constant 0 : i32
    %c0_i32_0 = arith.constant 0 : i32
    return %arg0, %c0_i32 : i32, i32
  }
}

module attributes {stable_mosaic.version = 11 : i64} {
  func.func @_fused_matmul_kernel(%arg0: i32, %arg1: memref<16x576xbf16, #tpu.memory_space<vmem>>, %arg2: memref<576x64xbf16, #tpu.memory_space<vmem>>, %arg3: memref<1x64xf32, #tpu.memory_space<vmem>>, %arg4: memref<1x1xf32, #tpu.memory_space<smem>>, %arg5: memref<16x64xf32, #tpu.memory_space<vmem>>, %arg6: memref<16x64xf32, #tpu.memory_space<vmem>>) attributes {dimension_semantics = [#tpu.dimension_semantics<parallel>], iteration_bounds = array<i64: 1>, scalar_prefetch = 0 : i64, scratch_operands = 0 : i64, tpu.core_type = #tpu.core_type<tc>, window_params = [{transform_indices = @transform_0, window_bounds = array<i64: 16, 576>}, {pipeline_mode = #tpu.pipeline_mode<synchronous>, transform_indices = @transform_1, window_bounds = array<i64: 576, 64>}, {pipeline_mode = #tpu.pipeline_mode<synchronous>, transform_indices = @transform_2, window_bounds = array<i64: 1, 64>}, {transform_indices = @transform_3, window_bounds = array<i64: 1, 1>}, {transform_indices = @transform_4, window_bounds = array<i64: 16, 64>}, {transform_indices = @transform_5, window_bounds = array<i64: 16, 64>}]} {
    %c0 = arith.constant 0 : index
    %c0_0 = arith.constant 0 : index
    %0 = vector.load %arg1[%c0, %c0_0] : memref<16x576xbf16, #tpu.memory_space<vmem>>, vector<16x576xbf16>
    %c0_1 = arith.constant 0 : index
    %c0_2 = arith.constant 0 : index
    %1 = vector.load %arg2[%c0_1, %c0_2] : memref<576x64xbf16, #tpu.memory_space<vmem>>, vector<576x64xbf16>
    %cst = arith.constant dense<0.000000e+00> : vector<16x64xf32>
    %2 = tpu.matmul %0, %1, %cst {dimension_numbers = #tpu.dot_dimension_numbers<[1], [0], [0], [1], [0, 0, 1, 1], [], []>} : vector<16x576xbf16>, vector<576x64xbf16>, vector<16x64xf32> -> vector<16x64xf32>
    %c0_3 = arith.constant 0 : index
    %c0_4 = arith.constant 0 : index
    %3 = vector.load %arg3[%c0_3, %c0_4] : memref<1x64xf32, #tpu.memory_space<vmem>>, vector<1x64xf32>
    %4 = vector.broadcast %3 : vector<1x64xf32> to vector<16x64xf32>
    %5 = arith.addf %2, %4 : vector<16x64xf32>
    %c0_5 = arith.constant 0 : index
    %c0_6 = arith.constant 0 : index
    %6 = memref.load %arg4[%c0_5, %c0_6] : memref<1x1xf32, #tpu.memory_space<smem>>
    %cst_7 = arith.constant 0.000000e+00 : f32
    %7 = vector.broadcast %cst_7 : f32 to vector<16x64xf32>
    %8 = arith.cmpf oge, %5, %7 : vector<16x64xf32>
    %9 = vector.broadcast %6 : f32 to vector<16x64xf32>
    %10 = arith.mulf %9, %5 : vector<16x64xf32>
    %11 = arith.select %8, %5, %10 : vector<16x64xi1>, vector<16x64xf32>
    %c0_8 = arith.constant 0 : index
    %c0_9 = arith.constant 0 : index
    %12 = vector.load %arg5[%c0_8, %c0_9] : memref<16x64xf32, #tpu.memory_space<vmem>>, vector<16x64xf32>
    %13 = arith.addf %11, %12 : vector<16x64xf32>
    %c0_10 = arith.constant 0 : index
    %c0_11 = arith.constant 0 : index
    %14 = vector.load %arg6[%c0_10, %c0_11] : memref<16x64xf32, #tpu.memory_space<vmem>>, vector<16x64xf32>
    tpu.vector_store %arg6[%c0_10, %c0_11], %13 {strides = array<i32>} : memref<16x64xf32, #tpu.memory_space<vmem>>, vector<16x64xf32>,
    return
  }
  func.func @transform_0(%arg0: i32) -> (i32, i32) {
    %c0_i32 = arith.constant 0 : i32
    %c0_i32_0 = arith.constant 0 : i32
    return %arg0, %c0_i32 : i32, i32
  }
  func.func @transform_1(%arg0: i32) -> (i32, i32) {
    %c0_i32 = arith.constant 0 : i32
    %c0_i32_0 = arith.constant 0 : i32
    %c0_i32_1 = arith.constant 0 : i32
    return %c0_i32, %c0_i32_0 : i32, i32
  }
  func.func @transform_2(%arg0: i32) -> (i32, i32) {
    %c0_i32 = arith.constant 0 : i32
    %c0_i32_0 = arith.constant 0 : i32
    %c0_i32_1 = arith.constant 0 : i32
    return %c0_i32, %c0_i32_0 : i32, i32
  }
  func.func @transform_3(%arg0: i32) -> (i32, i32) {
    %c0_i32 = arith.constant 0 : i32
    %c0_i32_0 = arith.constant 0 : i32
    %c0_i32_1 = arith.constant 0 : i32
    return %c0_i32, %c0_i32_0 : i32, i32
  }
  func.func @transform_4(%arg0: i32) -> (i32, i32) {
    %c0_i32 = arith.constant 0 : i32
    %c0_i32_0 = arith.constant 0 : i32
    return %arg0, %c0_i32 : i32, i32
  }
  func.func @transform_5(%arg0: i32) -> (i32, i32) {
    %c0_i32 = arith.constant 0 : i32
    %c0_i32_0 = arith.constant 0 : i32
    return %arg0, %c0_i32 : i32, i32
  }
}

module attributes {stable_mosaic.version = 11 : i64} {
  func.func @_fused_matmul_kernel(%arg0: i32, %arg1: memref<32x32xbf16, #tpu.memory_space<vmem>>, %arg2: memref<32x32xbf16, #tpu.memory_space<vmem>>, %arg3: memref<32x32xbf16, #tpu.memory_space<vmem>>, %arg4: memref<32x32xbf16, #tpu.memory_space<vmem>>, %arg5: memref<1x32xf32, #tpu.memory_space<vmem>>, %arg6: memref<32x32xf32, #tpu.memory_space<vmem>>) attributes {dimension_semantics = [#tpu.dimension_semantics<parallel>], iteration_bounds = array<i64: 1>, scalar_prefetch = 0 : i64, scratch_operands = 0 : i64, tpu.core_type = #tpu.core_type<tc>, window_params = [{transform_indices = @transform_0, window_bounds = array<i64: 32, 32>}, {transform_indices = @transform_1, window_bounds = array<i64: 32, 32>}, {pipeline_mode = #tpu.pipeline_mode<synchronous>, transform_indices = @transform_2, window_bounds = array<i64: 32, 32>}, {pipeline_mode = #tpu.pipeline_mode<synchronous>, transform_indices = @transform_3, window_bounds = array<i64: 32, 32>}, {pipeline_mode = #tpu.pipeline_mode<synchronous>, transform_indices = @transform_4, window_bounds = array<i64: 1, 32>}, {transform_indices = @transform_5, window_bounds = array<i64: 32, 32>}]} {
    %c0 = arith.constant 0 : index
    %c0_0 = arith.constant 0 : index
    %0 = vector.load %arg1[%c0, %c0_0] : memref<32x32xbf16, #tpu.memory_space<vmem>>, vector<32x32xbf16>
    %c0_1 = arith.constant 0 : index
    %c0_2 = arith.constant 0 : index
    %1 = vector.load %arg3[%c0_1, %c0_2] : memref<32x32xbf16, #tpu.memory_space<vmem>>, vector<32x32xbf16>
    %cst = arith.constant dense<0.000000e+00> : vector<32x32xf32>
    %2 = tpu.matmul %0, %1, %cst {dimension_numbers = #tpu.dot_dimension_numbers<[1], [0], [0], [1], [0, 0, 1, 1], [], []>} : vector<32x32xbf16>, vector<32x32xbf16>, vector<32x32xf32> -> vector<32x32xf32>
    %c0_3 = arith.constant 0 : index
    %c0_4 = arith.constant 0 : index
    %3 = vector.load %arg2[%c0_3, %c0_4] : memref<32x32xbf16, #tpu.memory_space<vmem>>, vector<32x32xbf16>
    %c0_5 = arith.constant 0 : index
    %c0_6 = arith.constant 0 : index
    %4 = vector.load %arg4[%c0_5, %c0_6] : memref<32x32xbf16, #tpu.memory_space<vmem>>, vector<32x32xbf16>
    %cst_7 = arith.constant dense<0.000000e+00> : vector<32x32xf32>
    %5 = tpu.matmul %3, %4, %cst_7 {dimension_numbers = #tpu.dot_dimension_numbers<[1], [0], [0], [1], [0, 0, 1, 1], [], []>} : vector<32x32xbf16>, vector<32x32xbf16>, vector<32x32xf32> -> vector<32x32xf32>
    %6 = arith.addf %2, %5 : vector<32x32xf32>
    %c0_8 = arith.constant 0 : index
    %c0_9 = arith.constant 0 : index
    %7 = vector.load %arg5[%c0_8, %c0_9] : memref<1x32xf32, #tpu.memory_space<vmem>>, vector<1x32xf32>
    %8 = vector.broadcast %7 : vector<1x32xf32> to vector<32x32xf32>
    %9 = arith.addf %6, %8 : vector<32x32xf32>
    %c0_10 = arith.constant 0 : index
    %c0_11 = arith.constant 0 : index
    %10 = vector.load %arg6[%c0_10, %c0_11] : memref<32x32xf32, #tpu.memory_space<vmem>>, vector<32x32xf32>
    tpu.vector_store %arg6[%c0_10, %c0_11], %9 {strides = array<i32>} : memref<32x32xf32, #tpu.memory_space<vmem>>, vector<32x32xf32>,
    return
  }
  func.func @transform_0(%arg0: i32) -> (i32, i32) {
    %c0_i32 = arith.constant 0 : i32
    %c0_i32_0 = arith.constant 0 : i32
    return %arg0, %c0_i32 : i32, i32
  }
  func.func @transform_1(%arg0: i32) -> (i32, i32) {
    %c0_i32 = arith.constant 0 : i32
    %c0_i32_0 = arith.constant 0 : i32
    return %arg0, %c0_i32 : i32, i32
  }
  func.func @transform_2(%arg0: i32) -> (i32, i32) {
    %c0_i32 = arith.constant 0 : i32
    %c0_i32_0 = arith.constant 0 : i32
    %c0_i32_1 = arith.constant 0 : i32
    return %c0_i32, %c0_i32_0 : i32, i32
  }
  func.func @transform_3(%arg0: i32) -> (i32, i32) {
    %c0_i32 = arith.constant 0 : i32
    %c0_i32_0 = arith.constant 0 : i32
    %c0_i32_1 = arith.constant 0 : i32
    return %c0_i32, %c0_i32_0 : i32, i32
  }
  func.func @transform_4(%arg0: i32) -> (i32, i32) {
    %c0_i32 = arith.constant 0 : i32
    %c0_i32_0 = arith.constant 0 : i32
    %c0_i32_1 = arith.constant 0 : i32
    return %c0_i32, %c0_i32_0 : i32, i32
  }
  func.func @transform_5(%arg0: i32) -> (i32, i32) {
    %c0_i32 = arith.constant 0 : i32
    %c0_i32_0 = arith.constant 0 : i32
    return %arg0, %c0_i32 : i32, i32
  }
}

module attributes {stable_mosaic.version = 11 : i64} {
  func.func @_fused_matmul_kernel(%arg0: i32, %arg1: memref<32x32xbf16, #tpu.memory_space<vmem>>, %arg2: memref<32x64xbf16, #tpu.memory_space<vmem>>, %arg3: memref<1x64xf32, #tpu.memory_space<vmem>>, %arg4: memref<32x64xf32, #tpu.memory_space<vmem>>) attributes {dimension_semantics = [#tpu.dimension_semantics<parallel>], iteration_bounds = array<i64: 1>, scalar_prefetch = 0 : i64, scratch_operands = 0 : i64, tpu.core_type = #tpu.core_type<tc>, window_params = [{transform_indices = @transform_0, window_bounds = array<i64: 32, 32>}, {pipeline_mode = #tpu.pipeline_mode<synchronous>, transform_indices = @transform_1, window_bounds = array<i64: 32, 64>}, {pipeline_mode = #tpu.pipeline_mode<synchronous>, transform_indices = @transform_2, window_bounds = array<i64: 1, 64>}, {transform_indices = @transform_3, window_bounds = array<i64: 32, 64>}]} {
    %c0 = arith.constant 0 : index
    %c0_0 = arith.constant 0 : index
    %0 = vector.load %arg1[%c0, %c0_0] : memref<32x32xbf16, #tpu.memory_space<vmem>>, vector<32x32xbf16>
    %c0_1 = arith.constant 0 : index
    %c0_2 = arith.constant 0 : index
    %1 = vector.load %arg2[%c0_1, %c0_2] : memref<32x64xbf16, #tpu.memory_space<vmem>>, vector<32x64xbf16>
    %cst = arith.constant dense<0.000000e+00> : vector<32x64xf32>
    %2 = tpu.matmul %0, %1, %cst {dimension_numbers = #tpu.dot_dimension_numbers<[1], [0], [0], [1], [0, 0, 1, 1], [], []>} : vector<32x32xbf16>, vector<32x64xbf16>, vector<32x64xf32> -> vector<32x64xf32>
    %c0_3 = arith.constant 0 : index
    %c0_4 = arith.constant 0 : index
    %3 = vector.load %arg3[%c0_3, %c0_4] : memref<1x64xf32, #tpu.memory_space<vmem>>, vector<1x64xf32>
    %4 = vector.broadcast %3 : vector<1x64xf32> to vector<32x64xf32>
    %5 = arith.addf %2, %4 : vector<32x64xf32>
    %c0_5 = arith.constant 0 : index
    %c0_6 = arith.constant 0 : index
    %6 = vector.load %arg4[%c0_5, %c0_6] : memref<32x64xf32, #tpu.memory_space<vmem>>, vector<32x64xf32>
    tpu.vector_store %arg4[%c0_5, %c0_6], %5 {strides = array<i32>} : memref<32x64xf32, #tpu.memory_space<vmem>>, vector<32x64xf32>,
    return
  }
  func.func @transform_0(%arg0: i32) -> (i32, i32) {
    %c0_i32 = arith.constant 0 : i32
    %c0_i32_0 = arith.constant 0 : i32
    return %arg0, %c0_i32 : i32, i32
  }
  func.func @transform_1(%arg0: i32) -> (i32, i32) {
    %c0_i32 = arith.constant 0 : i32
    %c0_i32_0 = arith.constant 0 : i32
    %c0_i32_1 = arith.constant 0 : i32
    return %c0_i32, %c0_i32_0 : i32, i32
  }
  func.func @transform_2(%arg0: i32) -> (i32, i32) {
    %c0_i32 = arith.constant 0 : i32
    %c0_i32_0 = arith.constant 0 : i32
    %c0_i32_1 = arith.constant 0 : i32
    return %c0_i32, %c0_i32_0 : i32, i32
  }
  func.func @transform_3(%arg0: i32) -> (i32, i32) {
    %c0_i32 = arith.constant 0 : i32
    %c0_i32_0 = arith.constant 0 : i32
    return %arg0, %c0_i32 : i32, i32
  }
}

module attributes {stable_mosaic.version = 11 : i64} {
  func.func @_fused_matmul_kernel(%arg0: i32, %arg1: memref<128x16xbf16, #tpu.memory_space<vmem>>, %arg2: memref<128x16xbf16, #tpu.memory_space<vmem>>, %arg3: memref<16x16xbf16, #tpu.memory_space<vmem>>, %arg4: memref<16x16xbf16, #tpu.memory_space<vmem>>, %arg5: memref<1x16xf32, #tpu.memory_space<vmem>>, %arg6: memref<128x16xf32, #tpu.memory_space<vmem>>) attributes {dimension_semantics = [#tpu.dimension_semantics<parallel>], iteration_bounds = array<i64: 1>, scalar_prefetch = 0 : i64, scratch_operands = 0 : i64, tpu.core_type = #tpu.core_type<tc>, window_params = [{transform_indices = @transform_0, window_bounds = array<i64: 128, 16>}, {transform_indices = @transform_1, window_bounds = array<i64: 128, 16>}, {pipeline_mode = #tpu.pipeline_mode<synchronous>, transform_indices = @transform_2, window_bounds = array<i64: 16, 16>}, {pipeline_mode = #tpu.pipeline_mode<synchronous>, transform_indices = @transform_3, window_bounds = array<i64: 16, 16>}, {pipeline_mode = #tpu.pipeline_mode<synchronous>, transform_indices = @transform_4, window_bounds = array<i64: 1, 16>}, {transform_indices = @transform_5, window_bounds = array<i64: 128, 16>}]} {
    %c0 = arith.constant 0 : index
    %c0_0 = arith.constant 0 : index
    %0 = vector.load %arg1[%c0, %c0_0] : memref<128x16xbf16, #tpu.memory_space<vmem>>, vector<128x16xbf16>
    %c0_1 = arith.constant 0 : index
    %c0_2 = arith.constant 0 : index
    %1 = vector.load %arg3[%c0_1, %c0_2] : memref<16x16xbf16, #tpu.memory_space<vmem>>, vector<16x16xbf16>
    %cst = arith.constant dense<0.000000e+00> : vector<128x16xf32>
    %2 = tpu.matmul %0, %1, %cst {dimension_numbers = #tpu.dot_dimension_numbers<[1], [0], [0], [1], [0, 0, 1, 1], [], []>} : vector<128x16xbf16>, vector<16x16xbf16>, vector<128x16xf32> -> vector<128x16xf32>
    %c0_3 = arith.constant 0 : index
    %c0_4 = arith.constant 0 : index
    %3 = vector.load %arg2[%c0_3, %c0_4] : memref<128x16xbf16, #tpu.memory_space<vmem>>, vector<128x16xbf16>
    %c0_5 = arith.constant 0 : index
    %c0_6 = arith.constant 0 : index
    %4 = vector.load %arg4[%c0_5, %c0_6] : memref<16x16xbf16, #tpu.memory_space<vmem>>, vector<16x16xbf16>
    %cst_7 = arith.constant dense<0.000000e+00> : vector<128x16xf32>
    %5 = tpu.matmul %3, %4, %cst_7 {dimension_numbers = #tpu.dot_dimension_numbers<[1], [0], [0], [1], [0, 0, 1, 1], [], []>} : vector<128x16xbf16>, vector<16x16xbf16>, vector<128x16xf32> -> vector<128x16xf32>
    %6 = arith.addf %2, %5 : vector<128x16xf32>
    %c0_8 = arith.constant 0 : index
    %c0_9 = arith.constant 0 : index
    %7 = vector.load %arg5[%c0_8, %c0_9] : memref<1x16xf32, #tpu.memory_space<vmem>>, vector<1x16xf32>
    %8 = vector.broadcast %7 : vector<1x16xf32> to vector<128x16xf32>
    %9 = arith.addf %6, %8 : vector<128x16xf32>
    %c0_10 = arith.constant 0 : index
    %c0_11 = arith.constant 0 : index
    %10 = vector.load %arg6[%c0_10, %c0_11] : memref<128x16xf32, #tpu.memory_space<vmem>>, vector<128x16xf32>
    tpu.vector_store %arg6[%c0_10, %c0_11], %9 {strides = array<i32>} : memref<128x16xf32, #tpu.memory_space<vmem>>, vector<128x16xf32>,
    return
  }
  func.func @transform_0(%arg0: i32) -> (i32, i32) {
    %c0_i32 = arith.constant 0 : i32
    %c0_i32_0 = arith.constant 0 : i32
    return %arg0, %c0_i32 : i32, i32
  }
  func.func @transform_1(%arg0: i32) -> (i32, i32) {
    %c0_i32 = arith.constant 0 : i32
    %c0_i32_0 = arith.constant 0 : i32
    return %arg0, %c0_i32 : i32, i32
  }
  func.func @transform_2(%arg0: i32) -> (i32, i32) {
    %c0_i32 = arith.constant 0 : i32
    %c0_i32_0 = arith.constant 0 : i32
    %c0_i32_1 = arith.constant 0 : i32
    return %c0_i32, %c0_i32_0 : i32, i32
  }
  func.func @transform_3(%arg0: i32) -> (i32, i32) {
    %c0_i32 = arith.constant 0 : i32
    %c0_i32_0 = arith.constant 0 : i32
    %c0_i32_1 = arith.constant 0 : i32
    return %c0_i32, %c0_i32_0 : i32, i32
  }
  func.func @transform_4(%arg0: i32) -> (i32, i32) {
    %c0_i32 = arith.constant 0 : i32
    %c0_i32_0 = arith.constant 0 : i32
    %c0_i32_1 = arith.constant 0 : i32
    return %c0_i32, %c0_i32_0 : i32, i32
  }
  func.func @transform_5(%arg0: i32) -> (i32, i32) {
    %c0_i32 = arith.constant 0 : i32
    %c0_i32_0 = arith.constant 0 : i32
    return %arg0, %c0_i32 : i32, i32
  }
}

module attributes {stable_mosaic.version = 11 : i64} {
  func.func @_fused_matmul_kernel(%arg0: i32, %arg1: memref<256x144xbf16, #tpu.memory_space<vmem>>, %arg2: memref<144x16xbf16, #tpu.memory_space<vmem>>, %arg3: memref<1x16xf32, #tpu.memory_space<vmem>>, %arg4: memref<1x1xf32, #tpu.memory_space<smem>>, %arg5: memref<256x16xf32, #tpu.memory_space<vmem>>) attributes {dimension_semantics = [#tpu.dimension_semantics<parallel>], iteration_bounds = array<i64: 1>, scalar_prefetch = 0 : i64, scratch_operands = 0 : i64, tpu.core_type = #tpu.core_type<tc>, window_params = [{transform_indices = @transform_0, window_bounds = array<i64: 256, 144>}, {pipeline_mode = #tpu.pipeline_mode<synchronous>, transform_indices = @transform_1, window_bounds = array<i64: 144, 16>}, {pipeline_mode = #tpu.pipeline_mode<synchronous>, transform_indices = @transform_2, window_bounds = array<i64: 1, 16>}, {transform_indices = @transform_3, window_bounds = array<i64: 1, 1>}, {transform_indices = @transform_4, window_bounds = array<i64: 256, 16>}]} {
    %c0 = arith.constant 0 : index
    %c0_0 = arith.constant 0 : index
    %0 = vector.load %arg1[%c0, %c0_0] : memref<256x144xbf16, #tpu.memory_space<vmem>>, vector<256x144xbf16>
    %c0_1 = arith.constant 0 : index
    %c0_2 = arith.constant 0 : index
    %1 = vector.load %arg2[%c0_1, %c0_2] : memref<144x16xbf16, #tpu.memory_space<vmem>>, vector<144x16xbf16>
    %cst = arith.constant dense<0.000000e+00> : vector<256x16xf32>
    %2 = tpu.matmul %0, %1, %cst {dimension_numbers = #tpu.dot_dimension_numbers<[1], [0], [0], [1], [0, 0, 1, 1], [], []>} : vector<256x144xbf16>, vector<144x16xbf16>, vector<256x16xf32> -> vector<256x16xf32>
    %c0_3 = arith.constant 0 : index
    %c0_4 = arith.constant 0 : index
    %3 = vector.load %arg3[%c0_3, %c0_4] : memref<1x16xf32, #tpu.memory_space<vmem>>, vector<1x16xf32>
    %4 = vector.broadcast %3 : vector<1x16xf32> to vector<256x16xf32>
    %5 = arith.addf %2, %4 : vector<256x16xf32>
    %c0_5 = arith.constant 0 : index
    %c0_6 = arith.constant 0 : index
    %6 = memref.load %arg4[%c0_5, %c0_6] : memref<1x1xf32, #tpu.memory_space<smem>>
    %cst_7 = arith.constant 0.000000e+00 : f32
    %7 = vector.broadcast %cst_7 : f32 to vector<256x16xf32>
    %8 = arith.cmpf oge, %5, %7 : vector<256x16xf32>
    %9 = vector.broadcast %6 : f32 to vector<256x16xf32>
    %10 = arith.mulf %9, %5 : vector<256x16xf32>
    %11 = arith.select %8, %5, %10 : vector<256x16xi1>, vector<256x16xf32>
    %c0_8 = arith.constant 0 : index
    %c0_9 = arith.constant 0 : index
    %12 = vector.load %arg5[%c0_8, %c0_9] : memref<256x16xf32, #tpu.memory_space<vmem>>, vector<256x16xf32>
    tpu.vector_store %arg5[%c0_8, %c0_9], %11 {strides = array<i32>} : memref<256x16xf32, #tpu.memory_space<vmem>>, vector<256x16xf32>,
    return
  }
  func.func @transform_0(%arg0: i32) -> (i32, i32) {
    %c0_i32 = arith.constant 0 : i32
    %c0_i32_0 = arith.constant 0 : i32
    return %arg0, %c0_i32 : i32, i32
  }
  func.func @transform_1(%arg0: i32) -> (i32, i32) {
    %c0_i32 = arith.constant 0 : i32
    %c0_i32_0 = arith.constant 0 : i32
    %c0_i32_1 = arith.constant 0 : i32
    return %c0_i32, %c0_i32_0 : i32, i32
  }
  func.func @transform_2(%arg0: i32) -> (i32, i32) {
    %c0_i32 = arith.constant 0 : i32
    %c0_i32_0 = arith.constant 0 : i32
    %c0_i32_1 = arith.constant 0 : i32
    return %c0_i32, %c0_i32_0 : i32, i32
  }
  func.func @transform_3(%arg0: i32) -> (i32, i32) {
    %c0_i32 = arith.constant 0 : i32
    %c0_i32_0 = arith.constant 0 : i32
    %c0_i32_1 = arith.constant 0 : i32
    return %c0_i32, %c0_i32_0 : i32, i32
  }
  func.func @transform_4(%arg0: i32) -> (i32, i32) {
    %c0_i32 = arith.constant 0 : i32
    %c0_i32_0 = arith.constant 0 : i32
    return %arg0, %c0_i32 : i32, i32
  }
}

module attributes {stable_mosaic.version = 11 : i64} {
  func.func @_fused_matmul_kernel(%arg0: i32, %arg1: memref<256x144xbf16, #tpu.memory_space<vmem>>, %arg2: memref<144x16xbf16, #tpu.memory_space<vmem>>, %arg3: memref<1x16xf32, #tpu.memory_space<vmem>>, %arg4: memref<256x16xf32, #tpu.memory_space<vmem>>, %arg5: memref<256x16xf32, #tpu.memory_space<vmem>>) attributes {dimension_semantics = [#tpu.dimension_semantics<parallel>], iteration_bounds = array<i64: 1>, scalar_prefetch = 0 : i64, scratch_operands = 0 : i64, tpu.core_type = #tpu.core_type<tc>, window_params = [{transform_indices = @transform_0, window_bounds = array<i64: 256, 144>}, {pipeline_mode = #tpu.pipeline_mode<synchronous>, transform_indices = @transform_1, window_bounds = array<i64: 144, 16>}, {pipeline_mode = #tpu.pipeline_mode<synchronous>, transform_indices = @transform_2, window_bounds = array<i64: 1, 16>}, {transform_indices = @transform_3, window_bounds = array<i64: 256, 16>}, {transform_indices = @transform_4, window_bounds = array<i64: 256, 16>}]} {
    %c0 = arith.constant 0 : index
    %c0_0 = arith.constant 0 : index
    %0 = vector.load %arg1[%c0, %c0_0] : memref<256x144xbf16, #tpu.memory_space<vmem>>, vector<256x144xbf16>
    %c0_1 = arith.constant 0 : index
    %c0_2 = arith.constant 0 : index
    %1 = vector.load %arg2[%c0_1, %c0_2] : memref<144x16xbf16, #tpu.memory_space<vmem>>, vector<144x16xbf16>
    %cst = arith.constant dense<0.000000e+00> : vector<256x16xf32>
    %2 = tpu.matmul %0, %1, %cst {dimension_numbers = #tpu.dot_dimension_numbers<[1], [0], [0], [1], [0, 0, 1, 1], [], []>} : vector<256x144xbf16>, vector<144x16xbf16>, vector<256x16xf32> -> vector<256x16xf32>
    %c0_3 = arith.constant 0 : index
    %c0_4 = arith.constant 0 : index
    %3 = vector.load %arg3[%c0_3, %c0_4] : memref<1x16xf32, #tpu.memory_space<vmem>>, vector<1x16xf32>
    %4 = vector.broadcast %3 : vector<1x16xf32> to vector<256x16xf32>
    %5 = arith.addf %2, %4 : vector<256x16xf32>
    %c0_5 = arith.constant 0 : index
    %c0_6 = arith.constant 0 : index
    %6 = vector.load %arg4[%c0_5, %c0_6] : memref<256x16xf32, #tpu.memory_space<vmem>>, vector<256x16xf32>
    %7 = arith.addf %5, %6 : vector<256x16xf32>
    %c0_7 = arith.constant 0 : index
    %c0_8 = arith.constant 0 : index
    %8 = vector.load %arg5[%c0_7, %c0_8] : memref<256x16xf32, #tpu.memory_space<vmem>>, vector<256x16xf32>
    tpu.vector_store %arg5[%c0_7, %c0_8], %7 {strides = array<i32>} : memref<256x16xf32, #tpu.memory_space<vmem>>, vector<256x16xf32>,
    return
  }
  func.func @transform_0(%arg0: i32) -> (i32, i32) {
    %c0_i32 = arith.constant 0 : i32
    %c0_i32_0 = arith.constant 0 : i32
    return %arg0, %c0_i32 : i32, i32
  }
  func.func @transform_1(%arg0: i32) -> (i32, i32) {
    %c0_i32 = arith.constant 0 : i32
    %c0_i32_0 = arith.constant 0 : i32
    %c0_i32_1 = arith.constant 0 : i32
    return %c0_i32, %c0_i32_0 : i32, i32
  }
  func.func @transform_2(%arg0: i32) -> (i32, i32) {
    %c0_i32 = arith.constant 0 : i32
    %c0_i32_0 = arith.constant 0 : i32
    %c0_i32_1 = arith.constant 0 : i32
    return %c0_i32, %c0_i32_0 : i32, i32
  }
  func.func @transform_3(%arg0: i32) -> (i32, i32) {
    %c0_i32 = arith.constant 0 : i32
    %c0_i32_0 = arith.constant 0 : i32
    return %arg0, %c0_i32 : i32, i32
  }
  func.func @transform_4(%arg0: i32) -> (i32, i32) {
    %c0_i32 = arith.constant 0 : i32
    %c0_i32_0 = arith.constant 0 : i32
    return %arg0, %c0_i32 : i32, i32
  }
}

module attributes {stable_mosaic.version = 11 : i64} {
  func.func @_fused_matmul_kernel(%arg0: i32, %arg1: memref<128x16xbf16, #tpu.memory_space<vmem>>, %arg2: memref<16x64xbf16, #tpu.memory_space<vmem>>, %arg3: memref<1x64xf32, #tpu.memory_space<vmem>>, %arg4: memref<128x64xf32, #tpu.memory_space<vmem>>) attributes {dimension_semantics = [#tpu.dimension_semantics<parallel>], iteration_bounds = array<i64: 1>, scalar_prefetch = 0 : i64, scratch_operands = 0 : i64, tpu.core_type = #tpu.core_type<tc>, window_params = [{transform_indices = @transform_0, window_bounds = array<i64: 128, 16>}, {pipeline_mode = #tpu.pipeline_mode<synchronous>, transform_indices = @transform_1, window_bounds = array<i64: 16, 64>}, {pipeline_mode = #tpu.pipeline_mode<synchronous>, transform_indices = @transform_2, window_bounds = array<i64: 1, 64>}, {transform_indices = @transform_3, window_bounds = array<i64: 128, 64>}]} {
    %c0 = arith.constant 0 : index
    %c0_0 = arith.constant 0 : index
    %0 = vector.load %arg1[%c0, %c0_0] : memref<128x16xbf16, #tpu.memory_space<vmem>>, vector<128x16xbf16>
    %c0_1 = arith.constant 0 : index
    %c0_2 = arith.constant 0 : index
    %1 = vector.load %arg2[%c0_1, %c0_2] : memref<16x64xbf16, #tpu.memory_space<vmem>>, vector<16x64xbf16>
    %cst = arith.constant dense<0.000000e+00> : vector<128x64xf32>
    %2 = tpu.matmul %0, %1, %cst {dimension_numbers = #tpu.dot_dimension_numbers<[1], [0], [0], [1], [0, 0, 1, 1], [], []>} : vector<128x16xbf16>, vector<16x64xbf16>, vector<128x64xf32> -> vector<128x64xf32>
    %c0_3 = arith.constant 0 : index
    %c0_4 = arith.constant 0 : index
    %3 = vector.load %arg3[%c0_3, %c0_4] : memref<1x64xf32, #tpu.memory_space<vmem>>, vector<1x64xf32>
    %4 = vector.broadcast %3 : vector<1x64xf32> to vector<128x64xf32>
    %5 = arith.addf %2, %4 : vector<128x64xf32>
    %c0_5 = arith.constant 0 : index
    %c0_6 = arith.constant 0 : index
    %6 = vector.load %arg4[%c0_5, %c0_6] : memref<128x64xf32, #tpu.memory_space<vmem>>, vector<128x64xf32>
    tpu.vector_store %arg4[%c0_5, %c0_6], %5 {strides = array<i32>} : memref<128x64xf32, #tpu.memory_space<vmem>>, vector<128x64xf32>,
    return
  }
  func.func @transform_0(%arg0: i32) -> (i32, i32) {
    %c0_i32 = arith.constant 0 : i32
    %c0_i32_0 = arith.constant 0 : i32
    return %arg0, %c0_i32 : i32, i32
  }
  func.func @transform_1(%arg0: i32) -> (i32, i32) {
    %c0_i32 = arith.constant 0 : i32
    %c0_i32_0 = arith.constant 0 : i32
    %c0_i32_1 = arith.constant 0 : i32
    return %c0_i32, %c0_i32_0 : i32, i32
  }
  func.func @transform_2(%arg0: i32) -> (i32, i32) {
    %c0_i32 = arith.constant 0 : i32
    %c0_i32_0 = arith.constant 0 : i32
    %c0_i32_1 = arith.constant 0 : i32
    return %c0_i32, %c0_i32_0 : i32, i32
  }
  func.func @transform_3(%arg0: i32) -> (i32, i32) {
    %c0_i32 = arith.constant 0 : i32
    %c0_i32_0 = arith.constant 0 : i32
    return %arg0, %c0_i32 : i32, i32
  }
}

module attributes {stable_mosaic.version = 11 : i64} {
  func.func @_fused_matmul_kernel(%arg0: i32, %arg1: memref<512x144xbf16, #tpu.memory_space<vmem>>, %arg2: memref<144x2xbf16, #tpu.memory_space<vmem>>, %arg3: memref<1x2xf32, #tpu.memory_space<vmem>>, %arg4: memref<512x2xf32, #tpu.memory_space<vmem>>) attributes {dimension_semantics = [#tpu.dimension_semantics<parallel>], iteration_bounds = array<i64: 1>, scalar_prefetch = 0 : i64, scratch_operands = 0 : i64, tpu.core_type = #tpu.core_type<tc>, window_params = [{transform_indices = @transform_0, window_bounds = array<i64: 512, 144>}, {pipeline_mode = #tpu.pipeline_mode<synchronous>, transform_indices = @transform_1, window_bounds = array<i64: 144, 2>}, {pipeline_mode = #tpu.pipeline_mode<synchronous>, transform_indices = @transform_2, window_bounds = array<i64: 1, 2>}, {transform_indices = @transform_3, window_bounds = array<i64: 512, 2>}]} {
    %c0 = arith.constant 0 : index
    %c0_0 = arith.constant 0 : index
    %0 = vector.load %arg1[%c0, %c0_0] : memref<512x144xbf16, #tpu.memory_space<vmem>>, vector<512x144xbf16>
    %c0_1 = arith.constant 0 : index
    %c0_2 = arith.constant 0 : index
    %1 = vector.load %arg2[%c0_1, %c0_2] : memref<144x2xbf16, #tpu.memory_space<vmem>>, vector<144x2xbf16>
    %cst = arith.constant dense<0.000000e+00> : vector<512x2xf32>
    %2 = tpu.matmul %0, %1, %cst {dimension_numbers = #tpu.dot_dimension_numbers<[1], [0], [0], [1], [0, 0, 1, 1], [], []>} : vector<512x144xbf16>, vector<144x2xbf16>, vector<512x2xf32> -> vector<512x2xf32>
    %c0_3 = arith.constant 0 : index
    %c0_4 = arith.constant 0 : index
    %3 = vector.load %arg3[%c0_3, %c0_4] : memref<1x2xf32, #tpu.memory_space<vmem>>, vector<1x2xf32>
    %4 = vector.broadcast %3 : vector<1x2xf32> to vector<512x2xf32>
    %5 = arith.addf %2, %4 : vector<512x2xf32>
    %c0_5 = arith.constant 0 : index
    %c0_6 = arith.constant 0 : index
    %6 = vector.load %arg4[%c0_5, %c0_6] : memref<512x2xf32, #tpu.memory_space<vmem>>, vector<512x2xf32>
    tpu.vector_store %arg4[%c0_5, %c0_6], %5 {strides = array<i32>} : memref<512x2xf32, #tpu.memory_space<vmem>>, vector<512x2xf32>,
    return
  }
  func.func @transform_0(%arg0: i32) -> (i32, i32) {
    %c0_i32 = arith.constant 0 : i32
    %c0_i32_0 = arith.constant 0 : i32
    return %arg0, %c0_i32 : i32, i32
  }
  func.func @transform_1(%arg0: i32) -> (i32, i32) {
    %c0_i32 = arith.constant 0 : i32
    %c0_i32_0 = arith.constant 0 : i32
    %c0_i32_1 = arith.constant 0 : i32
    return %c0_i32, %c0_i32_0 : i32, i32
  }
  func.func @transform_2(%arg0: i32) -> (i32, i32) {
    %c0_i32 = arith.constant 0 : i32
    %c0_i32_0 = arith.constant 0 : i32
    %c0_i32_1 = arith.constant 0 : i32
    return %c0_i32, %c0_i32_0 : i32, i32
  }
  func.func @transform_3(%arg0: i32) -> (i32, i32) {
    %c0_i32 = arith.constant 0 : i32
    %c0_i32_0 = arith.constant 0 : i32
    return %arg0, %c0_i32 : i32, i32
  }
}

</mosaic_0001>

<llo_original>
// kernel: didn_forward.37
$region0: #{didn_forward.37}
  #allocation0 [shape = 'u32[]', space=smem, size = 0x4, offset = 0x4, fixed_abs, tag = 'smem constant byte address 0x4 - core index']
  #allocation1 [shape = 'u32[72,128]{1,0:T(1,128)}', space=vmem, size = 0x9000, scoped, tag = 'internal scratch']
  #allocation2 [shape = 'f32[1,1]{1,0:T(1,128)S(6)}', space=smem, size = 0x200, scoped, tag = 'scoped memory for didn_forward.37']
  %s0 = inlined_call_operand.vmem [shape: bf16[512,18], index: 0, kind: input, shape index: {}]
  %s1 = inlined_call_operand.vmem [shape: bf16[18,16], index: 1, kind: input, shape index: {}]
  %s2 = inlined_call_operand.vmem [shape: f32[1,16], index: 2, kind: input, shape index: {}]
  %s3 = inlined_call_operand.<no memory space> [shape: f32[1,1], index: 3, kind: input, shape index: {}]
  %s4 = inlined_call_operand.vmem [shape: f32[512,16], index: 4, kind: output, shape index: {}]
  %s5 = sld [smem:[#allocation0]]
  $region26: #{didn_forward.37} parent=0
    _
  %s7 = ssub.s32 1, %s5
  %s8 = scalar_select 0, %s7, %s5
  %9 = sst [smem:[#allocation2]] %s3
  // Predicated region
  $region2: #{didn_forward.37} parent=0 // pred_check
    _
  $region3: #{didn_forward.37} parent=0 // pred_check_branch
    %11 = sbr.rel (0) target = $region5
  $region4: #{didn_forward.37} parent=0 // pred_region
    _
  $region5: #{didn_forward.37} parent=0 // pred_fallthru
    _
  // Predicated region
  $region6: #{didn_forward.37} parent=0 // pred_check
    _
  $region7: #{didn_forward.37} parent=0 // pred_check_branch
    %13 = sbr.rel (0) target = $region9
  $region8: #{didn_forward.37} parent=0 // pred_region
    _
  $region9: #{didn_forward.37} parent=0 // pred_fallthru
    _
  // Predicated region
  $region10: #{didn_forward.37} parent=0 // pred_check
    _
  $region11: #{didn_forward.37} parent=0 // pred_check_branch
    %15 = sbr.rel (0) target = $region13
  $region12: #{didn_forward.37} parent=0 // pred_region
    _
  $region13: #{didn_forward.37} parent=0 // pred_fallthru
    _
  // Predicated region
  $region14: #{didn_forward.37} parent=0 // pred_check
    _
  $region15: #{didn_forward.37} parent=0 // pred_check_branch
    %17 = sbr.rel (0) target = $region17
  $region16: #{didn_forward.37} parent=0 // pred_region
    _
  $region17: #{didn_forward.37} parent=0 // pred_fallthru
    _
  %v19 = vld [vmem:[%s0] sm:$0xf]
  %v20 = vld [vmem:[%s0 + $0x4] sm:$0xf]
  %v21 = vld [vmem:[%s0 + $0x8] sm:$0xf]
  %v22 = vld [vmem:[%s0 + $0xc] sm:$0xf]
  %v23 = vld [vmem:[%s0 + $0x10] sm:$0xf]
  %v24 = vld [vmem:[%s0 + $0x14] sm:$0xf]
  %v25 = vld [vmem:[%s0 + $0x18] sm:$0xf]
  %v26 = vld [vmem:[%s0 + $0x1c] sm:$0xf]
  %v27 = vld [vmem:[%s0 + $0x20] sm:$0xf]
  %v28 = vld [vmem:[%s0 + $0x24] sm:$0xf]
  %v29 = vld [vmem:[%s0 + $0x28] sm:$0xf]
  %v30 = vld [vmem:[%s0 + $0x2c] sm:$0xf]
  %v31 = vld [vmem:[%s0 + $0x30] sm:$0xf]
  %v32 = vld [vmem:[%s0 + $0x34] sm:$0xf]
  %v33 = vld [vmem:[%s0 + $0x38] sm:$0xf]
  %v34 = vld [vmem:[%s0 + $0x3c] sm:$0xf]
  %v35 = vld [vmem:[%s0 + $0x40] sm:$0xf]
  %v36 = vld [vmem:[%s0 + $0x44] sm:$0xf]
  %v37 = vld [vmem:[%s0 + $0x48] sm:$0xf]
  %v38 = vld [vmem:[%s0 + $0x4c] sm:$0xf]
  %v39 = vld [vmem:[%s0 + $0x50] sm:$0xf]
  %v40 = vld [vmem:[%s0 + $0x54] sm:$0xf]
  %v41 = vld [vmem:[%s0 + $0x58] sm:$0xf]
  %v42 = vld [vmem:[%s0 + $0x5c] sm:$0xf]
  %v43 = vld [vmem:[%s0 + $0x60] sm:$0xf]
  %v44 = vld [vmem:[%s0 + $0x64] sm:$0xf]
  %v45 = vld [vmem:[%s0 + $0x68] sm:$0xf]
  %v46 = vld [vmem:[%s0 + $0x6c] sm:$0xf]
  %v47 = vld [vmem:[%s0 + $0x70] sm:$0xf]
  %v48 = vld [vmem:[%s0 + $0x74] sm:$0xf]
  %v49 = vld [vmem:[%s0 + $0x78] sm:$0xf]
  %v50 = vld [vmem:[%s0 + $0x7c] sm:$0xf]
  %v51 = vld [vmem:[%s0 + $0x80] sm:$0xf]
  %v52 = vld [vmem:[%s0 + $0x84] sm:$0xf]
  %v53 = vld [vmem:[%s0 + $0x88] sm:$0xf]
  %v54 = vld [vmem:[%s0 + $0x8c] sm:$0xf]
  %v55 = vld [vmem:[%s0 + $0x90] sm:$0xf]
  %v56 = vld [vmem:[%s0 + $0x94] sm:$0xf]
  %v57 = vld [vmem:[%s0 + $0x98] sm:$0xf]
  %v58 = vld [vmem:[%s0 + $0x9c] sm:$0xf]
  %v59 = vld [vmem:[%s0 + $0xa0] sm:$0xf]
  %v60 = vld [vmem:[%s0 + $0xa4] sm:$0xf]
  %v61 = vld [vmem:[%s0 + $0xa8] sm:$0xf]
  %v62 = vld [vmem:[%s0 + $0xac] sm:$0xf]
  %v63 = vld [vmem:[%s0 + $0xb0] sm:$0xf]
  %v64 = vld [vmem:[%s0 + $0xb4] sm:$0xf]
  %v65 = vld [vmem:[%s0 + $0xb8] sm:$0xf]
  %v66 = vld [vmem:[%s0 + $0xbc] sm:$0xf]
  %v67 = vld [vmem:[%s0 + $0xc0] sm:$0xf]
  %v68 = vld [vmem:[%s0 + $0xc4] sm:$0xf]
  %v69 = vld [vmem:[%s0 + $0xc8] sm:$0xf]
  %v70 = vld [vmem:[%s0 + $0xcc] sm:$0xf]
  %v71 = vld [vmem:[%s0 + $0xd0] sm:$0xf]
  %v72 = vld [vmem:[%s0 + $0xd4] sm:$0xf]
  %v73 = vld [vmem:[%s0 + $0xd8] sm:$0xf]
  %v74 = vld [vmem:[%s0 + $0xdc] sm:$0xf]
  %v75 = vld [vmem:[%s0 + $0xe0] sm:$0xf]
  %v76 = vld [vmem:[%s0 + $0xe4] sm:$0xf]
  %v77 = vld [vmem:[%s0 + $0xe8] sm:$0xf]
  %v78 = vld [vmem:[%s0 + $0xec] sm:$0xf]
  %v79 = vld [vmem:[%s0 + $0xf0] sm:$0xf]
  %v80 = vld [vmem:[%s0 + $0xf4] sm:$0xf]
  %v81 = vld [vmem:[%s0 + $0xf8] sm:$0xf]
  %v82 = vld [vmem:[%s0 + $0xfc] sm:$0xf]
  %v83 = vld [vmem:[%s1] sm:$0xf]
  %v84 = vld [vmem:[%s1 + $0x4] sm:$0xf]
  %v85 = vld [vmem:[%s1 + $0x8] sm:$0x1]
  %v86 = vld [vmem:[%s2] sm:$0x1]
  %v88 = vperm.slane %v86, 0
  %v154 = vunpack.c.l.b16 %v19
  %v155 = vunpack.c.l.b16 %v20
  %v156 = vunpack.c.l.b16 %v21
  %v157 = vunpack.c.l.b16 %v22
  %v158 = vunpack.c.l.b16 %v23
  %v159 = vunpack.c.l.b16 %v24
  %v160 = vunpack.c.l.b16 %v25
  %v161 = vunpack.c.l.b16 %v26
  %v162 = vunpack.c.l.b16 %v27
  %v163 = vunpack.c.l.b16 %v28
  %v164 = vunpack.c.l.b16 %v29
  %v165 = vunpack.c.l.b16 %v30
  %v166 = vunpack.c.l.b16 %v31
  %v167 = vunpack.c.l.b16 %v32
  %v168 = vunpack.c.l.b16 %v33
  %v169 = vunpack.c.l.b16 %v34
  %v170 = vunpack.c.l.b16 %v35
  %v171 = vunpack.c.l.b16 %v36
  %v172 = vunpack.c.l.b16 %v37
  %v173 = vunpack.c.l.b16 %v38
  %v174 = vunpack.c.l.b16 %v39
  %v175 = vunpack.c.l.b16 %v40
  %v176 = vunpack.c.l.b16 %v41
  %v177 = vunpack.c.l.b16 %v42
  %v178 = vunpack.c.l.b16 %v43
  %v179 = vunpack.c.l.b16 %v44
  %v180 = vunpack.c.l.b16 %v45
  %v181 = vunpack.c.l.b16 %v46
  %v182 = vunpack.c.l.b16 %v47
  %v183 = vunpack.c.l.b16 %v48
  %v184 = vunpack.c.l.b16 %v49
  %v185 = vunpack.c.l.b16 %v50
  %v186 = vunpack.c.l.b16 %v51
  %v187 = vunpack.c.l.b16 %v52
  %v188 = vunpack.c.l.b16 %v53
  %v189 = vunpack.c.l.b16 %v54
  %v190 = vunpack.c.l.b16 %v55
  %v191 = vunpack.c.l.b16 %v56
  %v192 = vunpack.c.l.b16 %v57
  %v193 = vunpack.c.l.b16 %v58
  %v194 = vunpack.c.l.b16 %v59
  %v195 = vunpack.c.l.b16 %v60
  %v196 = vunpack.c.l.b16 %v61
  %v197 = vunpack.c.l.b16 %v62
  %v198 = vunpack.c.l.b16 %v63
  %v199 = vunpack.c.l.b16 %v64
  %v200 = vunpack.c.l.b16 %v65
  %v201 = vunpack.c.l.b16 %v66
  %v202 = vunpack.c.l.b16 %v67
  %v203 = vunpack.c.l.b16 %v68
  %v204 = vunpack.c.l.b16 %v69
  %v205 = vunpack.c.l.b16 %v70
  %v206 = vunpack.c.l.b16 %v71
  %v207 = vunpack.c.l.b16 %v72
  %v208 = vunpack.c.l.b16 %v73
  %v209 = vunpack.c.l.b16 %v74
  %v210 = vunpack.c.l.b16 %v75
  %v211 = vunpack.c.l.b16 %v76
  %v212 = vunpack.c.l.b16 %v77
  %v213 = vunpack.c.l.b16 %v78
  %v214 = vunpack.c.l.b16 %v79
  %v215 = vunpack.c.l.b16 %v80
  %v216 = vunpack.c.l.b16 %v81
  %v217 = vunpack.c.l.b16 %v82
  %v218 = vpack.c.b16 %v155, %v154
  %v219 = vpack.c.b16 %v157, %v156
  %v220 = vpack.c.b16 %v159, %v158
  %v221 = vpack.c.b16 %v161, %v160
  %v222 = vpack.c.b16 %v163, %v162
  %v223 = vpack.c.b16 %v165, %v164
  %v224 = vpack.c.b16 %v167, %v166
  %v225 = vpack.c.b16 %v169, %v168
  %v226 = vpack.c.b16 %v171, %v170
  %v227 = vpack.c.b16 %v173, %v172
  %v228 = vpack.c.b16 %v175, %v174
  %v229 = vpack.c.b16 %v177, %v176
  %v230 = vpack.c.b16 %v179, %v178
  %v231 = vpack.c.b16 %v181, %v180
  %v232 = vpack.c.b16 %v183, %v182
  %v233 = vpack.c.b16 %v185, %v184
  %v234 = vpack.c.b16 %v187, %v186
  %v235 = vpack.c.b16 %v189, %v188
  %v236 = vpack.c.b16 %v191, %v190
  %v237 = vpack.c.b16 %v193, %v192
  %v238 = vpack.c.b16 %v195, %v194
  %v239 = vpack.c.b16 %v197, %v196
  %v240 = vpack.c.b16 %v199, %v198
  %v241 = vpack.c.b16 %v201, %v200
  %v242 = vpack.c.b16 %v203, %v202
  %v243 = vpack.c.b16 %v205, %v204
  %v244 = vpack.c.b16 %v207, %v206
  %v245 = vpack.c.b16 %v209, %v208
  %v246 = vpack.c.b16 %v211, %v210
  %v247 = vpack.c.b16 %v213, %v212
  %v248 = vpack.c.b16 %v215, %v214
  %v249 = vpack.c.b16 %v217, %v216
  %v253 = vunpack.c.l.b16 %v83
  %v254 = vunpack.c.l.b16 %v84
  %v255 = vunpack.c.l.b16 %v85
  %v256 = vpack.c.b16 %v254, %v253
  %v257 = vpack.c.b16 %v255, %v255
  %vm259 = vcmask 146432
  %v261 = vsel %vm259, %v218, 0
  %v264 = vsel %vm259, %v219, 0
  %v267 = vsel %vm259, %v220, 0
  %v270 = vsel %vm259, %v221, 0
  %v273 = vsel %vm259, %v222, 0
  %v276 = vsel %vm259, %v223, 0
  %v279 = vsel %vm259, %v224, 0
  %v282 = vsel %vm259, %v225, 0
  %v285 = vsel %vm259, %v226, 0
  %v288 = vsel %vm259, %v227, 0
  %v291 = vsel %vm259, %v228, 0
  %v294 = vsel %vm259, %v229, 0
  %v297 = vsel %vm259, %v230, 0
  %v300 = vsel %vm259, %v231, 0
  %v303 = vsel %vm259, %v232, 0
  %v306 = vsel %vm259, %v233, 0
  %v309 = vsel %vm259, %v234, 0
  %v312 = vsel %vm259, %v235, 0
  %v315 = vsel %vm259, %v236, 0
  %v318 = vsel %vm259, %v237, 0
  %v321 = vsel %vm259, %v238, 0
  %v324 = vsel %vm259, %v239, 0
  %v327 = vsel %vm259, %v240, 0
  %v330 = vsel %vm259, %v241, 0
  %v333 = vsel %vm259, %v242, 0
  %v336 = vsel %vm259, %v243, 0
  %v339 = vsel %vm259, %v244, 0
  %v342 = vsel %vm259, %v245, 0
  %v345 = vsel %vm259, %v246, 0
  %v348 = vsel %vm259, %v247, 0
  %v351 = vsel %vm259, %v248, 0
  %v354 = vsel %vm259, %v249, 0
  %vm356 = vcmask 1040384
  %v358 = vsel %vm356, %v257, 0
  %360 = vmatpush.bf16.msra.mxu0 0
  %361 = vmatpush.bf16.msra.mxu0 0
  %362 = vmatpush.bf16.msra.mxu0 0
  %363 = vmatpush.bf16.msra.mxu0 0
  %364 = vmatpush.bf16.msra.mxu0 0
  %365 = vmatpush.bf16.msra.mxu0 0
  %366 = vmatpush.bf16.msra.mxu0 %v358
  %367 = vmatpush.bf16.msra.mxu0 %v256
  %368 = vmatmul.bf16.gmra.mxu0 %v261
  %v369 = vpop.f32.mrf.mxu0
  %v370 = vadd.f32 %v88, %v369
  %v371 = vpop.f32.mrf.mxu0
  %v372 = vadd.f32 %v88, %v371
  %373 = vmatmul.bf16.gmra.mxu0 %v264
  %v374 = vpop.f32.mrf.mxu0
  %v375 = vadd.f32 %v88, %v374
  %v376 = vpop.f32.mrf.mxu0
  %v377 = vadd.f32 %v88, %v376
  %378 = vmatmul.bf16.gmra.mxu0 %v267
  %v379 = vpop.f32.mrf.mxu0
  %v380 = vadd.f32 %v88, %v379
  %v381 = vpop.f32.mrf.mxu0
  %v382 = vadd.f32 %v88, %v381
  %383 = vmatmul.bf16.gmra.mxu0 %v270
  %v384 = vpop.f32.mrf.mxu0
  %v385 = vadd.f32 %v88, %v384
  %v386 = vpop.f32.mrf.mxu0
  %v387 = vadd.f32 %v88, %v386
  %388 = vmatmul.bf16.gmra.mxu0 %v273
  %v389 = vpop.f32.mrf.mxu0
  %v390 = vadd.f32 %v88, %v389
  %v391 = vpop.f32.mrf.mxu0
  %v392 = vadd.f32 %v88, %v391
  %393 = vmatmul.bf16.gmra.mxu0 %v276
  %v394 = vpop.f32.mrf.mxu0
  %v395 = vadd.f32 %v88, %v394
  %v396 = vpop.f32.mrf.mxu0
  %v397 = vadd.f32 %v88, %v396
  %398 = vmatmul.bf16.gmra.mxu0 %v279
  %v399 = vpop.f32.mrf.mxu0
  %v400 = vadd.f32 %v88, %v399
  %v401 = vpop.f32.mrf.mxu0
  %v402 = vadd.f32 %v88, %v401
  %403 = vmatmul.bf16.gmra.mxu0 %v282
  %v404 = vpop.f32.mrf.mxu0
  %v405 = vadd.f32 %v88, %v404
  %v406 = vpop.f32.mrf.mxu0
  %v407 = vadd.f32 %v88, %v406
  %408 = vmatmul.bf16.gmra.mxu0 %v285
  %v409 = vpop.f32.mrf.mxu0
  %v410 = vadd.f32 %v88, %v409
  %v411 = vpop.f32.mrf.mxu0
  %v412 = vadd.f32 %v88, %v411
  %413 = vmatmul.bf16.gmra.mxu0 %v288
  %v414 = vpop.f32.mrf.mxu0
  %v415 = vadd.f32 %v88, %v414
  %v416 = vpop.f32.mrf.mxu0
  %v417 = vadd.f32 %v88, %v416
  %418 = vmatmul.bf16.gmra.mxu0 %v291
  %v419 = vpop.f32.mrf.mxu0
  %v420 = vadd.f32 %v88, %v419
  %v421 = vpop.f32.mrf.mxu0
  %v422 = vadd.f32 %v88, %v421
  %423 = vmatmul.bf16.gmra.mxu0 %v294
  %v424 = vpop.f32.mrf.mxu0
  %v425 = vadd.f32 %v88, %v424
  %v426 = vpop.f32.mrf.mxu0
  %v427 = vadd.f32 %v88, %v426
  %428 = vmatmul.bf16.gmra.mxu0 %v297
  %v429 = vpop.f32.mrf.mxu0
  %v430 = vadd.f32 %v88, %v429
  %v431 = vpop.f32.mrf.mxu0
  %v432 = vadd.f32 %v88, %v431
  %433 = vmatmul.bf16.gmra.mxu0 %v300
  %v434 = vpop.f32.mrf.mxu0
  %v435 = vadd.f32 %v88, %v434
  %v436 = vpop.f32.mrf.mxu0
  %v437 = vadd.f32 %v88, %v436
  %438 = vmatmul.bf16.gmra.mxu0 %v303
  %v439 = vpop.f32.mrf.mxu0
  %v440 = vadd.f32 %v88, %v439
  %v441 = vpop.f32.mrf.mxu0
  %v442 = vadd.f32 %v88, %v441
  %443 = vmatmul.bf16.gmra.mxu0 %v306
  %v444 = vpop.f32.mrf.mxu0
  %v445 = vadd.f32 %v88, %v444
  %v446 = vpop.f32.mrf.mxu0
  %v447 = vadd.f32 %v88, %v446
  %448 = vmatmul.bf16.gmra.mxu0 %v309
  %v449 = vpop.f32.mrf.mxu0
  %v450 = vadd.f32 %v88, %v449
  %v451 = vpop.f32.mrf.mxu0
  %v452 = vadd.f32 %v88, %v451
  %453 = vmatmul.bf16.gmra.mxu0 %v312
  %v454 = vpop.f32.mrf.mxu0
  %v455 = vadd.f32 %v88, %v454
  %v456 = vpop.f32.mrf.mxu0
  %v457 = vadd.f32 %v88, %v456
  %458 = vmatmul.bf16.gmra.mxu0 %v315
  %v459 = vpop.f32.mrf.mxu0
  %v460 = vadd.f32 %v88, %v459
  %v461 = vpop.f32.mrf.mxu0
  %v462 = vadd.f32 %v88, %v461
  %463 = vmatmul.bf16.gmra.mxu0 %v318
  %v464 = vpop.f32.mrf.mxu0
  %v465 = vadd.f32 %v88, %v464
  %v466 = vpop.f32.mrf.mxu0
  %v467 = vadd.f32 %v88, %v466
  %468 = vmatmul.bf16.gmra.mxu0 %v321
  %v469 = vpop.f32.mrf.mxu0
  %v470 = vadd.f32 %v88, %v469
  %v471 = vpop.f32.mrf.mxu0
  %v472 = vadd.f32 %v88, %v471
  %473 = vmatmul.bf16.gmra.mxu0 %v324
  %v474 = vpop.f32.mrf.mxu0
  %v475 = vadd.f32 %v88, %v474
  %v476 = vpop.f32.mrf.mxu0
  %v477 = vadd.f32 %v88, %v476
  %478 = vmatmul.bf16.gmra.mxu0 %v327
  %v479 = vpop.f32.mrf.mxu0
  %v480 = vadd.f32 %v88, %v479
  %v481 = vpop.f32.mrf.mxu0
  %v482 = vadd.f32 %v88, %v481
  %483 = vmatmul.bf16.gmra.mxu0 %v330
  %v484 = vpop.f32.mrf.mxu0
  %v485 = vadd.f32 %v88, %v484
  %v486 = vpop.f32.mrf.mxu0
  %v487 = vadd.f32 %v88, %v486
  %488 = vmatmul.bf16.gmra.mxu0 %v333
  %v489 = vpop.f32.mrf.mxu0
  %v490 = vadd.f32 %v88, %v489
  %v491 = vpop.f32.mrf.mxu0
  %v492 = vadd.f32 %v88, %v491
  %493 = vmatmul.bf16.gmra.mxu0 %v336
  %v494 = vpop.f32.mrf.mxu0
  %v495 = vadd.f32 %v88, %v494
  %v496 = vpop.f32.mrf.mxu0
  %v497 = vadd.f32 %v88, %v496
  %498 = vmatmul.bf16.gmra.mxu0 %v339
  %v499 = vpop.f32.mrf.mxu0
  %v500 = vadd.f32 %v88, %v499
  %v501 = vpop.f32.mrf.mxu0
  %v502 = vadd.f32 %v88, %v501
  %503 = vmatmul.bf16.gmra.mxu0 %v342
  %v504 = vpop.f32.mrf.mxu0
  %v505 = vadd.f32 %v88, %v504
  %v506 = vpop.f32.mrf.mxu0
  %v507 = vadd.f32 %v88, %v506
  %508 = vmatmul.bf16.gmra.mxu0 %v345
  %v509 = vpop.f32.mrf.mxu0
  %v510 = vadd.f32 %v88, %v509
  %v511 = vpop.f32.mrf.mxu0
  %v512 = vadd.f32 %v88, %v511
  %513 = vmatmul.bf16.gmra.mxu0 %v348
  %v514 = vpop.f32.mrf.mxu0
  %v515 = vadd.f32 %v88, %v514
  %v516 = vpop.f32.mrf.mxu0
  %v517 = vadd.f32 %v88, %v516
  %518 = vmatmul.bf16.gmra.mxu0 %v351
  %v519 = vpop.f32.mrf.mxu0
  %v520 = vadd.f32 %v88, %v519
  %v521 = vpop.f32.mrf.mxu0
  %v522 = vadd.f32 %v88, %v521
  %523 = vmatmul.bf16.gmra.mxu0 %v354
  %v524 = vpop.f32.mrf.mxu0
  %v525 = vadd.f32 %v88, %v524
  %v526 = vpop.f32.mrf.mxu0
  %v527 = vadd.f32 %v88, %v526
  %528 = vdwg.mxu0
  %s529 = sld [smem:[#allocation2]]
  %vm530 = vcmp.ge.f32.partialorder %v370, 0.0
  %vm531 = vcmp.ge.f32.partialorder %v372, 0.0
  %vm532 = vcmp.ge.f32.partialorder %v375, 0.0
  %vm533 = vcmp.ge.f32.partialorder %v377, 0.0
  %vm534 = vcmp.ge.f32.partialorder %v380, 0.0
  %vm535 = vcmp.ge.f32.partialorder %v382, 0.0
  %vm536 = vcmp.ge.f32.partialorder %v385, 0.0
  %vm537 = vcmp.ge.f32.partialorder %v387, 0.0
  %vm538 = vcmp.ge.f32.partialorder %v390, 0.0
  %vm539 = vcmp.ge.f32.partialorder %v392, 0.0
  %vm540 = vcmp.ge.f32.partialorder %v395, 0.0
  %vm541 = vcmp.ge.f32.partialorder %v397, 0.0
  %vm542 = vcmp.ge.f32.partialorder %v400, 0.0
  %vm543 = vcmp.ge.f32.partialorder %v402, 0.0
  %vm544 = vcmp.ge.f32.partialorder %v405, 0.0
  %vm545 = vcmp.ge.f32.partialorder %v407, 0.0
  %vm546 = vcmp.ge.f32.partialorder %v410, 0.0
  %vm547 = vcmp.ge.f32.partialorder %v412, 0.0
  %vm548 = vcmp.ge.f32.partialorder %v415, 0.0
  %vm549 = vcmp.ge.f32.partialorder %v417, 0.0
  %vm550 = vcmp.ge.f32.partialorder %v420, 0.0
  %vm551 = vcmp.ge.f32.partialorder %v422, 0.0
  %vm552 = vcmp.ge.f32.partialorder %v425, 0.0
  %vm553 = vcmp.ge.f32.partialorder %v427, 0.0
  %vm554 = vcmp.ge.f32.partialorder %v430, 0.0
  %vm555 = vcmp.ge.f32.partialorder %v432, 0.0
  %vm556 = vcmp.ge.f32.partialorder %v435, 0.0
  %vm557 = vcmp.ge.f32.partialorder %v437, 0.0
  %vm558 = vcmp.ge.f32.partialorder %v440, 0.0
  %vm559 = vcmp.ge.f32.partialorder %v442, 0.0
  %vm560 = vcmp.ge.f32.partialorder %v445, 0.0
  %vm561 = vcmp.ge.f32.partialorder %v447, 0.0
  %vm562 = vcmp.ge.f32.partialorder %v450, 0.0
  %vm563 = vcmp.ge.f32.partialorder %v452, 0.0
  %vm564 = vcmp.ge.f32.partialorder %v455, 0.0
  %vm565 = vcmp.ge.f32.partialorder %v457, 0.0
  %vm566 = vcmp.ge.f32.partialorder %v460, 0.0
  %vm567 = vcmp.ge.f32.partialorder %v462, 0.0
  %vm568 = vcmp.ge.f32.partialorder %v465, 0.0
  %vm569 = vcmp.ge.f32.partialorder %v467, 0.0
  %vm570 = vcmp.ge.f32.partialorder %v470, 0.0
  %vm571 = vcmp.ge.f32.partialorder %v472, 0.0
  %vm572 = vcmp.ge.f32.partialorder %v475, 0.0
  %vm573 = vcmp.ge.f32.partialorder %v477, 0.0
  %vm574 = vcmp.ge.f32.partialorder %v480, 0.0
  %vm575 = vcmp.ge.f32.partialorder %v482, 0.0
  %vm576 = vcmp.ge.f32.partialorder %v485, 0.0
  %vm577 = vcmp.ge.f32.partialorder %v487, 0.0
  %vm578 = vcmp.ge.f32.partialorder %v490, 0.0
  %vm579 = vcmp.ge.f32.partialorder %v492, 0.0
  %vm580 = vcmp.ge.f32.partialorder %v495, 0.0
  %vm581 = vcmp.ge.f32.partialorder %v497, 0.0
  %vm582 = vcmp.ge.f32.partialorder %v500, 0.0
  %vm583 = vcmp.ge.f32.partialorder %v502, 0.0
  %vm584 = vcmp.ge.f32.partialorder %v505, 0.0
  %vm585 = vcmp.ge.f32.partialorder %v507, 0.0
  %vm586 = vcmp.ge.f32.partialorder %v510, 0.0
  %vm587 = vcmp.ge.f32.partialorder %v512, 0.0
  %vm588 = vcmp.ge.f32.partialorder %v515, 0.0
  %vm589 = vcmp.ge.f32.partialorder %v517, 0.0
  %vm590 = vcmp.ge.f32.partialorder %v520, 0.0
  %vm591 = vcmp.ge.f32.partialorder %v522, 0.0
  %vm592 = vcmp.ge.f32.partialorder %v525, 0.0
  %vm593 = vcmp.ge.f32.partialorder %v527, 0.0
  %v594 = vstv %s529
  %v595 = vmul.f32 %v594, %v370
  %v596 = vmul.f32 %v594, %v372
  %v597 = vmul.f32 %v594, %v375
  %v598 = vmul.f32 %v594, %v377
  %v599 = vmul.f32 %v594, %v380
  %v600 = vmul.f32 %v594, %v382
  %v601 = vmul.f32 %v594, %v385
  %v602 = vmul.f32 %v594, %v387
  %v603 = vmul.f32 %v594, %v390
  %v604 = vmul.f32 %v594, %v392
  %v605 = vmul.f32 %v594, %v395
  %v606 = vmul.f32 %v594, %v397
  %v607 = vmul.f32 %v594, %v400
  %v608 = vmul.f32 %v594, %v402
  %v609 = vmul.f32 %v594, %v405
  %v610 = vmul.f32 %v594, %v407
  %v611 = vmul.f32 %v594, %v410
  %v612 = vmul.f32 %v594, %v412
  %v613 = vmul.f32 %v594, %v415
  %v614 = vmul.f32 %v594, %v417
  %v615 = vmul.f32 %v594, %v420
  %v616 = vmul.f32 %v594, %v422
  %v617 = vmul.f32 %v594, %v425
  %v618 = vmul.f32 %v594, %v427
  %v619 = vmul.f32 %v594, %v430
  %v620 = vmul.f32 %v594, %v432
  %v621 = vmul.f32 %v594, %v435
  %v622 = vmul.f32 %v594, %v437
  %v623 = vmul.f32 %v594, %v440
  %v624 = vmul.f32 %v594, %v442
  %v625 = vmul.f32 %v594, %v445
  %v626 = vmul.f32 %v594, %v447
  %v627 = vmul.f32 %v594, %v450
  %v628 = vmul.f32 %v594, %v452
  %v629 = vmul.f32 %v594, %v455
  %v630 = vmul.f32 %v594, %v457
  %v631 = vmul.f32 %v594, %v460
  %v632 = vmul.f32 %v594, %v462
  %v633 = vmul.f32 %v594, %v465
  %v634 = vmul.f32 %v594, %v467
  %v635 = vmul.f32 %v594, %v470
  %v636 = vmul.f32 %v594, %v472
  %v637 = vmul.f32 %v594, %v475
  %v638 = vmul.f32 %v594, %v477
  %v639 = vmul.f32 %v594, %v480
  %v640 = vmul.f32 %v594, %v482
  %v641 = vmul.f32 %v594, %v485
  %v642 = vmul.f32 %v594, %v487
  %v643 = vmul.f32 %v594, %v490
  %v644 = vmul.f32 %v594, %v492
  %v645 = vmul.f32 %v594, %v495
  %v646 = vmul.f32 %v594, %v497
  %v647 = vmul.f32 %v594, %v500
  %v648 = vmul.f32 %v594, %v502
  %v649 = vmul.f32 %v594, %v505
  %v650 = vmul.f32 %v594, %v507
  %v651 = vmul.f32 %v594, %v510
  %v652 = vmul.f32 %v594, %v512
  %v653 = vmul.f32 %v594, %v515
  %v654 = vmul.f32 %v594, %v517
  %v655 = vmul.f32 %v594, %v520
  %v656 = vmul.f32 %v594, %v522
  %v657 = vmul.f32 %v594, %v525
  %v658 = vmul.f32 %v594, %v527
  %v659 = vsel %vm530, %v370, %v595
  %v660 = vsel %vm531, %v372, %v596
  %v661 = vsel %vm532, %v375, %v597
  %v662 = vsel %vm533, %v377, %v598
  %v663 = vsel %vm534, %v380, %v599
  %v664 = vsel %vm535, %v382, %v600
  %v665 = vsel %vm536, %v385, %v601
  %v666 = vsel %vm537, %v387, %v602
  %v667 = vsel %vm538, %v390, %v603
  %v668 = vsel %vm539, %v392, %v604
  %v669 = vsel %vm540, %v395, %v605
  %v670 = vsel %vm541, %v397, %v606
  %v671 = vsel %vm542, %v400, %v607
  %v672 = vsel %vm543, %v402, %v608
  %v673 = vsel %vm544, %v405, %v609
  %v674 = vsel %vm545, %v407, %v610
  %v675 = vsel %vm546, %v410, %v611
  %v676 = vsel %vm547, %v412, %v612
  %v677 = vsel %vm548, %v415, %v613
  %v678 = vsel %vm549, %v417, %v614
  %v679 = vsel %vm550, %v420, %v615
  %v680 = vsel %vm551, %v422, %v616
  %v681 = vsel %vm552, %v425, %v617
  %v682 = vsel %vm553, %v427, %v618
  %v683 = vsel %vm554, %v430, %v619
  %v684 = vsel %vm555, %v432, %v620
  %v685 = vsel %vm556, %v435, %v621
  %v686 = vsel %vm557, %v437, %v622
  %v687 = vsel %vm558, %v440, %v623
  %v688 = vsel %vm559, %v442, %v624
  %v689 = vsel %vm560, %v445, %v625
  %v690 = vsel %vm561, %v447, %v626
  %v691 = vsel %vm562, %v450, %v627
  %v692 = vsel %vm563, %v452, %v628
  %v693 = vsel %vm564, %v455, %v629
  %v694 = vsel %vm565, %v457, %v630
  %v695 = vsel %vm566, %v460, %v631
  %v696 = vsel %vm567, %v462, %v632
  %v697 = vsel %vm568, %v465, %v633
  %v698 = vsel %vm569, %v467, %v634
  %v699 = vsel %vm570, %v470, %v635
  %v700 = vsel %vm571, %v472, %v636
  %v701 = vsel %vm572, %v475, %v637
  %v702 = vsel %vm573, %v477, %v638
  %v703 = vsel %vm574, %v480, %v639
  %v704 = vsel %vm575, %v482, %v640
  %v705 = vsel %vm576, %v485, %v641
  %v706 = vsel %vm577, %v487, %v642
  %v707 = vsel %vm578, %v490, %v643
  %v708 = vsel %vm579, %v492, %v644
  %v709 = vsel %vm580, %v495, %v645
  %v710 = vsel %vm581, %v497, %v646
  %v711 = vsel %vm582, %v500, %v647
  %v712 = vsel %vm583, %v502, %v648
  %v713 = vsel %vm584, %v505, %v649
  %v714 = vsel %vm585, %v507, %v650
  %v715 = vsel %vm586, %v510, %v651
  %v716 = vsel %vm587, %v512, %v652
  %v717 = vsel %vm588, %v515, %v653
  %v718 = vsel %vm589, %v517, %v654
  %v719 = vsel %vm590, %v520, %v655
  %v720 = vsel %vm591, %v522, %v656
  %v721 = vsel %vm592, %v525, %v657
  %v722 = vsel %vm593, %v527, %v658
  %vm723 = vcmask 130048
  %724 = vst.msk [vmem:[%s4] sm:$0xff] %vm723, %v659
  %725 = vst.msk [vmem:[%s4 + $0x8] sm:$0xff] %vm723, %v660
  %726 = vst.msk [vmem:[%s4 + $0x10] sm:$0xff] %vm723, %v661
  %727 = vst.msk [vmem:[%s4 + $0x18] sm:$0xff] %vm723, %v662
  %728 = vst.msk [vmem:[%s4 + $0x20] sm:$0xff] %vm723, %v663
  %729 = vst.msk [vmem:[%s4 + $0x28] sm:$0xff] %vm723, %v664
  %730 = vst.msk [vmem:[%s4 + $0x30] sm:$0xff] %vm723, %v665
  %731 = vst.msk [vmem:[%s4 + $0x38] sm:$0xff] %vm723, %v666
  %732 = vst.msk [vmem:[%s4 + $0x40] sm:$0xff] %vm723, %v667
  %733 = vst.msk [vmem:[%s4 + $0x48] sm:$0xff] %vm723, %v668
  %734 = vst.msk [vmem:[%s4 + $0x50] sm:$0xff] %vm723, %v669
  %735 = vst.msk [vmem:[%s4 + $0x58] sm:$0xff] %vm723, %v670
  %736 = vst.msk [vmem:[%s4 + $0x60] sm:$0xff] %vm723, %v671
  %737 = vst.msk [vmem:[%s4 + $0x68] sm:$0xff] %vm723, %v672
  %738 = vst.msk [vmem:[%s4 + $0x70] sm:$0xff] %vm723, %v673
  %739 = vst.msk [vmem:[%s4 + $0x78] sm:$0xff] %vm723, %v674
  %740 = vst.msk [vmem:[%s4 + $0x80] sm:$0xff] %vm723, %v675
  %741 = vst.msk [vmem:[%s4 + $0x88] sm:$0xff] %vm723, %v676
  %742 = vst.msk [vmem:[%s4 + $0x90] sm:$0xff] %vm723, %v677
  %743 = vst.msk [vmem:[%s4 + $0x98] sm:$0xff] %vm723, %v678
  %744 = vst.msk [vmem:[%s4 + $0xa0] sm:$0xff] %vm723, %v679
  %745 = vst.msk [vmem:[%s4 + $0xa8] sm:$0xff] %vm723, %v680
  %746 = vst.msk [vmem:[%s4 + $0xb0] sm:$0xff] %vm723, %v681
  %747 = vst.msk [vmem:[%s4 + $0xb8] sm:$0xff] %vm723, %v682
  %748 = vst.msk [vmem:[%s4 + $0xc0] sm:$0xff] %vm723, %v683
  %749 = vst.msk [vmem:[%s4 + $0xc8] sm:$0xff] %vm723, %v684
  %750 = vst.msk [vmem:[%s4 + $0xd0] sm:$0xff] %vm723, %v685
  %751 = vst.msk [vmem:[%s4 + $0xd8] sm:$0xff] %vm723, %v686
  %752 = vst.msk [vmem:[%s4 + $0xe0] sm:$0xff] %vm723, %v687
  %753 = vst.msk [vmem:[%s4 + $0xe8] sm:$0xff] %vm723, %v688
  %754 = vst.msk [vmem:[%s4 + $0xf0] sm:$0xff] %vm723, %v689
  %755 = vst.msk [vmem:[%s4 + $0xf8] sm:$0xff] %vm723, %v690
  %756 = vst.msk [vmem:[%s4 + $0x100] sm:$0xff] %vm723, %v691
  %757 = vst.msk [vmem:[%s4 + $0x108] sm:$0xff] %vm723, %v692
  %758 = vst.msk [vmem:[%s4 + $0x110] sm:$0xff] %vm723, %v693
  %759 = vst.msk [vmem:[%s4 + $0x118] sm:$0xff] %vm723, %v694
  %760 = vst.msk [vmem:[%s4 + $0x120] sm:$0xff] %vm723, %v695
  %761 = vst.msk [vmem:[%s4 + $0x128] sm:$0xff] %vm723, %v696
  %762 = vst.msk [vmem:[%s4 + $0x130] sm:$0xff] %vm723, %v697
  %763 = vst.msk [vmem:[%s4 + $0x138] sm:$0xff] %vm723, %v698
  %764 = vst.msk [vmem:[%s4 + $0x140] sm:$0xff] %vm723, %v699
  %765 = vst.msk [vmem:[%s4 + $0x148] sm:$0xff] %vm723, %v700
  %766 = vst.msk [vmem:[%s4 + $0x150] sm:$0xff] %vm723, %v701
  %767 = vst.msk [vmem:[%s4 + $0x158] sm:$0xff] %vm723, %v702
  %768 = vst.msk [vmem:[%s4 + $0x160] sm:$0xff] %vm723, %v703
  %769 = vst.msk [vmem:[%s4 + $0x168] sm:$0xff] %vm723, %v704
  %770 = vst.msk [vmem:[%s4 + $0x170] sm:$0xff] %vm723, %v705
  %771 = vst.msk [vmem:[%s4 + $0x178] sm:$0xff] %vm723, %v706
  %772 = vst.msk [vmem:[%s4 + $0x180] sm:$0xff] %vm723, %v707
  %773 = vst.msk [vmem:[%s4 + $0x188] sm:$0xff] %vm723, %v708
  %774 = vst.msk [vmem:[%s4 + $0x190] sm:$0xff] %vm723, %v709
  %775 = vst.msk [vmem:[%s4 + $0x198] sm:$0xff] %vm723, %v710
  %776 = vst.msk [vmem:[%s4 + $0x1a0] sm:$0xff] %vm723, %v711
  %777 = vst.msk [vmem:[%s4 + $0x1a8] sm:$0xff] %vm723, %v712
  %778 = vst.msk [vmem:[%s4 + $0x1b0] sm:$0xff] %vm723, %v713
  %779 = vst.msk [vmem:[%s4 + $0x1b8] sm:$0xff] %vm723, %v714
  %780 = vst.msk [vmem:[%s4 + $0x1c0] sm:$0xff] %vm723, %v715
  %781 = vst.msk [vmem:[%s4 + $0x1c8] sm:$0xff] %vm723, %v716
  %782 = vst.msk [vmem:[%s4 + $0x1d0] sm:$0xff] %vm723, %v717
  %783 = vst.msk [vmem:[%s4 + $0x1d8] sm:$0xff] %vm723, %v718
  %784 = vst.msk [vmem:[%s4 + $0x1e0] sm:$0xff] %vm723, %v719
  %785 = vst.msk [vmem:[%s4 + $0x1e8] sm:$0xff] %vm723, %v720
  %786 = vst.msk [vmem:[%s4 + $0x1f0] sm:$0xff] %vm723, %v721
  %787 = vst.msk [vmem:[%s4 + $0x1f8] sm:$0xff] %vm723, %v722
  // Predicated region
  $region18: #{didn_forward.37} parent=0 // pred_check
    _
  $region19: #{didn_forward.37} parent=0 // pred_check_branch
    %789 = sbr.rel (0) target = $region21
  $region20: #{didn_forward.37} parent=0 // pred_region
    _
  $region21: #{didn_forward.37} parent=0 // pred_fallthru
    _
  // Predicated region
  $region22: #{didn_forward.37} parent=0 // pred_check
    _
  $region23: #{didn_forward.37} parent=0 // pred_check_branch
    %791 = sbr.rel (0) target = $region25
  $region24: #{didn_forward.37} parent=0 // pred_region
    _
  $region25: #{didn_forward.37} parent=0 // pred_fallthru
    _

// kernel: didn_forward.38
$region0: #{didn_forward.38}
  #allocation0 [shape = 'u32[]', space=smem, size = 0x4, offset = 0x4, fixed_abs, tag = 'smem constant byte address 0x4 - core index']
  #allocation1 [shape = 'u32[72,128]{1,0:T(1,128)}', space=vmem, size = 0x9000, scoped, tag = 'internal scratch']
  %s0 = inlined_call_operand.vmem [shape: bf16[128,144], index: 0, kind: input, shape index: {}]
  %s1 = inlined_call_operand.vmem [shape: bf16[144,16], index: 1, kind: input, shape index: {}]
  %s2 = inlined_call_operand.vmem [shape: f32[1,16], index: 2, kind: input, shape index: {}]
  %s3 = inlined_call_operand.vmem [shape: f32[128,16], index: 3, kind: output, shape index: {}]
  %s4 = sld [smem:[#allocation0]]
  $region22: #{didn_forward.38} parent=0
    _
  %s6 = ssub.s32 1, %s4
  %s7 = scalar_select 0, %s6, %s4
  // Predicated region
  $region2: #{didn_forward.38} parent=0 // pred_check
    _
  $region3: #{didn_forward.38} parent=0 // pred_check_branch
    %9 = sbr.rel (0) target = $region5
  $region4: #{didn_forward.38} parent=0 // pred_region
    _
  $region5: #{didn_forward.38} parent=0 // pred_fallthru
    _
  // Predicated region
  $region6: #{didn_forward.38} parent=0 // pred_check
    _
  $region7: #{didn_forward.38} parent=0 // pred_check_branch
    %11 = sbr.rel (0) target = $region9
  $region8: #{didn_forward.38} parent=0 // pred_region
    _
  $region9: #{didn_forward.38} parent=0 // pred_fallthru
    _
  // Predicated region
  $region10: #{didn_forward.38} parent=0 // pred_check
    _
  $region11: #{didn_forward.38} parent=0 // pred_check_branch
    %13 = sbr.rel (0) target = $region13
  $region12: #{didn_forward.38} parent=0 // pred_region
    _
  $region13: #{didn_forward.38} parent=0 // pred_fallthru
    _
  %v15 = vld [vmem:[%s0] sm:$0xff]
  %v16 = vld [vmem:[%s0 + $0x8] sm:$0xff]
  %v17 = vld [vmem:[%s0 + $0x10] sm:$0xff]
  %v18 = vld [vmem:[%s0 + $0x18] sm:$0xff]
  %v19 = vld [vmem:[%s0 + $0x20] sm:$0xff]
  %v20 = vld [vmem:[%s0 + $0x28] sm:$0xff]
  %v21 = vld [vmem:[%s0 + $0x30] sm:$0xff]
  %v22 = vld [vmem:[%s0 + $0x38] sm:$0xff]
  %v23 = vld [vmem:[%s0 + $0x40] sm:$0xff]
  %v24 = vld [vmem:[%s0 + $0x48] sm:$0xff]
  %v25 = vld [vmem:[%s0 + $0x50] sm:$0xff]
  %v26 = vld [vmem:[%s0 + $0x58] sm:$0xff]
  %v27 = vld [vmem:[%s0 + $0x60] sm:$0xff]
  %v28 = vld [vmem:[%s0 + $0x68] sm:$0xff]
  %v29 = vld [vmem:[%s0 + $0x70] sm:$0xff]
  %v30 = vld [vmem:[%s0 + $0x78] sm:$0xff]
  %v31 = vld [vmem:[%s1] sm:$0xf]
  %v32 = vld [vmem:[%s1 + $0x4] sm:$0xf]
  %v33 = vld [vmem:[%s1 + $0x8] sm:$0xf]
  %v34 = vld [vmem:[%s1 + $0xc] sm:$0xf]
  %v35 = vld [vmem:[%s1 + $0x10] sm:$0xf]
  %v36 = vld [vmem:[%s1 + $0x14] sm:$0xf]
  %v37 = vld [vmem:[%s1 + $0x18] sm:$0xf]
  %v38 = vld [vmem:[%s1 + $0x1c] sm:$0xf]
  %v39 = vld [vmem:[%s1 + $0x20] sm:$0xf]
  %v40 = vld [vmem:[%s1 + $0x24] sm:$0xf]
  %v41 = vld [vmem:[%s1 + $0x28] sm:$0xf]
  %v42 = vld [vmem:[%s1 + $0x2c] sm:$0xf]
  %v43 = vld [vmem:[%s1 + $0x30] sm:$0xf]
  %v44 = vld [vmem:[%s1 + $0x34] sm:$0xf]
  %v45 = vld [vmem:[%s1 + $0x38] sm:$0xf]
  %v46 = vld [vmem:[%s1 + $0x3c] sm:$0xf]
  %v47 = vld [vmem:[%s1 + $0x40] sm:$0xf]
  %v48 = vld [vmem:[%s1 + $0x44] sm:$0xf]
  %v49 = vld [vmem:[%s2] sm:$0x1]
  %v51 = vperm.slane %v49, 0
  %v69 = vunpack.c.l.b16 %v15
  %v70 = vunpack.c.h.b16 %v15
  %v71 = vunpack.c.l.b16 %v16
  %v72 = vunpack.c.h.b16 %v16
  %v73 = vunpack.c.l.b16 %v17
  %v74 = vunpack.c.h.b16 %v17
  %v75 = vunpack.c.l.b16 %v18
  %v76 = vunpack.c.h.b16 %v18
  %v77 = vunpack.c.l.b16 %v19
  %v78 = vunpack.c.h.b16 %v19
  %v79 = vunpack.c.l.b16 %v20
  %v80 = vunpack.c.h.b16 %v20
  %v81 = vunpack.c.l.b16 %v21
  %v82 = vunpack.c.h.b16 %v21
  %v83 = vunpack.c.l.b16 %v22
  %v84 = vunpack.c.h.b16 %v22
  %v85 = vunpack.c.l.b16 %v23
  %v86 = vunpack.c.h.b16 %v23
  %v87 = vunpack.c.l.b16 %v24
  %v88 = vunpack.c.h.b16 %v24
  %v89 = vunpack.c.l.b16 %v25
  %v90 = vunpack.c.h.b16 %v25
  %v91 = vunpack.c.l.b16 %v26
  %v92 = vunpack.c.h.b16 %v26
  %v93 = vunpack.c.l.b16 %v27
  %v94 = vunpack.c.h.b16 %v27
  %v95 = vunpack.c.l.b16 %v28
  %v96 = vunpack.c.h.b16 %v28
  %v97 = vunpack.c.l.b16 %v29
  %v98 = vunpack.c.h.b16 %v29
  %v99 = vunpack.c.l.b16 %v30
  %v100 = vunpack.c.h.b16 %v30
  %v101 = vpack.c.b16 %v71, %v69
  %v102 = vpack.c.b16 %v72, %v70
  %v103 = vpack.c.b16 %v75, %v73
  %v104 = vpack.c.b16 %v76, %v74
  %v105 = vpack.c.b16 %v79, %v77
  %v106 = vpack.c.b16 %v80, %v78
  %v107 = vpack.c.b16 %v83, %v81
  %v108 = vpack.c.b16 %v84, %v82
  %v109 = vpack.c.b16 %v87, %v85
  %v110 = vpack.c.b16 %v88, %v86
  %v111 = vpack.c.b16 %v91, %v89
  %v112 = vpack.c.b16 %v92, %v90
  %v113 = vpack.c.b16 %v95, %v93
  %v114 = vpack.c.b16 %v96, %v94
  %v115 = vpack.c.b16 %v99, %v97
  %v116 = vpack.c.b16 %v100, %v98
  %v143 = vunpack.c.l.b16 %v31
  %v144 = vunpack.c.l.b16 %v32
  %v145 = vunpack.c.l.b16 %v33
  %v146 = vunpack.c.l.b16 %v34
  %v147 = vunpack.c.l.b16 %v35
  %v148 = vunpack.c.l.b16 %v36
  %v149 = vunpack.c.l.b16 %v37
  %v150 = vunpack.c.l.b16 %v38
  %v151 = vunpack.c.l.b16 %v39
  %v152 = vunpack.c.l.b16 %v40
  %v153 = vunpack.c.l.b16 %v41
  %v154 = vunpack.c.l.b16 %v42
  %v155 = vunpack.c.l.b16 %v43
  %v156 = vunpack.c.l.b16 %v44
  %v157 = vunpack.c.l.b16 %v45
  %v158 = vunpack.c.l.b16 %v46
  %v159 = vunpack.c.l.b16 %v47
  %v160 = vunpack.c.l.b16 %v48
  %v161 = vpack.c.b16 %v144, %v143
  %v162 = vpack.c.b16 %v146, %v145
  %v163 = vpack.c.b16 %v148, %v147
  %v164 = vpack.c.b16 %v150, %v149
  %v165 = vpack.c.b16 %v152, %v151
  %v166 = vpack.c.b16 %v154, %v153
  %v167 = vpack.c.b16 %v156, %v155
  %v168 = vpack.c.b16 %v158, %v157
  %v169 = vpack.c.b16 %v160, %v159
  %vm179 = vcmask 130048
  %v181 = vsel %vm179, %v102, 0
  %v184 = vsel %vm179, %v104, 0
  %v187 = vsel %vm179, %v106, 0
  %v190 = vsel %vm179, %v108, 0
  %v193 = vsel %vm179, %v110, 0
  %v196 = vsel %vm179, %v112, 0
  %v199 = vsel %vm179, %v114, 0
  %v202 = vsel %vm179, %v116, 0
  %204 = vmatpush.bf16.msra.mxu0 %v168
  %205 = vmatpush.bf16.msra.mxu0 %v167
  %206 = vmatpush.bf16.msra.mxu0 %v166
  %207 = vmatpush.bf16.msra.mxu0 %v165
  %208 = vmatpush.bf16.msra.mxu0 %v164
  %209 = vmatpush.bf16.msra.mxu0 %v163
  %210 = vmatpush.bf16.msra.mxu0 %v162
  %211 = vmatpush.bf16.msra.mxu0 %v161
  %212 = vmatmul.bf16.gmra.mxu0 %v101
  %v213 = vpop.f32.mrf.mxu0
  %v214 = vadd.f32 %v51, %v213
  %v215 = vpop.f32.mrf.mxu0
  %v216 = vadd.f32 %v51, %v215
  %217 = vmatmul.bf16.gmra.mxu0 %v103
  %v218 = vpop.f32.mrf.mxu0
  %v219 = vadd.f32 %v51, %v218
  %v220 = vpop.f32.mrf.mxu0
  %v221 = vadd.f32 %v51, %v220
  %222 = vmatmul.bf16.gmra.mxu0 %v105
  %v223 = vpop.f32.mrf.mxu0
  %v224 = vadd.f32 %v51, %v223
  %v225 = vpop.f32.mrf.mxu0
  %v226 = vadd.f32 %v51, %v225
  %227 = vmatmul.bf16.gmra.mxu0 %v107
  %v228 = vpop.f32.mrf.mxu0
  %v229 = vadd.f32 %v51, %v228
  %v230 = vpop.f32.mrf.mxu0
  %v231 = vadd.f32 %v51, %v230
  %232 = vmatmul.bf16.gmra.mxu0 %v109
  %v233 = vpop.f32.mrf.mxu0
  %v234 = vadd.f32 %v51, %v233
  %v235 = vpop.f32.mrf.mxu0
  %v236 = vadd.f32 %v51, %v235
  %237 = vmatmul.bf16.gmra.mxu0 %v111
  %v238 = vpop.f32.mrf.mxu0
  %v239 = vadd.f32 %v51, %v238
  %v240 = vpop.f32.mrf.mxu0
  %v241 = vadd.f32 %v51, %v240
  %242 = vmatmul.bf16.gmra.mxu0 %v113
  %v243 = vpop.f32.mrf.mxu0
  %v244 = vadd.f32 %v51, %v243
  %v245 = vpop.f32.mrf.mxu0
  %v246 = vadd.f32 %v51, %v245
  %247 = vmatmul.bf16.gmra.mxu0 %v115
  %v248 = vpop.f32.mrf.mxu0
  %v249 = vadd.f32 %v51, %v248
  %v250 = vpop.f32.mrf.mxu0
  %v251 = vadd.f32 %v51, %v250
  %252 = vdwg.mxu0
  %253 = vmatpush.bf16.msra.mxu0 0
  %254 = vmatpush.bf16.msra.mxu0 0
  %255 = vmatpush.bf16.msra.mxu0 0
  %256 = vmatpush.bf16.msra.mxu0 0
  %257 = vmatpush.bf16.msra.mxu0 0
  %258 = vmatpush.bf16.msra.mxu0 0
  %259 = vmatpush.bf16.msra.mxu0 0
  %260 = vmatpush.bf16.msra.mxu0 %v169
  %261 = vmatmul.bf16.gmra.mxu0 %v181
  %v262 = vpop.f32.mrf.mxu0
  %v263 = vadd.f32 %v214, %v262
  %v264 = vpop.f32.mrf.mxu0
  %v265 = vadd.f32 %v216, %v264
  %266 = vmatmul.bf16.gmra.mxu0 %v184
  %v267 = vpop.f32.mrf.mxu0
  %v268 = vadd.f32 %v219, %v267
  %v269 = vpop.f32.mrf.mxu0
  %v270 = vadd.f32 %v221, %v269
  %271 = vmatmul.bf16.gmra.mxu0 %v187
  %v272 = vpop.f32.mrf.mxu0
  %v273 = vadd.f32 %v224, %v272
  %v274 = vpop.f32.mrf.mxu0
  %v275 = vadd.f32 %v226, %v274
  %276 = vmatmul.bf16.gmra.mxu0 %v190
  %v277 = vpop.f32.mrf.mxu0
  %v278 = vadd.f32 %v229, %v277
  %v279 = vpop.f32.mrf.mxu0
  %v280 = vadd.f32 %v231, %v279
  %281 = vmatmul.bf16.gmra.mxu0 %v193
  %v282 = vpop.f32.mrf.mxu0
  %v283 = vadd.f32 %v234, %v282
  %v284 = vpop.f32.mrf.mxu0
  %v285 = vadd.f32 %v236, %v284
  %286 = vmatmul.bf16.gmra.mxu0 %v196
  %v287 = vpop.f32.mrf.mxu0
  %v288 = vadd.f32 %v239, %v287
  %v289 = vpop.f32.mrf.mxu0
  %v290 = vadd.f32 %v241, %v289
  %291 = vmatmul.bf16.gmra.mxu0 %v199
  %v292 = vpop.f32.mrf.mxu0
  %v293 = vadd.f32 %v244, %v292
  %v294 = vpop.f32.mrf.mxu0
  %v295 = vadd.f32 %v246, %v294
  %296 = vmatmul.bf16.gmra.mxu0 %v202
  %v297 = vpop.f32.mrf.mxu0
  %v298 = vadd.f32 %v249, %v297
  %v299 = vpop.f32.mrf.mxu0
  %v300 = vadd.f32 %v251, %v299
  %301 = vdwg.mxu0
  %302 = vst.msk [vmem:[%s3] sm:$0xff] %vm179, %v263
  %303 = vst.msk [vmem:[%s3 + $0x8] sm:$0xff] %vm179, %v265
  %304 = vst.msk [vmem:[%s3 + $0x10] sm:$0xff] %vm179, %v268
  %305 = vst.msk [vmem:[%s3 + $0x18] sm:$0xff] %vm179, %v270
  %306 = vst.msk [vmem:[%s3 + $0x20] sm:$0xff] %vm179, %v273
  %307 = vst.msk [vmem:[%s3 + $0x28] sm:$0xff] %vm179, %v275
  %308 = vst.msk [vmem:[%s3 + $0x30] sm:$0xff] %vm179, %v278
  %309 = vst.msk [vmem:[%s3 + $0x38] sm:$0xff] %vm179, %v280
  %310 = vst.msk [vmem:[%s3 + $0x40] sm:$0xff] %vm179, %v283
  %311 = vst.msk [vmem:[%s3 + $0x48] sm:$0xff] %vm179, %v285
  %312 = vst.msk [vmem:[%s3 + $0x50] sm:$0xff] %vm179, %v288
  %313 = vst.msk [vmem:[%s3 + $0x58] sm:$0xff] %vm179, %v290
  %314 = vst.msk [vmem:[%s3 + $0x60] sm:$0xff] %vm179, %v293
  %315 = vst.msk [vmem:[%s3 + $0x68] sm:$0xff] %vm179, %v295
  %316 = vst.msk [vmem:[%s3 + $0x70] sm:$0xff] %vm179, %v298
  %317 = vst.msk [vmem:[%s3 + $0x78] sm:$0xff] %vm179, %v300
  // Predicated region
  $region14: #{didn_forward.38} parent=0 // pred_check
    _
  $region15: #{didn_forward.38} parent=0 // pred_check_branch
    %319 = sbr.rel (0) target = $region17
  $region16: #{didn_forward.38} parent=0 // pred_region
    _
  $region17: #{didn_forward.38} parent=0 // pred_fallthru
    _
  // Predicated region
  $region18: #{didn_forward.38} parent=0 // pred_check
    _
  $region19: #{didn_forward.38} parent=0 // pred_check_branch
    %321 = sbr.rel (0) target = $region21
  $region20: #{didn_forward.38} parent=0 // pred_region
    _
  $region21: #{didn_forward.38} parent=0 // pred_fallthru
    _

// kernel: didn_forward.39
$region0: #{didn_forward.39}
  #allocation0 [shape = 'u32[]', space=smem, size = 0x4, offset = 0x4, fixed_abs, tag = 'smem constant byte address 0x4 - core index']
  #allocation1 [shape = 'u32[72,128]{1,0:T(1,128)}', space=vmem, size = 0x9000, scoped, tag = 'internal scratch']
  #allocation2 [shape = 'f32[1,1]{1,0:T(1,128)S(6)}', space=smem, size = 0x200, scoped, tag = 'scoped memory for didn_forward.39']
  %s0 = inlined_call_operand.vmem [shape: bf16[128,144], index: 0, kind: input, shape index: {}]
  %s1 = inlined_call_operand.vmem [shape: bf16[144,16], index: 1, kind: input, shape index: {}]
  %s2 = inlined_call_operand.vmem [shape: f32[1,16], index: 2, kind: input, shape index: {}]
  %s3 = inlined_call_operand.<no memory space> [shape: f32[1,1], index: 3, kind: input, shape index: {}]
  %s4 = inlined_call_operand.vmem [shape: f32[128,16], index: 4, kind: output, shape index: {}]
  %s5 = sld [smem:[#allocation0]]
  $region26: #{didn_forward.39} parent=0
    _
  %s7 = ssub.s32 1, %s5
  %s8 = scalar_select 0, %s7, %s5
  %9 = sst [smem:[#allocation2]] %s3
  // Predicated region
  $region2: #{didn_forward.39} parent=0 // pred_check
    _
  $region3: #{didn_forward.39} parent=0 // pred_check_branch
    %11 = sbr.rel (0) target = $region5
  $region4: #{didn_forward.39} parent=0 // pred_region
    _
  $region5: #{didn_forward.39} parent=0 // pred_fallthru
    _
  // Predicated region
  $region6: #{didn_forward.39} parent=0 // pred_check
    _
  $region7: #{didn_forward.39} parent=0 // pred_check_branch
    %13 = sbr.rel (0) target = $region9
  $region8: #{didn_forward.39} parent=0 // pred_region
    _
  $region9: #{didn_forward.39} parent=0 // pred_fallthru
    _
  // Predicated region
  $region10: #{didn_forward.39} parent=0 // pred_check
    _
  $region11: #{didn_forward.39} parent=0 // pred_check_branch
    %15 = sbr.rel (0) target = $region13
  $region12: #{didn_forward.39} parent=0 // pred_region
    _
  $region13: #{didn_forward.39} parent=0 // pred_fallthru
    _
  // Predicated region
  $region14: #{didn_forward.39} parent=0 // pred_check
    _
  $region15: #{didn_forward.39} parent=0 // pred_check_branch
    %17 = sbr.rel (0) target = $region17
  $region16: #{didn_forward.39} parent=0 // pred_region
    _
  $region17: #{didn_forward.39} parent=0 // pred_fallthru
    _
  %v19 = vld [vmem:[%s0] sm:$0xff]
  %v20 = vld [vmem:[%s0 + $0x8] sm:$0xff]
  %v21 = vld [vmem:[%s0 + $0x10] sm:$0xff]
  %v22 = vld [vmem:[%s0 + $0x18] sm:$0xff]
  %v23 = vld [vmem:[%s0 + $0x20] sm:$0xff]
  %v24 = vld [vmem:[%s0 + $0x28] sm:$0xff]
  %v25 = vld [vmem:[%s0 + $0x30] sm:$0xff]
  %v26 = vld [vmem:[%s0 + $0x38] sm:$0xff]
  %v27 = vld [vmem:[%s0 + $0x40] sm:$0xff]
  %v28 = vld [vmem:[%s0 + $0x48] sm:$0xff]
  %v29 = vld [vmem:[%s0 + $0x50] sm:$0xff]
  %v30 = vld [vmem:[%s0 + $0x58] sm:$0xff]
  %v31 = vld [vmem:[%s0 + $0x60] sm:$0xff]
  %v32 = vld [vmem:[%s0 + $0x68] sm:$0xff]
  %v33 = vld [vmem:[%s0 + $0x70] sm:$0xff]
  %v34 = vld [vmem:[%s0 + $0x78] sm:$0xff]
  %v35 = vld [vmem:[%s1] sm:$0xf]
  %v36 = vld [vmem:[%s1 + $0x4] sm:$0xf]
  %v37 = vld [vmem:[%s1 + $0x8] sm:$0xf]
  %v38 = vld [vmem:[%s1 + $0xc] sm:$0xf]
  %v39 = vld [vmem:[%s1 + $0x10] sm:$0xf]
  %v40 = vld [vmem:[%s1 + $0x14] sm:$0xf]
  %v41 = vld [vmem:[%s1 + $0x18] sm:$0xf]
  %v42 = vld [vmem:[%s1 + $0x1c] sm:$0xf]
  %v43 = vld [vmem:[%s1 + $0x20] sm:$0xf]
  %v44 = vld [vmem:[%s1 + $0x24] sm:$0xf]
  %v45 = vld [vmem:[%s1 + $0x28] sm:$0xf]
  %v46 = vld [vmem:[%s1 + $0x2c] sm:$0xf]
  %v47 = vld [vmem:[%s1 + $0x30] sm:$0xf]
  %v48 = vld [vmem:[%s1 + $0x34] sm:$0xf]
  %v49 = vld [vmem:[%s1 + $0x38] sm:$0xf]
  %v50 = vld [vmem:[%s1 + $0x3c] sm:$0xf]
  %v51 = vld [vmem:[%s1 + $0x40] sm:$0xf]
  %v52 = vld [vmem:[%s1 + $0x44] sm:$0xf]
  %v53 = vld [vmem:[%s2] sm:$0x1]
  %v55 = vperm.slane %v53, 0
  %v73 = vunpack.c.l.b16 %v19
  %v74 = vunpack.c.h.b16 %v19
  %v75 = vunpack.c.l.b16 %v20
  %v76 = vunpack.c.h.b16 %v20
  %v77 = vunpack.c.l.b16 %v21
  %v78 = vunpack.c.h.b16 %v21
  %v79 = vunpack.c.l.b16 %v22
  %v80 = vunpack.c.h.b16 %v22
  %v81 = vunpack.c.l.b16 %v23
  %v82 = vunpack.c.h.b16 %v23
  %v83 = vunpack.c.l.b16 %v24
  %v84 = vunpack.c.h.b16 %v24
  %v85 = vunpack.c.l.b16 %v25
  %v86 = vunpack.c.h.b16 %v25
  %v87 = vunpack.c.l.b16 %v26
  %v88 = vunpack.c.h.b16 %v26
  %v89 = vunpack.c.l.b16 %v27
  %v90 = vunpack.c.h.b16 %v27
  %v91 = vunpack.c.l.b16 %v28
  %v92 = vunpack.c.h.b16 %v28
  %v93 = vunpack.c.l.b16 %v29
  %v94 = vunpack.c.h.b16 %v29
  %v95 = vunpack.c.l.b16 %v30
  %v96 = vunpack.c.h.b16 %v30
  %v97 = vunpack.c.l.b16 %v31
  %v98 = vunpack.c.h.b16 %v31
  %v99 = vunpack.c.l.b16 %v32
  %v100 = vunpack.c.h.b16 %v32
  %v101 = vunpack.c.l.b16 %v33
  %v102 = vunpack.c.h.b16 %v33
  %v103 = vunpack.c.l.b16 %v34
  %v104 = vunpack.c.h.b16 %v34
  %v105 = vpack.c.b16 %v75, %v73
  %v106 = vpack.c.b16 %v76, %v74
  %v107 = vpack.c.b16 %v79, %v77
  %v108 = vpack.c.b16 %v80, %v78
  %v109 = vpack.c.b16 %v83, %v81
  %v110 = vpack.c.b16 %v84, %v82
  %v111 = vpack.c.b16 %v87, %v85
  %v112 = vpack.c.b16 %v88, %v86
  %v113 = vpack.c.b16 %v91, %v89
  %v114 = vpack.c.b16 %v92, %v90
  %v115 = vpack.c.b16 %v95, %v93
  %v116 = vpack.c.b16 %v96, %v94
  %v117 = vpack.c.b16 %v99, %v97
  %v118 = vpack.c.b16 %v100, %v98
  %v119 = vpack.c.b16 %v103, %v101
  %v120 = vpack.c.b16 %v104, %v102
  %v147 = vunpack.c.l.b16 %v35
  %v148 = vunpack.c.l.b16 %v36
  %v149 = vunpack.c.l.b16 %v37
  %v150 = vunpack.c.l.b16 %v38
  %v151 = vunpack.c.l.b16 %v39
  %v152 = vunpack.c.l.b16 %v40
  %v153 = vunpack.c.l.b16 %v41
  %v154 = vunpack.c.l.b16 %v42
  %v155 = vunpack.c.l.b16 %v43
  %v156 = vunpack.c.l.b16 %v44
  %v157 = vunpack.c.l.b16 %v45
  %v158 = vunpack.c.l.b16 %v46
  %v159 = vunpack.c.l.b16 %v47
  %v160 = vunpack.c.l.b16 %v48
  %v161 = vunpack.c.l.b16 %v49
  %v162 = vunpack.c.l.b16 %v50
  %v163 = vunpack.c.l.b16 %v51
  %v164 = vunpack.c.l.b16 %v52
  %v165 = vpack.c.b16 %v148, %v147
  %v166 = vpack.c.b16 %v150, %v149
  %v167 = vpack.c.b16 %v152, %v151
  %v168 = vpack.c.b16 %v154, %v153
  %v169 = vpack.c.b16 %v156, %v155
  %v170 = vpack.c.b16 %v158, %v157
  %v171 = vpack.c.b16 %v160, %v159
  %v172 = vpack.c.b16 %v162, %v161
  %v173 = vpack.c.b16 %v164, %v163
  %vm183 = vcmask 130048
  %v185 = vsel %vm183, %v106, 0
  %v188 = vsel %vm183, %v108, 0
  %v191 = vsel %vm183, %v110, 0
  %v194 = vsel %vm183, %v112, 0
  %v197 = vsel %vm183, %v114, 0
  %v200 = vsel %vm183, %v116, 0
  %v203 = vsel %vm183, %v118, 0
  %v206 = vsel %vm183, %v120, 0
  %208 = vmatpush.bf16.msra.mxu0 %v172
  %209 = vmatpush.bf16.msra.mxu0 %v171
  %210 = vmatpush.bf16.msra.mxu0 %v170
  %211 = vmatpush.bf16.msra.mxu0 %v169
  %212 = vmatpush.bf16.msra.mxu0 %v168
  %213 = vmatpush.bf16.msra.mxu0 %v167
  %214 = vmatpush.bf16.msra.mxu0 %v166
  %215 = vmatpush.bf16.msra.mxu0 %v165
  %216 = vmatmul.bf16.gmra.mxu0 %v105
  %v217 = vpop.f32.mrf.mxu0
  %v218 = vadd.f32 %v55, %v217
  %v219 = vpop.f32.mrf.mxu0
  %v220 = vadd.f32 %v55, %v219
  %221 = vmatmul.bf16.gmra.mxu0 %v107
  %v222 = vpop.f32.mrf.mxu0
  %v223 = vadd.f32 %v55, %v222
  %v224 = vpop.f32.mrf.mxu0
  %v225 = vadd.f32 %v55, %v224
  %226 = vmatmul.bf16.gmra.mxu0 %v109
  %v227 = vpop.f32.mrf.mxu0
  %v228 = vadd.f32 %v55, %v227
  %v229 = vpop.f32.mrf.mxu0
  %v230 = vadd.f32 %v55, %v229
  %231 = vmatmul.bf16.gmra.mxu0 %v111
  %v232 = vpop.f32.mrf.mxu0
  %v233 = vadd.f32 %v55, %v232
  %v234 = vpop.f32.mrf.mxu0
  %v235 = vadd.f32 %v55, %v234
  %236 = vmatmul.bf16.gmra.mxu0 %v113
  %v237 = vpop.f32.mrf.mxu0
  %v238 = vadd.f32 %v55, %v237
  %v239 = vpop.f32.mrf.mxu0
  %v240 = vadd.f32 %v55, %v239
  %241 = vmatmul.bf16.gmra.mxu0 %v115
  %v242 = vpop.f32.mrf.mxu0
  %v243 = vadd.f32 %v55, %v242
  %v244 = vpop.f32.mrf.mxu0
  %v245 = vadd.f32 %v55, %v244
  %246 = vmatmul.bf16.gmra.mxu0 %v117
  %v247 = vpop.f32.mrf.mxu0
  %v248 = vadd.f32 %v55, %v247
  %v249 = vpop.f32.mrf.mxu0
  %v250 = vadd.f32 %v55, %v249
  %251 = vmatmul.bf16.gmra.mxu0 %v119
  %v252 = vpop.f32.mrf.mxu0
  %v253 = vadd.f32 %v55, %v252
  %v254 = vpop.f32.mrf.mxu0
  %v255 = vadd.f32 %v55, %v254
  %256 = vdwg.mxu0
  %257 = vmatpush.bf16.msra.mxu0 0
  %258 = vmatpush.bf16.msra.mxu0 0
  %259 = vmatpush.bf16.msra.mxu0 0
  %260 = vmatpush.bf16.msra.mxu0 0
  %261 = vmatpush.bf16.msra.mxu0 0
  %262 = vmatpush.bf16.msra.mxu0 0
  %263 = vmatpush.bf16.msra.mxu0 0
  %264 = vmatpush.bf16.msra.mxu0 %v173
  %265 = vmatmul.bf16.gmra.mxu0 %v185
  %v266 = vpop.f32.mrf.mxu0
  %v267 = vadd.f32 %v218, %v266
  %v268 = vpop.f32.mrf.mxu0
  %v269 = vadd.f32 %v220, %v268
  %270 = vmatmul.bf16.gmra.mxu0 %v188
  %v271 = vpop.f32.mrf.mxu0
  %v272 = vadd.f32 %v223, %v271
  %v273 = vpop.f32.mrf.mxu0
  %v274 = vadd.f32 %v225, %v273
  %275 = vmatmul.bf16.gmra.mxu0 %v191
  %v276 = vpop.f32.mrf.mxu0
  %v277 = vadd.f32 %v228, %v276
  %v278 = vpop.f32.mrf.mxu0
  %v279 = vadd.f32 %v230, %v278
  %280 = vmatmul.bf16.gmra.mxu0 %v194
  %v281 = vpop.f32.mrf.mxu0
  %v282 = vadd.f32 %v233, %v281
  %v283 = vpop.f32.mrf.mxu0
  %v284 = vadd.f32 %v235, %v283
  %285 = vmatmul.bf16.gmra.mxu0 %v197
  %v286 = vpop.f32.mrf.mxu0
  %v287 = vadd.f32 %v238, %v286
  %v288 = vpop.f32.mrf.mxu0
  %v289 = vadd.f32 %v240, %v288
  %290 = vmatmul.bf16.gmra.mxu0 %v200
  %v291 = vpop.f32.mrf.mxu0
  %v292 = vadd.f32 %v243, %v291
  %v293 = vpop.f32.mrf.mxu0
  %v294 = vadd.f32 %v245, %v293
  %295 = vmatmul.bf16.gmra.mxu0 %v203
  %v296 = vpop.f32.mrf.mxu0
  %v297 = vadd.f32 %v248, %v296
  %v298 = vpop.f32.mrf.mxu0
  %v299 = vadd.f32 %v250, %v298
  %300 = vmatmul.bf16.gmra.mxu0 %v206
  %v301 = vpop.f32.mrf.mxu0
  %v302 = vadd.f32 %v253, %v301
  %v303 = vpop.f32.mrf.mxu0
  %v304 = vadd.f32 %v255, %v303
  %305 = vdwg.mxu0
  %s306 = sld [smem:[#allocation2]]
  %vm307 = vcmp.ge.f32.partialorder %v267, 0.0
  %vm308 = vcmp.ge.f32.partialorder %v269, 0.0
  %vm309 = vcmp.ge.f32.partialorder %v272, 0.0
  %vm310 = vcmp.ge.f32.partialorder %v274, 0.0
  %vm311 = vcmp.ge.f32.partialorder %v277, 0.0
  %vm312 = vcmp.ge.f32.partialorder %v279, 0.0
  %vm313 = vcmp.ge.f32.partialorder %v282, 0.0
  %vm314 = vcmp.ge.f32.partialorder %v284, 0.0
  %vm315 = vcmp.ge.f32.partialorder %v287, 0.0
  %vm316 = vcmp.ge.f32.partialorder %v289, 0.0
  %vm317 = vcmp.ge.f32.partialorder %v292, 0.0
  %vm318 = vcmp.ge.f32.partialorder %v294, 0.0
  %vm319 = vcmp.ge.f32.partialorder %v297, 0.0
  %vm320 = vcmp.ge.f32.partialorder %v299, 0.0
  %vm321 = vcmp.ge.f32.partialorder %v302, 0.0
  %vm322 = vcmp.ge.f32.partialorder %v304, 0.0
  %v323 = vstv %s306
  %v324 = vmul.f32 %v323, %v267
  %v325 = vmul.f32 %v323, %v269
  %v326 = vmul.f32 %v323, %v272
  %v327 = vmul.f32 %v323, %v274
  %v328 = vmul.f32 %v323, %v277
  %v329 = vmul.f32 %v323, %v279
  %v330 = vmul.f32 %v323, %v282
  %v331 = vmul.f32 %v323, %v284
  %v332 = vmul.f32 %v323, %v287
  %v333 = vmul.f32 %v323, %v289
  %v334 = vmul.f32 %v323, %v292
  %v335 = vmul.f32 %v323, %v294
  %v336 = vmul.f32 %v323, %v297
  %v337 = vmul.f32 %v323, %v299
  %v338 = vmul.f32 %v323, %v302
  %v339 = vmul.f32 %v323, %v304
  %v340 = vsel %vm307, %v267, %v324
  %v341 = vsel %vm308, %v269, %v325
  %v342 = vsel %vm309, %v272, %v326
  %v343 = vsel %vm310, %v274, %v327
  %v344 = vsel %vm311, %v277, %v328
  %v345 = vsel %vm312, %v279, %v329
  %v346 = vsel %vm313, %v282, %v330
  %v347 = vsel %vm314, %v284, %v331
  %v348 = vsel %vm315, %v287, %v332
  %v349 = vsel %vm316, %v289, %v333
  %v350 = vsel %vm317, %v292, %v334
  %v351 = vsel %vm318, %v294, %v335
  %v352 = vsel %vm319, %v297, %v336
  %v353 = vsel %vm320, %v299, %v337
  %v354 = vsel %vm321, %v302, %v338
  %v355 = vsel %vm322, %v304, %v339
  %356 = vst.msk [vmem:[%s4] sm:$0xff] %vm183, %v340
  %357 = vst.msk [vmem:[%s4 + $0x8] sm:$0xff] %vm183, %v341
  %358 = vst.msk [vmem:[%s4 + $0x10] sm:$0xff] %vm183, %v342
  %359 = vst.msk [vmem:[%s4 + $0x18] sm:$0xff] %vm183, %v343
  %360 = vst.msk [vmem:[%s4 + $0x20] sm:$0xff] %vm183, %v344
  %361 = vst.msk [vmem:[%s4 + $0x28] sm:$0xff] %vm183, %v345
  %362 = vst.msk [vmem:[%s4 + $0x30] sm:$0xff] %vm183, %v346
  %363 = vst.msk [vmem:[%s4 + $0x38] sm:$0xff] %vm183, %v347
  %364 = vst.msk [vmem:[%s4 + $0x40] sm:$0xff] %vm183, %v348
  %365 = vst.msk [vmem:[%s4 + $0x48] sm:$0xff] %vm183, %v349
  %366 = vst.msk [vmem:[%s4 + $0x50] sm:$0xff] %vm183, %v350
  %367 = vst.msk [vmem:[%s4 + $0x58] sm:$0xff] %vm183, %v351
  %368 = vst.msk [vmem:[%s4 + $0x60] sm:$0xff] %vm183, %v352
  %369 = vst.msk [vmem:[%s4 + $0x68] sm:$0xff] %vm183, %v353
  %370 = vst.msk [vmem:[%s4 + $0x70] sm:$0xff] %vm183, %v354
  %371 = vst.msk [vmem:[%s4 + $0x78] sm:$0xff] %vm183, %v355
  // Predicated region
  $region18: #{didn_forward.39} parent=0 // pred_check
    _
  $region19: #{didn_forward.39} parent=0 // pred_check_branch
    %373 = sbr.rel (0) target = $region21
  $region20: #{didn_forward.39} parent=0 // pred_region
    _
  $region21: #{didn_forward.39} parent=0 // pred_fallthru
    _
  // Predicated region
  $region22: #{didn_forward.39} parent=0 // pred_check
    _
  $region23: #{didn_forward.39} parent=0 // pred_check_branch
    %375 = sbr.rel (0) target = $region25
  $region24: #{didn_forward.39} parent=0 // pred_region
    _
  $region25: #{didn_forward.39} parent=0 // pred_fallthru
    _

// kernel: didn_forward.40
$region0: #{didn_forward.40}
  #allocation0 [shape = 'u32[]', space=smem, size = 0x4, offset = 0x4, fixed_abs, tag = 'smem constant byte address 0x4 - core index']
  #allocation1 [shape = 'u32[72,128]{1,0:T(1,128)}', space=vmem, size = 0x9000, scoped, tag = 'internal scratch']
  #allocation2 [shape = 'f32[1,1]{1,0:T(1,128)S(6)}', space=smem, size = 0x200, scoped, tag = 'scoped memory for didn_forward.40']
  %s0 = inlined_call_operand.vmem [shape: bf16[128,144], index: 0, kind: input, shape index: {}]
  %s1 = inlined_call_operand.vmem [shape: bf16[144,16], index: 1, kind: input, shape index: {}]
  %s2 = inlined_call_operand.vmem [shape: f32[1,16], index: 2, kind: input, shape index: {}]
  %s3 = inlined_call_operand.<no memory space> [shape: f32[1,1], index: 3, kind: input, shape index: {}]
  %s4 = inlined_call_operand.vmem [shape: f32[128,16], index: 4, kind: input, shape index: {}]
  %s5 = inlined_call_operand.vmem [shape: f32[128,16], index: 5, kind: output, shape index: {}]
  %s6 = sld [smem:[#allocation0]]
  $region30: #{didn_forward.40} parent=0
    _
  %s8 = ssub.s32 1, %s6
  %s9 = scalar_select 0, %s8, %s6
  %10 = sst [smem:[#allocation2]] %s3
  // Predicated region
  $region2: #{didn_forward.40} parent=0 // pred_check
    _
  $region3: #{didn_forward.40} parent=0 // pred_check_branch
    %12 = sbr.rel (0) target = $region5
  $region4: #{didn_forward.40} parent=0 // pred_region
    _
  $region5: #{didn_forward.40} parent=0 // pred_fallthru
    _
  // Predicated region
  $region6: #{didn_forward.40} parent=0 // pred_check
    _
  $region7: #{didn_forward.40} parent=0 // pred_check_branch
    %14 = sbr.rel (0) target = $region9
  $region8: #{didn_forward.40} parent=0 // pred_region
    _
  $region9: #{didn_forward.40} parent=0 // pred_fallthru
    _
  // Predicated region
  $region10: #{didn_forward.40} parent=0 // pred_check
    _
  $region11: #{didn_forward.40} parent=0 // pred_check_branch
    %16 = sbr.rel (0) target = $region13
  $region12: #{didn_forward.40} parent=0 // pred_region
    _
  $region13: #{didn_forward.40} parent=0 // pred_fallthru
    _
  // Predicated region
  $region14: #{didn_forward.40} parent=0 // pred_check
    _
  $region15: #{didn_forward.40} parent=0 // pred_check_branch
    %18 = sbr.rel (0) target = $region17
  $region16: #{didn_forward.40} parent=0 // pred_region
    _
  $region17: #{didn_forward.40} parent=0 // pred_fallthru
    _
  // Predicated region
  $region18: #{didn_forward.40} parent=0 // pred_check
    _
  $region19: #{didn_forward.40} parent=0 // pred_check_branch
    %20 = sbr.rel (0) target = $region21
  $region20: #{didn_forward.40} parent=0 // pred_region
    _
  $region21: #{didn_forward.40} parent=0 // pred_fallthru
    _
  %v22 = vld [vmem:[%s0] sm:$0xff]
  %v23 = vld [vmem:[%s0 + $0x8] sm:$0xff]
  %v24 = vld [vmem:[%s0 + $0x10] sm:$0xff]
  %v25 = vld [vmem:[%s0 + $0x18] sm:$0xff]
  %v26 = vld [vmem:[%s0 + $0x20] sm:$0xff]
  %v27 = vld [vmem:[%s0 + $0x28] sm:$0xff]
  %v28 = vld [vmem:[%s0 + $0x30] sm:$0xff]
  %v29 = vld [vmem:[%s0 + $0x38] sm:$0xff]
  %v30 = vld [vmem:[%s0 + $0x40] sm:$0xff]
  %v31 = vld [vmem:[%s0 + $0x48] sm:$0xff]
  %v32 = vld [vmem:[%s0 + $0x50] sm:$0xff]
  %v33 = vld [vmem:[%s0 + $0x58] sm:$0xff]
  %v34 = vld [vmem:[%s0 + $0x60] sm:$0xff]
  %v35 = vld [vmem:[%s0 + $0x68] sm:$0xff]
  %v36 = vld [vmem:[%s0 + $0x70] sm:$0xff]
  %v37 = vld [vmem:[%s0 + $0x78] sm:$0xff]
  %v38 = vld [vmem:[%s1] sm:$0xf]
  %v39 = vld [vmem:[%s1 + $0x4] sm:$0xf]
  %v40 = vld [vmem:[%s1 + $0x8] sm:$0xf]
  %v41 = vld [vmem:[%s1 + $0xc] sm:$0xf]
  %v42 = vld [vmem:[%s1 + $0x10] sm:$0xf]
  %v43 = vld [vmem:[%s1 + $0x14] sm:$0xf]
  %v44 = vld [vmem:[%s1 + $0x18] sm:$0xf]
  %v45 = vld [vmem:[%s1 + $0x1c] sm:$0xf]
  %v46 = vld [vmem:[%s1 + $0x20] sm:$0xf]
  %v47 = vld [vmem:[%s1 + $0x24] sm:$0xf]
  %v48 = vld [vmem:[%s1 + $0x28] sm:$0xf]
  %v49 = vld [vmem:[%s1 + $0x2c] sm:$0xf]
  %v50 = vld [vmem:[%s1 + $0x30] sm:$0xf]
  %v51 = vld [vmem:[%s1 + $0x34] sm:$0xf]
  %v52 = vld [vmem:[%s1 + $0x38] sm:$0xf]
  %v53 = vld [vmem:[%s1 + $0x3c] sm:$0xf]
  %v54 = vld [vmem:[%s1 + $0x40] sm:$0xf]
  %v55 = vld [vmem:[%s1 + $0x44] sm:$0xf]
  %v56 = vld [vmem:[%s2] sm:$0x1]
  %v58 = vperm.slane %v56, 0
  %v76 = vunpack.c.l.b16 %v22
  %v77 = vunpack.c.h.b16 %v22
  %v78 = vunpack.c.l.b16 %v23
  %v79 = vunpack.c.h.b16 %v23
  %v80 = vunpack.c.l.b16 %v24
  %v81 = vunpack.c.h.b16 %v24
  %v82 = vunpack.c.l.b16 %v25
  %v83 = vunpack.c.h.b16 %v25
  %v84 = vunpack.c.l.b16 %v26
  %v85 = vunpack.c.h.b16 %v26
  %v86 = vunpack.c.l.b16 %v27
  %v87 = vunpack.c.h.b16 %v27
  %v88 = vunpack.c.l.b16 %v28
  %v89 = vunpack.c.h.b16 %v28
  %v90 = vunpack.c.l.b16 %v29
  %v91 = vunpack.c.h.b16 %v29
  %v92 = vunpack.c.l.b16 %v30
  %v93 = vunpack.c.h.b16 %v30
  %v94 = vunpack.c.l.b16 %v31
  %v95 = vunpack.c.h.b16 %v31
  %v96 = vunpack.c.l.b16 %v32
  %v97 = vunpack.c.h.b16 %v32
  %v98 = vunpack.c.l.b16 %v33
  %v99 = vunpack.c.h.b16 %v33
  %v100 = vunpack.c.l.b16 %v34
  %v101 = vunpack.c.h.b16 %v34
  %v102 = vunpack.c.l.b16 %v35
  %v103 = vunpack.c.h.b16 %v35
  %v104 = vunpack.c.l.b16 %v36
  %v105 = vunpack.c.h.b16 %v36
  %v106 = vunpack.c.l.b16 %v37
  %v107 = vunpack.c.h.b16 %v37
  %v108 = vpack.c.b16 %v78, %v76
  %v109 = vpack.c.b16 %v79, %v77
  %v110 = vpack.c.b16 %v82, %v80
  %v111 = vpack.c.b16 %v83, %v81
  %v112 = vpack.c.b16 %v86, %v84
  %v113 = vpack.c.b16 %v87, %v85
  %v114 = vpack.c.b16 %v90, %v88
  %v115 = vpack.c.b16 %v91, %v89
  %v116 = vpack.c.b16 %v94, %v92
  %v117 = vpack.c.b16 %v95, %v93
  %v118 = vpack.c.b16 %v98, %v96
  %v119 = vpack.c.b16 %v99, %v97
  %v120 = vpack.c.b16 %v102, %v100
  %v121 = vpack.c.b16 %v103, %v101
  %v122 = vpack.c.b16 %v106, %v104
  %v123 = vpack.c.b16 %v107, %v105
  %v150 = vunpack.c.l.b16 %v38
  %v151 = vunpack.c.l.b16 %v39
  %v152 = vunpack.c.l.b16 %v40
  %v153 = vunpack.c.l.b16 %v41
  %v154 = vunpack.c.l.b16 %v42
  %v155 = vunpack.c.l.b16 %v43
  %v156 = vunpack.c.l.b16 %v44
  %v157 = vunpack.c.l.b16 %v45
  %v158 = vunpack.c.l.b16 %v46
  %v159 = vunpack.c.l.b16 %v47
  %v160 = vunpack.c.l.b16 %v48
  %v161 = vunpack.c.l.b16 %v49
  %v162 = vunpack.c.l.b16 %v50
  %v163 = vunpack.c.l.b16 %v51
  %v164 = vunpack.c.l.b16 %v52
  %v165 = vunpack.c.l.b16 %v53
  %v166 = vunpack.c.l.b16 %v54
  %v167 = vunpack.c.l.b16 %v55
  %v168 = vpack.c.b16 %v151, %v150
  %v169 = vpack.c.b16 %v153, %v152
  %v170 = vpack.c.b16 %v155, %v154
  %v171 = vpack.c.b16 %v157, %v156
  %v172 = vpack.c.b16 %v159, %v158
  %v173 = vpack.c.b16 %v161, %v160
  %v174 = vpack.c.b16 %v163, %v162
  %v175 = vpack.c.b16 %v165, %v164
  %v176 = vpack.c.b16 %v167, %v166
  %vm186 = vcmask 130048
  %v188 = vsel %vm186, %v109, 0
  %v191 = vsel %vm186, %v111, 0
  %v194 = vsel %vm186, %v113, 0
  %v197 = vsel %vm186, %v115, 0
  %v200 = vsel %vm186, %v117, 0
  %v203 = vsel %vm186, %v119, 0
  %v206 = vsel %vm186, %v121, 0
  %v209 = vsel %vm186, %v123, 0
  %211 = vmatpush.bf16.msra.mxu0 %v175
  %212 = vmatpush.bf16.msra.mxu0 %v174
  %213 = vmatpush.bf16.msra.mxu0 %v173
  %214 = vmatpush.bf16.msra.mxu0 %v172
  %215 = vmatpush.bf16.msra.mxu0 %v171
  %216 = vmatpush.bf16.msra.mxu0 %v170
  %217 = vmatpush.bf16.msra.mxu0 %v169
  %218 = vmatpush.bf16.msra.mxu0 %v168
  %219 = vmatmul.bf16.gmra.mxu0 %v108
  %v220 = vpop.f32.mrf.mxu0
  %v221 = vadd.f32 %v58, %v220
  %v222 = vpop.f32.mrf.mxu0
  %v223 = vadd.f32 %v58, %v222
  %224 = vmatmul.bf16.gmra.mxu0 %v110
  %v225 = vpop.f32.mrf.mxu0
  %v226 = vadd.f32 %v58, %v225
  %v227 = vpop.f32.mrf.mxu0
  %v228 = vadd.f32 %v58, %v227
  %229 = vmatmul.bf16.gmra.mxu0 %v112
  %v230 = vpop.f32.mrf.mxu0
  %v231 = vadd.f32 %v58, %v230
  %v232 = vpop.f32.mrf.mxu0
  %v233 = vadd.f32 %v58, %v232
  %234 = vmatmul.bf16.gmra.mxu0 %v114
  %v235 = vpop.f32.mrf.mxu0
  %v236 = vadd.f32 %v58, %v235
  %v237 = vpop.f32.mrf.mxu0
  %v238 = vadd.f32 %v58, %v237
  %239 = vmatmul.bf16.gmra.mxu0 %v116
  %v240 = vpop.f32.mrf.mxu0
  %v241 = vadd.f32 %v58, %v240
  %v242 = vpop.f32.mrf.mxu0
  %v243 = vadd.f32 %v58, %v242
  %244 = vmatmul.bf16.gmra.mxu0 %v118
  %v245 = vpop.f32.mrf.mxu0
  %v246 = vadd.f32 %v58, %v245
  %v247 = vpop.f32.mrf.mxu0
  %v248 = vadd.f32 %v58, %v247
  %249 = vmatmul.bf16.gmra.mxu0 %v120
  %v250 = vpop.f32.mrf.mxu0
  %v251 = vadd.f32 %v58, %v250
  %v252 = vpop.f32.mrf.mxu0
  %v253 = vadd.f32 %v58, %v252
  %254 = vmatmul.bf16.gmra.mxu0 %v122
  %v255 = vpop.f32.mrf.mxu0
  %v256 = vadd.f32 %v58, %v255
  %v257 = vpop.f32.mrf.mxu0
  %v258 = vadd.f32 %v58, %v257
  %259 = vdwg.mxu0
  %260 = vmatpush.bf16.msra.mxu0 0
  %261 = vmatpush.bf16.msra.mxu0 0
  %262 = vmatpush.bf16.msra.mxu0 0
  %263 = vmatpush.bf16.msra.mxu0 0
  %264 = vmatpush.bf16.msra.mxu0 0
  %265 = vmatpush.bf16.msra.mxu0 0
  %266 = vmatpush.bf16.msra.mxu0 0
  %267 = vmatpush.bf16.msra.mxu0 %v176
  %268 = vmatmul.bf16.gmra.mxu0 %v188
  %v269 = vpop.f32.mrf.mxu0
  %v270 = vadd.f32 %v221, %v269
  %v271 = vpop.f32.mrf.mxu0
  %v272 = vadd.f32 %v223, %v271
  %273 = vmatmul.bf16.gmra.mxu0 %v191
  %v274 = vpop.f32.mrf.mxu0
  %v275 = vadd.f32 %v226, %v274
  %v276 = vpop.f32.mrf.mxu0
  %v277 = vadd.f32 %v228, %v276
  %278 = vmatmul.bf16.gmra.mxu0 %v194
  %v279 = vpop.f32.mrf.mxu0
  %v280 = vadd.f32 %v231, %v279
  %v281 = vpop.f32.mrf.mxu0
  %v282 = vadd.f32 %v233, %v281
  %283 = vmatmul.bf16.gmra.mxu0 %v197
  %v284 = vpop.f32.mrf.mxu0
  %v285 = vadd.f32 %v236, %v284
  %v286 = vpop.f32.mrf.mxu0
  %v287 = vadd.f32 %v238, %v286
  %288 = vmatmul.bf16.gmra.mxu0 %v200
  %v289 = vpop.f32.mrf.mxu0
  %v290 = vadd.f32 %v241, %v289
  %v291 = vpop.f32.mrf.mxu0
  %v292 = vadd.f32 %v243, %v291
  %293 = vmatmul.bf16.gmra.mxu0 %v203
  %v294 = vpop.f32.mrf.mxu0
  %v295 = vadd.f32 %v246, %v294
  %v296 = vpop.f32.mrf.mxu0
  %v297 = vadd.f32 %v248, %v296
  %298 = vmatmul.bf16.gmra.mxu0 %v206
  %v299 = vpop.f32.mrf.mxu0
  %v300 = vadd.f32 %v251, %v299
  %v301 = vpop.f32.mrf.mxu0
  %v302 = vadd.f32 %v253, %v301
  %303 = vmatmul.bf16.gmra.mxu0 %v209
  %v304 = vpop.f32.mrf.mxu0
  %v305 = vadd.f32 %v256, %v304
  %v306 = vpop.f32.mrf.mxu0
  %v307 = vadd.f32 %v258, %v306
  %308 = vdwg.mxu0
  %s309 = sld [smem:[#allocation2]]
  %vm310 = vcmp.ge.f32.partialorder %v270, 0.0
  %vm311 = vcmp.ge.f32.partialorder %v272, 0.0
  %vm312 = vcmp.ge.f32.partialorder %v275, 0.0
  %vm313 = vcmp.ge.f32.partialorder %v277, 0.0
  %vm314 = vcmp.ge.f32.partialorder %v280, 0.0
  %vm315 = vcmp.ge.f32.partialorder %v282, 0.0
  %vm316 = vcmp.ge.f32.partialorder %v285, 0.0
  %vm317 = vcmp.ge.f32.partialorder %v287, 0.0
  %vm318 = vcmp.ge.f32.partialorder %v290, 0.0
  %vm319 = vcmp.ge.f32.partialorder %v292, 0.0
  %vm320 = vcmp.ge.f32.partialorder %v295, 0.0
  %vm321 = vcmp.ge.f32.partialorder %v297, 0.0
  %vm322 = vcmp.ge.f32.partialorder %v300, 0.0
  %vm323 = vcmp.ge.f32.partialorder %v302, 0.0
  %vm324 = vcmp.ge.f32.partialorder %v305, 0.0
  %vm325 = vcmp.ge.f32.partialorder %v307, 0.0
  %v326 = vstv %s309
  %v327 = vmul.f32 %v326, %v270
  %v328 = vmul.f32 %v326, %v272
  %v329 = vmul.f32 %v326, %v275
  %v330 = vmul.f32 %v326, %v277
  %v331 = vmul.f32 %v326, %v280
  %v332 = vmul.f32 %v326, %v282
  %v333 = vmul.f32 %v326, %v285
  %v334 = vmul.f32 %v326, %v287
  %v335 = vmul.f32 %v326, %v290
  %v336 = vmul.f32 %v326, %v292
  %v337 = vmul.f32 %v326, %v295
  %v338 = vmul.f32 %v326, %v297
  %v339 = vmul.f32 %v326, %v300
  %v340 = vmul.f32 %v326, %v302
  %v341 = vmul.f32 %v326, %v305
  %v342 = vmul.f32 %v326, %v307
  %v343 = vsel %vm310, %v270, %v327
  %v344 = vsel %vm311, %v272, %v328
  %v345 = vsel %vm312, %v275, %v329
  %v346 = vsel %vm313, %v277, %v330
  %v347 = vsel %vm314, %v280, %v331
  %v348 = vsel %vm315, %v282, %v332
  %v349 = vsel %vm316, %v285, %v333
  %v350 = vsel %vm317, %v287, %v334
  %v351 = vsel %vm318, %v290, %v335
  %v352 = vsel %vm319, %v292, %v336
  %v353 = vsel %vm320, %v295, %v337
  %v354 = vsel %vm321, %v297, %v338
  %v355 = vsel %vm322, %v300, %v339
  %v356 = vsel %vm323, %v302, %v340
  %v357 = vsel %vm324, %v305, %v341
  %v358 = vsel %vm325, %v307, %v342
  %v359 = vld [vmem:[%s4] sm:$0xff]
  %v360 = vld [vmem:[%s4 + $0x8] sm:$0xff]
  %v361 = vld [vmem:[%s4 + $0x10] sm:$0xff]
  %v362 = vld [vmem:[%s4 + $0x18] sm:$0xff]
  %v363 = vld [vmem:[%s4 + $0x20] sm:$0xff]
  %v364 = vld [vmem:[%s4 + $0x28] sm:$0xff]
  %v365 = vld [vmem:[%s4 + $0x30] sm:$0xff]
  %v366 = vld [vmem:[%s4 + $0x38] sm:$0xff]
  %v367 = vld [vmem:[%s4 + $0x40] sm:$0xff]
  %v368 = vld [vmem:[%s4 + $0x48] sm:$0xff]
  %v369 = vld [vmem:[%s4 + $0x50] sm:$0xff]
  %v370 = vld [vmem:[%s4 + $0x58] sm:$0xff]
  %v371 = vld [vmem:[%s4 + $0x60] sm:$0xff]
  %v372 = vld [vmem:[%s4 + $0x68] sm:$0xff]
  %v373 = vld [vmem:[%s4 + $0x70] sm:$0xff]
  %v374 = vld [vmem:[%s4 + $0x78] sm:$0xff]
  %v375 = vadd.f32 %v343, %v359
  %v376 = vadd.f32 %v344, %v360
  %v377 = vadd.f32 %v345, %v361
  %v378 = vadd.f32 %v346, %v362
  %v379 = vadd.f32 %v347, %v363
  %v380 = vadd.f32 %v348, %v364
  %v381 = vadd.f32 %v349, %v365
  %v382 = vadd.f32 %v350, %v366
  %v383 = vadd.f32 %v351, %v367
  %v384 = vadd.f32 %v352, %v368
  %v385 = vadd.f32 %v353, %v369
  %v386 = vadd.f32 %v354, %v370
  %v387 = vadd.f32 %v355, %v371
  %v388 = vadd.f32 %v356, %v372
  %v389 = vadd.f32 %v357, %v373
  %v390 = vadd.f32 %v358, %v374
  %391 = vst.msk [vmem:[%s5] sm:$0xff] %vm186, %v375
  %392 = vst.msk [vmem:[%s5 + $0x8] sm:$0xff] %vm186, %v376
  %393 = vst.msk [vmem:[%s5 + $0x10] sm:$0xff] %vm186, %v377
  %394 = vst.msk [vmem:[%s5 + $0x18] sm:$0xff] %vm186, %v378
  %395 = vst.msk [vmem:[%s5 + $0x20] sm:$0xff] %vm186, %v379
  %396 = vst.msk [vmem:[%s5 + $0x28] sm:$0xff] %vm186, %v380
  %397 = vst.msk [vmem:[%s5 + $0x30] sm:$0xff] %vm186, %v381
  %398 = vst.msk [vmem:[%s5 + $0x38] sm:$0xff] %vm186, %v382
  %399 = vst.msk [vmem:[%s5 + $0x40] sm:$0xff] %vm186, %v383
  %400 = vst.msk [vmem:[%s5 + $0x48] sm:$0xff] %vm186, %v384
  %401 = vst.msk [vmem:[%s5 + $0x50] sm:$0xff] %vm186, %v385
  %402 = vst.msk [vmem:[%s5 + $0x58] sm:$0xff] %vm186, %v386
  %403 = vst.msk [vmem:[%s5 + $0x60] sm:$0xff] %vm186, %v387
  %404 = vst.msk [vmem:[%s5 + $0x68] sm:$0xff] %vm186, %v388
  %405 = vst.msk [vmem:[%s5 + $0x70] sm:$0xff] %vm186, %v389
  %406 = vst.msk [vmem:[%s5 + $0x78] sm:$0xff] %vm186, %v390
  // Predicated region
  $region22: #{didn_forward.40} parent=0 // pred_check
    _
  $region23: #{didn_forward.40} parent=0 // pred_check_branch
    %408 = sbr.rel (0) target = $region25
  $region24: #{didn_forward.40} parent=0 // pred_region
    _
  $region25: #{didn_forward.40} parent=0 // pred_fallthru
    _
  // Predicated region
  $region26: #{didn_forward.40} parent=0 // pred_check
    _
  $region27: #{didn_forward.40} parent=0 // pred_check_branch
    %410 = sbr.rel (0) target = $region29
  $region28: #{didn_forward.40} parent=0 // pred_region
    _
  $region29: #{didn_forward.40} parent=0 // pred_fallthru
    _

// kernel: didn_forward.41
$region0: #{didn_forward.41}
  #allocation0 [shape = 'u32[]', space=smem, size = 0x4, offset = 0x4, fixed_abs, tag = 'smem constant byte address 0x4 - core index']
  #allocation1 [shape = 'u32[72,128]{1,0:T(1,128)}', space=vmem, size = 0x9000, scoped, tag = 'internal scratch']
  %s0 = inlined_call_operand.vmem [shape: bf16[32,144], index: 0, kind: input, shape index: {}]
  %s1 = inlined_call_operand.vmem [shape: bf16[144,32], index: 1, kind: input, shape index: {}]
  %s2 = inlined_call_operand.vmem [shape: f32[1,32], index: 2, kind: input, shape index: {}]
  %s3 = inlined_call_operand.vmem [shape: f32[32,32], index: 3, kind: output, shape index: {}]
  %s4 = sld [smem:[#allocation0]]
  $region22: #{didn_forward.41} parent=0
    _
  %s6 = ssub.s32 1, %s4
  %s7 = scalar_select 0, %s6, %s4
  // Predicated region
  $region2: #{didn_forward.41} parent=0 // pred_check
    _
  $region3: #{didn_forward.41} parent=0 // pred_check_branch
    %9 = sbr.rel (0) target = $region5
  $region4: #{didn_forward.41} parent=0 // pred_region
    _
  $region5: #{didn_forward.41} parent=0 // pred_fallthru
    _
  // Predicated region
  $region6: #{didn_forward.41} parent=0 // pred_check
    _
  $region7: #{didn_forward.41} parent=0 // pred_check_branch
    %11 = sbr.rel (0) target = $region9
  $region8: #{didn_forward.41} parent=0 // pred_region
    _
  $region9: #{didn_forward.41} parent=0 // pred_fallthru
    _
  // Predicated region
  $region10: #{didn_forward.41} parent=0 // pred_check
    _
  $region11: #{didn_forward.41} parent=0 // pred_check_branch
    %13 = sbr.rel (0) target = $region13
  $region12: #{didn_forward.41} parent=0 // pred_region
    _
  $region13: #{didn_forward.41} parent=0 // pred_fallthru
    _
  %v15 = vld [vmem:[%s0] sm:$0xff]
  %v16 = vld [vmem:[%s0 + $0x8] sm:$0xff]
  %v17 = vld [vmem:[%s0 + $0x10] sm:$0xff]
  %v18 = vld [vmem:[%s0 + $0x18] sm:$0xff]
  %v19 = vld [vmem:[%s1] sm:$0xf]
  %v20 = vld [vmem:[%s1 + $0x4] sm:$0xf]
  %v21 = vld [vmem:[%s1 + $0x8] sm:$0xf]
  %v22 = vld [vmem:[%s1 + $0xc] sm:$0xf]
  %v23 = vld [vmem:[%s1 + $0x10] sm:$0xf]
  %v24 = vld [vmem:[%s1 + $0x14] sm:$0xf]
  %v25 = vld [vmem:[%s1 + $0x18] sm:$0xf]
  %v26 = vld [vmem:[%s1 + $0x1c] sm:$0xf]
  %v27 = vld [vmem:[%s1 + $0x20] sm:$0xf]
  %v28 = vld [vmem:[%s1 + $0x24] sm:$0xf]
  %v29 = vld [vmem:[%s1 + $0x28] sm:$0xf]
  %v30 = vld [vmem:[%s1 + $0x2c] sm:$0xf]
  %v31 = vld [vmem:[%s1 + $0x30] sm:$0xf]
  %v32 = vld [vmem:[%s1 + $0x34] sm:$0xf]
  %v33 = vld [vmem:[%s1 + $0x38] sm:$0xf]
  %v34 = vld [vmem:[%s1 + $0x3c] sm:$0xf]
  %v35 = vld [vmem:[%s1 + $0x40] sm:$0xf]
  %v36 = vld [vmem:[%s1 + $0x44] sm:$0xf]
  %v37 = vld [vmem:[%s2] sm:$0x1]
  %v39 = vperm.slane %v37, 0
  %v45 = vunpack.c.l.b16 %v15
  %v46 = vunpack.c.h.b16 %v15
  %v47 = vunpack.c.l.b16 %v16
  %v48 = vunpack.c.h.b16 %v16
  %v49 = vunpack.c.l.b16 %v17
  %v50 = vunpack.c.h.b16 %v17
  %v51 = vunpack.c.l.b16 %v18
  %v52 = vunpack.c.h.b16 %v18
  %v53 = vpack.c.b16 %v47, %v45
  %v54 = vpack.c.b16 %v48, %v46
  %v55 = vpack.c.b16 %v51, %v49
  %v56 = vpack.c.b16 %v52, %v50
  %v77 = vunpack.c.l.b16 %v19
  %v78 = vunpack.c.l.b16 %v20
  %v79 = vunpack.c.l.b16 %v21
  %v80 = vunpack.c.l.b16 %v22
  %v81 = vunpack.c.l.b16 %v23
  %v82 = vunpack.c.l.b16 %v24
  %v83 = vunpack.c.l.b16 %v25
  %v84 = vunpack.c.l.b16 %v26
  %v85 = vunpack.c.l.b16 %v27
  %v86 = vunpack.c.l.b16 %v28
  %v87 = vunpack.c.l.b16 %v29
  %v88 = vunpack.c.l.b16 %v30
  %v89 = vunpack.c.l.b16 %v31
  %v90 = vunpack.c.l.b16 %v32
  %v91 = vunpack.c.l.b16 %v33
  %v92 = vunpack.c.l.b16 %v34
  %v93 = vunpack.c.l.b16 %v35
  %v94 = vunpack.c.l.b16 %v36
  %v95 = vpack.c.b16 %v78, %v77
  %v96 = vpack.c.b16 %v80, %v79
  %v97 = vpack.c.b16 %v82, %v81
  %v98 = vpack.c.b16 %v84, %v83
  %v99 = vpack.c.b16 %v86, %v85
  %v100 = vpack.c.b16 %v88, %v87
  %v101 = vpack.c.b16 %v90, %v89
  %v102 = vpack.c.b16 %v92, %v91
  %v103 = vpack.c.b16 %v94, %v93
  %vm113 = vcmask 130048
  %v115 = vsel %vm113, %v54, 0
  %v118 = vsel %vm113, %v56, 0
  %120 = vmatpush.bf16.msra.mxu0 %v102
  %121 = vmatpush.bf16.msra.mxu0 %v101
  %122 = vmatpush.bf16.msra.mxu0 %v100
  %123 = vmatpush.bf16.msra.mxu0 %v99
  %124 = vmatpush.bf16.msra.mxu0 %v98
  %125 = vmatpush.bf16.msra.mxu0 %v97
  %126 = vmatpush.bf16.msra.mxu0 %v96
  %127 = vmatpush.bf16.msra.mxu0 %v95
  %128 = vmatmul.bf16.gmra.mxu0 %v53
  %v129 = vpop.f32.mrf.mxu0
  %v130 = vadd.f32 %v39, %v129
  %v131 = vpop.f32.mrf.mxu0
  %v132 = vadd.f32 %v39, %v131
  %133 = vmatmul.bf16.gmra.mxu0 %v55
  %v134 = vpop.f32.mrf.mxu0
  %v135 = vadd.f32 %v39, %v134
  %v136 = vpop.f32.mrf.mxu0
  %v137 = vadd.f32 %v39, %v136
  %138 = vdwg.mxu0
  %139 = vmatpush.bf16.msra.mxu0 0
  %140 = vmatpush.bf16.msra.mxu0 0
  %141 = vmatpush.bf16.msra.mxu0 0
  %142 = vmatpush.bf16.msra.mxu0 0
  %143 = vmatpush.bf16.msra.mxu0 0
  %144 = vmatpush.bf16.msra.mxu0 0
  %145 = vmatpush.bf16.msra.mxu0 0
  %146 = vmatpush.bf16.msra.mxu0 %v103
  %147 = vmatmul.bf16.gmra.mxu0 %v115
  %v148 = vpop.f32.mrf.mxu0
  %v149 = vadd.f32 %v130, %v148
  %v150 = vpop.f32.mrf.mxu0
  %v151 = vadd.f32 %v132, %v150
  %152 = vmatmul.bf16.gmra.mxu0 %v118
  %v153 = vpop.f32.mrf.mxu0
  %v154 = vadd.f32 %v135, %v153
  %v155 = vpop.f32.mrf.mxu0
  %v156 = vadd.f32 %v137, %v155
  %157 = vdwg.mxu0
  %vm158 = vcmask 261120
  %159 = vst.msk [vmem:[%s3] sm:$0xff] %vm158, %v149
  %160 = vst.msk [vmem:[%s3 + $0x8] sm:$0xff] %vm158, %v151
  %161 = vst.msk [vmem:[%s3 + $0x10] sm:$0xff] %vm158, %v154
  %162 = vst.msk [vmem:[%s3 + $0x18] sm:$0xff] %vm158, %v156
  // Predicated region
  $region14: #{didn_forward.41} parent=0 // pred_check
    _
  $region15: #{didn_forward.41} parent=0 // pred_check_branch
    %164 = sbr.rel (0) target = $region17
  $region16: #{didn_forward.41} parent=0 // pred_region
    _
  $region17: #{didn_forward.41} parent=0 // pred_fallthru
    _
  // Predicated region
  $region18: #{didn_forward.41} parent=0 // pred_check
    _
  $region19: #{didn_forward.41} parent=0 // pred_check_branch
    %166 = sbr.rel (0) target = $region21
  $region20: #{didn_forward.41} parent=0 // pred_region
    _
  $region21: #{didn_forward.41} parent=0 // pred_fallthru
    _

// kernel: didn_forward.42
$region0: #{didn_forward.42}
  #allocation0 [shape = 'u32[]', space=smem, size = 0x4, offset = 0x4, fixed_abs, tag = 'smem constant byte address 0x4 - core index']
  #allocation1 [shape = 'u32[72,128]{1,0:T(1,128)}', space=vmem, size = 0x9000, scoped, tag = 'internal scratch']
  #allocation2 [shape = 'f32[1,1]{1,0:T(1,128)S(6)}', space=smem, size = 0x200, scoped, tag = 'scoped memory for didn_forward.42']
  %s0 = inlined_call_operand.vmem [shape: bf16[32,288], index: 0, kind: input, shape index: {}]
  %s1 = inlined_call_operand.vmem [shape: bf16[288,32], index: 1, kind: input, shape index: {}]
  %s2 = inlined_call_operand.vmem [shape: f32[1,32], index: 2, kind: input, shape index: {}]
  %s3 = inlined_call_operand.<no memory space> [shape: f32[1,1], index: 3, kind: input, shape index: {}]
  %s4 = inlined_call_operand.vmem [shape: f32[32,32], index: 4, kind: input, shape index: {}]
  %s5 = inlined_call_operand.vmem [shape: f32[32,32], index: 5, kind: output, shape index: {}]
  %s6 = sld [smem:[#allocation0]]
  $region30: #{didn_forward.42} parent=0
    _
  %s8 = ssub.s32 1, %s6
  %s9 = scalar_select 0, %s8, %s6
  %10 = sst [smem:[#allocation2]] %s3
  // Predicated region
  $region2: #{didn_forward.42} parent=0 // pred_check
    _
  $region3: #{didn_forward.42} parent=0 // pred_check_branch
    %12 = sbr.rel (0) target = $region5
  $region4: #{didn_forward.42} parent=0 // pred_region
    _
  $region5: #{didn_forward.42} parent=0 // pred_fallthru
    _
  // Predicated region
  $region6: #{didn_forward.42} parent=0 // pred_check
    _
  $region7: #{didn_forward.42} parent=0 // pred_check_branch
    %14 = sbr.rel (0) target = $region9
  $region8: #{didn_forward.42} parent=0 // pred_region
    _
  $region9: #{didn_forward.42} parent=0 // pred_fallthru
    _
  // Predicated region
  $region10: #{didn_forward.42} parent=0 // pred_check
    _
  $region11: #{didn_forward.42} parent=0 // pred_check_branch
    %16 = sbr.rel (0) target = $region13
  $region12: #{didn_forward.42} parent=0 // pred_region
    _
  $region13: #{didn_forward.42} parent=0 // pred_fallthru
    _
  // Predicated region
  $region14: #{didn_forward.42} parent=0 // pred_check
    _
  $region15: #{didn_forward.42} parent=0 // pred_check_branch
    %18 = sbr.rel (0) target = $region17
  $region16: #{didn_forward.42} parent=0 // pred_region
    _
  $region17: #{didn_forward.42} parent=0 // pred_fallthru
    _
  // Predicated region
  $region18: #{didn_forward.42} parent=0 // pred_check
    _
  $region19: #{didn_forward.42} parent=0 // pred_check_branch
    %20 = sbr.rel (0) target = $region21
  $region20: #{didn_forward.42} parent=0 // pred_region
    _
  $region21: #{didn_forward.42} parent=0 // pred_fallthru
    _
  %v22 = vld [vmem:[%s0] sm:$0xff]
  %v23 = vld [vmem:[%s0 + $0x8] sm:$0xf]
  %v24 = vld [vmem:[%s0 + $0xc] sm:$0xff]
  %v25 = vld [vmem:[%s0 + $0x14] sm:$0xf]
  %v26 = vld [vmem:[%s0 + $0x18] sm:$0xff]
  %v27 = vld [vmem:[%s0 + $0x20] sm:$0xf]
  %v28 = vld [vmem:[%s0 + $0x24] sm:$0xff]
  %v29 = vld [vmem:[%s0 + $0x2c] sm:$0xf]
  %v30 = vld [vmem:[%s1] sm:$0xf]
  %v31 = vld [vmem:[%s1 + $0x4] sm:$0xf]
  %v32 = vld [vmem:[%s1 + $0x8] sm:$0xf]
  %v33 = vld [vmem:[%s1 + $0xc] sm:$0xf]
  %v34 = vld [vmem:[%s1 + $0x10] sm:$0xf]
  %v35 = vld [vmem:[%s1 + $0x14] sm:$0xf]
  %v36 = vld [vmem:[%s1 + $0x18] sm:$0xf]
  %v37 = vld [vmem:[%s1 + $0x1c] sm:$0xf]
  %v38 = vld [vmem:[%s1 + $0x20] sm:$0xf]
  %v39 = vld [vmem:[%s1 + $0x24] sm:$0xf]
  %v40 = vld [vmem:[%s1 + $0x28] sm:$0xf]
  %v41 = vld [vmem:[%s1 + $0x2c] sm:$0xf]
  %v42 = vld [vmem:[%s1 + $0x30] sm:$0xf]
  %v43 = vld [vmem:[%s1 + $0x34] sm:$0xf]
  %v44 = vld [vmem:[%s1 + $0x38] sm:$0xf]
  %v45 = vld [vmem:[%s1 + $0x3c] sm:$0xf]
  %v46 = vld [vmem:[%s1 + $0x40] sm:$0xf]
  %v47 = vld [vmem:[%s1 + $0x44] sm:$0xf]
  %v48 = vld [vmem:[%s1 + $0x48] sm:$0xf]
  %v49 = vld [vmem:[%s1 + $0x4c] sm:$0xf]
  %v50 = vld [vmem:[%s1 + $0x50] sm:$0xf]
  %v51 = vld [vmem:[%s1 + $0x54] sm:$0xf]
  %v52 = vld [vmem:[%s1 + $0x58] sm:$0xf]
  %v53 = vld [vmem:[%s1 + $0x5c] sm:$0xf]
  %v54 = vld [vmem:[%s1 + $0x60] sm:$0xf]
  %v55 = vld [vmem:[%s1 + $0x64] sm:$0xf]
  %v56 = vld [vmem:[%s1 + $0x68] sm:$0xf]
  %v57 = vld [vmem:[%s1 + $0x6c] sm:$0xf]
  %v58 = vld [vmem:[%s1 + $0x70] sm:$0xf]
  %v59 = vld [vmem:[%s1 + $0x74] sm:$0xf]
  %v60 = vld [vmem:[%s1 + $0x78] sm:$0xf]
  %v61 = vld [vmem:[%s1 + $0x7c] sm:$0xf]
  %v62 = vld [vmem:[%s1 + $0x80] sm:$0xf]
  %v63 = vld [vmem:[%s1 + $0x84] sm:$0xf]
  %v64 = vld [vmem:[%s1 + $0x88] sm:$0xf]
  %v65 = vld [vmem:[%s1 + $0x8c] sm:$0xf]
  %v66 = vld [vmem:[%s2] sm:$0x1]
  %v68 = vperm.slane %v66, 0
  %v78 = vunpack.c.l.b16 %v22
  %v79 = vunpack.c.h.b16 %v22
  %v80 = vunpack.c.l.b16 %v23
  %v81 = vunpack.c.l.b16 %v24
  %v82 = vunpack.c.h.b16 %v24
  %v83 = vunpack.c.l.b16 %v25
  %v84 = vunpack.c.l.b16 %v26
  %v85 = vunpack.c.h.b16 %v26
  %v86 = vunpack.c.l.b16 %v27
  %v87 = vunpack.c.l.b16 %v28
  %v88 = vunpack.c.h.b16 %v28
  %v89 = vunpack.c.l.b16 %v29
  %v90 = vpack.c.b16 %v81, %v78
  %v91 = vpack.c.b16 %v82, %v79
  %v92 = vpack.c.b16 %v83, %v80
  %v93 = vpack.c.b16 %v87, %v84
  %v94 = vpack.c.b16 %v88, %v85
  %v95 = vpack.c.b16 %v89, %v86
  %v136 = vunpack.c.l.b16 %v30
  %v137 = vunpack.c.l.b16 %v31
  %v138 = vunpack.c.l.b16 %v32
  %v139 = vunpack.c.l.b16 %v33
  %v140 = vunpack.c.l.b16 %v34
  %v141 = vunpack.c.l.b16 %v35
  %v142 = vunpack.c.l.b16 %v36
  %v143 = vunpack.c.l.b16 %v37
  %v144 = vunpack.c.l.b16 %v38
  %v145 = vunpack.c.l.b16 %v39
  %v146 = vunpack.c.l.b16 %v40
  %v147 = vunpack.c.l.b16 %v41
  %v148 = vunpack.c.l.b16 %v42
  %v149 = vunpack.c.l.b16 %v43
  %v150 = vunpack.c.l.b16 %v44
  %v151 = vunpack.c.l.b16 %v45
  %v152 = vunpack.c.l.b16 %v46
  %v153 = vunpack.c.l.b16 %v47
  %v154 = vunpack.c.l.b16 %v48
  %v155 = vunpack.c.l.b16 %v49
  %v156 = vunpack.c.l.b16 %v50
  %v157 = vunpack.c.l.b16 %v51
  %v158 = vunpack.c.l.b16 %v52
  %v159 = vunpack.c.l.b16 %v53
  %v160 = vunpack.c.l.b16 %v54
  %v161 = vunpack.c.l.b16 %v55
  %v162 = vunpack.c.l.b16 %v56
  %v163 = vunpack.c.l.b16 %v57
  %v164 = vunpack.c.l.b16 %v58
  %v165 = vunpack.c.l.b16 %v59
  %v166 = vunpack.c.l.b16 %v60
  %v167 = vunpack.c.l.b16 %v61
  %v168 = vunpack.c.l.b16 %v62
  %v169 = vunpack.c.l.b16 %v63
  %v170 = vunpack.c.l.b16 %v64
  %v171 = vunpack.c.l.b16 %v65
  %v172 = vpack.c.b16 %v137, %v136
  %v173 = vpack.c.b16 %v139, %v138
  %v174 = vpack.c.b16 %v141, %v140
  %v175 = vpack.c.b16 %v143, %v142
  %v176 = vpack.c.b16 %v145, %v144
  %v177 = vpack.c.b16 %v147, %v146
  %v178 = vpack.c.b16 %v149, %v148
  %v179 = vpack.c.b16 %v151, %v150
  %v180 = vpack.c.b16 %v153, %v152
  %v181 = vpack.c.b16 %v155, %v154
  %v182 = vpack.c.b16 %v157, %v156
  %v183 = vpack.c.b16 %v159, %v158
  %v184 = vpack.c.b16 %v161, %v160
  %v185 = vpack.c.b16 %v163, %v162
  %v186 = vpack.c.b16 %v165, %v164
  %v187 = vpack.c.b16 %v167, %v166
  %v188 = vpack.c.b16 %v169, %v168
  %v189 = vpack.c.b16 %v171, %v170
  %vm208 = vcmask 261120
  %v210 = vsel %vm208, %v92, 0
  %v213 = vsel %vm208, %v95, 0
  %215 = vmatpush.bf16.msra.mxu0 %v179
  %216 = vmatpush.bf16.msra.mxu0 %v178
  %217 = vmatpush.bf16.msra.mxu0 %v177
  %218 = vmatpush.bf16.msra.mxu0 %v176
  %219 = vmatpush.bf16.msra.mxu0 %v175
  %220 = vmatpush.bf16.msra.mxu0 %v174
  %221 = vmatpush.bf16.msra.mxu0 %v173
  %222 = vmatpush.bf16.msra.mxu0 %v172
  %223 = vmatmul.bf16.gmra.mxu0 %v90
  %v224 = vpop.f32.mrf.mxu0
  %v225 = vadd.f32 %v68, %v224
  %v226 = vpop.f32.mrf.mxu0
  %v227 = vadd.f32 %v68, %v226
  %228 = vmatmul.bf16.gmra.mxu0 %v93
  %v229 = vpop.f32.mrf.mxu0
  %v230 = vadd.f32 %v68, %v229
  %v231 = vpop.f32.mrf.mxu0
  %v232 = vadd.f32 %v68, %v231
  %233 = vdwg.mxu0
  %234 = vmatpush.bf16.msra.mxu0 %v187
  %235 = vmatpush.bf16.msra.mxu0 %v186
  %236 = vmatpush.bf16.msra.mxu0 %v185
  %237 = vmatpush.bf16.msra.mxu0 %v184
  %238 = vmatpush.bf16.msra.mxu0 %v183
  %239 = vmatpush.bf16.msra.mxu0 %v182
  %240 = vmatpush.bf16.msra.mxu0 %v181
  %241 = vmatpush.bf16.msra.mxu0 %v180
  %242 = vmatmul.bf16.gmra.mxu0 %v91
  %v243 = vpop.f32.mrf.mxu0
  %v244 = vadd.f32 %v225, %v243
  %v245 = vpop.f32.mrf.mxu0
  %v246 = vadd.f32 %v227, %v245
  %247 = vmatmul.bf16.gmra.mxu0 %v94
  %v248 = vpop.f32.mrf.mxu0
  %v249 = vadd.f32 %v230, %v248
  %v250 = vpop.f32.mrf.mxu0
  %v251 = vadd.f32 %v232, %v250
  %252 = vdwg.mxu0
  %253 = vmatpush.bf16.msra.mxu0 0
  %254 = vmatpush.bf16.msra.mxu0 0
  %255 = vmatpush.bf16.msra.mxu0 0
  %256 = vmatpush.bf16.msra.mxu0 0
  %257 = vmatpush.bf16.msra.mxu0 0
  %258 = vmatpush.bf16.msra.mxu0 0
  %259 = vmatpush.bf16.msra.mxu0 %v189
  %260 = vmatpush.bf16.msra.mxu0 %v188
  %261 = vmatmul.bf16.gmra.mxu0 %v210
  %v262 = vpop.f32.mrf.mxu0
  %v263 = vadd.f32 %v244, %v262
  %v264 = vpop.f32.mrf.mxu0
  %v265 = vadd.f32 %v246, %v264
  %266 = vmatmul.bf16.gmra.mxu0 %v213
  %v267 = vpop.f32.mrf.mxu0
  %v268 = vadd.f32 %v249, %v267
  %v269 = vpop.f32.mrf.mxu0
  %v270 = vadd.f32 %v251, %v269
  %271 = vdwg.mxu0
  %s272 = sld [smem:[#allocation2]]
  %vm273 = vcmp.ge.f32.partialorder %v263, 0.0
  %vm274 = vcmp.ge.f32.partialorder %v265, 0.0
  %vm275 = vcmp.ge.f32.partialorder %v268, 0.0
  %vm276 = vcmp.ge.f32.partialorder %v270, 0.0
  %v277 = vstv %s272
  %v278 = vmul.f32 %v277, %v263
  %v279 = vmul.f32 %v277, %v265
  %v280 = vmul.f32 %v277, %v268
  %v281 = vmul.f32 %v277, %v270
  %v282 = vsel %vm273, %v263, %v278
  %v283 = vsel %vm274, %v265, %v279
  %v284 = vsel %vm275, %v268, %v280
  %v285 = vsel %vm276, %v270, %v281
  %v286 = vld [vmem:[%s4] sm:$0xff]
  %v287 = vld [vmem:[%s4 + $0x8] sm:$0xff]
  %v288 = vld [vmem:[%s4 + $0x10] sm:$0xff]
  %v289 = vld [vmem:[%s4 + $0x18] sm:$0xff]
  %v290 = vadd.f32 %v282, %v286
  %v291 = vadd.f32 %v283, %v287
  %v292 = vadd.f32 %v284, %v288
  %v293 = vadd.f32 %v285, %v289
  %294 = vst.msk [vmem:[%s5] sm:$0xff] %vm208, %v290
  %295 = vst.msk [vmem:[%s5 + $0x8] sm:$0xff] %vm208, %v291
  %296 = vst.msk [vmem:[%s5 + $0x10] sm:$0xff] %vm208, %v292
  %297 = vst.msk [vmem:[%s5 + $0x18] sm:$0xff] %vm208, %v293
  // Predicated region
  $region22: #{didn_forward.42} parent=0 // pred_check
    _
  $region23: #{didn_forward.42} parent=0 // pred_check_branch
    %299 = sbr.rel (0) target = $region25
  $region24: #{didn_forward.42} parent=0 // pred_region
    _
  $region25: #{didn_forward.42} parent=0 // pred_fallthru
    _
  // Predicated region
  $region26: #{didn_forward.42} parent=0 // pred_check
    _
  $region27: #{didn_forward.42} parent=0 // pred_check_branch
    %301 = sbr.rel (0) target = $region29
  $region28: #{didn_forward.42} parent=0 // pred_region
    _
  $region29: #{didn_forward.42} parent=0 // pred_fallthru
    _

// kernel: didn_forward.43
$region0: #{didn_forward.43}
  #allocation0 [shape = 'u32[]', space=smem, size = 0x4, offset = 0x4, fixed_abs, tag = 'smem constant byte address 0x4 - core index']
  #allocation1 [shape = 'u32[72,128]{1,0:T(1,128)}', space=vmem, size = 0x9000, scoped, tag = 'internal scratch']
  %s0 = inlined_call_operand.vmem [shape: bf16[16,288], index: 0, kind: input, shape index: {}]
  %s1 = inlined_call_operand.vmem [shape: bf16[288,64], index: 1, kind: input, shape index: {}]
  %s2 = inlined_call_operand.vmem [shape: f32[1,64], index: 2, kind: input, shape index: {}]
  %s3 = inlined_call_operand.vmem [shape: f32[16,64], index: 3, kind: output, shape index: {}]
  %s4 = sld [smem:[#allocation0]]
  $region22: #{didn_forward.43} parent=0
    _
  %s6 = ssub.s32 1, %s4
  %s7 = scalar_select 0, %s6, %s4
  // Predicated region
  $region2: #{didn_forward.43} parent=0 // pred_check
    _
  $region3: #{didn_forward.43} parent=0 // pred_check_branch
    %9 = sbr.rel (0) target = $region5
  $region4: #{didn_forward.43} parent=0 // pred_region
    _
  $region5: #{didn_forward.43} parent=0 // pred_fallthru
    _
  // Predicated region
  $region6: #{didn_forward.43} parent=0 // pred_check
    _
  $region7: #{didn_forward.43} parent=0 // pred_check_branch
    %11 = sbr.rel (0) target = $region9
  $region8: #{didn_forward.43} parent=0 // pred_region
    _
  $region9: #{didn_forward.43} parent=0 // pred_fallthru
    _
  // Predicated region
  $region10: #{didn_forward.43} parent=0 // pred_check
    _
  $region11: #{didn_forward.43} parent=0 // pred_check_branch
    %13 = sbr.rel (0) target = $region13
  $region12: #{didn_forward.43} parent=0 // pred_region
    _
  $region13: #{didn_forward.43} parent=0 // pred_fallthru
    _
  %v15 = vld [vmem:[%s0] sm:$0xff]
  %v16 = vld [vmem:[%s0 + $0x8] sm:$0xf]
  %v17 = vld [vmem:[%s0 + $0xc] sm:$0xff]
  %v18 = vld [vmem:[%s0 + $0x14] sm:$0xf]
  %v19 = vld [vmem:[%s1] sm:$0xf]
  %v20 = vld [vmem:[%s1 + $0x4] sm:$0xf]
  %v21 = vld [vmem:[%s1 + $0x8] sm:$0xf]
  %v22 = vld [vmem:[%s1 + $0xc] sm:$0xf]
  %v23 = vld [vmem:[%s1 + $0x10] sm:$0xf]
  %v24 = vld [vmem:[%s1 + $0x14] sm:$0xf]
  %v25 = vld [vmem:[%s1 + $0x18] sm:$0xf]
  %v26 = vld [vmem:[%s1 + $0x1c] sm:$0xf]
  %v27 = vld [vmem:[%s1 + $0x20] sm:$0xf]
  %v28 = vld [vmem:[%s1 + $0x24] sm:$0xf]
  %v29 = vld [vmem:[%s1 + $0x28] sm:$0xf]
  %v30 = vld [vmem:[%s1 + $0x2c] sm:$0xf]
  %v31 = vld [vmem:[%s1 + $0x30] sm:$0xf]
  %v32 = vld [vmem:[%s1 + $0x34] sm:$0xf]
  %v33 = vld [vmem:[%s1 + $0x38] sm:$0xf]
  %v34 = vld [vmem:[%s1 + $0x3c] sm:$0xf]
  %v35 = vld [vmem:[%s1 + $0x40] sm:$0xf]
  %v36 = vld [vmem:[%s1 + $0x44] sm:$0xf]
  %v37 = vld [vmem:[%s1 + $0x48] sm:$0xf]
  %v38 = vld [vmem:[%s1 + $0x4c] sm:$0xf]
  %v39 = vld [vmem:[%s1 + $0x50] sm:$0xf]
  %v40 = vld [vmem:[%s1 + $0x54] sm:$0xf]
  %v41 = vld [vmem:[%s1 + $0x58] sm:$0xf]
  %v42 = vld [vmem:[%s1 + $0x5c] sm:$0xf]
  %v43 = vld [vmem:[%s1 + $0x60] sm:$0xf]
  %v44 = vld [vmem:[%s1 + $0x64] sm:$0xf]
  %v45 = vld [vmem:[%s1 + $0x68] sm:$0xf]
  %v46 = vld [vmem:[%s1 + $0x6c] sm:$0xf]
  %v47 = vld [vmem:[%s1 + $0x70] sm:$0xf]
  %v48 = vld [vmem:[%s1 + $0x74] sm:$0xf]
  %v49 = vld [vmem:[%s1 + $0x78] sm:$0xf]
  %v50 = vld [vmem:[%s1 + $0x7c] sm:$0xf]
  %v51 = vld [vmem:[%s1 + $0x80] sm:$0xf]
  %v52 = vld [vmem:[%s1 + $0x84] sm:$0xf]
  %v53 = vld [vmem:[%s1 + $0x88] sm:$0xf]
  %v54 = vld [vmem:[%s1 + $0x8c] sm:$0xf]
  %v55 = vld [vmem:[%s2] sm:$0x1]
  %v57 = vperm.slane %v55, 0
  %v63 = vunpack.c.l.b16 %v15
  %v64 = vunpack.c.h.b16 %v15
  %v65 = vunpack.c.l.b16 %v16
  %v66 = vunpack.c.l.b16 %v17
  %v67 = vunpack.c.h.b16 %v17
  %v68 = vunpack.c.l.b16 %v18
  %v69 = vpack.c.b16 %v66, %v63
  %v70 = vpack.c.b16 %v67, %v64
  %v71 = vpack.c.b16 %v68, %v65
  %v110 = vunpack.c.l.b16 %v19
  %v111 = vunpack.c.l.b16 %v20
  %v112 = vunpack.c.l.b16 %v21
  %v113 = vunpack.c.l.b16 %v22
  %v114 = vunpack.c.l.b16 %v23
  %v115 = vunpack.c.l.b16 %v24
  %v116 = vunpack.c.l.b16 %v25
  %v117 = vunpack.c.l.b16 %v26
  %v118 = vunpack.c.l.b16 %v27
  %v119 = vunpack.c.l.b16 %v28
  %v120 = vunpack.c.l.b16 %v29
  %v121 = vunpack.c.l.b16 %v30
  %v122 = vunpack.c.l.b16 %v31
  %v123 = vunpack.c.l.b16 %v32
  %v124 = vunpack.c.l.b16 %v33
  %v125 = vunpack.c.l.b16 %v34
  %v126 = vunpack.c.l.b16 %v35
  %v127 = vunpack.c.l.b16 %v36
  %v128 = vunpack.c.l.b16 %v37
  %v129 = vunpack.c.l.b16 %v38
  %v130 = vunpack.c.l.b16 %v39
  %v131 = vunpack.c.l.b16 %v40
  %v132 = vunpack.c.l.b16 %v41
  %v133 = vunpack.c.l.b16 %v42
  %v134 = vunpack.c.l.b16 %v43
  %v135 = vunpack.c.l.b16 %v44
  %v136 = vunpack.c.l.b16 %v45
  %v137 = vunpack.c.l.b16 %v46
  %v138 = vunpack.c.l.b16 %v47
  %v139 = vunpack.c.l.b16 %v48
  %v140 = vunpack.c.l.b16 %v49
  %v141 = vunpack.c.l.b16 %v50
  %v142 = vunpack.c.l.b16 %v51
  %v143 = vunpack.c.l.b16 %v52
  %v144 = vunpack.c.l.b16 %v53
  %v145 = vunpack.c.l.b16 %v54
  %v146 = vpack.c.b16 %v111, %v110
  %v147 = vpack.c.b16 %v113, %v112
  %v148 = vpack.c.b16 %v115, %v114
  %v149 = vpack.c.b16 %v117, %v116
  %v150 = vpack.c.b16 %v119, %v118
  %v151 = vpack.c.b16 %v121, %v120
  %v152 = vpack.c.b16 %v123, %v122
  %v153 = vpack.c.b16 %v125, %v124
  %v154 = vpack.c.b16 %v127, %v126
  %v155 = vpack.c.b16 %v129, %v128
  %v156 = vpack.c.b16 %v131, %v130
  %v157 = vpack.c.b16 %v133, %v132
  %v158 = vpack.c.b16 %v135, %v134
  %v159 = vpack.c.b16 %v137, %v136
  %v160 = vpack.c.b16 %v139, %v138
  %v161 = vpack.c.b16 %v141, %v140
  %v162 = vpack.c.b16 %v143, %v142
  %v163 = vpack.c.b16 %v145, %v144
  %vm182 = vcmask 261120
  %v184 = vsel %vm182, %v71, 0
  %186 = vmatpush.bf16.msra.mxu0 %v153
  %187 = vmatpush.bf16.msra.mxu0 %v152
  %188 = vmatpush.bf16.msra.mxu0 %v151
  %189 = vmatpush.bf16.msra.mxu0 %v150
  %190 = vmatpush.bf16.msra.mxu0 %v149
  %191 = vmatpush.bf16.msra.mxu0 %v148
  %192 = vmatpush.bf16.msra.mxu0 %v147
  %193 = vmatpush.bf16.msra.mxu0 %v146
  %194 = vmatmul.bf16.gmra.mxu0 %v69
  %v195 = vpop.f32.mrf.mxu0
  %v196 = vadd.f32 %v57, %v195
  %v197 = vpop.f32.mrf.mxu0
  %v198 = vadd.f32 %v57, %v197
  %199 = vdwg.mxu0
  %200 = vmatpush.bf16.msra.mxu0 %v161
  %201 = vmatpush.bf16.msra.mxu0 %v160
  %202 = vmatpush.bf16.msra.mxu0 %v159
  %203 = vmatpush.bf16.msra.mxu0 %v158
  %204 = vmatpush.bf16.msra.mxu0 %v157
  %205 = vmatpush.bf16.msra.mxu0 %v156
  %206 = vmatpush.bf16.msra.mxu0 %v155
  %207 = vmatpush.bf16.msra.mxu0 %v154
  %208 = vmatmul.bf16.gmra.mxu0 %v70
  %v209 = vpop.f32.mrf.mxu0
  %v210 = vadd.f32 %v196, %v209
  %v211 = vpop.f32.mrf.mxu0
  %v212 = vadd.f32 %v198, %v211
  %213 = vdwg.mxu0
  %214 = vmatpush.bf16.msra.mxu0 0
  %215 = vmatpush.bf16.msra.mxu0 0
  %216 = vmatpush.bf16.msra.mxu0 0
  %217 = vmatpush.bf16.msra.mxu0 0
  %218 = vmatpush.bf16.msra.mxu0 0
  %219 = vmatpush.bf16.msra.mxu0 0
  %220 = vmatpush.bf16.msra.mxu0 %v163
  %221 = vmatpush.bf16.msra.mxu0 %v162
  %222 = vmatmul.bf16.gmra.mxu0 %v184
  %v223 = vpop.f32.mrf.mxu0
  %v224 = vadd.f32 %v210, %v223
  %v225 = vpop.f32.mrf.mxu0
  %v226 = vadd.f32 %v212, %v225
  %227 = vdwg.mxu0
  %vm228 = vcmask 523264
  %229 = vst.msk [vmem:[%s3] sm:$0xff] %vm228, %v224
  %230 = vst.msk [vmem:[%s3 + $0x8] sm:$0xff] %vm228, %v226
  // Predicated region
  $region14: #{didn_forward.43} parent=0 // pred_check
    _
  $region15: #{didn_forward.43} parent=0 // pred_check_branch
    %232 = sbr.rel (0) target = $region17
  $region16: #{didn_forward.43} parent=0 // pred_region
    _
  $region17: #{didn_forward.43} parent=0 // pred_fallthru
    _
  // Predicated region
  $region18: #{didn_forward.43} parent=0 // pred_check
    _
  $region19: #{didn_forward.43} parent=0 // pred_check_branch
    %234 = sbr.rel (0) target = $region21
  $region20: #{didn_forward.43} parent=0 // pred_region
    _
  $region21: #{didn_forward.43} parent=0 // pred_fallthru
    _

// kernel: didn_forward.45
$region0: #{didn_forward.45}
  #allocation0 [shape = 'u32[]', space=smem, size = 0x4, offset = 0x4, fixed_abs, tag = 'smem constant byte address 0x4 - core index']
  #allocation1 [shape = 'u32[72,128]{1,0:T(1,128)}', space=vmem, size = 0x9000, scoped, tag = 'internal scratch']
  %s0 = inlined_call_operand.vmem [shape: bf16[16,64], index: 0, kind: input, shape index: {}]
  %s1 = inlined_call_operand.vmem [shape: bf16[64,128], index: 1, kind: input, shape index: {}]
  %s2 = inlined_call_operand.vmem [shape: f32[1,128], index: 2, kind: input, shape index: {}]
  %s3 = inlined_call_operand.vmem [shape: f32[16,128], index: 3, kind: output, shape index: {}]
  %s4 = sld [smem:[#allocation0]]
  $region22: #{didn_forward.45} parent=0
    _
  %s6 = ssub.s32 1, %s4
  %s7 = scalar_select 0, %s6, %s4
  // Predicated region
  $region2: #{didn_forward.45} parent=0 // pred_check
    _
  $region3: #{didn_forward.45} parent=0 // pred_check_branch
    %9 = sbr.rel (0) target = $region5
  $region4: #{didn_forward.45} parent=0 // pred_region
    _
  $region5: #{didn_forward.45} parent=0 // pred_fallthru
    _
  // Predicated region
  $region6: #{didn_forward.45} parent=0 // pred_check
    _
  $region7: #{didn_forward.45} parent=0 // pred_check_branch
    %11 = sbr.rel (0) target = $region9
  $region8: #{didn_forward.45} parent=0 // pred_region
    _
  $region9: #{didn_forward.45} parent=0 // pred_fallthru
    _
  // Predicated region
  $region10: #{didn_forward.45} parent=0 // pred_check
    _
  $region11: #{didn_forward.45} parent=0 // pred_check_branch
    %13 = sbr.rel (0) target = $region13
  $region12: #{didn_forward.45} parent=0 // pred_region
    _
  $region13: #{didn_forward.45} parent=0 // pred_fallthru
    _
  %v15 = vld [vmem:[%s0] sm:$0xf]
  %v16 = vld [vmem:[%s0 + $0x4] sm:$0xf]
  %v17 = vld [vmem:[%s1] sm:$0xf]
  %v18 = vld [vmem:[%s1 + $0x4] sm:$0xf]
  %v19 = vld [vmem:[%s1 + $0x8] sm:$0xf]
  %v20 = vld [vmem:[%s1 + $0xc] sm:$0xf]
  %v21 = vld [vmem:[%s1 + $0x10] sm:$0xf]
  %v22 = vld [vmem:[%s1 + $0x14] sm:$0xf]
  %v23 = vld [vmem:[%s1 + $0x18] sm:$0xf]
  %v24 = vld [vmem:[%s1 + $0x1c] sm:$0xf]
  %v25 = vld [vmem:[%s2] sm:$0x1]
  %v27 = vperm.slane %v25, 0
  %v31 = vunpack.c.l.b16 %v15
  %v32 = vunpack.c.l.b16 %v16
  %v33 = vpack.c.b16 %v32, %v31
  %v42 = vunpack.c.l.b16 %v17
  %v43 = vunpack.c.l.b16 %v18
  %v44 = vunpack.c.l.b16 %v19
  %v45 = vunpack.c.l.b16 %v20
  %v46 = vunpack.c.l.b16 %v21
  %v47 = vunpack.c.l.b16 %v22
  %v48 = vunpack.c.l.b16 %v23
  %v49 = vunpack.c.l.b16 %v24
  %v50 = vpack.c.b16 %v43, %v42
  %v51 = vpack.c.b16 %v45, %v44
  %v52 = vpack.c.b16 %v47, %v46
  %v53 = vpack.c.b16 %v49, %v48
  %vm58 = vcmask 523264
  %v60 = vsel %vm58, %v33, 0
  %62 = vmatpush.bf16.msra.mxu0 0
  %63 = vmatpush.bf16.msra.mxu0 0
  %64 = vmatpush.bf16.msra.mxu0 0
  %65 = vmatpush.bf16.msra.mxu0 0
  %66 = vmatpush.bf16.msra.mxu0 %v53
  %67 = vmatpush.bf16.msra.mxu0 %v52
  %68 = vmatpush.bf16.msra.mxu0 %v51
  %69 = vmatpush.bf16.msra.mxu0 %v50
  %70 = vmatmul.bf16.gmra.mxu0 %v60
  %v71 = vpop.f32.mrf.mxu0
  %v72 = vadd.f32 %v27, %v71
  %v73 = vpop.f32.mrf.mxu0
  %v74 = vadd.f32 %v27, %v73
  %75 = vdwg.mxu0
  %76 = vst [vmem:[%s3] sm:$0xff] %v72
  %77 = vst [vmem:[%s3 + $0x8] sm:$0xff] %v74
  // Predicated region
  $region14: #{didn_forward.45} parent=0 // pred_check
    _
  $region15: #{didn_forward.45} parent=0 // pred_check_branch
    %79 = sbr.rel (0) target = $region17
  $region16: #{didn_forward.45} parent=0 // pred_region
    _
  $region17: #{didn_forward.45} parent=0 // pred_fallthru
    _
  // Predicated region
  $region18: #{didn_forward.45} parent=0 // pred_check
    _
  $region19: #{didn_forward.45} parent=0 // pred_check_branch
    %81 = sbr.rel (0) target = $region21
  $region20: #{didn_forward.45} parent=0 // pred_region
    _
  $region21: #{didn_forward.45} parent=0 // pred_fallthru
    _

// kernel: didn_forward.44
$region0: #{didn_forward.44}
  #allocation0 [shape = 'u32[]', space=smem, size = 0x4, offset = 0x4, fixed_abs, tag = 'smem constant byte address 0x4 - core index']
  #allocation1 [shape = 'u32[72,128]{1,0:T(1,128)}', space=vmem, size = 0x9000, scoped, tag = 'internal scratch']
  #allocation2 [shape = 'f32[1,1]{1,0:T(1,128)S(6)}', space=smem, size = 0x200, scoped, tag = 'scoped memory for didn_forward.44']
  %s0 = inlined_call_operand.vmem [shape: bf16[16,576], index: 0, kind: input, shape index: {}]
  %s1 = inlined_call_operand.vmem [shape: bf16[576,64], index: 1, kind: input, shape index: {}]
  %s2 = inlined_call_operand.vmem [shape: f32[1,64], index: 2, kind: input, shape index: {}]
  %s3 = inlined_call_operand.<no memory space> [shape: f32[1,1], index: 3, kind: input, shape index: {}]
  %s4 = inlined_call_operand.vmem [shape: f32[16,64], index: 4, kind: input, shape index: {}]
  %s5 = inlined_call_operand.vmem [shape: f32[16,64], index: 5, kind: output, shape index: {}]
  %s6 = sld [smem:[#allocation0]]
  $region30: #{didn_forward.44} parent=0
    _
  %s8 = ssub.s32 1, %s6
  %s9 = scalar_select 0, %s8, %s6
  %10 = sst [smem:[#allocation2]] %s3
  // Predicated region
  $region2: #{didn_forward.44} parent=0 // pred_check
    _
  $region3: #{didn_forward.44} parent=0 // pred_check_branch
    %12 = sbr.rel (0) target = $region5
  $region4: #{didn_forward.44} parent=0 // pred_region
    _
  $region5: #{didn_forward.44} parent=0 // pred_fallthru
    _
  // Predicated region
  $region6: #{didn_forward.44} parent=0 // pred_check
    _
  $region7: #{didn_forward.44} parent=0 // pred_check_branch
    %14 = sbr.rel (0) target = $region9
  $region8: #{didn_forward.44} parent=0 // pred_region
    _
  $region9: #{didn_forward.44} parent=0 // pred_fallthru
    _
  // Predicated region
  $region10: #{didn_forward.44} parent=0 // pred_check
    _
  $region11: #{didn_forward.44} parent=0 // pred_check_branch
    %16 = sbr.rel (0) target = $region13
  $region12: #{didn_forward.44} parent=0 // pred_region
    _
  $region13: #{didn_forward.44} parent=0 // pred_fallthru
    _
  // Predicated region
  $region14: #{didn_forward.44} parent=0 // pred_check
    _
  $region15: #{didn_forward.44} parent=0 // pred_check_branch
    %18 = sbr.rel (0) target = $region17
  $region16: #{didn_forward.44} parent=0 // pred_region
    _
  $region17: #{didn_forward.44} parent=0 // pred_fallthru
    _
  // Predicated region
  $region18: #{didn_forward.44} parent=0 // pred_check
    _
  $region19: #{didn_forward.44} parent=0 // pred_check_branch
    %20 = sbr.rel (0) target = $region21
  $region20: #{didn_forward.44} parent=0 // pred_region
    _
  $region21: #{didn_forward.44} parent=0 // pred_fallthru
    _
  %v22 = vld [vmem:[%s0] sm:$0xff]
  %v23 = vld [vmem:[%s0 + $0x8] sm:$0xff]
  %v24 = vld [vmem:[%s0 + $0x10] sm:$0xf]
  %v25 = vld [vmem:[%s0 + $0x14] sm:$0xff]
  %v26 = vld [vmem:[%s0 + $0x1c] sm:$0xff]
  %v27 = vld [vmem:[%s0 + $0x24] sm:$0xf]
  %v28 = vld [vmem:[%s1] sm:$0xf]
  %v29 = vld [vmem:[%s1 + $0x4] sm:$0xf]
  %v30 = vld [vmem:[%s1 + $0x8] sm:$0xf]
  %v31 = vld [vmem:[%s1 + $0xc] sm:$0xf]
  %v32 = vld [vmem:[%s1 + $0x10] sm:$0xf]
  %v33 = vld [vmem:[%s1 + $0x14] sm:$0xf]
  %v34 = vld [vmem:[%s1 + $0x18] sm:$0xf]
  %v35 = vld [vmem:[%s1 + $0x1c] sm:$0xf]
  %v36 = vld [vmem:[%s1 + $0x20] sm:$0xf]
  %v37 = vld [vmem:[%s1 + $0x24] sm:$0xf]
  %v38 = vld [vmem:[%s1 + $0x28] sm:$0xf]
  %v39 = vld [vmem:[%s1 + $0x2c] sm:$0xf]
  %v40 = vld [vmem:[%s1 + $0x30] sm:$0xf]
  %v41 = vld [vmem:[%s1 + $0x34] sm:$0xf]
  %v42 = vld [vmem:[%s1 + $0x38] sm:$0xf]
  %v43 = vld [vmem:[%s1 + $0x3c] sm:$0xf]
  %v44 = vld [vmem:[%s1 + $0x40] sm:$0xf]
  %v45 = vld [vmem:[%s1 + $0x44] sm:$0xf]
  %v46 = vld [vmem:[%s1 + $0x48] sm:$0xf]
  %v47 = vld [vmem:[%s1 + $0x4c] sm:$0xf]
  %v48 = vld [vmem:[%s1 + $0x50] sm:$0xf]
  %v49 = vld [vmem:[%s1 + $0x54] sm:$0xf]
  %v50 = vld [vmem:[%s1 + $0x58] sm:$0xf]
  %v51 = vld [vmem:[%s1 + $0x5c] sm:$0xf]
  %v52 = vld [vmem:[%s1 + $0x60] sm:$0xf]
  %v53 = vld [vmem:[%s1 + $0x64] sm:$0xf]
  %v54 = vld [vmem:[%s1 + $0x68] sm:$0xf]
  %v55 = vld [vmem:[%s1 + $0x6c] sm:$0xf]
  %v56 = vld [vmem:[%s1 + $0x70] sm:$0xf]
  %v57 = vld [vmem:[%s1 + $0x74] sm:$0xf]
  %v58 = vld [vmem:[%s1 + $0x78] sm:$0xf]
  %v59 = vld [vmem:[%s1 + $0x7c] sm:$0xf]
  %v60 = vld [vmem:[%s1 + $0x80] sm:$0xf]
  %v61 = vld [vmem:[%s1 + $0x84] sm:$0xf]
  %v62 = vld [vmem:[%s1 + $0x88] sm:$0xf]
  %v63 = vld [vmem:[%s1 + $0x8c] sm:$0xf]
  %v64 = vld [vmem:[%s1 + $0x90] sm:$0xf]
  %v65 = vld [vmem:[%s1 + $0x94] sm:$0xf]
  %v66 = vld [vmem:[%s1 + $0x98] sm:$0xf]
  %v67 = vld [vmem:[%s1 + $0x9c] sm:$0xf]
  %v68 = vld [vmem:[%s1 + $0xa0] sm:$0xf]
  %v69 = vld [vmem:[%s1 + $0xa4] sm:$0xf]
  %v70 = vld [vmem:[%s1 + $0xa8] sm:$0xf]
  %v71 = vld [vmem:[%s1 + $0xac] sm:$0xf]
  %v72 = vld [vmem:[%s1 + $0xb0] sm:$0xf]
  %v73 = vld [vmem:[%s1 + $0xb4] sm:$0xf]
  %v74 = vld [vmem:[%s1 + $0xb8] sm:$0xf]
  %v75 = vld [vmem:[%s1 + $0xbc] sm:$0xf]
  %v76 = vld [vmem:[%s1 + $0xc0] sm:$0xf]
  %v77 = vld [vmem:[%s1 + $0xc4] sm:$0xf]
  %v78 = vld [vmem:[%s1 + $0xc8] sm:$0xf]
  %v79 = vld [vmem:[%s1 + $0xcc] sm:$0xf]
  %v80 = vld [vmem:[%s1 + $0xd0] sm:$0xf]
  %v81 = vld [vmem:[%s1 + $0xd4] sm:$0xf]
  %v82 = vld [vmem:[%s1 + $0xd8] sm:$0xf]
  %v83 = vld [vmem:[%s1 + $0xdc] sm:$0xf]
  %v84 = vld [vmem:[%s1 + $0xe0] sm:$0xf]
  %v85 = vld [vmem:[%s1 + $0xe4] sm:$0xf]
  %v86 = vld [vmem:[%s1 + $0xe8] sm:$0xf]
  %v87 = vld [vmem:[%s1 + $0xec] sm:$0xf]
  %v88 = vld [vmem:[%s1 + $0xf0] sm:$0xf]
  %v89 = vld [vmem:[%s1 + $0xf4] sm:$0xf]
  %v90 = vld [vmem:[%s1 + $0xf8] sm:$0xf]
  %v91 = vld [vmem:[%s1 + $0xfc] sm:$0xf]
  %v92 = vld [vmem:[%s1 + $0x100] sm:$0xf]
  %v93 = vld [vmem:[%s1 + $0x104] sm:$0xf]
  %v94 = vld [vmem:[%s1 + $0x108] sm:$0xf]
  %v95 = vld [vmem:[%s1 + $0x10c] sm:$0xf]
  %v96 = vld [vmem:[%s1 + $0x110] sm:$0xf]
  %v97 = vld [vmem:[%s1 + $0x114] sm:$0xf]
  %v98 = vld [vmem:[%s1 + $0x118] sm:$0xf]
  %v99 = vld [vmem:[%s1 + $0x11c] sm:$0xf]
  %v100 = vld [vmem:[%s2] sm:$0x1]
  %v102 = vperm.slane %v100, 0
  %v110 = vunpack.c.l.b16 %v22
  %v111 = vunpack.c.h.b16 %v22
  %v112 = vunpack.c.l.b16 %v23
  %v113 = vunpack.c.h.b16 %v23
  %v114 = vunpack.c.l.b16 %v24
  %v115 = vunpack.c.l.b16 %v25
  %v116 = vunpack.c.h.b16 %v25
  %v117 = vunpack.c.l.b16 %v26
  %v118 = vunpack.c.h.b16 %v26
  %v119 = vunpack.c.l.b16 %v27
  %v120 = vpack.c.b16 %v115, %v110
  %v121 = vpack.c.b16 %v116, %v111
  %v122 = vpack.c.b16 %v117, %v112
  %v123 = vpack.c.b16 %v118, %v113
  %v124 = vpack.c.b16 %v119, %v114
  %v201 = vunpack.c.l.b16 %v28
  %v202 = vunpack.c.l.b16 %v29
  %v203 = vunpack.c.l.b16 %v30
  %v204 = vunpack.c.l.b16 %v31
  %v205 = vunpack.c.l.b16 %v32
  %v206 = vunpack.c.l.b16 %v33
  %v207 = vunpack.c.l.b16 %v34
  %v208 = vunpack.c.l.b16 %v35
  %v209 = vunpack.c.l.b16 %v36
  %v210 = vunpack.c.l.b16 %v37
  %v211 = vunpack.c.l.b16 %v38
  %v212 = vunpack.c.l.b16 %v39
  %v213 = vunpack.c.l.b16 %v40
  %v214 = vunpack.c.l.b16 %v41
  %v215 = vunpack.c.l.b16 %v42
  %v216 = vunpack.c.l.b16 %v43
  %v217 = vunpack.c.l.b16 %v44
  %v218 = vunpack.c.l.b16 %v45
  %v219 = vunpack.c.l.b16 %v46
  %v220 = vunpack.c.l.b16 %v47
  %v221 = vunpack.c.l.b16 %v48
  %v222 = vunpack.c.l.b16 %v49
  %v223 = vunpack.c.l.b16 %v50
  %v224 = vunpack.c.l.b16 %v51
  %v225 = vunpack.c.l.b16 %v52
  %v226 = vunpack.c.l.b16 %v53
  %v227 = vunpack.c.l.b16 %v54
  %v228 = vunpack.c.l.b16 %v55
  %v229 = vunpack.c.l.b16 %v56
  %v230 = vunpack.c.l.b16 %v57
  %v231 = vunpack.c.l.b16 %v58
  %v232 = vunpack.c.l.b16 %v59
  %v233 = vunpack.c.l.b16 %v60
  %v234 = vunpack.c.l.b16 %v61
  %v235 = vunpack.c.l.b16 %v62
  %v236 = vunpack.c.l.b16 %v63
  %v237 = vunpack.c.l.b16 %v64
  %v238 = vunpack.c.l.b16 %v65
  %v239 = vunpack.c.l.b16 %v66
  %v240 = vunpack.c.l.b16 %v67
  %v241 = vunpack.c.l.b16 %v68
  %v242 = vunpack.c.l.b16 %v69
  %v243 = vunpack.c.l.b16 %v70
  %v244 = vunpack.c.l.b16 %v71
  %v245 = vunpack.c.l.b16 %v72
  %v246 = vunpack.c.l.b16 %v73
  %v247 = vunpack.c.l.b16 %v74
  %v248 = vunpack.c.l.b16 %v75
  %v249 = vunpack.c.l.b16 %v76
  %v250 = vunpack.c.l.b16 %v77
  %v251 = vunpack.c.l.b16 %v78
  %v252 = vunpack.c.l.b16 %v79
  %v253 = vunpack.c.l.b16 %v80
  %v254 = vunpack.c.l.b16 %v81
  %v255 = vunpack.c.l.b16 %v82
  %v256 = vunpack.c.l.b16 %v83
  %v257 = vunpack.c.l.b16 %v84
  %v258 = vunpack.c.l.b16 %v85
  %v259 = vunpack.c.l.b16 %v86
  %v260 = vunpack.c.l.b16 %v87
  %v261 = vunpack.c.l.b16 %v88
  %v262 = vunpack.c.l.b16 %v89
  %v263 = vunpack.c.l.b16 %v90
  %v264 = vunpack.c.l.b16 %v91
  %v265 = vunpack.c.l.b16 %v92
  %v266 = vunpack.c.l.b16 %v93
  %v267 = vunpack.c.l.b16 %v94
  %v268 = vunpack.c.l.b16 %v95
  %v269 = vunpack.c.l.b16 %v96
  %v270 = vunpack.c.l.b16 %v97
  %v271 = vunpack.c.l.b16 %v98
  %v272 = vunpack.c.l.b16 %v99
  %v273 = vpack.c.b16 %v202, %v201
  %v274 = vpack.c.b16 %v204, %v203
  %v275 = vpack.c.b16 %v206, %v205
  %v276 = vpack.c.b16 %v208, %v207
  %v277 = vpack.c.b16 %v210, %v209
  %v278 = vpack.c.b16 %v212, %v211
  %v279 = vpack.c.b16 %v214, %v213
  %v280 = vpack.c.b16 %v216, %v215
  %v281 = vpack.c.b16 %v218, %v217
  %v282 = vpack.c.b16 %v220, %v219
  %v283 = vpack.c.b16 %v222, %v221
  %v284 = vpack.c.b16 %v224, %v223
  %v285 = vpack.c.b16 %v226, %v225
  %v286 = vpack.c.b16 %v228, %v227
  %v287 = vpack.c.b16 %v230, %v229
  %v288 = vpack.c.b16 %v232, %v231
  %v289 = vpack.c.b16 %v234, %v233
  %v290 = vpack.c.b16 %v236, %v235
  %v291 = vpack.c.b16 %v238, %v237
  %v292 = vpack.c.b16 %v240, %v239
  %v293 = vpack.c.b16 %v242, %v241
  %v294 = vpack.c.b16 %v244, %v243
  %v295 = vpack.c.b16 %v246, %v245
  %v296 = vpack.c.b16 %v248, %v247
  %v297 = vpack.c.b16 %v250, %v249
  %v298 = vpack.c.b16 %v252, %v251
  %v299 = vpack.c.b16 %v254, %v253
  %v300 = vpack.c.b16 %v256, %v255
  %v301 = vpack.c.b16 %v258, %v257
  %v302 = vpack.c.b16 %v260, %v259
  %v303 = vpack.c.b16 %v262, %v261
  %v304 = vpack.c.b16 %v264, %v263
  %v305 = vpack.c.b16 %v266, %v265
  %v306 = vpack.c.b16 %v268, %v267
  %v307 = vpack.c.b16 %v270, %v269
  %v308 = vpack.c.b16 %v272, %v271
  %vm345 = vcmask 523264
  %v347 = vsel %vm345, %v124, 0
  %349 = vmatpush.bf16.msra.mxu0 %v280
  %350 = vmatpush.bf16.msra.mxu0 %v279
  %351 = vmatpush.bf16.msra.mxu0 %v278
  %352 = vmatpush.bf16.msra.mxu0 %v277
  %353 = vmatpush.bf16.msra.mxu0 %v276
  %354 = vmatpush.bf16.msra.mxu0 %v275
  %355 = vmatpush.bf16.msra.mxu0 %v274
  %356 = vmatpush.bf16.msra.mxu0 %v273
  %357 = vmatmul.bf16.gmra.mxu0 %v120
  %v358 = vpop.f32.mrf.mxu0
  %v359 = vadd.f32 %v102, %v358
  %v360 = vpop.f32.mrf.mxu0
  %v361 = vadd.f32 %v102, %v360
  %362 = vdwg.mxu0
  %363 = vmatpush.bf16.msra.mxu0 %v288
  %364 = vmatpush.bf16.msra.mxu0 %v287
  %365 = vmatpush.bf16.msra.mxu0 %v286
  %366 = vmatpush.bf16.msra.mxu0 %v285
  %367 = vmatpush.bf16.msra.mxu0 %v284
  %368 = vmatpush.bf16.msra.mxu0 %v283
  %369 = vmatpush.bf16.msra.mxu0 %v282
  %370 = vmatpush.bf16.msra.mxu0 %v281
  %371 = vmatmul.bf16.gmra.mxu0 %v121
  %v372 = vpop.f32.mrf.mxu0
  %v373 = vadd.f32 %v359, %v372
  %v374 = vpop.f32.mrf.mxu0
  %v375 = vadd.f32 %v361, %v374
  %376 = vdwg.mxu0
  %377 = vmatpush.bf16.msra.mxu0 %v296
  %378 = vmatpush.bf16.msra.mxu0 %v295
  %379 = vmatpush.bf16.msra.mxu0 %v294
  %380 = vmatpush.bf16.msra.mxu0 %v293
  %381 = vmatpush.bf16.msra.mxu0 %v292
  %382 = vmatpush.bf16.msra.mxu0 %v291
  %383 = vmatpush.bf16.msra.mxu0 %v290
  %384 = vmatpush.bf16.msra.mxu0 %v289
  %385 = vmatmul.bf16.gmra.mxu0 %v122
  %v386 = vpop.f32.mrf.mxu0
  %v387 = vadd.f32 %v373, %v386
  %v388 = vpop.f32.mrf.mxu0
  %v389 = vadd.f32 %v375, %v388
  %390 = vdwg.mxu0
  %391 = vmatpush.bf16.msra.mxu0 %v304
  %392 = vmatpush.bf16.msra.mxu0 %v303
  %393 = vmatpush.bf16.msra.mxu0 %v302
  %394 = vmatpush.bf16.msra.mxu0 %v301
  %395 = vmatpush.bf16.msra.mxu0 %v300
  %396 = vmatpush.bf16.msra.mxu0 %v299
  %397 = vmatpush.bf16.msra.mxu0 %v298
  %398 = vmatpush.bf16.msra.mxu0 %v297
  %399 = vmatmul.bf16.gmra.mxu0 %v123
  %v400 = vpop.f32.mrf.mxu0
  %v401 = vadd.f32 %v387, %v400
  %v402 = vpop.f32.mrf.mxu0
  %v403 = vadd.f32 %v389, %v402
  %404 = vdwg.mxu0
  %405 = vmatpush.bf16.msra.mxu0 0
  %406 = vmatpush.bf16.msra.mxu0 0
  %407 = vmatpush.bf16.msra.mxu0 0
  %408 = vmatpush.bf16.msra.mxu0 0
  %409 = vmatpush.bf16.msra.mxu0 %v308
  %410 = vmatpush.bf16.msra.mxu0 %v307
  %411 = vmatpush.bf16.msra.mxu0 %v306
  %412 = vmatpush.bf16.msra.mxu0 %v305
  %413 = vmatmul.bf16.gmra.mxu0 %v347
  %v414 = vpop.f32.mrf.mxu0
  %v415 = vadd.f32 %v401, %v414
  %v416 = vpop.f32.mrf.mxu0
  %v417 = vadd.f32 %v403, %v416
  %418 = vdwg.mxu0
  %s419 = sld [smem:[#allocation2]]
  %vm420 = vcmp.ge.f32.partialorder %v415, 0.0
  %vm421 = vcmp.ge.f32.partialorder %v417, 0.0
  %v422 = vstv %s419
  %v423 = vmul.f32 %v422, %v415
  %v424 = vmul.f32 %v422, %v417
  %v425 = vsel %vm420, %v415, %v423
  %v426 = vsel %vm421, %v417, %v424
  %v427 = vld [vmem:[%s4] sm:$0xff]
  %v428 = vld [vmem:[%s4 + $0x8] sm:$0xff]
  %v429 = vadd.f32 %v425, %v427
  %v430 = vadd.f32 %v426, %v428
  %431 = vst.msk [vmem:[%s5] sm:$0xff] %vm345, %v429
  %432 = vst.msk [vmem:[%s5 + $0x8] sm:$0xff] %vm345, %v430
  // Predicated region
  $region22: #{didn_forward.44} parent=0 // pred_check
    _
  $region23: #{didn_forward.44} parent=0 // pred_check_branch
    %434 = sbr.rel (0) target = $region25
  $region24: #{didn_forward.44} parent=0 // pred_region
    _
  $region25: #{didn_forward.44} parent=0 // pred_fallthru
    _
  // Predicated region
  $region26: #{didn_forward.44} parent=0 // pred_check
    _
  $region27: #{didn_forward.44} parent=0 // pred_check_branch
    %436 = sbr.rel (0) target = $region29
  $region28: #{didn_forward.44} parent=0 // pred_region
    _
  $region29: #{didn_forward.44} parent=0 // pred_fallthru
    _

// kernel: didn_forward.46
$region0: #{didn_forward.46}
  #allocation0 [shape = 'u32[]', space=smem, size = 0x4, offset = 0x4, fixed_abs, tag = 'smem constant byte address 0x4 - core index']
  #allocation1 [shape = 'u32[72,128]{1,0:T(1,128)}', space=vmem, size = 0x9000, scoped, tag = 'internal scratch']
  %s0 = inlined_call_operand.vmem [shape: bf16[32,32], index: 0, kind: input, shape index: {}]
  %s1 = inlined_call_operand.vmem [shape: bf16[32,32], index: 1, kind: input, shape index: {}]
  %s2 = inlined_call_operand.vmem [shape: bf16[32,32], index: 2, kind: input, shape index: {}]
  %s3 = inlined_call_operand.vmem [shape: bf16[32,32], index: 3, kind: input, shape index: {}]
  %s4 = inlined_call_operand.vmem [shape: f32[1,32], index: 4, kind: input, shape index: {}]
  %s5 = inlined_call_operand.vmem [shape: f32[32,32], index: 5, kind: output, shape index: {}]
  %s6 = sld [smem:[#allocation0]]
  $region30: #{didn_forward.46} parent=0
    _
  %s8 = ssub.s32 1, %s6
  %s9 = scalar_select 0, %s8, %s6
  // Predicated region
  $region2: #{didn_forward.46} parent=0 // pred_check
    _
  $region3: #{didn_forward.46} parent=0 // pred_check_branch
    %11 = sbr.rel (0) target = $region5
  $region4: #{didn_forward.46} parent=0 // pred_region
    _
  $region5: #{didn_forward.46} parent=0 // pred_fallthru
    _
  // Predicated region
  $region6: #{didn_forward.46} parent=0 // pred_check
    _
  $region7: #{didn_forward.46} parent=0 // pred_check_branch
    %13 = sbr.rel (0) target = $region9
  $region8: #{didn_forward.46} parent=0 // pred_region
    _
  $region9: #{didn_forward.46} parent=0 // pred_fallthru
    _
  // Predicated region
  $region10: #{didn_forward.46} parent=0 // pred_check
    _
  $region11: #{didn_forward.46} parent=0 // pred_check_branch
    %15 = sbr.rel (0) target = $region13
  $region12: #{didn_forward.46} parent=0 // pred_region
    _
  $region13: #{didn_forward.46} parent=0 // pred_fallthru
    _
  // Predicated region
  $region14: #{didn_forward.46} parent=0 // pred_check
    _
  $region15: #{didn_forward.46} parent=0 // pred_check_branch
    %17 = sbr.rel (0) target = $region17
  $region16: #{didn_forward.46} parent=0 // pred_region
    _
  $region17: #{didn_forward.46} parent=0 // pred_fallthru
    _
  // Predicated region
  $region18: #{didn_forward.46} parent=0 // pred_check
    _
  $region19: #{didn_forward.46} parent=0 // pred_check_branch
    %19 = sbr.rel (0) target = $region21
  $region20: #{didn_forward.46} parent=0 // pred_region
    _
  $region21: #{didn_forward.46} parent=0 // pred_fallthru
    _
  %v21 = vld [vmem:[%s0] sm:$0xf]
  %v22 = vld [vmem:[%s0 + $0x4] sm:$0xf]
  %v23 = vld [vmem:[%s0 + $0x8] sm:$0xf]
  %v24 = vld [vmem:[%s0 + $0xc] sm:$0xf]
  %v25 = vld [vmem:[%s2] sm:$0xf]
  %v26 = vld [vmem:[%s2 + $0x4] sm:$0xf]
  %v27 = vld [vmem:[%s2 + $0x8] sm:$0xf]
  %v28 = vld [vmem:[%s2 + $0xc] sm:$0xf]
  %v29 = vld [vmem:[%s1] sm:$0xf]
  %v30 = vld [vmem:[%s1 + $0x4] sm:$0xf]
  %v31 = vld [vmem:[%s1 + $0x8] sm:$0xf]
  %v32 = vld [vmem:[%s1 + $0xc] sm:$0xf]
  %v33 = vld [vmem:[%s3] sm:$0xf]
  %v34 = vld [vmem:[%s3 + $0x4] sm:$0xf]
  %v35 = vld [vmem:[%s3 + $0x8] sm:$0xf]
  %v36 = vld [vmem:[%s3 + $0xc] sm:$0xf]
  %v41 = vunpack.c.l.b16 %v29
  %v42 = vunpack.c.l.b16 %v30
  %v43 = vunpack.c.l.b16 %v31
  %v44 = vunpack.c.l.b16 %v32
  %v45 = vpack.c.b16 %v42, %v41
  %v46 = vpack.c.b16 %v44, %v43
  %v51 = vunpack.c.l.b16 %v33
  %v52 = vunpack.c.l.b16 %v34
  %v53 = vunpack.c.l.b16 %v35
  %v54 = vunpack.c.l.b16 %v36
  %v55 = vpack.c.b16 %v52, %v51
  %v56 = vpack.c.b16 %v54, %v53
  %vm59 = vcmask 261120
  %v61 = vsel %vm59, %v45, 0
  %v64 = vsel %vm59, %v46, 0
  %66 = vmatpush.bf16.msra.mxu0 0
  %67 = vmatpush.bf16.msra.mxu0 0
  %68 = vmatpush.bf16.msra.mxu0 0
  %69 = vmatpush.bf16.msra.mxu0 0
  %70 = vmatpush.bf16.msra.mxu0 0
  %71 = vmatpush.bf16.msra.mxu0 0
  %72 = vmatpush.bf16.msra.mxu0 %v56
  %73 = vmatpush.bf16.msra.mxu0 %v55
  %74 = vmatmul.bf16.gmra.mxu0 %v61
  %v75 = vpop.f32.mrf.mxu0
  %v76 = vadd.f32 0.0, %v75
  %v77 = vpop.f32.mrf.mxu0
  %v78 = vadd.f32 0.0, %v77
  %79 = vmatmul.bf16.gmra.mxu0 %v64
  %v80 = vpop.f32.mrf.mxu0
  %v81 = vadd.f32 0.0, %v80
  %v82 = vpop.f32.mrf.mxu0
  %v83 = vadd.f32 0.0, %v82
  %84 = vdwg.mxu0
  %v89 = vunpack.c.l.b16 %v21
  %v90 = vunpack.c.l.b16 %v22
  %v91 = vunpack.c.l.b16 %v23
  %v92 = vunpack.c.l.b16 %v24
  %v93 = vpack.c.b16 %v90, %v89
  %v94 = vpack.c.b16 %v92, %v91
  %v99 = vunpack.c.l.b16 %v25
  %v100 = vunpack.c.l.b16 %v26
  %v101 = vunpack.c.l.b16 %v27
  %v102 = vunpack.c.l.b16 %v28
  %v103 = vpack.c.b16 %v100, %v99
  %v104 = vpack.c.b16 %v102, %v101
  %v108 = vsel %vm59, %v93, 0
  %v111 = vsel %vm59, %v94, 0
  %113 = vmatpush.bf16.msra.mxu0 0
  %114 = vmatpush.bf16.msra.mxu0 0
  %115 = vmatpush.bf16.msra.mxu0 0
  %116 = vmatpush.bf16.msra.mxu0 0
  %117 = vmatpush.bf16.msra.mxu0 0
  %118 = vmatpush.bf16.msra.mxu0 0
  %119 = vmatpush.bf16.msra.mxu0 %v104
  %120 = vmatpush.bf16.msra.mxu0 %v103
  %121 = vmatmul.bf16.gmra.mxu0 %v108
  %v122 = vpop.f32.mrf.mxu0
  %v123 = vadd.f32 %v76, %v122
  %v124 = vpop.f32.mrf.mxu0
  %v125 = vadd.f32 %v78, %v124
  %126 = vmatmul.bf16.gmra.mxu0 %v111
  %v127 = vpop.f32.mrf.mxu0
  %v128 = vadd.f32 %v81, %v127
  %v129 = vpop.f32.mrf.mxu0
  %v130 = vadd.f32 %v83, %v129
  %131 = vdwg.mxu0
  %v132 = vld [vmem:[%s4] sm:$0x1]
  %v134 = vperm.slane %v132, 0
  %v136 = vadd.f32 %v123, %v134
  %v137 = vadd.f32 %v125, %v134
  %v138 = vadd.f32 %v128, %v134
  %v139 = vadd.f32 %v130, %v134
  %140 = vst.msk [vmem:[%s5] sm:$0xff] %vm59, %v136
  %141 = vst.msk [vmem:[%s5 + $0x8] sm:$0xff] %vm59, %v137
  %142 = vst.msk [vmem:[%s5 + $0x10] sm:$0xff] %vm59, %v138
  %143 = vst.msk [vmem:[%s5 + $0x18] sm:$0xff] %vm59, %v139
  // Predicated region
  $region22: #{didn_forward.46} parent=0 // pred_check
    _
  $region23: #{didn_forward.46} parent=0 // pred_check_branch
    %145 = sbr.rel (0) target = $region25
  $region24: #{didn_forward.46} parent=0 // pred_region
    _
  $region25: #{didn_forward.46} parent=0 // pred_fallthru
    _
  // Predicated region
  $region26: #{didn_forward.46} parent=0 // pred_check
    _
  $region27: #{didn_forward.46} parent=0 // pred_check_branch
    %147 = sbr.rel (0) target = $region29
  $region28: #{didn_forward.46} parent=0 // pred_region
    _
  $region29: #{didn_forward.46} parent=0 // pred_fallthru
    _

// kernel: didn_forward.48
$region0: #{didn_forward.48}
  #allocation0 [shape = 'u32[]', space=smem, size = 0x4, offset = 0x4, fixed_abs, tag = 'smem constant byte address 0x4 - core index']
  #allocation1 [shape = 'u32[72,128]{1,0:T(1,128)}', space=vmem, size = 0x9000, scoped, tag = 'internal scratch']
  %s0 = inlined_call_operand.vmem [shape: bf16[32,32], index: 0, kind: input, shape index: {}]
  %s1 = inlined_call_operand.vmem [shape: bf16[32,64], index: 1, kind: input, shape index: {}]
  %s2 = inlined_call_operand.vmem [shape: f32[1,64], index: 2, kind: input, shape index: {}]
  %s3 = inlined_call_operand.vmem [shape: f32[32,64], index: 3, kind: output, shape index: {}]
  %s4 = sld [smem:[#allocation0]]
  $region22: #{didn_forward.48} parent=0
    _
  %s6 = ssub.s32 1, %s4
  %s7 = scalar_select 0, %s6, %s4
  // Predicated region
  $region2: #{didn_forward.48} parent=0 // pred_check
    _
  $region3: #{didn_forward.48} parent=0 // pred_check_branch
    %9 = sbr.rel (0) target = $region5
  $region4: #{didn_forward.48} parent=0 // pred_region
    _
  $region5: #{didn_forward.48} parent=0 // pred_fallthru
    _
  // Predicated region
  $region6: #{didn_forward.48} parent=0 // pred_check
    _
  $region7: #{didn_forward.48} parent=0 // pred_check_branch
    %11 = sbr.rel (0) target = $region9
  $region8: #{didn_forward.48} parent=0 // pred_region
    _
  $region9: #{didn_forward.48} parent=0 // pred_fallthru
    _
  // Predicated region
  $region10: #{didn_forward.48} parent=0 // pred_check
    _
  $region11: #{didn_forward.48} parent=0 // pred_check_branch
    %13 = sbr.rel (0) target = $region13
  $region12: #{didn_forward.48} parent=0 // pred_region
    _
  $region13: #{didn_forward.48} parent=0 // pred_fallthru
    _
  %v15 = vld [vmem:[%s0] sm:$0xf]
  %v16 = vld [vmem:[%s0 + $0x4] sm:$0xf]
  %v17 = vld [vmem:[%s0 + $0x8] sm:$0xf]
  %v18 = vld [vmem:[%s0 + $0xc] sm:$0xf]
  %v19 = vld [vmem:[%s1] sm:$0xf]
  %v20 = vld [vmem:[%s1 + $0x4] sm:$0xf]
  %v21 = vld [vmem:[%s1 + $0x8] sm:$0xf]
  %v22 = vld [vmem:[%s1 + $0xc] sm:$0xf]
  %v23 = vld [vmem:[%s2] sm:$0x1]
  %v25 = vperm.slane %v23, 0
  %v31 = vunpack.c.l.b16 %v15
  %v32 = vunpack.c.l.b16 %v16
  %v33 = vunpack.c.l.b16 %v17
  %v34 = vunpack.c.l.b16 %v18
  %v35 = vpack.c.b16 %v32, %v31
  %v36 = vpack.c.b16 %v34, %v33
  %v41 = vunpack.c.l.b16 %v19
  %v42 = vunpack.c.l.b16 %v20
  %v43 = vunpack.c.l.b16 %v21
  %v44 = vunpack.c.l.b16 %v22
  %v45 = vpack.c.b16 %v42, %v41
  %v46 = vpack.c.b16 %v44, %v43
  %vm49 = vcmask 261120
  %v51 = vsel %vm49, %v35, 0
  %v54 = vsel %vm49, %v36, 0
  %56 = vmatpush.bf16.msra.mxu0 0
  %57 = vmatpush.bf16.msra.mxu0 0
  %58 = vmatpush.bf16.msra.mxu0 0
  %59 = vmatpush.bf16.msra.mxu0 0
  %60 = vmatpush.bf16.msra.mxu0 0
  %61 = vmatpush.bf16.msra.mxu0 0
  %62 = vmatpush.bf16.msra.mxu0 %v46
  %63 = vmatpush.bf16.msra.mxu0 %v45
  %64 = vmatmul.bf16.gmra.mxu0 %v51
  %v65 = vpop.f32.mrf.mxu0
  %v66 = vadd.f32 %v25, %v65
  %v67 = vpop.f32.mrf.mxu0
  %v68 = vadd.f32 %v25, %v67
  %69 = vmatmul.bf16.gmra.mxu0 %v54
  %v70 = vpop.f32.mrf.mxu0
  %v71 = vadd.f32 %v25, %v70
  %v72 = vpop.f32.mrf.mxu0
  %v73 = vadd.f32 %v25, %v72
  %74 = vdwg.mxu0
  %vm75 = vcmask 523264
  %76 = vst.msk [vmem:[%s3] sm:$0xff] %vm75, %v66
  %77 = vst.msk [vmem:[%s3 + $0x8] sm:$0xff] %vm75, %v68
  %78 = vst.msk [vmem:[%s3 + $0x10] sm:$0xff] %vm75, %v71
  %79 = vst.msk [vmem:[%s3 + $0x18] sm:$0xff] %vm75, %v73
  // Predicated region
  $region14: #{didn_forward.48} parent=0 // pred_check
    _
  $region15: #{didn_forward.48} parent=0 // pred_check_branch
    %81 = sbr.rel (0) target = $region17
  $region16: #{didn_forward.48} parent=0 // pred_region
    _
  $region17: #{didn_forward.48} parent=0 // pred_fallthru
    _
  // Predicated region
  $region18: #{didn_forward.48} parent=0 // pred_check
    _
  $region19: #{didn_forward.48} parent=0 // pred_check_branch
    %83 = sbr.rel (0) target = $region21
  $region20: #{didn_forward.48} parent=0 // pred_region
    _
  $region21: #{didn_forward.48} parent=0 // pred_fallthru
    _

// kernel: didn_forward.49
$region0: #{didn_forward.49}
  #allocation0 [shape = 'u32[]', space=smem, size = 0x4, offset = 0x4, fixed_abs, tag = 'smem constant byte address 0x4 - core index']
  #allocation1 [shape = 'u32[72,128]{1,0:T(1,128)}', space=vmem, size = 0x9000, scoped, tag = 'internal scratch']
  %s0 = inlined_call_operand.vmem [shape: bf16[128,16], index: 0, kind: input, shape index: {}]
  %s1 = inlined_call_operand.vmem [shape: bf16[128,16], index: 1, kind: input, shape index: {}]
  %s2 = inlined_call_operand.vmem [shape: bf16[16,16], index: 2, kind: input, shape index: {}]
  %s3 = inlined_call_operand.vmem [shape: bf16[16,16], index: 3, kind: input, shape index: {}]
  %s4 = inlined_call_operand.vmem [shape: f32[1,16], index: 4, kind: input, shape index: {}]
  %s5 = inlined_call_operand.vmem [shape: f32[128,16], index: 5, kind: output, shape index: {}]
  %s6 = sld [smem:[#allocation0]]
  $region30: #{didn_forward.49} parent=0
    _
  %s8 = ssub.s32 1, %s6
  %s9 = scalar_select 0, %s8, %s6
  // Predicated region
  $region2: #{didn_forward.49} parent=0 // pred_check
    _
  $region3: #{didn_forward.49} parent=0 // pred_check_branch
    %11 = sbr.rel (0) target = $region5
  $region4: #{didn_forward.49} parent=0 // pred_region
    _
  $region5: #{didn_forward.49} parent=0 // pred_fallthru
    _
  // Predicated region
  $region6: #{didn_forward.49} parent=0 // pred_check
    _
  $region7: #{didn_forward.49} parent=0 // pred_check_branch
    %13 = sbr.rel (0) target = $region9
  $region8: #{didn_forward.49} parent=0 // pred_region
    _
  $region9: #{didn_forward.49} parent=0 // pred_fallthru
    _
  // Predicated region
  $region10: #{didn_forward.49} parent=0 // pred_check
    _
  $region11: #{didn_forward.49} parent=0 // pred_check_branch
    %15 = sbr.rel (0) target = $region13
  $region12: #{didn_forward.49} parent=0 // pred_region
    _
  $region13: #{didn_forward.49} parent=0 // pred_fallthru
    _
  // Predicated region
  $region14: #{didn_forward.49} parent=0 // pred_check
    _
  $region15: #{didn_forward.49} parent=0 // pred_check_branch
    %17 = sbr.rel (0) target = $region17
  $region16: #{didn_forward.49} parent=0 // pred_region
    _
  $region17: #{didn_forward.49} parent=0 // pred_fallthru
    _
  // Predicated region
  $region18: #{didn_forward.49} parent=0 // pred_check
    _
  $region19: #{didn_forward.49} parent=0 // pred_check_branch
    %19 = sbr.rel (0) target = $region21
  $region20: #{didn_forward.49} parent=0 // pred_region
    _
  $region21: #{didn_forward.49} parent=0 // pred_fallthru
    _
  %v21 = vld [vmem:[%s0] sm:$0xf]
  %v22 = vld [vmem:[%s0 + $0x4] sm:$0xf]
  %v23 = vld [vmem:[%s0 + $0x8] sm:$0xf]
  %v24 = vld [vmem:[%s0 + $0xc] sm:$0xf]
  %v25 = vld [vmem:[%s0 + $0x10] sm:$0xf]
  %v26 = vld [vmem:[%s0 + $0x14] sm:$0xf]
  %v27 = vld [vmem:[%s0 + $0x18] sm:$0xf]
  %v28 = vld [vmem:[%s0 + $0x1c] sm:$0xf]
  %v29 = vld [vmem:[%s0 + $0x20] sm:$0xf]
  %v30 = vld [vmem:[%s0 + $0x24] sm:$0xf]
  %v31 = vld [vmem:[%s0 + $0x28] sm:$0xf]
  %v32 = vld [vmem:[%s0 + $0x2c] sm:$0xf]
  %v33 = vld [vmem:[%s0 + $0x30] sm:$0xf]
  %v34 = vld [vmem:[%s0 + $0x34] sm:$0xf]
  %v35 = vld [vmem:[%s0 + $0x38] sm:$0xf]
  %v36 = vld [vmem:[%s0 + $0x3c] sm:$0xf]
  %v37 = vld [vmem:[%s2] sm:$0xf]
  %v38 = vld [vmem:[%s2 + $0x4] sm:$0xf]
  %v39 = vld [vmem:[%s1] sm:$0xf]
  %v40 = vld [vmem:[%s1 + $0x4] sm:$0xf]
  %v41 = vld [vmem:[%s1 + $0x8] sm:$0xf]
  %v42 = vld [vmem:[%s1 + $0xc] sm:$0xf]
  %v43 = vld [vmem:[%s1 + $0x10] sm:$0xf]
  %v44 = vld [vmem:[%s1 + $0x14] sm:$0xf]
  %v45 = vld [vmem:[%s1 + $0x18] sm:$0xf]
  %v46 = vld [vmem:[%s1 + $0x1c] sm:$0xf]
  %v47 = vld [vmem:[%s1 + $0x20] sm:$0xf]
  %v48 = vld [vmem:[%s1 + $0x24] sm:$0xf]
  %v49 = vld [vmem:[%s1 + $0x28] sm:$0xf]
  %v50 = vld [vmem:[%s1 + $0x2c] sm:$0xf]
  %v51 = vld [vmem:[%s1 + $0x30] sm:$0xf]
  %v52 = vld [vmem:[%s1 + $0x34] sm:$0xf]
  %v53 = vld [vmem:[%s1 + $0x38] sm:$0xf]
  %v54 = vld [vmem:[%s1 + $0x3c] sm:$0xf]
  %v55 = vld [vmem:[%s3] sm:$0xf]
  %v56 = vld [vmem:[%s3 + $0x4] sm:$0xf]
  %v73 = vunpack.c.l.b16 %v39
  %v74 = vunpack.c.l.b16 %v40
  %v75 = vunpack.c.l.b16 %v41
  %v76 = vunpack.c.l.b16 %v42
  %v77 = vunpack.c.l.b16 %v43
  %v78 = vunpack.c.l.b16 %v44
  %v79 = vunpack.c.l.b16 %v45
  %v80 = vunpack.c.l.b16 %v46
  %v81 = vunpack.c.l.b16 %v47
  %v82 = vunpack.c.l.b16 %v48
  %v83 = vunpack.c.l.b16 %v49
  %v84 = vunpack.c.l.b16 %v50
  %v85 = vunpack.c.l.b16 %v51
  %v86 = vunpack.c.l.b16 %v52
  %v87 = vunpack.c.l.b16 %v53
  %v88 = vunpack.c.l.b16 %v54
  %v89 = vpack.c.b16 %v74, %v73
  %v90 = vpack.c.b16 %v76, %v75
  %v91 = vpack.c.b16 %v78, %v77
  %v92 = vpack.c.b16 %v80, %v79
  %v93 = vpack.c.b16 %v82, %v81
  %v94 = vpack.c.b16 %v84, %v83
  %v95 = vpack.c.b16 %v86, %v85
  %v96 = vpack.c.b16 %v88, %v87
  %v99 = vunpack.c.l.b16 %v55
  %v100 = vunpack.c.l.b16 %v56
  %v101 = vpack.c.b16 %v100, %v99
  %vm103 = vcmask 130048
  %v105 = vsel %vm103, %v89, 0
  %v108 = vsel %vm103, %v90, 0
  %v111 = vsel %vm103, %v91, 0
  %v114 = vsel %vm103, %v92, 0
  %v117 = vsel %vm103, %v93, 0
  %v120 = vsel %vm103, %v94, 0
  %v123 = vsel %vm103, %v95, 0
  %v126 = vsel %vm103, %v96, 0
  %128 = vmatpush.bf16.msra.mxu0 0
  %129 = vmatpush.bf16.msra.mxu0 0
  %130 = vmatpush.bf16.msra.mxu0 0
  %131 = vmatpush.bf16.msra.mxu0 0
  %132 = vmatpush.bf16.msra.mxu0 0
  %133 = vmatpush.bf16.msra.mxu0 0
  %134 = vmatpush.bf16.msra.mxu0 0
  %135 = vmatpush.bf16.msra.mxu0 %v101
  %136 = vmatmul.bf16.gmra.mxu0 %v105
  %v137 = vpop.f32.mrf.mxu0
  %v138 = vadd.f32 0.0, %v137
  %v139 = vpop.f32.mrf.mxu0
  %v140 = vadd.f32 0.0, %v139
  %141 = vmatmul.bf16.gmra.mxu0 %v108
  %v142 = vpop.f32.mrf.mxu0
  %v143 = vadd.f32 0.0, %v142
  %v144 = vpop.f32.mrf.mxu0
  %v145 = vadd.f32 0.0, %v144
  %146 = vmatmul.bf16.gmra.mxu0 %v111
  %v147 = vpop.f32.mrf.mxu0
  %v148 = vadd.f32 0.0, %v147
  %v149 = vpop.f32.mrf.mxu0
  %v150 = vadd.f32 0.0, %v149
  %151 = vmatmul.bf16.gmra.mxu0 %v114
  %v152 = vpop.f32.mrf.mxu0
  %v153 = vadd.f32 0.0, %v152
  %v154 = vpop.f32.mrf.mxu0
  %v155 = vadd.f32 0.0, %v154
  %156 = vmatmul.bf16.gmra.mxu0 %v117
  %v157 = vpop.f32.mrf.mxu0
  %v158 = vadd.f32 0.0, %v157
  %v159 = vpop.f32.mrf.mxu0
  %v160 = vadd.f32 0.0, %v159
  %161 = vmatmul.bf16.gmra.mxu0 %v120
  %v162 = vpop.f32.mrf.mxu0
  %v163 = vadd.f32 0.0, %v162
  %v164 = vpop.f32.mrf.mxu0
  %v165 = vadd.f32 0.0, %v164
  %166 = vmatmul.bf16.gmra.mxu0 %v123
  %v167 = vpop.f32.mrf.mxu0
  %v168 = vadd.f32 0.0, %v167
  %v169 = vpop.f32.mrf.mxu0
  %v170 = vadd.f32 0.0, %v169
  %171 = vmatmul.bf16.gmra.mxu0 %v126
  %v172 = vpop.f32.mrf.mxu0
  %v173 = vadd.f32 0.0, %v172
  %v174 = vpop.f32.mrf.mxu0
  %v175 = vadd.f32 0.0, %v174
  %176 = vdwg.mxu0
  %v193 = vunpack.c.l.b16 %v21
  %v194 = vunpack.c.l.b16 %v22
  %v195 = vunpack.c.l.b16 %v23
  %v196 = vunpack.c.l.b16 %v24
  %v197 = vunpack.c.l.b16 %v25
  %v198 = vunpack.c.l.b16 %v26
  %v199 = vunpack.c.l.b16 %v27
  %v200 = vunpack.c.l.b16 %v28
  %v201 = vunpack.c.l.b16 %v29
  %v202 = vunpack.c.l.b16 %v30
  %v203 = vunpack.c.l.b16 %v31
  %v204 = vunpack.c.l.b16 %v32
  %v205 = vunpack.c.l.b16 %v33
  %v206 = vunpack.c.l.b16 %v34
  %v207 = vunpack.c.l.b16 %v35
  %v208 = vunpack.c.l.b16 %v36
  %v209 = vpack.c.b16 %v194, %v193
  %v210 = vpack.c.b16 %v196, %v195
  %v211 = vpack.c.b16 %v198, %v197
  %v212 = vpack.c.b16 %v200, %v199
  %v213 = vpack.c.b16 %v202, %v201
  %v214 = vpack.c.b16 %v204, %v203
  %v215 = vpack.c.b16 %v206, %v205
  %v216 = vpack.c.b16 %v208, %v207
  %v219 = vunpack.c.l.b16 %v37
  %v220 = vunpack.c.l.b16 %v38
  %v221 = vpack.c.b16 %v220, %v219
  %v224 = vsel %vm103, %v209, 0
  %v227 = vsel %vm103, %v210, 0
  %v230 = vsel %vm103, %v211, 0
  %v233 = vsel %vm103, %v212, 0
  %v236 = vsel %vm103, %v213, 0
  %v239 = vsel %vm103, %v214, 0
  %v242 = vsel %vm103, %v215, 0
  %v245 = vsel %vm103, %v216, 0
  %247 = vmatpush.bf16.msra.mxu0 0
  %248 = vmatpush.bf16.msra.mxu0 0
  %249 = vmatpush.bf16.msra.mxu0 0
  %250 = vmatpush.bf16.msra.mxu0 0
  %251 = vmatpush.bf16.msra.mxu0 0
  %252 = vmatpush.bf16.msra.mxu0 0
  %253 = vmatpush.bf16.msra.mxu0 0
  %254 = vmatpush.bf16.msra.mxu0 %v221
  %255 = vmatmul.bf16.gmra.mxu0 %v224
  %v256 = vpop.f32.mrf.mxu0
  %v257 = vadd.f32 %v138, %v256
  %v258 = vpop.f32.mrf.mxu0
  %v259 = vadd.f32 %v140, %v258
  %260 = vmatmul.bf16.gmra.mxu0 %v227
  %v261 = vpop.f32.mrf.mxu0
  %v262 = vadd.f32 %v143, %v261
  %v263 = vpop.f32.mrf.mxu0
  %v264 = vadd.f32 %v145, %v263
  %265 = vmatmul.bf16.gmra.mxu0 %v230
  %v266 = vpop.f32.mrf.mxu0
  %v267 = vadd.f32 %v148, %v266
  %v268 = vpop.f32.mrf.mxu0
  %v269 = vadd.f32 %v150, %v268
  %270 = vmatmul.bf16.gmra.mxu0 %v233
  %v271 = vpop.f32.mrf.mxu0
  %v272 = vadd.f32 %v153, %v271
  %v273 = vpop.f32.mrf.mxu0
  %v274 = vadd.f32 %v155, %v273
  %275 = vmatmul.bf16.gmra.mxu0 %v236
  %v276 = vpop.f32.mrf.mxu0
  %v277 = vadd.f32 %v158, %v276
  %v278 = vpop.f32.mrf.mxu0
  %v279 = vadd.f32 %v160, %v278
  %280 = vmatmul.bf16.gmra.mxu0 %v239
  %v281 = vpop.f32.mrf.mxu0
  %v282 = vadd.f32 %v163, %v281
  %v283 = vpop.f32.mrf.mxu0
  %v284 = vadd.f32 %v165, %v283
  %285 = vmatmul.bf16.gmra.mxu0 %v242
  %v286 = vpop.f32.mrf.mxu0
  %v287 = vadd.f32 %v168, %v286
  %v288 = vpop.f32.mrf.mxu0
  %v289 = vadd.f32 %v170, %v288
  %290 = vmatmul.bf16.gmra.mxu0 %v245
  %v291 = vpop.f32.mrf.mxu0
  %v292 = vadd.f32 %v173, %v291
  %v293 = vpop.f32.mrf.mxu0
  %v294 = vadd.f32 %v175, %v293
  %295 = vdwg.mxu0
  %v296 = vld [vmem:[%s4] sm:$0x1]
  %v298 = vperm.slane %v296, 0
  %v300 = vadd.f32 %v257, %v298
  %v301 = vadd.f32 %v259, %v298
  %v302 = vadd.f32 %v262, %v298
  %v303 = vadd.f32 %v264, %v298
  %v304 = vadd.f32 %v267, %v298
  %v305 = vadd.f32 %v269, %v298
  %v306 = vadd.f32 %v272, %v298
  %v307 = vadd.f32 %v274, %v298
  %v308 = vadd.f32 %v277, %v298
  %v309 = vadd.f32 %v279, %v298
  %v310 = vadd.f32 %v282, %v298
  %v311 = vadd.f32 %v284, %v298
  %v312 = vadd.f32 %v287, %v298
  %v313 = vadd.f32 %v289, %v298
  %v314 = vadd.f32 %v292, %v298
  %v315 = vadd.f32 %v294, %v298
  %316 = vst.msk [vmem:[%s5] sm:$0xff] %vm103, %v300
  %317 = vst.msk [vmem:[%s5 + $0x8] sm:$0xff] %vm103, %v301
  %318 = vst.msk [vmem:[%s5 + $0x10] sm:$0xff] %vm103, %v302
  %319 = vst.msk [vmem:[%s5 + $0x18] sm:$0xff] %vm103, %v303
  %320 = vst.msk [vmem:[%s5 + $0x20] sm:$0xff] %vm103, %v304
  %321 = vst.msk [vmem:[%s5 + $0x28] sm:$0xff] %vm103, %v305
  %322 = vst.msk [vmem:[%s5 + $0x30] sm:$0xff] %vm103, %v306
  %323 = vst.msk [vmem:[%s5 + $0x38] sm:$0xff] %vm103, %v307
  %324 = vst.msk [vmem:[%s5 + $0x40] sm:$0xff] %vm103, %v308
  %325 = vst.msk [vmem:[%s5 + $0x48] sm:$0xff] %vm103, %v309
  %326 = vst.msk [vmem:[%s5 + $0x50] sm:$0xff] %vm103, %v310
  %327 = vst.msk [vmem:[%s5 + $0x58] sm:$0xff] %vm103, %v311
  %328 = vst.msk [vmem:[%s5 + $0x60] sm:$0xff] %vm103, %v312
  %329 = vst.msk [vmem:[%s5 + $0x68] sm:$0xff] %vm103, %v313
  %330 = vst.msk [vmem:[%s5 + $0x70] sm:$0xff] %vm103, %v314
  %331 = vst.msk [vmem:[%s5 + $0x78] sm:$0xff] %vm103, %v315
  // Predicated region
  $region22: #{didn_forward.49} parent=0 // pred_check
    _
  $region23: #{didn_forward.49} parent=0 // pred_check_branch
    %333 = sbr.rel (0) target = $region25
  $region24: #{didn_forward.49} parent=0 // pred_region
    _
  $region25: #{didn_forward.49} parent=0 // pred_fallthru
    _
  // Predicated region
  $region26: #{didn_forward.49} parent=0 // pred_check
    _
  $region27: #{didn_forward.49} parent=0 // pred_check_branch
    %335 = sbr.rel (0) target = $region29
  $region28: #{didn_forward.49} parent=0 // pred_region
    _
  $region29: #{didn_forward.49} parent=0 // pred_fallthru
    _

// kernel: split.1
$region0: #{split.1}
  #allocation0 [shape = 'u32[2048]{0}', space=vmem, size = 0x2000, scoped, tag = 'scoped memory for split.1']
  #allocation1 [shape = 'u32[2048]{0}', space=vmem, size = 0x2000, scoped, tag = 'scoped memory for split.1']
  #allocation2 [shape = 'u32[2048]{0}', space=vmem, size = 0x2000, scoped, tag = 'scoped memory for split.1']
  #allocation3 [shape = 'u32[2048]{0}', space=vmem, size = 0x2000, scoped, tag = 'scoped memory for split.1']
  #allocation4 [shape = 'u32[2048]{0}', space=vmem, size = 0x2000, scoped, tag = 'scoped memory for split.1']
  #allocation5 [shape = 's32[1]{0}', space=sflag, size = 0x4, scoped, tag = 'scoped memory for split.1']
  %s0 = inlined_call_operand.vmem [shape: bf16[4,8,8,16], index: 0, kind: input, shape index: {}]
  %s1 = inlined_call_operand.vmem [shape: bf16[2,8,8,16], index: 1, kind: output, shape index: {}]
  %s2 = scalar_lea.vmem %s0, 64
  %s3 = scalar_lea.vmem %s0, 64
  %s4 = scalar_lea.vmem %s0, 64
  %v5 = vld [vmem:[%s4] sm:$0xf]
  %v6 = vunpack.c.l.bf16 %v5
  %v7 = vunpack.c.h.bf16 %v5
  %v8 = vpack.c.bf16 0.0, %v6
  %9 = vst [vmem:[%s1] sm:$0xf] %v8
  %s10 = scalar_lea.vmem %s4, 32
  %v11 = vld [vmem:[%s10] sm:$0xf]
  %v12 = vunpack.c.l.bf16 %v11
  %v13 = vunpack.c.h.bf16 %v11
  %s14 = scalar_lea.vmem %s1, 32
  %v15 = vpack.c.bf16 0.0, %v12
  %16 = vst [vmem:[%s14] sm:$0xf] %v15
  %s17 = scalar_lea.vmem %s4, 4
  %v18 = vld [vmem:[%s17] sm:$0xf]
  %v19 = vunpack.c.l.bf16 %v18
  %v20 = vunpack.c.h.bf16 %v18
  %s21 = scalar_lea.vmem %s1, 4
  %v22 = vpack.c.bf16 0.0, %v19
  %23 = vst [vmem:[%s21] sm:$0xf] %v22
  %s24 = scalar_lea.vmem %s4, 36
  %v25 = vld [vmem:[%s24] sm:$0xf]
  %v26 = vunpack.c.l.bf16 %v25
  %v27 = vunpack.c.h.bf16 %v25
  %s28 = scalar_lea.vmem %s1, 36
  %v29 = vpack.c.bf16 0.0, %v26
  %30 = vst [vmem:[%s28] sm:$0xf] %v29
  %s31 = scalar_lea.vmem %s4, 8
  %v32 = vld [vmem:[%s31] sm:$0xf]
  %v33 = vunpack.c.l.bf16 %v32
  %v34 = vunpack.c.h.bf16 %v32
  %s35 = scalar_lea.vmem %s1, 8
  %v36 = vpack.c.bf16 0.0, %v33
  %37 = vst [vmem:[%s35] sm:$0xf] %v36
  %s38 = scalar_lea.vmem %s4, 40
  %v39 = vld [vmem:[%s38] sm:$0xf]
  %v40 = vunpack.c.l.bf16 %v39
  %v41 = vunpack.c.h.bf16 %v39
  %s42 = scalar_lea.vmem %s1, 40
  %v43 = vpack.c.bf16 0.0, %v40
  %44 = vst [vmem:[%s42] sm:$0xf] %v43
  %s45 = scalar_lea.vmem %s4, 12
  %v46 = vld [vmem:[%s45] sm:$0xf]
  %v47 = vunpack.c.l.bf16 %v46
  %v48 = vunpack.c.h.bf16 %v46
  %s49 = scalar_lea.vmem %s1, 12
  %v50 = vpack.c.bf16 0.0, %v47
  %51 = vst [vmem:[%s49] sm:$0xf] %v50
  %s52 = scalar_lea.vmem %s4, 44
  %v53 = vld [vmem:[%s52] sm:$0xf]
  %v54 = vunpack.c.l.bf16 %v53
  %v55 = vunpack.c.h.bf16 %v53
  %s56 = scalar_lea.vmem %s1, 44
  %v57 = vpack.c.bf16 0.0, %v54
  %58 = vst [vmem:[%s56] sm:$0xf] %v57
  %s59 = scalar_lea.vmem %s4, 16
  %v60 = vld [vmem:[%s59] sm:$0xf]
  %v61 = vunpack.c.l.bf16 %v60
  %v62 = vunpack.c.h.bf16 %v60
  %s63 = scalar_lea.vmem %s1, 16
  %v64 = vpack.c.bf16 0.0, %v61
  %65 = vst [vmem:[%s63] sm:$0xf] %v64
  %s66 = scalar_lea.vmem %s4, 48
  %v67 = vld [vmem:[%s66] sm:$0xf]
  %v68 = vunpack.c.l.bf16 %v67
  %v69 = vunpack.c.h.bf16 %v67
  %s70 = scalar_lea.vmem %s1, 48
  %v71 = vpack.c.bf16 0.0, %v68
  %72 = vst [vmem:[%s70] sm:$0xf] %v71
  %s73 = scalar_lea.vmem %s4, 20
  %v74 = vld [vmem:[%s73] sm:$0xf]
  %v75 = vunpack.c.l.bf16 %v74
  %v76 = vunpack.c.h.bf16 %v74
  %s77 = scalar_lea.vmem %s1, 20
  %v78 = vpack.c.bf16 0.0, %v75
  %79 = vst [vmem:[%s77] sm:$0xf] %v78
  %s80 = scalar_lea.vmem %s4, 52
  %v81 = vld [vmem:[%s80] sm:$0xf]
  %v82 = vunpack.c.l.bf16 %v81
  %v83 = vunpack.c.h.bf16 %v81
  %s84 = scalar_lea.vmem %s1, 52
  %v85 = vpack.c.bf16 0.0, %v82
  %86 = vst [vmem:[%s84] sm:$0xf] %v85
  %s87 = scalar_lea.vmem %s4, 24
  %v88 = vld [vmem:[%s87] sm:$0xf]
  %v89 = vunpack.c.l.bf16 %v88
  %v90 = vunpack.c.h.bf16 %v88
  %s91 = scalar_lea.vmem %s1, 24
  %v92 = vpack.c.bf16 0.0, %v89
  %93 = vst [vmem:[%s91] sm:$0xf] %v92
  %s94 = scalar_lea.vmem %s4, 56
  %v95 = vld [vmem:[%s94] sm:$0xf]
  %v96 = vunpack.c.l.bf16 %v95
  %v97 = vunpack.c.h.bf16 %v95
  %s98 = scalar_lea.vmem %s1, 56
  %v99 = vpack.c.bf16 0.0, %v96
  %100 = vst [vmem:[%s98] sm:$0xf] %v99
  %s101 = scalar_lea.vmem %s4, 28
  %v102 = vld [vmem:[%s101] sm:$0xf]
  %v103 = vunpack.c.l.bf16 %v102
  %v104 = vunpack.c.h.bf16 %v102
  %s105 = scalar_lea.vmem %s1, 28
  %v106 = vpack.c.bf16 0.0, %v103
  %107 = vst [vmem:[%s105] sm:$0xf] %v106
  %s108 = scalar_lea.vmem %s4, 60
  %v109 = vld [vmem:[%s108] sm:$0xf]
  %v110 = vunpack.c.l.bf16 %v109
  %v111 = vunpack.c.h.bf16 %v109
  %s112 = scalar_lea.vmem %s1, 60
  %v113 = vpack.c.bf16 0.0, %v110
  %114 = vst [vmem:[%s112] sm:$0xf] %v113

// kernel: didn_forward.67
$region0: #{didn_forward.67}
  #allocation0 [shape = 'u32[]', space=smem, size = 0x4, offset = 0x4, fixed_abs, tag = 'smem constant byte address 0x4 - core index']
  #allocation1 [shape = 'u32[72,128]{1,0:T(1,128)}', space=vmem, size = 0x9000, scoped, tag = 'internal scratch']
  #allocation2 [shape = 'f32[1,1]{1,0:T(1,128)S(6)}', space=smem, size = 0x200, scoped, tag = 'scoped memory for didn_forward.67']
  %s0 = inlined_call_operand.vmem [shape: bf16[256,144], index: 0, kind: input, shape index: {}]
  %s1 = inlined_call_operand.vmem [shape: bf16[144,16], index: 1, kind: input, shape index: {}]
  %s2 = inlined_call_operand.vmem [shape: f32[1,16], index: 2, kind: input, shape index: {}]
  %s3 = inlined_call_operand.<no memory space> [shape: f32[1,1], index: 3, kind: input, shape index: {}]
  %s4 = inlined_call_operand.vmem [shape: f32[256,16], index: 4, kind: output, shape index: {}]
  %s5 = sld [smem:[#allocation0]]
  $region26: #{didn_forward.67} parent=0
    _
  %s7 = ssub.s32 1, %s5
  %s8 = scalar_select 0, %s7, %s5
  %9 = sst [smem:[#allocation2]] %s3
  // Predicated region
  $region2: #{didn_forward.67} parent=0 // pred_check
    _
  $region3: #{didn_forward.67} parent=0 // pred_check_branch
    %11 = sbr.rel (0) target = $region5
  $region4: #{didn_forward.67} parent=0 // pred_region
    _
  $region5: #{didn_forward.67} parent=0 // pred_fallthru
    _
  // Predicated region
  $region6: #{didn_forward.67} parent=0 // pred_check
    _
  $region7: #{didn_forward.67} parent=0 // pred_check_branch
    %13 = sbr.rel (0) target = $region9
  $region8: #{didn_forward.67} parent=0 // pred_region
    _
  $region9: #{didn_forward.67} parent=0 // pred_fallthru
    _
  // Predicated region
  $region10: #{didn_forward.67} parent=0 // pred_check
    _
  $region11: #{didn_forward.67} parent=0 // pred_check_branch
    %15 = sbr.rel (0) target = $region13
  $region12: #{didn_forward.67} parent=0 // pred_region
    _
  $region13: #{didn_forward.67} parent=0 // pred_fallthru
    _
  // Predicated region
  $region14: #{didn_forward.67} parent=0 // pred_check
    _
  $region15: #{didn_forward.67} parent=0 // pred_check_branch
    %17 = sbr.rel (0) target = $region17
  $region16: #{didn_forward.67} parent=0 // pred_region
    _
  $region17: #{didn_forward.67} parent=0 // pred_fallthru
    _
  %v19 = vld [vmem:[%s0] sm:$0xff]
  %v20 = vld [vmem:[%s0 + $0x8] sm:$0xff]
  %v21 = vld [vmem:[%s0 + $0x10] sm:$0xff]
  %v22 = vld [vmem:[%s0 + $0x18] sm:$0xff]
  %v23 = vld [vmem:[%s0 + $0x20] sm:$0xff]
  %v24 = vld [vmem:[%s0 + $0x28] sm:$0xff]
  %v25 = vld [vmem:[%s0 + $0x30] sm:$0xff]
  %v26 = vld [vmem:[%s0 + $0x38] sm:$0xff]
  %v27 = vld [vmem:[%s0 + $0x40] sm:$0xff]
  %v28 = vld [vmem:[%s0 + $0x48] sm:$0xff]
  %v29 = vld [vmem:[%s0 + $0x50] sm:$0xff]
  %v30 = vld [vmem:[%s0 + $0x58] sm:$0xff]
  %v31 = vld [vmem:[%s0 + $0x60] sm:$0xff]
  %v32 = vld [vmem:[%s0 + $0x68] sm:$0xff]
  %v33 = vld [vmem:[%s0 + $0x70] sm:$0xff]
  %v34 = vld [vmem:[%s0 + $0x78] sm:$0xff]
  %v35 = vld [vmem:[%s0 + $0x80] sm:$0xff]
  %v36 = vld [vmem:[%s0 + $0x88] sm:$0xff]
  %v37 = vld [vmem:[%s0 + $0x90] sm:$0xff]
  %v38 = vld [vmem:[%s0 + $0x98] sm:$0xff]
  %v39 = vld [vmem:[%s0 + $0xa0] sm:$0xff]
  %v40 = vld [vmem:[%s0 + $0xa8] sm:$0xff]
  %v41 = vld [vmem:[%s0 + $0xb0] sm:$0xff]
  %v42 = vld [vmem:[%s0 + $0xb8] sm:$0xff]
  %v43 = vld [vmem:[%s0 + $0xc0] sm:$0xff]
  %v44 = vld [vmem:[%s0 + $0xc8] sm:$0xff]
  %v45 = vld [vmem:[%s0 + $0xd0] sm:$0xff]
  %v46 = vld [vmem:[%s0 + $0xd8] sm:$0xff]
  %v47 = vld [vmem:[%s0 + $0xe0] sm:$0xff]
  %v48 = vld [vmem:[%s0 + $0xe8] sm:$0xff]
  %v49 = vld [vmem:[%s0 + $0xf0] sm:$0xff]
  %v50 = vld [vmem:[%s0 + $0xf8] sm:$0xff]
  %v51 = vld [vmem:[%s1] sm:$0xf]
  %v52 = vld [vmem:[%s1 + $0x4] sm:$0xf]
  %v53 = vld [vmem:[%s1 + $0x8] sm:$0xf]
  %v54 = vld [vmem:[%s1 + $0xc] sm:$0xf]
  %v55 = vld [vmem:[%s1 + $0x10] sm:$0xf]
  %v56 = vld [vmem:[%s1 + $0x14] sm:$0xf]
  %v57 = vld [vmem:[%s1 + $0x18] sm:$0xf]
  %v58 = vld [vmem:[%s1 + $0x1c] sm:$0xf]
  %v59 = vld [vmem:[%s1 + $0x20] sm:$0xf]
  %v60 = vld [vmem:[%s1 + $0x24] sm:$0xf]
  %v61 = vld [vmem:[%s1 + $0x28] sm:$0xf]
  %v62 = vld [vmem:[%s1 + $0x2c] sm:$0xf]
  %v63 = vld [vmem:[%s1 + $0x30] sm:$0xf]
  %v64 = vld [vmem:[%s1 + $0x34] sm:$0xf]
  %v65 = vld [vmem:[%s1 + $0x38] sm:$0xf]
  %v66 = vld [vmem:[%s1 + $0x3c] sm:$0xf]
  %v67 = vld [vmem:[%s1 + $0x40] sm:$0xf]
  %v68 = vld [vmem:[%s1 + $0x44] sm:$0xf]
  %v69 = vld [vmem:[%s2] sm:$0x1]
  %v71 = vperm.slane %v69, 0
  %v105 = vunpack.c.l.b16 %v19
  %v106 = vunpack.c.h.b16 %v19
  %v107 = vunpack.c.l.b16 %v20
  %v108 = vunpack.c.h.b16 %v20
  %v109 = vunpack.c.l.b16 %v21
  %v110 = vunpack.c.h.b16 %v21
  %v111 = vunpack.c.l.b16 %v22
  %v112 = vunpack.c.h.b16 %v22
  %v113 = vunpack.c.l.b16 %v23
  %v114 = vunpack.c.h.b16 %v23
  %v115 = vunpack.c.l.b16 %v24
  %v116 = vunpack.c.h.b16 %v24
  %v117 = vunpack.c.l.b16 %v25
  %v118 = vunpack.c.h.b16 %v25
  %v119 = vunpack.c.l.b16 %v26
  %v120 = vunpack.c.h.b16 %v26
  %v121 = vunpack.c.l.b16 %v27
  %v122 = vunpack.c.h.b16 %v27
  %v123 = vunpack.c.l.b16 %v28
  %v124 = vunpack.c.h.b16 %v28
  %v125 = vunpack.c.l.b16 %v29
  %v126 = vunpack.c.h.b16 %v29
  %v127 = vunpack.c.l.b16 %v30
  %v128 = vunpack.c.h.b16 %v30
  %v129 = vunpack.c.l.b16 %v31
  %v130 = vunpack.c.h.b16 %v31
  %v131 = vunpack.c.l.b16 %v32
  %v132 = vunpack.c.h.b16 %v32
  %v133 = vunpack.c.l.b16 %v33
  %v134 = vunpack.c.h.b16 %v33
  %v135 = vunpack.c.l.b16 %v34
  %v136 = vunpack.c.h.b16 %v34
  %v137 = vunpack.c.l.b16 %v35
  %v138 = vunpack.c.h.b16 %v35
  %v139 = vunpack.c.l.b16 %v36
  %v140 = vunpack.c.h.b16 %v36
  %v141 = vunpack.c.l.b16 %v37
  %v142 = vunpack.c.h.b16 %v37
  %v143 = vunpack.c.l.b16 %v38
  %v144 = vunpack.c.h.b16 %v38
  %v145 = vunpack.c.l.b16 %v39
  %v146 = vunpack.c.h.b16 %v39
  %v147 = vunpack.c.l.b16 %v40
  %v148 = vunpack.c.h.b16 %v40
  %v149 = vunpack.c.l.b16 %v41
  %v150 = vunpack.c.h.b16 %v41
  %v151 = vunpack.c.l.b16 %v42
  %v152 = vunpack.c.h.b16 %v42
  %v153 = vunpack.c.l.b16 %v43
  %v154 = vunpack.c.h.b16 %v43
  %v155 = vunpack.c.l.b16 %v44
  %v156 = vunpack.c.h.b16 %v44
  %v157 = vunpack.c.l.b16 %v45
  %v158 = vunpack.c.h.b16 %v45
  %v159 = vunpack.c.l.b16 %v46
  %v160 = vunpack.c.h.b16 %v46
  %v161 = vunpack.c.l.b16 %v47
  %v162 = vunpack.c.h.b16 %v47
  %v163 = vunpack.c.l.b16 %v48
  %v164 = vunpack.c.h.b16 %v48
  %v165 = vunpack.c.l.b16 %v49
  %v166 = vunpack.c.h.b16 %v49
  %v167 = vunpack.c.l.b16 %v50
  %v168 = vunpack.c.h.b16 %v50
  %v169 = vpack.c.b16 %v107, %v105
  %v170 = vpack.c.b16 %v108, %v106
  %v171 = vpack.c.b16 %v111, %v109
  %v172 = vpack.c.b16 %v112, %v110
  %v173 = vpack.c.b16 %v115, %v113
  %v174 = vpack.c.b16 %v116, %v114
  %v175 = vpack.c.b16 %v119, %v117
  %v176 = vpack.c.b16 %v120, %v118
  %v177 = vpack.c.b16 %v123, %v121
  %v178 = vpack.c.b16 %v124, %v122
  %v179 = vpack.c.b16 %v127, %v125
  %v180 = vpack.c.b16 %v128, %v126
  %v181 = vpack.c.b16 %v131, %v129
  %v182 = vpack.c.b16 %v132, %v130
  %v183 = vpack.c.b16 %v135, %v133
  %v184 = vpack.c.b16 %v136, %v134
  %v185 = vpack.c.b16 %v139, %v137
  %v186 = vpack.c.b16 %v140, %v138
  %v187 = vpack.c.b16 %v143, %v141
  %v188 = vpack.c.b16 %v144, %v142
  %v189 = vpack.c.b16 %v147, %v145
  %v190 = vpack.c.b16 %v148, %v146
  %v191 = vpack.c.b16 %v151, %v149
  %v192 = vpack.c.b16 %v152, %v150
  %v193 = vpack.c.b16 %v155, %v153
  %v194 = vpack.c.b16 %v156, %v154
  %v195 = vpack.c.b16 %v159, %v157
  %v196 = vpack.c.b16 %v160, %v158
  %v197 = vpack.c.b16 %v163, %v161
  %v198 = vpack.c.b16 %v164, %v162
  %v199 = vpack.c.b16 %v167, %v165
  %v200 = vpack.c.b16 %v168, %v166
  %v235 = vunpack.c.l.b16 %v51
  %v236 = vunpack.c.l.b16 %v52
  %v237 = vunpack.c.l.b16 %v53
  %v238 = vunpack.c.l.b16 %v54
  %v239 = vunpack.c.l.b16 %v55
  %v240 = vunpack.c.l.b16 %v56
  %v241 = vunpack.c.l.b16 %v57
  %v242 = vunpack.c.l.b16 %v58
  %v243 = vunpack.c.l.b16 %v59
  %v244 = vunpack.c.l.b16 %v60
  %v245 = vunpack.c.l.b16 %v61
  %v246 = vunpack.c.l.b16 %v62
  %v247 = vunpack.c.l.b16 %v63
  %v248 = vunpack.c.l.b16 %v64
  %v249 = vunpack.c.l.b16 %v65
  %v250 = vunpack.c.l.b16 %v66
  %v251 = vunpack.c.l.b16 %v67
  %v252 = vunpack.c.l.b16 %v68
  %v253 = vpack.c.b16 %v236, %v235
  %v254 = vpack.c.b16 %v238, %v237
  %v255 = vpack.c.b16 %v240, %v239
  %v256 = vpack.c.b16 %v242, %v241
  %v257 = vpack.c.b16 %v244, %v243
  %v258 = vpack.c.b16 %v246, %v245
  %v259 = vpack.c.b16 %v248, %v247
  %v260 = vpack.c.b16 %v250, %v249
  %v261 = vpack.c.b16 %v252, %v251
  %vm271 = vcmask 130048
  %v273 = vsel %vm271, %v170, 0
  %v276 = vsel %vm271, %v172, 0
  %v279 = vsel %vm271, %v174, 0
  %v282 = vsel %vm271, %v176, 0
  %v285 = vsel %vm271, %v178, 0
  %v288 = vsel %vm271, %v180, 0
  %v291 = vsel %vm271, %v182, 0
  %v294 = vsel %vm271, %v184, 0
  %v297 = vsel %vm271, %v186, 0
  %v300 = vsel %vm271, %v188, 0
  %v303 = vsel %vm271, %v190, 0
  %v306 = vsel %vm271, %v192, 0
  %v309 = vsel %vm271, %v194, 0
  %v312 = vsel %vm271, %v196, 0
  %v315 = vsel %vm271, %v198, 0
  %v318 = vsel %vm271, %v200, 0
  %320 = vmatpush.bf16.msra.mxu0 %v260
  %321 = vmatpush.bf16.msra.mxu0 %v259
  %322 = vmatpush.bf16.msra.mxu0 %v258
  %323 = vmatpush.bf16.msra.mxu0 %v257
  %324 = vmatpush.bf16.msra.mxu0 %v256
  %325 = vmatpush.bf16.msra.mxu0 %v255
  %326 = vmatpush.bf16.msra.mxu0 %v254
  %327 = vmatpush.bf16.msra.mxu0 %v253
  %328 = vmatmul.bf16.gmra.mxu0 %v169
  %v329 = vpop.f32.mrf.mxu0
  %v330 = vadd.f32 %v71, %v329
  %v331 = vpop.f32.mrf.mxu0
  %v332 = vadd.f32 %v71, %v331
  %333 = vmatmul.bf16.gmra.mxu0 %v171
  %v334 = vpop.f32.mrf.mxu0
  %v335 = vadd.f32 %v71, %v334
  %v336 = vpop.f32.mrf.mxu0
  %v337 = vadd.f32 %v71, %v336
  %338 = vmatmul.bf16.gmra.mxu0 %v173
  %v339 = vpop.f32.mrf.mxu0
  %v340 = vadd.f32 %v71, %v339
  %v341 = vpop.f32.mrf.mxu0
  %v342 = vadd.f32 %v71, %v341
  %343 = vmatmul.bf16.gmra.mxu0 %v175
  %v344 = vpop.f32.mrf.mxu0
  %v345 = vadd.f32 %v71, %v344
  %v346 = vpop.f32.mrf.mxu0
  %v347 = vadd.f32 %v71, %v346
  %348 = vmatmul.bf16.gmra.mxu0 %v177
  %v349 = vpop.f32.mrf.mxu0
  %v350 = vadd.f32 %v71, %v349
  %v351 = vpop.f32.mrf.mxu0
  %v352 = vadd.f32 %v71, %v351
  %353 = vmatmul.bf16.gmra.mxu0 %v179
  %v354 = vpop.f32.mrf.mxu0
  %v355 = vadd.f32 %v71, %v354
  %v356 = vpop.f32.mrf.mxu0
  %v357 = vadd.f32 %v71, %v356
  %358 = vmatmul.bf16.gmra.mxu0 %v181
  %v359 = vpop.f32.mrf.mxu0
  %v360 = vadd.f32 %v71, %v359
  %v361 = vpop.f32.mrf.mxu0
  %v362 = vadd.f32 %v71, %v361
  %363 = vmatmul.bf16.gmra.mxu0 %v183
  %v364 = vpop.f32.mrf.mxu0
  %v365 = vadd.f32 %v71, %v364
  %v366 = vpop.f32.mrf.mxu0
  %v367 = vadd.f32 %v71, %v366
  %368 = vmatmul.bf16.gmra.mxu0 %v185
  %v369 = vpop.f32.mrf.mxu0
  %v370 = vadd.f32 %v71, %v369
  %v371 = vpop.f32.mrf.mxu0
  %v372 = vadd.f32 %v71, %v371
  %373 = vmatmul.bf16.gmra.mxu0 %v187
  %v374 = vpop.f32.mrf.mxu0
  %v375 = vadd.f32 %v71, %v374
  %v376 = vpop.f32.mrf.mxu0
  %v377 = vadd.f32 %v71, %v376
  %378 = vmatmul.bf16.gmra.mxu0 %v189
  %v379 = vpop.f32.mrf.mxu0
  %v380 = vadd.f32 %v71, %v379
  %v381 = vpop.f32.mrf.mxu0
  %v382 = vadd.f32 %v71, %v381
  %383 = vmatmul.bf16.gmra.mxu0 %v191
  %v384 = vpop.f32.mrf.mxu0
  %v385 = vadd.f32 %v71, %v384
  %v386 = vpop.f32.mrf.mxu0
  %v387 = vadd.f32 %v71, %v386
  %388 = vmatmul.bf16.gmra.mxu0 %v193
  %v389 = vpop.f32.mrf.mxu0
  %v390 = vadd.f32 %v71, %v389
  %v391 = vpop.f32.mrf.mxu0
  %v392 = vadd.f32 %v71, %v391
  %393 = vmatmul.bf16.gmra.mxu0 %v195
  %v394 = vpop.f32.mrf.mxu0
  %v395 = vadd.f32 %v71, %v394
  %v396 = vpop.f32.mrf.mxu0
  %v397 = vadd.f32 %v71, %v396
  %398 = vmatmul.bf16.gmra.mxu0 %v197
  %v399 = vpop.f32.mrf.mxu0
  %v400 = vadd.f32 %v71, %v399
  %v401 = vpop.f32.mrf.mxu0
  %v402 = vadd.f32 %v71, %v401
  %403 = vmatmul.bf16.gmra.mxu0 %v199
  %v404 = vpop.f32.mrf.mxu0
  %v405 = vadd.f32 %v71, %v404
  %v406 = vpop.f32.mrf.mxu0
  %v407 = vadd.f32 %v71, %v406
  %408 = vdwg.mxu0
  %409 = vmatpush.bf16.msra.mxu0 0
  %410 = vmatpush.bf16.msra.mxu0 0
  %411 = vmatpush.bf16.msra.mxu0 0
  %412 = vmatpush.bf16.msra.mxu0 0
  %413 = vmatpush.bf16.msra.mxu0 0
  %414 = vmatpush.bf16.msra.mxu0 0
  %415 = vmatpush.bf16.msra.mxu0 0
  %416 = vmatpush.bf16.msra.mxu0 %v261
  %417 = vmatmul.bf16.gmra.mxu0 %v273
  %v418 = vpop.f32.mrf.mxu0
  %v419 = vadd.f32 %v330, %v418
  %v420 = vpop.f32.mrf.mxu0
  %v421 = vadd.f32 %v332, %v420
  %422 = vmatmul.bf16.gmra.mxu0 %v276
  %v423 = vpop.f32.mrf.mxu0
  %v424 = vadd.f32 %v335, %v423
  %v425 = vpop.f32.mrf.mxu0
  %v426 = vadd.f32 %v337, %v425
  %427 = vmatmul.bf16.gmra.mxu0 %v279
  %v428 = vpop.f32.mrf.mxu0
  %v429 = vadd.f32 %v340, %v428
  %v430 = vpop.f32.mrf.mxu0
  %v431 = vadd.f32 %v342, %v430
  %432 = vmatmul.bf16.gmra.mxu0 %v282
  %v433 = vpop.f32.mrf.mxu0
  %v434 = vadd.f32 %v345, %v433
  %v435 = vpop.f32.mrf.mxu0
  %v436 = vadd.f32 %v347, %v435
  %437 = vmatmul.bf16.gmra.mxu0 %v285
  %v438 = vpop.f32.mrf.mxu0
  %v439 = vadd.f32 %v350, %v438
  %v440 = vpop.f32.mrf.mxu0
  %v441 = vadd.f32 %v352, %v440
  %442 = vmatmul.bf16.gmra.mxu0 %v288
  %v443 = vpop.f32.mrf.mxu0
  %v444 = vadd.f32 %v355, %v443
  %v445 = vpop.f32.mrf.mxu0
  %v446 = vadd.f32 %v357, %v445
  %447 = vmatmul.bf16.gmra.mxu0 %v291
  %v448 = vpop.f32.mrf.mxu0
  %v449 = vadd.f32 %v360, %v448
  %v450 = vpop.f32.mrf.mxu0
  %v451 = vadd.f32 %v362, %v450
  %452 = vmatmul.bf16.gmra.mxu0 %v294
  %v453 = vpop.f32.mrf.mxu0
  %v454 = vadd.f32 %v365, %v453
  %v455 = vpop.f32.mrf.mxu0
  %v456 = vadd.f32 %v367, %v455
  %457 = vmatmul.bf16.gmra.mxu0 %v297
  %v458 = vpop.f32.mrf.mxu0
  %v459 = vadd.f32 %v370, %v458
  %v460 = vpop.f32.mrf.mxu0
  %v461 = vadd.f32 %v372, %v460
  %462 = vmatmul.bf16.gmra.mxu0 %v300
  %v463 = vpop.f32.mrf.mxu0
  %v464 = vadd.f32 %v375, %v463
  %v465 = vpop.f32.mrf.mxu0
  %v466 = vadd.f32 %v377, %v465
  %467 = vmatmul.bf16.gmra.mxu0 %v303
  %v468 = vpop.f32.mrf.mxu0
  %v469 = vadd.f32 %v380, %v468
  %v470 = vpop.f32.mrf.mxu0
  %v471 = vadd.f32 %v382, %v470
  %472 = vmatmul.bf16.gmra.mxu0 %v306
  %v473 = vpop.f32.mrf.mxu0
  %v474 = vadd.f32 %v385, %v473
  %v475 = vpop.f32.mrf.mxu0
  %v476 = vadd.f32 %v387, %v475
  %477 = vmatmul.bf16.gmra.mxu0 %v309
  %v478 = vpop.f32.mrf.mxu0
  %v479 = vadd.f32 %v390, %v478
  %v480 = vpop.f32.mrf.mxu0
  %v481 = vadd.f32 %v392, %v480
  %482 = vmatmul.bf16.gmra.mxu0 %v312
  %v483 = vpop.f32.mrf.mxu0
  %v484 = vadd.f32 %v395, %v483
  %v485 = vpop.f32.mrf.mxu0
  %v486 = vadd.f32 %v397, %v485
  %487 = vmatmul.bf16.gmra.mxu0 %v315
  %v488 = vpop.f32.mrf.mxu0
  %v489 = vadd.f32 %v400, %v488
  %v490 = vpop.f32.mrf.mxu0
  %v491 = vadd.f32 %v402, %v490
  %492 = vmatmul.bf16.gmra.mxu0 %v318
  %v493 = vpop.f32.mrf.mxu0
  %v494 = vadd.f32 %v405, %v493
  %v495 = vpop.f32.mrf.mxu0
  %v496 = vadd.f32 %v407, %v495
  %497 = vdwg.mxu0
  %s498 = sld [smem:[#allocation2]]
  %vm499 = vcmp.ge.f32.partialorder %v419, 0.0
  %vm500 = vcmp.ge.f32.partialorder %v421, 0.0
  %vm501 = vcmp.ge.f32.partialorder %v424, 0.0
  %vm502 = vcmp.ge.f32.partialorder %v426, 0.0
  %vm503 = vcmp.ge.f32.partialorder %v429, 0.0
  %vm504 = vcmp.ge.f32.partialorder %v431, 0.0
  %vm505 = vcmp.ge.f32.partialorder %v434, 0.0
  %vm506 = vcmp.ge.f32.partialorder %v436, 0.0
  %vm507 = vcmp.ge.f32.partialorder %v439, 0.0
  %vm508 = vcmp.ge.f32.partialorder %v441, 0.0
  %vm509 = vcmp.ge.f32.partialorder %v444, 0.0
  %vm510 = vcmp.ge.f32.partialorder %v446, 0.0
  %vm511 = vcmp.ge.f32.partialorder %v449, 0.0
  %vm512 = vcmp.ge.f32.partialorder %v451, 0.0
  %vm513 = vcmp.ge.f32.partialorder %v454, 0.0
  %vm514 = vcmp.ge.f32.partialorder %v456, 0.0
  %vm515 = vcmp.ge.f32.partialorder %v459, 0.0
  %vm516 = vcmp.ge.f32.partialorder %v461, 0.0
  %vm517 = vcmp.ge.f32.partialorder %v464, 0.0
  %vm518 = vcmp.ge.f32.partialorder %v466, 0.0
  %vm519 = vcmp.ge.f32.partialorder %v469, 0.0
  %vm520 = vcmp.ge.f32.partialorder %v471, 0.0
  %vm521 = vcmp.ge.f32.partialorder %v474, 0.0
  %vm522 = vcmp.ge.f32.partialorder %v476, 0.0
  %vm523 = vcmp.ge.f32.partialorder %v479, 0.0
  %vm524 = vcmp.ge.f32.partialorder %v481, 0.0
  %vm525 = vcmp.ge.f32.partialorder %v484, 0.0
  %vm526 = vcmp.ge.f32.partialorder %v486, 0.0
  %vm527 = vcmp.ge.f32.partialorder %v489, 0.0
  %vm528 = vcmp.ge.f32.partialorder %v491, 0.0
  %vm529 = vcmp.ge.f32.partialorder %v494, 0.0
  %vm530 = vcmp.ge.f32.partialorder %v496, 0.0
  %v531 = vstv %s498
  %v532 = vmul.f32 %v531, %v419
  %v533 = vmul.f32 %v531, %v421
  %v534 = vmul.f32 %v531, %v424
  %v535 = vmul.f32 %v531, %v426
  %v536 = vmul.f32 %v531, %v429
  %v537 = vmul.f32 %v531, %v431
  %v538 = vmul.f32 %v531, %v434
  %v539 = vmul.f32 %v531, %v436
  %v540 = vmul.f32 %v531, %v439
  %v541 = vmul.f32 %v531, %v441
  %v542 = vmul.f32 %v531, %v444
  %v543 = vmul.f32 %v531, %v446
  %v544 = vmul.f32 %v531, %v449
  %v545 = vmul.f32 %v531, %v451
  %v546 = vmul.f32 %v531, %v454
  %v547 = vmul.f32 %v531, %v456
  %v548 = vmul.f32 %v531, %v459
  %v549 = vmul.f32 %v531, %v461
  %v550 = vmul.f32 %v531, %v464
  %v551 = vmul.f32 %v531, %v466
  %v552 = vmul.f32 %v531, %v469
  %v553 = vmul.f32 %v531, %v471
  %v554 = vmul.f32 %v531, %v474
  %v555 = vmul.f32 %v531, %v476
  %v556 = vmul.f32 %v531, %v479
  %v557 = vmul.f32 %v531, %v481
  %v558 = vmul.f32 %v531, %v484
  %v559 = vmul.f32 %v531, %v486
  %v560 = vmul.f32 %v531, %v489
  %v561 = vmul.f32 %v531, %v491
  %v562 = vmul.f32 %v531, %v494
  %v563 = vmul.f32 %v531, %v496
  %v564 = vsel %vm499, %v419, %v532
  %v565 = vsel %vm500, %v421, %v533
  %v566 = vsel %vm501, %v424, %v534
  %v567 = vsel %vm502, %v426, %v535
  %v568 = vsel %vm503, %v429, %v536
  %v569 = vsel %vm504, %v431, %v537
  %v570 = vsel %vm505, %v434, %v538
  %v571 = vsel %vm506, %v436, %v539
  %v572 = vsel %vm507, %v439, %v540
  %v573 = vsel %vm508, %v441, %v541
  %v574 = vsel %vm509, %v444, %v542
  %v575 = vsel %vm510, %v446, %v543
  %v576 = vsel %vm511, %v449, %v544
  %v577 = vsel %vm512, %v451, %v545
  %v578 = vsel %vm513, %v454, %v546
  %v579 = vsel %vm514, %v456, %v547
  %v580 = vsel %vm515, %v459, %v548
  %v581 = vsel %vm516, %v461, %v549
  %v582 = vsel %vm517, %v464, %v550
  %v583 = vsel %vm518, %v466, %v551
  %v584 = vsel %vm519, %v469, %v552
  %v585 = vsel %vm520, %v471, %v553
  %v586 = vsel %vm521, %v474, %v554
  %v587 = vsel %vm522, %v476, %v555
  %v588 = vsel %vm523, %v479, %v556
  %v589 = vsel %vm524, %v481, %v557
  %v590 = vsel %vm525, %v484, %v558
  %v591 = vsel %vm526, %v486, %v559
  %v592 = vsel %vm527, %v489, %v560
  %v593 = vsel %vm528, %v491, %v561
  %v594 = vsel %vm529, %v494, %v562
  %v595 = vsel %vm530, %v496, %v563
  %596 = vst.msk [vmem:[%s4] sm:$0xff] %vm271, %v564
  %597 = vst.msk [vmem:[%s4 + $0x8] sm:$0xff] %vm271, %v565
  %598 = vst.msk [vmem:[%s4 + $0x10] sm:$0xff] %vm271, %v566
  %599 = vst.msk [vmem:[%s4 + $0x18] sm:$0xff] %vm271, %v567
  %600 = vst.msk [vmem:[%s4 + $0x20] sm:$0xff] %vm271, %v568
  %601 = vst.msk [vmem:[%s4 + $0x28] sm:$0xff] %vm271, %v569
  %602 = vst.msk [vmem:[%s4 + $0x30] sm:$0xff] %vm271, %v570
  %603 = vst.msk [vmem:[%s4 + $0x38] sm:$0xff] %vm271, %v571
  %604 = vst.msk [vmem:[%s4 + $0x40] sm:$0xff] %vm271, %v572
  %605 = vst.msk [vmem:[%s4 + $0x48] sm:$0xff] %vm271, %v573
  %606 = vst.msk [vmem:[%s4 + $0x50] sm:$0xff] %vm271, %v574
  %607 = vst.msk [vmem:[%s4 + $0x58] sm:$0xff] %vm271, %v575
  %608 = vst.msk [vmem:[%s4 + $0x60] sm:$0xff] %vm271, %v576
  %609 = vst.msk [vmem:[%s4 + $0x68] sm:$0xff] %vm271, %v577
  %610 = vst.msk [vmem:[%s4 + $0x70] sm:$0xff] %vm271, %v578
  %611 = vst.msk [vmem:[%s4 + $0x78] sm:$0xff] %vm271, %v579
  %612 = vst.msk [vmem:[%s4 + $0x80] sm:$0xff] %vm271, %v580
  %613 = vst.msk [vmem:[%s4 + $0x88] sm:$0xff] %vm271, %v581
  %614 = vst.msk [vmem:[%s4 + $0x90] sm:$0xff] %vm271, %v582
  %615 = vst.msk [vmem:[%s4 + $0x98] sm:$0xff] %vm271, %v583
  %616 = vst.msk [vmem:[%s4 + $0xa0] sm:$0xff] %vm271, %v584
  %617 = vst.msk [vmem:[%s4 + $0xa8] sm:$0xff] %vm271, %v585
  %618 = vst.msk [vmem:[%s4 + $0xb0] sm:$0xff] %vm271, %v586
  %619 = vst.msk [vmem:[%s4 + $0xb8] sm:$0xff] %vm271, %v587
  %620 = vst.msk [vmem:[%s4 + $0xc0] sm:$0xff] %vm271, %v588
  %621 = vst.msk [vmem:[%s4 + $0xc8] sm:$0xff] %vm271, %v589
  %622 = vst.msk [vmem:[%s4 + $0xd0] sm:$0xff] %vm271, %v590
  %623 = vst.msk [vmem:[%s4 + $0xd8] sm:$0xff] %vm271, %v591
  %624 = vst.msk [vmem:[%s4 + $0xe0] sm:$0xff] %vm271, %v592
  %625 = vst.msk [vmem:[%s4 + $0xe8] sm:$0xff] %vm271, %v593
  %626 = vst.msk [vmem:[%s4 + $0xf0] sm:$0xff] %vm271, %v594
  %627 = vst.msk [vmem:[%s4 + $0xf8] sm:$0xff] %vm271, %v595
  // Predicated region
  $region18: #{didn_forward.67} parent=0 // pred_check
    _
  $region19: #{didn_forward.67} parent=0 // pred_check_branch
    %629 = sbr.rel (0) target = $region21
  $region20: #{didn_forward.67} parent=0 // pred_region
    _
  $region21: #{didn_forward.67} parent=0 // pred_fallthru
    _
  // Predicated region
  $region22: #{didn_forward.67} parent=0 // pred_check
    _
  $region23: #{didn_forward.67} parent=0 // pred_check_branch
    %631 = sbr.rel (0) target = $region25
  $region24: #{didn_forward.67} parent=0 // pred_region
    _
  $region25: #{didn_forward.67} parent=0 // pred_fallthru
    _

// kernel: didn_forward.69
$region0: #{didn_forward.69}
  #allocation0 [shape = 'u32[]', space=smem, size = 0x4, offset = 0x4, fixed_abs, tag = 'smem constant byte address 0x4 - core index']
  #allocation1 [shape = 'u32[72,128]{1,0:T(1,128)}', space=vmem, size = 0x9000, scoped, tag = 'internal scratch']
  %s0 = inlined_call_operand.vmem [shape: bf16[256,144], index: 0, kind: input, shape index: {}]
  %s1 = inlined_call_operand.vmem [shape: bf16[144,16], index: 1, kind: input, shape index: {}]
  %s2 = inlined_call_operand.vmem [shape: f32[1,16], index: 2, kind: input, shape index: {}]
  %s3 = inlined_call_operand.vmem [shape: f32[256,16], index: 3, kind: input, shape index: {}]
  %s4 = inlined_call_operand.vmem [shape: f32[256,16], index: 4, kind: output, shape index: {}]
  %s5 = sld [smem:[#allocation0]]
  $region26: #{didn_forward.69} parent=0
    _
  %s7 = ssub.s32 1, %s5
  %s8 = scalar_select 0, %s7, %s5
  // Predicated region
  $region2: #{didn_forward.69} parent=0 // pred_check
    _
  $region3: #{didn_forward.69} parent=0 // pred_check_branch
    %10 = sbr.rel (0) target = $region5
  $region4: #{didn_forward.69} parent=0 // pred_region
    _
  $region5: #{didn_forward.69} parent=0 // pred_fallthru
    _
  // Predicated region
  $region6: #{didn_forward.69} parent=0 // pred_check
    _
  $region7: #{didn_forward.69} parent=0 // pred_check_branch
    %12 = sbr.rel (0) target = $region9
  $region8: #{didn_forward.69} parent=0 // pred_region
    _
  $region9: #{didn_forward.69} parent=0 // pred_fallthru
    _
  // Predicated region
  $region10: #{didn_forward.69} parent=0 // pred_check
    _
  $region11: #{didn_forward.69} parent=0 // pred_check_branch
    %14 = sbr.rel (0) target = $region13
  $region12: #{didn_forward.69} parent=0 // pred_region
    _
  $region13: #{didn_forward.69} parent=0 // pred_fallthru
    _
  // Predicated region
  $region14: #{didn_forward.69} parent=0 // pred_check
    _
  $region15: #{didn_forward.69} parent=0 // pred_check_branch
    %16 = sbr.rel (0) target = $region17
  $region16: #{didn_forward.69} parent=0 // pred_region
    _
  $region17: #{didn_forward.69} parent=0 // pred_fallthru
    _
  %v18 = vld [vmem:[%s0] sm:$0xff]
  %v19 = vld [vmem:[%s0 + $0x8] sm:$0xff]
  %v20 = vld [vmem:[%s0 + $0x10] sm:$0xff]
  %v21 = vld [vmem:[%s0 + $0x18] sm:$0xff]
  %v22 = vld [vmem:[%s0 + $0x20] sm:$0xff]
  %v23 = vld [vmem:[%s0 + $0x28] sm:$0xff]
  %v24 = vld [vmem:[%s0 + $0x30] sm:$0xff]
  %v25 = vld [vmem:[%s0 + $0x38] sm:$0xff]
  %v26 = vld [vmem:[%s0 + $0x40] sm:$0xff]
  %v27 = vld [vmem:[%s0 + $0x48] sm:$0xff]
  %v28 = vld [vmem:[%s0 + $0x50] sm:$0xff]
  %v29 = vld [vmem:[%s0 + $0x58] sm:$0xff]
  %v30 = vld [vmem:[%s0 + $0x60] sm:$0xff]
  %v31 = vld [vmem:[%s0 + $0x68] sm:$0xff]
  %v32 = vld [vmem:[%s0 + $0x70] sm:$0xff]
  %v33 = vld [vmem:[%s0 + $0x78] sm:$0xff]
  %v34 = vld [vmem:[%s0 + $0x80] sm:$0xff]
  %v35 = vld [vmem:[%s0 + $0x88] sm:$0xff]
  %v36 = vld [vmem:[%s0 + $0x90] sm:$0xff]
  %v37 = vld [vmem:[%s0 + $0x98] sm:$0xff]
  %v38 = vld [vmem:[%s0 + $0xa0] sm:$0xff]
  %v39 = vld [vmem:[%s0 + $0xa8] sm:$0xff]
  %v40 = vld [vmem:[%s0 + $0xb0] sm:$0xff]
  %v41 = vld [vmem:[%s0 + $0xb8] sm:$0xff]
  %v42 = vld [vmem:[%s0 + $0xc0] sm:$0xff]
  %v43 = vld [vmem:[%s0 + $0xc8] sm:$0xff]
  %v44 = vld [vmem:[%s0 + $0xd0] sm:$0xff]
  %v45 = vld [vmem:[%s0 + $0xd8] sm:$0xff]
  %v46 = vld [vmem:[%s0 + $0xe0] sm:$0xff]
  %v47 = vld [vmem:[%s0 + $0xe8] sm:$0xff]
  %v48 = vld [vmem:[%s0 + $0xf0] sm:$0xff]
  %v49 = vld [vmem:[%s0 + $0xf8] sm:$0xff]
  %v50 = vld [vmem:[%s1] sm:$0xf]
  %v51 = vld [vmem:[%s1 + $0x4] sm:$0xf]
  %v52 = vld [vmem:[%s1 + $0x8] sm:$0xf]
  %v53 = vld [vmem:[%s1 + $0xc] sm:$0xf]
  %v54 = vld [vmem:[%s1 + $0x10] sm:$0xf]
  %v55 = vld [vmem:[%s1 + $0x14] sm:$0xf]
  %v56 = vld [vmem:[%s1 + $0x18] sm:$0xf]
  %v57 = vld [vmem:[%s1 + $0x1c] sm:$0xf]
  %v58 = vld [vmem:[%s1 + $0x20] sm:$0xf]
  %v59 = vld [vmem:[%s1 + $0x24] sm:$0xf]
  %v60 = vld [vmem:[%s1 + $0x28] sm:$0xf]
  %v61 = vld [vmem:[%s1 + $0x2c] sm:$0xf]
  %v62 = vld [vmem:[%s1 + $0x30] sm:$0xf]
  %v63 = vld [vmem:[%s1 + $0x34] sm:$0xf]
  %v64 = vld [vmem:[%s1 + $0x38] sm:$0xf]
  %v65 = vld [vmem:[%s1 + $0x3c] sm:$0xf]
  %v66 = vld [vmem:[%s1 + $0x40] sm:$0xf]
  %v67 = vld [vmem:[%s1 + $0x44] sm:$0xf]
  %v68 = vld [vmem:[%s2] sm:$0x1]
  %v70 = vperm.slane %v68, 0
  %v104 = vunpack.c.l.b16 %v18
  %v105 = vunpack.c.h.b16 %v18
  %v106 = vunpack.c.l.b16 %v19
  %v107 = vunpack.c.h.b16 %v19
  %v108 = vunpack.c.l.b16 %v20
  %v109 = vunpack.c.h.b16 %v20
  %v110 = vunpack.c.l.b16 %v21
  %v111 = vunpack.c.h.b16 %v21
  %v112 = vunpack.c.l.b16 %v22
  %v113 = vunpack.c.h.b16 %v22
  %v114 = vunpack.c.l.b16 %v23
  %v115 = vunpack.c.h.b16 %v23
  %v116 = vunpack.c.l.b16 %v24
  %v117 = vunpack.c.h.b16 %v24
  %v118 = vunpack.c.l.b16 %v25
  %v119 = vunpack.c.h.b16 %v25
  %v120 = vunpack.c.l.b16 %v26
  %v121 = vunpack.c.h.b16 %v26
  %v122 = vunpack.c.l.b16 %v27
  %v123 = vunpack.c.h.b16 %v27
  %v124 = vunpack.c.l.b16 %v28
  %v125 = vunpack.c.h.b16 %v28
  %v126 = vunpack.c.l.b16 %v29
  %v127 = vunpack.c.h.b16 %v29
  %v128 = vunpack.c.l.b16 %v30
  %v129 = vunpack.c.h.b16 %v30
  %v130 = vunpack.c.l.b16 %v31
  %v131 = vunpack.c.h.b16 %v31
  %v132 = vunpack.c.l.b16 %v32
  %v133 = vunpack.c.h.b16 %v32
  %v134 = vunpack.c.l.b16 %v33
  %v135 = vunpack.c.h.b16 %v33
  %v136 = vunpack.c.l.b16 %v34
  %v137 = vunpack.c.h.b16 %v34
  %v138 = vunpack.c.l.b16 %v35
  %v139 = vunpack.c.h.b16 %v35
  %v140 = vunpack.c.l.b16 %v36
  %v141 = vunpack.c.h.b16 %v36
  %v142 = vunpack.c.l.b16 %v37
  %v143 = vunpack.c.h.b16 %v37
  %v144 = vunpack.c.l.b16 %v38
  %v145 = vunpack.c.h.b16 %v38
  %v146 = vunpack.c.l.b16 %v39
  %v147 = vunpack.c.h.b16 %v39
  %v148 = vunpack.c.l.b16 %v40
  %v149 = vunpack.c.h.b16 %v40
  %v150 = vunpack.c.l.b16 %v41
  %v151 = vunpack.c.h.b16 %v41
  %v152 = vunpack.c.l.b16 %v42
  %v153 = vunpack.c.h.b16 %v42
  %v154 = vunpack.c.l.b16 %v43
  %v155 = vunpack.c.h.b16 %v43
  %v156 = vunpack.c.l.b16 %v44
  %v157 = vunpack.c.h.b16 %v44
  %v158 = vunpack.c.l.b16 %v45
  %v159 = vunpack.c.h.b16 %v45
  %v160 = vunpack.c.l.b16 %v46
  %v161 = vunpack.c.h.b16 %v46
  %v162 = vunpack.c.l.b16 %v47
  %v163 = vunpack.c.h.b16 %v47
  %v164 = vunpack.c.l.b16 %v48
  %v165 = vunpack.c.h.b16 %v48
  %v166 = vunpack.c.l.b16 %v49
  %v167 = vunpack.c.h.b16 %v49
  %v168 = vpack.c.b16 %v106, %v104
  %v169 = vpack.c.b16 %v107, %v105
  %v170 = vpack.c.b16 %v110, %v108
  %v171 = vpack.c.b16 %v111, %v109
  %v172 = vpack.c.b16 %v114, %v112
  %v173 = vpack.c.b16 %v115, %v113
  %v174 = vpack.c.b16 %v118, %v116
  %v175 = vpack.c.b16 %v119, %v117
  %v176 = vpack.c.b16 %v122, %v120
  %v177 = vpack.c.b16 %v123, %v121
  %v178 = vpack.c.b16 %v126, %v124
  %v179 = vpack.c.b16 %v127, %v125
  %v180 = vpack.c.b16 %v130, %v128
  %v181 = vpack.c.b16 %v131, %v129
  %v182 = vpack.c.b16 %v134, %v132
  %v183 = vpack.c.b16 %v135, %v133
  %v184 = vpack.c.b16 %v138, %v136
  %v185 = vpack.c.b16 %v139, %v137
  %v186 = vpack.c.b16 %v142, %v140
  %v187 = vpack.c.b16 %v143, %v141
  %v188 = vpack.c.b16 %v146, %v144
  %v189 = vpack.c.b16 %v147, %v145
  %v190 = vpack.c.b16 %v150, %v148
  %v191 = vpack.c.b16 %v151, %v149
  %v192 = vpack.c.b16 %v154, %v152
  %v193 = vpack.c.b16 %v155, %v153
  %v194 = vpack.c.b16 %v158, %v156
  %v195 = vpack.c.b16 %v159, %v157
  %v196 = vpack.c.b16 %v162, %v160
  %v197 = vpack.c.b16 %v163, %v161
  %v198 = vpack.c.b16 %v166, %v164
  %v199 = vpack.c.b16 %v167, %v165
  %v234 = vunpack.c.l.b16 %v50
  %v235 = vunpack.c.l.b16 %v51
  %v236 = vunpack.c.l.b16 %v52
  %v237 = vunpack.c.l.b16 %v53
  %v238 = vunpack.c.l.b16 %v54
  %v239 = vunpack.c.l.b16 %v55
  %v240 = vunpack.c.l.b16 %v56
  %v241 = vunpack.c.l.b16 %v57
  %v242 = vunpack.c.l.b16 %v58
  %v243 = vunpack.c.l.b16 %v59
  %v244 = vunpack.c.l.b16 %v60
  %v245 = vunpack.c.l.b16 %v61
  %v246 = vunpack.c.l.b16 %v62
  %v247 = vunpack.c.l.b16 %v63
  %v248 = vunpack.c.l.b16 %v64
  %v249 = vunpack.c.l.b16 %v65
  %v250 = vunpack.c.l.b16 %v66
  %v251 = vunpack.c.l.b16 %v67
  %v252 = vpack.c.b16 %v235, %v234
  %v253 = vpack.c.b16 %v237, %v236
  %v254 = vpack.c.b16 %v239, %v238
  %v255 = vpack.c.b16 %v241, %v240
  %v256 = vpack.c.b16 %v243, %v242
  %v257 = vpack.c.b16 %v245, %v244
  %v258 = vpack.c.b16 %v247, %v246
  %v259 = vpack.c.b16 %v249, %v248
  %v260 = vpack.c.b16 %v251, %v250
  %vm270 = vcmask 130048
  %v272 = vsel %vm270, %v169, 0
  %v275 = vsel %vm270, %v171, 0
  %v278 = vsel %vm270, %v173, 0
  %v281 = vsel %vm270, %v175, 0
  %v284 = vsel %vm270, %v177, 0
  %v287 = vsel %vm270, %v179, 0
  %v290 = vsel %vm270, %v181, 0
  %v293 = vsel %vm270, %v183, 0
  %v296 = vsel %vm270, %v185, 0
  %v299 = vsel %vm270, %v187, 0
  %v302 = vsel %vm270, %v189, 0
  %v305 = vsel %vm270, %v191, 0
  %v308 = vsel %vm270, %v193, 0
  %v311 = vsel %vm270, %v195, 0
  %v314 = vsel %vm270, %v197, 0
  %v317 = vsel %vm270, %v199, 0
  %319 = vmatpush.bf16.msra.mxu0 %v259
  %320 = vmatpush.bf16.msra.mxu0 %v258
  %321 = vmatpush.bf16.msra.mxu0 %v257
  %322 = vmatpush.bf16.msra.mxu0 %v256
  %323 = vmatpush.bf16.msra.mxu0 %v255
  %324 = vmatpush.bf16.msra.mxu0 %v254
  %325 = vmatpush.bf16.msra.mxu0 %v253
  %326 = vmatpush.bf16.msra.mxu0 %v252
  %327 = vmatmul.bf16.gmra.mxu0 %v168
  %v328 = vpop.f32.mrf.mxu0
  %v329 = vadd.f32 %v70, %v328
  %v330 = vpop.f32.mrf.mxu0
  %v331 = vadd.f32 %v70, %v330
  %332 = vmatmul.bf16.gmra.mxu0 %v170
  %v333 = vpop.f32.mrf.mxu0
  %v334 = vadd.f32 %v70, %v333
  %v335 = vpop.f32.mrf.mxu0
  %v336 = vadd.f32 %v70, %v335
  %337 = vmatmul.bf16.gmra.mxu0 %v172
  %v338 = vpop.f32.mrf.mxu0
  %v339 = vadd.f32 %v70, %v338
  %v340 = vpop.f32.mrf.mxu0
  %v341 = vadd.f32 %v70, %v340
  %342 = vmatmul.bf16.gmra.mxu0 %v174
  %v343 = vpop.f32.mrf.mxu0
  %v344 = vadd.f32 %v70, %v343
  %v345 = vpop.f32.mrf.mxu0
  %v346 = vadd.f32 %v70, %v345
  %347 = vmatmul.bf16.gmra.mxu0 %v176
  %v348 = vpop.f32.mrf.mxu0
  %v349 = vadd.f32 %v70, %v348
  %v350 = vpop.f32.mrf.mxu0
  %v351 = vadd.f32 %v70, %v350
  %352 = vmatmul.bf16.gmra.mxu0 %v178
  %v353 = vpop.f32.mrf.mxu0
  %v354 = vadd.f32 %v70, %v353
  %v355 = vpop.f32.mrf.mxu0
  %v356 = vadd.f32 %v70, %v355
  %357 = vmatmul.bf16.gmra.mxu0 %v180
  %v358 = vpop.f32.mrf.mxu0
  %v359 = vadd.f32 %v70, %v358
  %v360 = vpop.f32.mrf.mxu0
  %v361 = vadd.f32 %v70, %v360
  %362 = vmatmul.bf16.gmra.mxu0 %v182
  %v363 = vpop.f32.mrf.mxu0
  %v364 = vadd.f32 %v70, %v363
  %v365 = vpop.f32.mrf.mxu0
  %v366 = vadd.f32 %v70, %v365
  %367 = vmatmul.bf16.gmra.mxu0 %v184
  %v368 = vpop.f32.mrf.mxu0
  %v369 = vadd.f32 %v70, %v368
  %v370 = vpop.f32.mrf.mxu0
  %v371 = vadd.f32 %v70, %v370
  %372 = vmatmul.bf16.gmra.mxu0 %v186
  %v373 = vpop.f32.mrf.mxu0
  %v374 = vadd.f32 %v70, %v373
  %v375 = vpop.f32.mrf.mxu0
  %v376 = vadd.f32 %v70, %v375
  %377 = vmatmul.bf16.gmra.mxu0 %v188
  %v378 = vpop.f32.mrf.mxu0
  %v379 = vadd.f32 %v70, %v378
  %v380 = vpop.f32.mrf.mxu0
  %v381 = vadd.f32 %v70, %v380
  %382 = vmatmul.bf16.gmra.mxu0 %v190
  %v383 = vpop.f32.mrf.mxu0
  %v384 = vadd.f32 %v70, %v383
  %v385 = vpop.f32.mrf.mxu0
  %v386 = vadd.f32 %v70, %v385
  %387 = vmatmul.bf16.gmra.mxu0 %v192
  %v388 = vpop.f32.mrf.mxu0
  %v389 = vadd.f32 %v70, %v388
  %v390 = vpop.f32.mrf.mxu0
  %v391 = vadd.f32 %v70, %v390
  %392 = vmatmul.bf16.gmra.mxu0 %v194
  %v393 = vpop.f32.mrf.mxu0
  %v394 = vadd.f32 %v70, %v393
  %v395 = vpop.f32.mrf.mxu0
  %v396 = vadd.f32 %v70, %v395
  %397 = vmatmul.bf16.gmra.mxu0 %v196
  %v398 = vpop.f32.mrf.mxu0
  %v399 = vadd.f32 %v70, %v398
  %v400 = vpop.f32.mrf.mxu0
  %v401 = vadd.f32 %v70, %v400
  %402 = vmatmul.bf16.gmra.mxu0 %v198
  %v403 = vpop.f32.mrf.mxu0
  %v404 = vadd.f32 %v70, %v403
  %v405 = vpop.f32.mrf.mxu0
  %v406 = vadd.f32 %v70, %v405
  %407 = vdwg.mxu0
  %408 = vmatpush.bf16.msra.mxu0 0
  %409 = vmatpush.bf16.msra.mxu0 0
  %410 = vmatpush.bf16.msra.mxu0 0
  %411 = vmatpush.bf16.msra.mxu0 0
  %412 = vmatpush.bf16.msra.mxu0 0
  %413 = vmatpush.bf16.msra.mxu0 0
  %414 = vmatpush.bf16.msra.mxu0 0
  %415 = vmatpush.bf16.msra.mxu0 %v260
  %416 = vmatmul.bf16.gmra.mxu0 %v272
  %v417 = vpop.f32.mrf.mxu0
  %v418 = vadd.f32 %v329, %v417
  %v419 = vpop.f32.mrf.mxu0
  %v420 = vadd.f32 %v331, %v419
  %421 = vmatmul.bf16.gmra.mxu0 %v275
  %v422 = vpop.f32.mrf.mxu0
  %v423 = vadd.f32 %v334, %v422
  %v424 = vpop.f32.mrf.mxu0
  %v425 = vadd.f32 %v336, %v424
  %426 = vmatmul.bf16.gmra.mxu0 %v278
  %v427 = vpop.f32.mrf.mxu0
  %v428 = vadd.f32 %v339, %v427
  %v429 = vpop.f32.mrf.mxu0
  %v430 = vadd.f32 %v341, %v429
  %431 = vmatmul.bf16.gmra.mxu0 %v281
  %v432 = vpop.f32.mrf.mxu0
  %v433 = vadd.f32 %v344, %v432
  %v434 = vpop.f32.mrf.mxu0
  %v435 = vadd.f32 %v346, %v434
  %436 = vmatmul.bf16.gmra.mxu0 %v284
  %v437 = vpop.f32.mrf.mxu0
  %v438 = vadd.f32 %v349, %v437
  %v439 = vpop.f32.mrf.mxu0
  %v440 = vadd.f32 %v351, %v439
  %441 = vmatmul.bf16.gmra.mxu0 %v287
  %v442 = vpop.f32.mrf.mxu0
  %v443 = vadd.f32 %v354, %v442
  %v444 = vpop.f32.mrf.mxu0
  %v445 = vadd.f32 %v356, %v444
  %446 = vmatmul.bf16.gmra.mxu0 %v290
  %v447 = vpop.f32.mrf.mxu0
  %v448 = vadd.f32 %v359, %v447
  %v449 = vpop.f32.mrf.mxu0
  %v450 = vadd.f32 %v361, %v449
  %451 = vmatmul.bf16.gmra.mxu0 %v293
  %v452 = vpop.f32.mrf.mxu0
  %v453 = vadd.f32 %v364, %v452
  %v454 = vpop.f32.mrf.mxu0
  %v455 = vadd.f32 %v366, %v454
  %456 = vmatmul.bf16.gmra.mxu0 %v296
  %v457 = vpop.f32.mrf.mxu0
  %v458 = vadd.f32 %v369, %v457
  %v459 = vpop.f32.mrf.mxu0
  %v460 = vadd.f32 %v371, %v459
  %461 = vmatmul.bf16.gmra.mxu0 %v299
  %v462 = vpop.f32.mrf.mxu0
  %v463 = vadd.f32 %v374, %v462
  %v464 = vpop.f32.mrf.mxu0
  %v465 = vadd.f32 %v376, %v464
  %466 = vmatmul.bf16.gmra.mxu0 %v302
  %v467 = vpop.f32.mrf.mxu0
  %v468 = vadd.f32 %v379, %v467
  %v469 = vpop.f32.mrf.mxu0
  %v470 = vadd.f32 %v381, %v469
  %471 = vmatmul.bf16.gmra.mxu0 %v305
  %v472 = vpop.f32.mrf.mxu0
  %v473 = vadd.f32 %v384, %v472
  %v474 = vpop.f32.mrf.mxu0
  %v475 = vadd.f32 %v386, %v474
  %476 = vmatmul.bf16.gmra.mxu0 %v308
  %v477 = vpop.f32.mrf.mxu0
  %v478 = vadd.f32 %v389, %v477
  %v479 = vpop.f32.mrf.mxu0
  %v480 = vadd.f32 %v391, %v479
  %481 = vmatmul.bf16.gmra.mxu0 %v311
  %v482 = vpop.f32.mrf.mxu0
  %v483 = vadd.f32 %v394, %v482
  %v484 = vpop.f32.mrf.mxu0
  %v485 = vadd.f32 %v396, %v484
  %486 = vmatmul.bf16.gmra.mxu0 %v314
  %v487 = vpop.f32.mrf.mxu0
  %v488 = vadd.f32 %v399, %v487
  %v489 = vpop.f32.mrf.mxu0
  %v490 = vadd.f32 %v401, %v489
  %491 = vmatmul.bf16.gmra.mxu0 %v317
  %v492 = vpop.f32.mrf.mxu0
  %v493 = vadd.f32 %v404, %v492
  %v494 = vpop.f32.mrf.mxu0
  %v495 = vadd.f32 %v406, %v494
  %496 = vdwg.mxu0
  %v497 = vld [vmem:[%s3] sm:$0xff]
  %v498 = vld [vmem:[%s3 + $0x8] sm:$0xff]
  %v499 = vld [vmem:[%s3 + $0x10] sm:$0xff]
  %v500 = vld [vmem:[%s3 + $0x18] sm:$0xff]
  %v501 = vld [vmem:[%s3 + $0x20] sm:$0xff]
  %v502 = vld [vmem:[%s3 + $0x28] sm:$0xff]
  %v503 = vld [vmem:[%s3 + $0x30] sm:$0xff]
  %v504 = vld [vmem:[%s3 + $0x38] sm:$0xff]
  %v505 = vld [vmem:[%s3 + $0x40] sm:$0xff]
  %v506 = vld [vmem:[%s3 + $0x48] sm:$0xff]
  %v507 = vld [vmem:[%s3 + $0x50] sm:$0xff]
  %v508 = vld [vmem:[%s3 + $0x58] sm:$0xff]
  %v509 = vld [vmem:[%s3 + $0x60] sm:$0xff]
  %v510 = vld [vmem:[%s3 + $0x68] sm:$0xff]
  %v511 = vld [vmem:[%s3 + $0x70] sm:$0xff]
  %v512 = vld [vmem:[%s3 + $0x78] sm:$0xff]
  %v513 = vld [vmem:[%s3 + $0x80] sm:$0xff]
  %v514 = vld [vmem:[%s3 + $0x88] sm:$0xff]
  %v515 = vld [vmem:[%s3 + $0x90] sm:$0xff]
  %v516 = vld [vmem:[%s3 + $0x98] sm:$0xff]
  %v517 = vld [vmem:[%s3 + $0xa0] sm:$0xff]
  %v518 = vld [vmem:[%s3 + $0xa8] sm:$0xff]
  %v519 = vld [vmem:[%s3 + $0xb0] sm:$0xff]
  %v520 = vld [vmem:[%s3 + $0xb8] sm:$0xff]
  %v521 = vld [vmem:[%s3 + $0xc0] sm:$0xff]
  %v522 = vld [vmem:[%s3 + $0xc8] sm:$0xff]
  %v523 = vld [vmem:[%s3 + $0xd0] sm:$0xff]
  %v524 = vld [vmem:[%s3 + $0xd8] sm:$0xff]
  %v525 = vld [vmem:[%s3 + $0xe0] sm:$0xff]
  %v526 = vld [vmem:[%s3 + $0xe8] sm:$0xff]
  %v527 = vld [vmem:[%s3 + $0xf0] sm:$0xff]
  %v528 = vld [vmem:[%s3 + $0xf8] sm:$0xff]
  %v529 = vadd.f32 %v418, %v497
  %v530 = vadd.f32 %v420, %v498
  %v531 = vadd.f32 %v423, %v499
  %v532 = vadd.f32 %v425, %v500
  %v533 = vadd.f32 %v428, %v501
  %v534 = vadd.f32 %v430, %v502
  %v535 = vadd.f32 %v433, %v503
  %v536 = vadd.f32 %v435, %v504
  %v537 = vadd.f32 %v438, %v505
  %v538 = vadd.f32 %v440, %v506
  %v539 = vadd.f32 %v443, %v507
  %v540 = vadd.f32 %v445, %v508
  %v541 = vadd.f32 %v448, %v509
  %v542 = vadd.f32 %v450, %v510
  %v543 = vadd.f32 %v453, %v511
  %v544 = vadd.f32 %v455, %v512
  %v545 = vadd.f32 %v458, %v513
  %v546 = vadd.f32 %v460, %v514
  %v547 = vadd.f32 %v463, %v515
  %v548 = vadd.f32 %v465, %v516
  %v549 = vadd.f32 %v468, %v517
  %v550 = vadd.f32 %v470, %v518
  %v551 = vadd.f32 %v473, %v519
  %v552 = vadd.f32 %v475, %v520
  %v553 = vadd.f32 %v478, %v521
  %v554 = vadd.f32 %v480, %v522
  %v555 = vadd.f32 %v483, %v523
  %v556 = vadd.f32 %v485, %v524
  %v557 = vadd.f32 %v488, %v525
  %v558 = vadd.f32 %v490, %v526
  %v559 = vadd.f32 %v493, %v527
  %v560 = vadd.f32 %v495, %v528
  %561 = vst.msk [vmem:[%s4] sm:$0xff] %vm270, %v529
  %562 = vst.msk [vmem:[%s4 + $0x8] sm:$0xff] %vm270, %v530
  %563 = vst.msk [vmem:[%s4 + $0x10] sm:$0xff] %vm270, %v531
  %564 = vst.msk [vmem:[%s4 + $0x18] sm:$0xff] %vm270, %v532
  %565 = vst.msk [vmem:[%s4 + $0x20] sm:$0xff] %vm270, %v533
  %566 = vst.msk [vmem:[%s4 + $0x28] sm:$0xff] %vm270, %v534
  %567 = vst.msk [vmem:[%s4 + $0x30] sm:$0xff] %vm270, %v535
  %568 = vst.msk [vmem:[%s4 + $0x38] sm:$0xff] %vm270, %v536
  %569 = vst.msk [vmem:[%s4 + $0x40] sm:$0xff] %vm270, %v537
  %570 = vst.msk [vmem:[%s4 + $0x48] sm:$0xff] %vm270, %v538
  %571 = vst.msk [vmem:[%s4 + $0x50] sm:$0xff] %vm270, %v539
  %572 = vst.msk [vmem:[%s4 + $0x58] sm:$0xff] %vm270, %v540
  %573 = vst.msk [vmem:[%s4 + $0x60] sm:$0xff] %vm270, %v541
  %574 = vst.msk [vmem:[%s4 + $0x68] sm:$0xff] %vm270, %v542
  %575 = vst.msk [vmem:[%s4 + $0x70] sm:$0xff] %vm270, %v543
  %576 = vst.msk [vmem:[%s4 + $0x78] sm:$0xff] %vm270, %v544
  %577 = vst.msk [vmem:[%s4 + $0x80] sm:$0xff] %vm270, %v545
  %578 = vst.msk [vmem:[%s4 + $0x88] sm:$0xff] %vm270, %v546
  %579 = vst.msk [vmem:[%s4 + $0x90] sm:$0xff] %vm270, %v547
  %580 = vst.msk [vmem:[%s4 + $0x98] sm:$0xff] %vm270, %v548
  %581 = vst.msk [vmem:[%s4 + $0xa0] sm:$0xff] %vm270, %v549
  %582 = vst.msk [vmem:[%s4 + $0xa8] sm:$0xff] %vm270, %v550
  %583 = vst.msk [vmem:[%s4 + $0xb0] sm:$0xff] %vm270, %v551
  %584 = vst.msk [vmem:[%s4 + $0xb8] sm:$0xff] %vm270, %v552
  %585 = vst.msk [vmem:[%s4 + $0xc0] sm:$0xff] %vm270, %v553
  %586 = vst.msk [vmem:[%s4 + $0xc8] sm:$0xff] %vm270, %v554
  %587 = vst.msk [vmem:[%s4 + $0xd0] sm:$0xff] %vm270, %v555
  %588 = vst.msk [vmem:[%s4 + $0xd8] sm:$0xff] %vm270, %v556
  %589 = vst.msk [vmem:[%s4 + $0xe0] sm:$0xff] %vm270, %v557
  %590 = vst.msk [vmem:[%s4 + $0xe8] sm:$0xff] %vm270, %v558
  %591 = vst.msk [vmem:[%s4 + $0xf0] sm:$0xff] %vm270, %v559
  %592 = vst.msk [vmem:[%s4 + $0xf8] sm:$0xff] %vm270, %v560
  // Predicated region
  $region18: #{didn_forward.69} parent=0 // pred_check
    _
  $region19: #{didn_forward.69} parent=0 // pred_check_branch
    %594 = sbr.rel (0) target = $region21
  $region20: #{didn_forward.69} parent=0 // pred_region
    _
  $region21: #{didn_forward.69} parent=0 // pred_fallthru
    _
  // Predicated region
  $region22: #{didn_forward.69} parent=0 // pred_check
    _
  $region23: #{didn_forward.69} parent=0 // pred_check_branch
    %596 = sbr.rel (0) target = $region25
  $region24: #{didn_forward.69} parent=0 // pred_region
    _
  $region25: #{didn_forward.69} parent=0 // pred_fallthru
    _

// kernel: didn_forward.72
$region0: #{didn_forward.72}
  #allocation0 [shape = 'u32[]', space=smem, size = 0x4, offset = 0x4, fixed_abs, tag = 'smem constant byte address 0x4 - core index']
  #allocation1 [shape = 'u32[72,128]{1,0:T(1,128)}', space=vmem, size = 0x9000, scoped, tag = 'internal scratch']
  %s0 = inlined_call_operand.vmem [shape: bf16[128,16], index: 0, kind: input, shape index: {}]
  %s1 = inlined_call_operand.vmem [shape: bf16[16,64], index: 1, kind: input, shape index: {}]
  %s2 = inlined_call_operand.vmem [shape: f32[1,64], index: 2, kind: input, shape index: {}]
  %s3 = inlined_call_operand.vmem [shape: f32[128,64], index: 3, kind: output, shape index: {}]
  %s4 = sld [smem:[#allocation0]]
  $region22: #{didn_forward.72} parent=0
    _
  %s6 = ssub.s32 1, %s4
  %s7 = scalar_select 0, %s6, %s4
  // Predicated region
  $region2: #{didn_forward.72} parent=0 // pred_check
    _
  $region3: #{didn_forward.72} parent=0 // pred_check_branch
    %9 = sbr.rel (0) target = $region5
  $region4: #{didn_forward.72} parent=0 // pred_region
    _
  $region5: #{didn_forward.72} parent=0 // pred_fallthru
    _
  // Predicated region
  $region6: #{didn_forward.72} parent=0 // pred_check
    _
  $region7: #{didn_forward.72} parent=0 // pred_check_branch
    %11 = sbr.rel (0) target = $region9
  $region8: #{didn_forward.72} parent=0 // pred_region
    _
  $region9: #{didn_forward.72} parent=0 // pred_fallthru
    _
  // Predicated region
  $region10: #{didn_forward.72} parent=0 // pred_check
    _
  $region11: #{didn_forward.72} parent=0 // pred_check_branch
    %13 = sbr.rel (0) target = $region13
  $region12: #{didn_forward.72} parent=0 // pred_region
    _
  $region13: #{didn_forward.72} parent=0 // pred_fallthru
    _
  %v15 = vld [vmem:[%s0] sm:$0xf]
  %v16 = vld [vmem:[%s0 + $0x4] sm:$0xf]
  %v17 = vld [vmem:[%s0 + $0x8] sm:$0xf]
  %v18 = vld [vmem:[%s0 + $0xc] sm:$0xf]
  %v19 = vld [vmem:[%s0 + $0x10] sm:$0xf]
  %v20 = vld [vmem:[%s0 + $0x14] sm:$0xf]
  %v21 = vld [vmem:[%s0 + $0x18] sm:$0xf]
  %v22 = vld [vmem:[%s0 + $0x1c] sm:$0xf]
  %v23 = vld [vmem:[%s0 + $0x20] sm:$0xf]
  %v24 = vld [vmem:[%s0 + $0x24] sm:$0xf]
  %v25 = vld [vmem:[%s0 + $0x28] sm:$0xf]
  %v26 = vld [vmem:[%s0 + $0x2c] sm:$0xf]
  %v27 = vld [vmem:[%s0 + $0x30] sm:$0xf]
  %v28 = vld [vmem:[%s0 + $0x34] sm:$0xf]
  %v29 = vld [vmem:[%s0 + $0x38] sm:$0xf]
  %v30 = vld [vmem:[%s0 + $0x3c] sm:$0xf]
  %v31 = vld [vmem:[%s1] sm:$0xf]
  %v32 = vld [vmem:[%s1 + $0x4] sm:$0xf]
  %v33 = vld [vmem:[%s2] sm:$0x1]
  %v35 = vperm.slane %v33, 0
  %v53 = vunpack.c.l.b16 %v15
  %v54 = vunpack.c.l.b16 %v16
  %v55 = vunpack.c.l.b16 %v17
  %v56 = vunpack.c.l.b16 %v18
  %v57 = vunpack.c.l.b16 %v19
  %v58 = vunpack.c.l.b16 %v20
  %v59 = vunpack.c.l.b16 %v21
  %v60 = vunpack.c.l.b16 %v22
  %v61 = vunpack.c.l.b16 %v23
  %v62 = vunpack.c.l.b16 %v24
  %v63 = vunpack.c.l.b16 %v25
  %v64 = vunpack.c.l.b16 %v26
  %v65 = vunpack.c.l.b16 %v27
  %v66 = vunpack.c.l.b16 %v28
  %v67 = vunpack.c.l.b16 %v29
  %v68 = vunpack.c.l.b16 %v30
  %v69 = vpack.c.b16 %v54, %v53
  %v70 = vpack.c.b16 %v56, %v55
  %v71 = vpack.c.b16 %v58, %v57
  %v72 = vpack.c.b16 %v60, %v59
  %v73 = vpack.c.b16 %v62, %v61
  %v74 = vpack.c.b16 %v64, %v63
  %v75 = vpack.c.b16 %v66, %v65
  %v76 = vpack.c.b16 %v68, %v67
  %v79 = vunpack.c.l.b16 %v31
  %v80 = vunpack.c.l.b16 %v32
  %v81 = vpack.c.b16 %v80, %v79
  %vm83 = vcmask 130048
  %v85 = vsel %vm83, %v69, 0
  %v88 = vsel %vm83, %v70, 0
  %v91 = vsel %vm83, %v71, 0
  %v94 = vsel %vm83, %v72, 0
  %v97 = vsel %vm83, %v73, 0
  %v100 = vsel %vm83, %v74, 0
  %v103 = vsel %vm83, %v75, 0
  %v106 = vsel %vm83, %v76, 0
  %108 = vmatpush.bf16.msra.mxu0 0
  %109 = vmatpush.bf16.msra.mxu0 0
  %110 = vmatpush.bf16.msra.mxu0 0
  %111 = vmatpush.bf16.msra.mxu0 0
  %112 = vmatpush.bf16.msra.mxu0 0
  %113 = vmatpush.bf16.msra.mxu0 0
  %114 = vmatpush.bf16.msra.mxu0 0
  %115 = vmatpush.bf16.msra.mxu0 %v81
  %116 = vmatmul.bf16.gmra.mxu0 %v85
  %v117 = vpop.f32.mrf.mxu0
  %v118 = vadd.f32 %v35, %v117
  %v119 = vpop.f32.mrf.mxu0
  %v120 = vadd.f32 %v35, %v119
  %121 = vmatmul.bf16.gmra.mxu0 %v88
  %v122 = vpop.f32.mrf.mxu0
  %v123 = vadd.f32 %v35, %v122
  %v124 = vpop.f32.mrf.mxu0
  %v125 = vadd.f32 %v35, %v124
  %126 = vmatmul.bf16.gmra.mxu0 %v91
  %v127 = vpop.f32.mrf.mxu0
  %v128 = vadd.f32 %v35, %v127
  %v129 = vpop.f32.mrf.mxu0
  %v130 = vadd.f32 %v35, %v129
  %131 = vmatmul.bf16.gmra.mxu0 %v94
  %v132 = vpop.f32.mrf.mxu0
  %v133 = vadd.f32 %v35, %v132
  %v134 = vpop.f32.mrf.mxu0
  %v135 = vadd.f32 %v35, %v134
  %136 = vmatmul.bf16.gmra.mxu0 %v97
  %v137 = vpop.f32.mrf.mxu0
  %v138 = vadd.f32 %v35, %v137
  %v139 = vpop.f32.mrf.mxu0
  %v140 = vadd.f32 %v35, %v139
  %141 = vmatmul.bf16.gmra.mxu0 %v100
  %v142 = vpop.f32.mrf.mxu0
  %v143 = vadd.f32 %v35, %v142
  %v144 = vpop.f32.mrf.mxu0
  %v145 = vadd.f32 %v35, %v144
  %146 = vmatmul.bf16.gmra.mxu0 %v103
  %v147 = vpop.f32.mrf.mxu0
  %v148 = vadd.f32 %v35, %v147
  %v149 = vpop.f32.mrf.mxu0
  %v150 = vadd.f32 %v35, %v149
  %151 = vmatmul.bf16.gmra.mxu0 %v106
  %v152 = vpop.f32.mrf.mxu0
  %v153 = vadd.f32 %v35, %v152
  %v154 = vpop.f32.mrf.mxu0
  %v155 = vadd.f32 %v35, %v154
  %156 = vdwg.mxu0
  %vm157 = vcmask 523264
  %158 = vst.msk [vmem:[%s3] sm:$0xff] %vm157, %v118
  %159 = vst.msk [vmem:[%s3 + $0x8] sm:$0xff] %vm157, %v120
  %160 = vst.msk [vmem:[%s3 + $0x10] sm:$0xff] %vm157, %v123
  %161 = vst.msk [vmem:[%s3 + $0x18] sm:$0xff] %vm157, %v125
  %162 = vst.msk [vmem:[%s3 + $0x20] sm:$0xff] %vm157, %v128
  %163 = vst.msk [vmem:[%s3 + $0x28] sm:$0xff] %vm157, %v130
  %164 = vst.msk [vmem:[%s3 + $0x30] sm:$0xff] %vm157, %v133
  %165 = vst.msk [vmem:[%s3 + $0x38] sm:$0xff] %vm157, %v135
  %166 = vst.msk [vmem:[%s3 + $0x40] sm:$0xff] %vm157, %v138
  %167 = vst.msk [vmem:[%s3 + $0x48] sm:$0xff] %vm157, %v140
  %168 = vst.msk [vmem:[%s3 + $0x50] sm:$0xff] %vm157, %v143
  %169 = vst.msk [vmem:[%s3 + $0x58] sm:$0xff] %vm157, %v145
  %170 = vst.msk [vmem:[%s3 + $0x60] sm:$0xff] %vm157, %v148
  %171 = vst.msk [vmem:[%s3 + $0x68] sm:$0xff] %vm157, %v150
  %172 = vst.msk [vmem:[%s3 + $0x70] sm:$0xff] %vm157, %v153
  %173 = vst.msk [vmem:[%s3 + $0x78] sm:$0xff] %vm157, %v155
  // Predicated region
  $region14: #{didn_forward.72} parent=0 // pred_check
    _
  $region15: #{didn_forward.72} parent=0 // pred_check_branch
    %175 = sbr.rel (0) target = $region17
  $region16: #{didn_forward.72} parent=0 // pred_region
    _
  $region17: #{didn_forward.72} parent=0 // pred_fallthru
    _
  // Predicated region
  $region18: #{didn_forward.72} parent=0 // pred_check
    _
  $region19: #{didn_forward.72} parent=0 // pred_check_branch
    %177 = sbr.rel (0) target = $region21
  $region20: #{didn_forward.72} parent=0 // pred_region
    _
  $region21: #{didn_forward.72} parent=0 // pred_fallthru
    _

// kernel: didn_forward.73
$region0: #{didn_forward.73}
  #allocation0 [shape = 'u32[]', space=smem, size = 0x4, offset = 0x4, fixed_abs, tag = 'smem constant byte address 0x4 - core index']
  #allocation1 [shape = 'u32[72,128]{1,0:T(1,128)}', space=vmem, size = 0x9000, scoped, tag = 'internal scratch']
  %s0 = inlined_call_operand.vmem [shape: bf16[512,144], index: 0, kind: input, shape index: {}]
  %s1 = inlined_call_operand.vmem [shape: bf16[144,2], index: 1, kind: input, shape index: {}]
  %s2 = inlined_call_operand.vmem [shape: f32[1,2], index: 2, kind: input, shape index: {}]
  %s3 = inlined_call_operand.vmem [shape: f32[512,2], index: 3, kind: output, shape index: {}]
  %s4 = sld [smem:[#allocation0]]
  $region22: #{didn_forward.73} parent=0
    _
  %s6 = ssub.s32 1, %s4
  %s7 = scalar_select 0, %s6, %s4
  // Predicated region
  $region2: #{didn_forward.73} parent=0 // pred_check
    _
  $region3: #{didn_forward.73} parent=0 // pred_check_branch
    %9 = sbr.rel (0) target = $region5
  $region4: #{didn_forward.73} parent=0 // pred_region
    _
  $region5: #{didn_forward.73} parent=0 // pred_fallthru
    _
  // Predicated region
  $region6: #{didn_forward.73} parent=0 // pred_check
    _
  $region7: #{didn_forward.73} parent=0 // pred_check_branch
    %11 = sbr.rel (0) target = $region9
  $region8: #{didn_forward.73} parent=0 // pred_region
    _
  $region9: #{didn_forward.73} parent=0 // pred_fallthru
    _
  // Predicated region
  $region10: #{didn_forward.73} parent=0 // pred_check
    _
  $region11: #{didn_forward.73} parent=0 // pred_check_branch
    %13 = sbr.rel (0) target = $region13
  $region12: #{didn_forward.73} parent=0 // pred_region
    _
  $region13: #{didn_forward.73} parent=0 // pred_fallthru
    _
  %v15 = vld [vmem:[%s0] sm:$0xff]
  %v16 = vld [vmem:[%s0 + $0x8] sm:$0xff]
  %v17 = vld [vmem:[%s0 + $0x10] sm:$0xff]
  %v18 = vld [vmem:[%s0 + $0x18] sm:$0xff]
  %v19 = vld [vmem:[%s0 + $0x20] sm:$0xff]
  %v20 = vld [vmem:[%s0 + $0x28] sm:$0xff]
  %v21 = vld [vmem:[%s0 + $0x30] sm:$0xff]
  %v22 = vld [vmem:[%s0 + $0x38] sm:$0xff]
  %v23 = vld [vmem:[%s0 + $0x40] sm:$0xff]
  %v24 = vld [vmem:[%s0 + $0x48] sm:$0xff]
  %v25 = vld [vmem:[%s0 + $0x50] sm:$0xff]
  %v26 = vld [vmem:[%s0 + $0x58] sm:$0xff]
  %v27 = vld [vmem:[%s0 + $0x60] sm:$0xff]
  %v28 = vld [vmem:[%s0 + $0x68] sm:$0xff]
  %v29 = vld [vmem:[%s0 + $0x70] sm:$0xff]
  %v30 = vld [vmem:[%s0 + $0x78] sm:$0xff]
  %v31 = vld [vmem:[%s0 + $0x80] sm:$0xff]
  %v32 = vld [vmem:[%s0 + $0x88] sm:$0xff]
  %v33 = vld [vmem:[%s0 + $0x90] sm:$0xff]
  %v34 = vld [vmem:[%s0 + $0x98] sm:$0xff]
  %v35 = vld [vmem:[%s0 + $0xa0] sm:$0xff]
  %v36 = vld [vmem:[%s0 + $0xa8] sm:$0xff]
  %v37 = vld [vmem:[%s0 + $0xb0] sm:$0xff]
  %v38 = vld [vmem:[%s0 + $0xb8] sm:$0xff]
  %v39 = vld [vmem:[%s0 + $0xc0] sm:$0xff]
  %v40 = vld [vmem:[%s0 + $0xc8] sm:$0xff]
  %v41 = vld [vmem:[%s0 + $0xd0] sm:$0xff]
  %v42 = vld [vmem:[%s0 + $0xd8] sm:$0xff]
  %v43 = vld [vmem:[%s0 + $0xe0] sm:$0xff]
  %v44 = vld [vmem:[%s0 + $0xe8] sm:$0xff]
  %v45 = vld [vmem:[%s0 + $0xf0] sm:$0xff]
  %v46 = vld [vmem:[%s0 + $0xf8] sm:$0xff]
  %v47 = vld [vmem:[%s0 + $0x100] sm:$0xff]
  %v48 = vld [vmem:[%s0 + $0x108] sm:$0xff]
  %v49 = vld [vmem:[%s0 + $0x110] sm:$0xff]
  %v50 = vld [vmem:[%s0 + $0x118] sm:$0xff]
  %v51 = vld [vmem:[%s0 + $0x120] sm:$0xff]
  %v52 = vld [vmem:[%s0 + $0x128] sm:$0xff]
  %v53 = vld [vmem:[%s0 + $0x130] sm:$0xff]
  %v54 = vld [vmem:[%s0 + $0x138] sm:$0xff]
  %v55 = vld [vmem:[%s0 + $0x140] sm:$0xff]
  %v56 = vld [vmem:[%s0 + $0x148] sm:$0xff]
  %v57 = vld [vmem:[%s0 + $0x150] sm:$0xff]
  %v58 = vld [vmem:[%s0 + $0x158] sm:$0xff]
  %v59 = vld [vmem:[%s0 + $0x160] sm:$0xff]
  %v60 = vld [vmem:[%s0 + $0x168] sm:$0xff]
  %v61 = vld [vmem:[%s0 + $0x170] sm:$0xff]
  %v62 = vld [vmem:[%s0 + $0x178] sm:$0xff]
  %v63 = vld [vmem:[%s0 + $0x180] sm:$0xff]
  %v64 = vld [vmem:[%s0 + $0x188] sm:$0xff]
  %v65 = vld [vmem:[%s0 + $0x190] sm:$0xff]
  %v66 = vld [vmem:[%s0 + $0x198] sm:$0xff]
  %v67 = vld [vmem:[%s0 + $0x1a0] sm:$0xff]
  %v68 = vld [vmem:[%s0 + $0x1a8] sm:$0xff]
  %v69 = vld [vmem:[%s0 + $0x1b0] sm:$0xff]
  %v70 = vld [vmem:[%s0 + $0x1b8] sm:$0xff]
  %v71 = vld [vmem:[%s0 + $0x1c0] sm:$0xff]
  %v72 = vld [vmem:[%s0 + $0x1c8] sm:$0xff]
  %v73 = vld [vmem:[%s0 + $0x1d0] sm:$0xff]
  %v74 = vld [vmem:[%s0 + $0x1d8] sm:$0xff]
  %v75 = vld [vmem:[%s0 + $0x1e0] sm:$0xff]
  %v76 = vld [vmem:[%s0 + $0x1e8] sm:$0xff]
  %v77 = vld [vmem:[%s0 + $0x1f0] sm:$0xff]
  %v78 = vld [vmem:[%s0 + $0x1f8] sm:$0xff]
  %v79 = vld [vmem:[%s1] sm:$0xf]
  %v80 = vld [vmem:[%s1 + $0x4] sm:$0xf]
  %v81 = vld [vmem:[%s1 + $0x8] sm:$0xf]
  %v82 = vld [vmem:[%s1 + $0xc] sm:$0xf]
  %v83 = vld [vmem:[%s1 + $0x10] sm:$0xf]
  %v84 = vld [vmem:[%s1 + $0x14] sm:$0xf]
  %v85 = vld [vmem:[%s1 + $0x18] sm:$0xf]
  %v86 = vld [vmem:[%s1 + $0x1c] sm:$0xf]
  %v87 = vld [vmem:[%s1 + $0x20] sm:$0xf]
  %v88 = vld [vmem:[%s1 + $0x24] sm:$0xf]
  %v89 = vld [vmem:[%s1 + $0x28] sm:$0xf]
  %v90 = vld [vmem:[%s1 + $0x2c] sm:$0xf]
  %v91 = vld [vmem:[%s1 + $0x30] sm:$0xf]
  %v92 = vld [vmem:[%s1 + $0x34] sm:$0xf]
  %v93 = vld [vmem:[%s1 + $0x38] sm:$0xf]
  %v94 = vld [vmem:[%s1 + $0x3c] sm:$0xf]
  %v95 = vld [vmem:[%s1 + $0x40] sm:$0xf]
  %v96 = vld [vmem:[%s1 + $0x44] sm:$0xf]
  %v97 = vld [vmem:[%s2] sm:$0x1]
  %v99 = vperm.slane %v97, 0
  %v165 = vunpack.c.l.b16 %v15
  %v166 = vunpack.c.h.b16 %v15
  %v167 = vunpack.c.l.b16 %v16
  %v168 = vunpack.c.h.b16 %v16
  %v169 = vunpack.c.l.b16 %v17
  %v170 = vunpack.c.h.b16 %v17
  %v171 = vunpack.c.l.b16 %v18
  %v172 = vunpack.c.h.b16 %v18
  %v173 = vunpack.c.l.b16 %v19
  %v174 = vunpack.c.h.b16 %v19
  %v175 = vunpack.c.l.b16 %v20
  %v176 = vunpack.c.h.b16 %v20
  %v177 = vunpack.c.l.b16 %v21
  %v178 = vunpack.c.h.b16 %v21
  %v179 = vunpack.c.l.b16 %v22
  %v180 = vunpack.c.h.b16 %v22
  %v181 = vunpack.c.l.b16 %v23
  %v182 = vunpack.c.h.b16 %v23
  %v183 = vunpack.c.l.b16 %v24
  %v184 = vunpack.c.h.b16 %v24
  %v185 = vunpack.c.l.b16 %v25
  %v186 = vunpack.c.h.b16 %v25
  %v187 = vunpack.c.l.b16 %v26
  %v188 = vunpack.c.h.b16 %v26
  %v189 = vunpack.c.l.b16 %v27
  %v190 = vunpack.c.h.b16 %v27
  %v191 = vunpack.c.l.b16 %v28
  %v192 = vunpack.c.h.b16 %v28
  %v193 = vunpack.c.l.b16 %v29
  %v194 = vunpack.c.h.b16 %v29
  %v195 = vunpack.c.l.b16 %v30
  %v196 = vunpack.c.h.b16 %v30
  %v197 = vunpack.c.l.b16 %v31
  %v198 = vunpack.c.h.b16 %v31
  %v199 = vunpack.c.l.b16 %v32
  %v200 = vunpack.c.h.b16 %v32
  %v201 = vunpack.c.l.b16 %v33
  %v202 = vunpack.c.h.b16 %v33
  %v203 = vunpack.c.l.b16 %v34
  %v204 = vunpack.c.h.b16 %v34
  %v205 = vunpack.c.l.b16 %v35
  %v206 = vunpack.c.h.b16 %v35
  %v207 = vunpack.c.l.b16 %v36
  %v208 = vunpack.c.h.b16 %v36
  %v209 = vunpack.c.l.b16 %v37
  %v210 = vunpack.c.h.b16 %v37
  %v211 = vunpack.c.l.b16 %v38
  %v212 = vunpack.c.h.b16 %v38
  %v213 = vunpack.c.l.b16 %v39
  %v214 = vunpack.c.h.b16 %v39
  %v215 = vunpack.c.l.b16 %v40
  %v216 = vunpack.c.h.b16 %v40
  %v217 = vunpack.c.l.b16 %v41
  %v218 = vunpack.c.h.b16 %v41
  %v219 = vunpack.c.l.b16 %v42
  %v220 = vunpack.c.h.b16 %v42
  %v221 = vunpack.c.l.b16 %v43
  %v222 = vunpack.c.h.b16 %v43
  %v223 = vunpack.c.l.b16 %v44
  %v224 = vunpack.c.h.b16 %v44
  %v225 = vunpack.c.l.b16 %v45
  %v226 = vunpack.c.h.b16 %v45
  %v227 = vunpack.c.l.b16 %v46
  %v228 = vunpack.c.h.b16 %v46
  %v229 = vunpack.c.l.b16 %v47
  %v230 = vunpack.c.h.b16 %v47
  %v231 = vunpack.c.l.b16 %v48
  %v232 = vunpack.c.h.b16 %v48
  %v233 = vunpack.c.l.b16 %v49
  %v234 = vunpack.c.h.b16 %v49
  %v235 = vunpack.c.l.b16 %v50
  %v236 = vunpack.c.h.b16 %v50
  %v237 = vunpack.c.l.b16 %v51
  %v238 = vunpack.c.h.b16 %v51
  %v239 = vunpack.c.l.b16 %v52
  %v240 = vunpack.c.h.b16 %v52
  %v241 = vunpack.c.l.b16 %v53
  %v242 = vunpack.c.h.b16 %v53
  %v243 = vunpack.c.l.b16 %v54
  %v244 = vunpack.c.h.b16 %v54
  %v245 = vunpack.c.l.b16 %v55
  %v246 = vunpack.c.h.b16 %v55
  %v247 = vunpack.c.l.b16 %v56
  %v248 = vunpack.c.h.b16 %v56
  %v249 = vunpack.c.l.b16 %v57
  %v250 = vunpack.c.h.b16 %v57
  %v251 = vunpack.c.l.b16 %v58
  %v252 = vunpack.c.h.b16 %v58
  %v253 = vunpack.c.l.b16 %v59
  %v254 = vunpack.c.h.b16 %v59
  %v255 = vunpack.c.l.b16 %v60
  %v256 = vunpack.c.h.b16 %v60
  %v257 = vunpack.c.l.b16 %v61
  %v258 = vunpack.c.h.b16 %v61
  %v259 = vunpack.c.l.b16 %v62
  %v260 = vunpack.c.h.b16 %v62
  %v261 = vunpack.c.l.b16 %v63
  %v262 = vunpack.c.h.b16 %v63
  %v263 = vunpack.c.l.b16 %v64
  %v264 = vunpack.c.h.b16 %v64
  %v265 = vunpack.c.l.b16 %v65
  %v266 = vunpack.c.h.b16 %v65
  %v267 = vunpack.c.l.b16 %v66
  %v268 = vunpack.c.h.b16 %v66
  %v269 = vunpack.c.l.b16 %v67
  %v270 = vunpack.c.h.b16 %v67
  %v271 = vunpack.c.l.b16 %v68
  %v272 = vunpack.c.h.b16 %v68
  %v273 = vunpack.c.l.b16 %v69
  %v274 = vunpack.c.h.b16 %v69
  %v275 = vunpack.c.l.b16 %v70
  %v276 = vunpack.c.h.b16 %v70
  %v277 = vunpack.c.l.b16 %v71
  %v278 = vunpack.c.h.b16 %v71
  %v279 = vunpack.c.l.b16 %v72
  %v280 = vunpack.c.h.b16 %v72
  %v281 = vunpack.c.l.b16 %v73
  %v282 = vunpack.c.h.b16 %v73
  %v283 = vunpack.c.l.b16 %v74
  %v284 = vunpack.c.h.b16 %v74
  %v285 = vunpack.c.l.b16 %v75
  %v286 = vunpack.c.h.b16 %v75
  %v287 = vunpack.c.l.b16 %v76
  %v288 = vunpack.c.h.b16 %v76
  %v289 = vunpack.c.l.b16 %v77
  %v290 = vunpack.c.h.b16 %v77
  %v291 = vunpack.c.l.b16 %v78
  %v292 = vunpack.c.h.b16 %v78
  %v293 = vpack.c.b16 %v167, %v165
  %v294 = vpack.c.b16 %v168, %v166
  %v295 = vpack.c.b16 %v171, %v169
  %v296 = vpack.c.b16 %v172, %v170
  %v297 = vpack.c.b16 %v175, %v173
  %v298 = vpack.c.b16 %v176, %v174
  %v299 = vpack.c.b16 %v179, %v177
  %v300 = vpack.c.b16 %v180, %v178
  %v301 = vpack.c.b16 %v183, %v181
  %v302 = vpack.c.b16 %v184, %v182
  %v303 = vpack.c.b16 %v187, %v185
  %v304 = vpack.c.b16 %v188, %v186
  %v305 = vpack.c.b16 %v191, %v189
  %v306 = vpack.c.b16 %v192, %v190
  %v307 = vpack.c.b16 %v195, %v193
  %v308 = vpack.c.b16 %v196, %v194
  %v309 = vpack.c.b16 %v199, %v197
  %v310 = vpack.c.b16 %v200, %v198
  %v311 = vpack.c.b16 %v203, %v201
  %v312 = vpack.c.b16 %v204, %v202
  %v313 = vpack.c.b16 %v207, %v205
  %v314 = vpack.c.b16 %v208, %v206
  %v315 = vpack.c.b16 %v211, %v209
  %v316 = vpack.c.b16 %v212, %v210
  %v317 = vpack.c.b16 %v215, %v213
  %v318 = vpack.c.b16 %v216, %v214
  %v319 = vpack.c.b16 %v219, %v217
  %v320 = vpack.c.b16 %v220, %v218
  %v321 = vpack.c.b16 %v223, %v221
  %v322 = vpack.c.b16 %v224, %v222
  %v323 = vpack.c.b16 %v227, %v225
  %v324 = vpack.c.b16 %v228, %v226
  %v325 = vpack.c.b16 %v231, %v229
  %v326 = vpack.c.b16 %v232, %v230
  %v327 = vpack.c.b16 %v235, %v233
  %v328 = vpack.c.b16 %v236, %v234
  %v329 = vpack.c.b16 %v239, %v237
  %v330 = vpack.c.b16 %v240, %v238
  %v331 = vpack.c.b16 %v243, %v241
  %v332 = vpack.c.b16 %v244, %v242
  %v333 = vpack.c.b16 %v247, %v245
  %v334 = vpack.c.b16 %v248, %v246
  %v335 = vpack.c.b16 %v251, %v249
  %v336 = vpack.c.b16 %v252, %v250
  %v337 = vpack.c.b16 %v255, %v253
  %v338 = vpack.c.b16 %v256, %v254
  %v339 = vpack.c.b16 %v259, %v257
  %v340 = vpack.c.b16 %v260, %v258
  %v341 = vpack.c.b16 %v263, %v261
  %v342 = vpack.c.b16 %v264, %v262
  %v343 = vpack.c.b16 %v267, %v265
  %v344 = vpack.c.b16 %v268, %v266
  %v345 = vpack.c.b16 %v271, %v269
  %v346 = vpack.c.b16 %v272, %v270
  %v347 = vpack.c.b16 %v275, %v273
  %v348 = vpack.c.b16 %v276, %v274
  %v349 = vpack.c.b16 %v279, %v277
  %v350 = vpack.c.b16 %v280, %v278
  %v351 = vpack.c.b16 %v283, %v281
  %v352 = vpack.c.b16 %v284, %v282
  %v353 = vpack.c.b16 %v287, %v285
  %v354 = vpack.c.b16 %v288, %v286
  %v355 = vpack.c.b16 %v291, %v289
  %v356 = vpack.c.b16 %v292, %v290
  %v407 = vunpack.c.l.b16 %v79
  %v408 = vunpack.c.l.b16 %v80
  %v409 = vunpack.c.l.b16 %v81
  %v410 = vunpack.c.l.b16 %v82
  %v411 = vunpack.c.l.b16 %v83
  %v412 = vunpack.c.l.b16 %v84
  %v413 = vunpack.c.l.b16 %v85
  %v414 = vunpack.c.l.b16 %v86
  %v415 = vunpack.c.l.b16 %v87
  %v416 = vunpack.c.l.b16 %v88
  %v417 = vunpack.c.l.b16 %v89
  %v418 = vunpack.c.l.b16 %v90
  %v419 = vunpack.c.l.b16 %v91
  %v420 = vunpack.c.l.b16 %v92
  %v421 = vunpack.c.l.b16 %v93
  %v422 = vunpack.c.l.b16 %v94
  %v423 = vunpack.c.l.b16 %v95
  %v424 = vunpack.c.l.b16 %v96
  %v425 = vpack.c.b16 %v408, %v407
  %v426 = vpack.c.b16 %v410, %v409
  %v427 = vpack.c.b16 %v412, %v411
  %v428 = vpack.c.b16 %v414, %v413
  %v429 = vpack.c.b16 %v416, %v415
  %v430 = vpack.c.b16 %v418, %v417
  %v431 = vpack.c.b16 %v420, %v419
  %v432 = vpack.c.b16 %v422, %v421
  %v433 = vpack.c.b16 %v424, %v423
  %vm443 = vcmask 130048
  %v445 = vsel %vm443, %v294, 0
  %v448 = vsel %vm443, %v296, 0
  %v451 = vsel %vm443, %v298, 0
  %v454 = vsel %vm443, %v300, 0
  %v457 = vsel %vm443, %v302, 0
  %v460 = vsel %vm443, %v304, 0
  %v463 = vsel %vm443, %v306, 0
  %v466 = vsel %vm443, %v308, 0
  %v469 = vsel %vm443, %v310, 0
  %v472 = vsel %vm443, %v312, 0
  %v475 = vsel %vm443, %v314, 0
  %v478 = vsel %vm443, %v316, 0
  %v481 = vsel %vm443, %v318, 0
  %v484 = vsel %vm443, %v320, 0
  %v487 = vsel %vm443, %v322, 0
  %v490 = vsel %vm443, %v324, 0
  %v493 = vsel %vm443, %v326, 0
  %v496 = vsel %vm443, %v328, 0
  %v499 = vsel %vm443, %v330, 0
  %v502 = vsel %vm443, %v332, 0
  %v505 = vsel %vm443, %v334, 0
  %v508 = vsel %vm443, %v336, 0
  %v511 = vsel %vm443, %v338, 0
  %v514 = vsel %vm443, %v340, 0
  %v517 = vsel %vm443, %v342, 0
  %v520 = vsel %vm443, %v344, 0
  %v523 = vsel %vm443, %v346, 0
  %v526 = vsel %vm443, %v348, 0
  %v529 = vsel %vm443, %v350, 0
  %v532 = vsel %vm443, %v352, 0
  %v535 = vsel %vm443, %v354, 0
  %v538 = vsel %vm443, %v356, 0
  %540 = vmatpush.bf16.msra.mxu0 %v432
  %541 = vmatpush.bf16.msra.mxu0 %v431
  %542 = vmatpush.bf16.msra.mxu0 %v430
  %543 = vmatpush.bf16.msra.mxu0 %v429
  %544 = vmatpush.bf16.msra.mxu0 %v428
  %545 = vmatpush.bf16.msra.mxu0 %v427
  %546 = vmatpush.bf16.msra.mxu0 %v426
  %547 = vmatpush.bf16.msra.mxu0 %v425
  %548 = vmatmul.bf16.gmra.mxu0 %v293
  %v549 = vpop.f32.mrf.mxu0
  %v550 = vadd.f32 %v99, %v549
  %v551 = vpop.f32.mrf.mxu0
  %v552 = vadd.f32 %v99, %v551
  %553 = vmatmul.bf16.gmra.mxu0 %v295
  %v554 = vpop.f32.mrf.mxu0
  %v555 = vadd.f32 %v99, %v554
  %v556 = vpop.f32.mrf.mxu0
  %v557 = vadd.f32 %v99, %v556
  %558 = vmatmul.bf16.gmra.mxu0 %v297
  %v559 = vpop.f32.mrf.mxu0
  %v560 = vadd.f32 %v99, %v559
  %v561 = vpop.f32.mrf.mxu0
  %v562 = vadd.f32 %v99, %v561
  %563 = vmatmul.bf16.gmra.mxu0 %v299
  %v564 = vpop.f32.mrf.mxu0
  %v565 = vadd.f32 %v99, %v564
  %v566 = vpop.f32.mrf.mxu0
  %v567 = vadd.f32 %v99, %v566
  %568 = vmatmul.bf16.gmra.mxu0 %v301
  %v569 = vpop.f32.mrf.mxu0
  %v570 = vadd.f32 %v99, %v569
  %v571 = vpop.f32.mrf.mxu0
  %v572 = vadd.f32 %v99, %v571
  %573 = vmatmul.bf16.gmra.mxu0 %v303
  %v574 = vpop.f32.mrf.mxu0
  %v575 = vadd.f32 %v99, %v574
  %v576 = vpop.f32.mrf.mxu0
  %v577 = vadd.f32 %v99, %v576
  %578 = vmatmul.bf16.gmra.mxu0 %v305
  %v579 = vpop.f32.mrf.mxu0
  %v580 = vadd.f32 %v99, %v579
  %v581 = vpop.f32.mrf.mxu0
  %v582 = vadd.f32 %v99, %v581
  %583 = vmatmul.bf16.gmra.mxu0 %v307
  %v584 = vpop.f32.mrf.mxu0
  %v585 = vadd.f32 %v99, %v584
  %v586 = vpop.f32.mrf.mxu0
  %v587 = vadd.f32 %v99, %v586
  %588 = vmatmul.bf16.gmra.mxu0 %v309
  %v589 = vpop.f32.mrf.mxu0
  %v590 = vadd.f32 %v99, %v589
  %v591 = vpop.f32.mrf.mxu0
  %v592 = vadd.f32 %v99, %v591
  %593 = vmatmul.bf16.gmra.mxu0 %v311
  %v594 = vpop.f32.mrf.mxu0
  %v595 = vadd.f32 %v99, %v594
  %v596 = vpop.f32.mrf.mxu0
  %v597 = vadd.f32 %v99, %v596
  %598 = vmatmul.bf16.gmra.mxu0 %v313
  %v599 = vpop.f32.mrf.mxu0
  %v600 = vadd.f32 %v99, %v599
  %v601 = vpop.f32.mrf.mxu0
  %v602 = vadd.f32 %v99, %v601
  %603 = vmatmul.bf16.gmra.mxu0 %v315
  %v604 = vpop.f32.mrf.mxu0
  %v605 = vadd.f32 %v99, %v604
  %v606 = vpop.f32.mrf.mxu0
  %v607 = vadd.f32 %v99, %v606
  %608 = vmatmul.bf16.gmra.mxu0 %v317
  %v609 = vpop.f32.mrf.mxu0
  %v610 = vadd.f32 %v99, %v609
  %v611 = vpop.f32.mrf.mxu0
  %v612 = vadd.f32 %v99, %v611
  %613 = vmatmul.bf16.gmra.mxu0 %v319
  %v614 = vpop.f32.mrf.mxu0
  %v615 = vadd.f32 %v99, %v614
  %v616 = vpop.f32.mrf.mxu0
  %v617 = vadd.f32 %v99, %v616
  %618 = vmatmul.bf16.gmra.mxu0 %v321
  %v619 = vpop.f32.mrf.mxu0
  %v620 = vadd.f32 %v99, %v619
  %v621 = vpop.f32.mrf.mxu0
  %v622 = vadd.f32 %v99, %v621
  %623 = vmatmul.bf16.gmra.mxu0 %v323
  %v624 = vpop.f32.mrf.mxu0
  %v625 = vadd.f32 %v99, %v624
  %v626 = vpop.f32.mrf.mxu0
  %v627 = vadd.f32 %v99, %v626
  %628 = vmatmul.bf16.gmra.mxu0 %v325
  %v629 = vpop.f32.mrf.mxu0
  %v630 = vadd.f32 %v99, %v629
  %v631 = vpop.f32.mrf.mxu0
  %v632 = vadd.f32 %v99, %v631
  %633 = vmatmul.bf16.gmra.mxu0 %v327
  %v634 = vpop.f32.mrf.mxu0
  %v635 = vadd.f32 %v99, %v634
  %v636 = vpop.f32.mrf.mxu0
  %v637 = vadd.f32 %v99, %v636
  %638 = vmatmul.bf16.gmra.mxu0 %v329
  %v639 = vpop.f32.mrf.mxu0
  %v640 = vadd.f32 %v99, %v639
  %v641 = vpop.f32.mrf.mxu0
  %v642 = vadd.f32 %v99, %v641
  %643 = vmatmul.bf16.gmra.mxu0 %v331
  %v644 = vpop.f32.mrf.mxu0
  %v645 = vadd.f32 %v99, %v644
  %v646 = vpop.f32.mrf.mxu0
  %v647 = vadd.f32 %v99, %v646
  %648 = vmatmul.bf16.gmra.mxu0 %v333
  %v649 = vpop.f32.mrf.mxu0
  %v650 = vadd.f32 %v99, %v649
  %v651 = vpop.f32.mrf.mxu0
  %v652 = vadd.f32 %v99, %v651
  %653 = vmatmul.bf16.gmra.mxu0 %v335
  %v654 = vpop.f32.mrf.mxu0
  %v655 = vadd.f32 %v99, %v654
  %v656 = vpop.f32.mrf.mxu0
  %v657 = vadd.f32 %v99, %v656
  %658 = vmatmul.bf16.gmra.mxu0 %v337
  %v659 = vpop.f32.mrf.mxu0
  %v660 = vadd.f32 %v99, %v659
  %v661 = vpop.f32.mrf.mxu0
  %v662 = vadd.f32 %v99, %v661
  %663 = vmatmul.bf16.gmra.mxu0 %v339
  %v664 = vpop.f32.mrf.mxu0
  %v665 = vadd.f32 %v99, %v664
  %v666 = vpop.f32.mrf.mxu0
  %v667 = vadd.f32 %v99, %v666
  %668 = vmatmul.bf16.gmra.mxu0 %v341
  %v669 = vpop.f32.mrf.mxu0
  %v670 = vadd.f32 %v99, %v669
  %v671 = vpop.f32.mrf.mxu0
  %v672 = vadd.f32 %v99, %v671
  %673 = vmatmul.bf16.gmra.mxu0 %v343
  %v674 = vpop.f32.mrf.mxu0
  %v675 = vadd.f32 %v99, %v674
  %v676 = vpop.f32.mrf.mxu0
  %v677 = vadd.f32 %v99, %v676
  %678 = vmatmul.bf16.gmra.mxu0 %v345
  %v679 = vpop.f32.mrf.mxu0
  %v680 = vadd.f32 %v99, %v679
  %v681 = vpop.f32.mrf.mxu0
  %v682 = vadd.f32 %v99, %v681
  %683 = vmatmul.bf16.gmra.mxu0 %v347
  %v684 = vpop.f32.mrf.mxu0
  %v685 = vadd.f32 %v99, %v684
  %v686 = vpop.f32.mrf.mxu0
  %v687 = vadd.f32 %v99, %v686
  %688 = vmatmul.bf16.gmra.mxu0 %v349
  %v689 = vpop.f32.mrf.mxu0
  %v690 = vadd.f32 %v99, %v689
  %v691 = vpop.f32.mrf.mxu0
  %v692 = vadd.f32 %v99, %v691
  %693 = vmatmul.bf16.gmra.mxu0 %v351
  %v694 = vpop.f32.mrf.mxu0
  %v695 = vadd.f32 %v99, %v694
  %v696 = vpop.f32.mrf.mxu0
  %v697 = vadd.f32 %v99, %v696
  %698 = vmatmul.bf16.gmra.mxu0 %v353
  %v699 = vpop.f32.mrf.mxu0
  %v700 = vadd.f32 %v99, %v699
  %v701 = vpop.f32.mrf.mxu0
  %v702 = vadd.f32 %v99, %v701
  %703 = vmatmul.bf16.gmra.mxu0 %v355
  %v704 = vpop.f32.mrf.mxu0
  %v705 = vadd.f32 %v99, %v704
  %v706 = vpop.f32.mrf.mxu0
  %v707 = vadd.f32 %v99, %v706
  %708 = vdwg.mxu0
  %709 = vmatpush.bf16.msra.mxu0 0
  %710 = vmatpush.bf16.msra.mxu0 0
  %711 = vmatpush.bf16.msra.mxu0 0
  %712 = vmatpush.bf16.msra.mxu0 0
  %713 = vmatpush.bf16.msra.mxu0 0
  %714 = vmatpush.bf16.msra.mxu0 0
  %715 = vmatpush.bf16.msra.mxu0 0
  %716 = vmatpush.bf16.msra.mxu0 %v433
  %717 = vmatmul.bf16.gmra.mxu0 %v445
  %v718 = vpop.f32.mrf.mxu0
  %v719 = vadd.f32 %v550, %v718
  %v720 = vpop.f32.mrf.mxu0
  %v721 = vadd.f32 %v552, %v720
  %722 = vmatmul.bf16.gmra.mxu0 %v448
  %v723 = vpop.f32.mrf.mxu0
  %v724 = vadd.f32 %v555, %v723
  %v725 = vpop.f32.mrf.mxu0
  %v726 = vadd.f32 %v557, %v725
  %727 = vmatmul.bf16.gmra.mxu0 %v451
  %v728 = vpop.f32.mrf.mxu0
  %v729 = vadd.f32 %v560, %v728
  %v730 = vpop.f32.mrf.mxu0
  %v731 = vadd.f32 %v562, %v730
  %732 = vmatmul.bf16.gmra.mxu0 %v454
  %v733 = vpop.f32.mrf.mxu0
  %v734 = vadd.f32 %v565, %v733
  %v735 = vpop.f32.mrf.mxu0
  %v736 = vadd.f32 %v567, %v735
  %737 = vmatmul.bf16.gmra.mxu0 %v457
  %v738 = vpop.f32.mrf.mxu0
  %v739 = vadd.f32 %v570, %v738
  %v740 = vpop.f32.mrf.mxu0
  %v741 = vadd.f32 %v572, %v740
  %742 = vmatmul.bf16.gmra.mxu0 %v460
  %v743 = vpop.f32.mrf.mxu0
  %v744 = vadd.f32 %v575, %v743
  %v745 = vpop.f32.mrf.mxu0
  %v746 = vadd.f32 %v577, %v745
  %747 = vmatmul.bf16.gmra.mxu0 %v463
  %v748 = vpop.f32.mrf.mxu0
  %v749 = vadd.f32 %v580, %v748
  %v750 = vpop.f32.mrf.mxu0
  %v751 = vadd.f32 %v582, %v750
  %752 = vmatmul.bf16.gmra.mxu0 %v466
  %v753 = vpop.f32.mrf.mxu0
  %v754 = vadd.f32 %v585, %v753
  %v755 = vpop.f32.mrf.mxu0
  %v756 = vadd.f32 %v587, %v755
  %757 = vmatmul.bf16.gmra.mxu0 %v469
  %v758 = vpop.f32.mrf.mxu0
  %v759 = vadd.f32 %v590, %v758
  %v760 = vpop.f32.mrf.mxu0
  %v761 = vadd.f32 %v592, %v760
  %762 = vmatmul.bf16.gmra.mxu0 %v472
  %v763 = vpop.f32.mrf.mxu0
  %v764 = vadd.f32 %v595, %v763
  %v765 = vpop.f32.mrf.mxu0
  %v766 = vadd.f32 %v597, %v765
  %767 = vmatmul.bf16.gmra.mxu0 %v475
  %v768 = vpop.f32.mrf.mxu0
  %v769 = vadd.f32 %v600, %v768
  %v770 = vpop.f32.mrf.mxu0
  %v771 = vadd.f32 %v602, %v770
  %772 = vmatmul.bf16.gmra.mxu0 %v478
  %v773 = vpop.f32.mrf.mxu0
  %v774 = vadd.f32 %v605, %v773
  %v775 = vpop.f32.mrf.mxu0
  %v776 = vadd.f32 %v607, %v775
  %777 = vmatmul.bf16.gmra.mxu0 %v481
  %v778 = vpop.f32.mrf.mxu0
  %v779 = vadd.f32 %v610, %v778
  %v780 = vpop.f32.mrf.mxu0
  %v781 = vadd.f32 %v612, %v780
  %782 = vmatmul.bf16.gmra.mxu0 %v484
  %v783 = vpop.f32.mrf.mxu0
  %v784 = vadd.f32 %v615, %v783
  %v785 = vpop.f32.mrf.mxu0
  %v786 = vadd.f32 %v617, %v785
  %787 = vmatmul.bf16.gmra.mxu0 %v487
  %v788 = vpop.f32.mrf.mxu0
  %v789 = vadd.f32 %v620, %v788
  %v790 = vpop.f32.mrf.mxu0
  %v791 = vadd.f32 %v622, %v790
  %792 = vmatmul.bf16.gmra.mxu0 %v490
  %v793 = vpop.f32.mrf.mxu0
  %v794 = vadd.f32 %v625, %v793
  %v795 = vpop.f32.mrf.mxu0
  %v796 = vadd.f32 %v627, %v795
  %797 = vmatmul.bf16.gmra.mxu0 %v493
  %v798 = vpop.f32.mrf.mxu0
  %v799 = vadd.f32 %v630, %v798
  %v800 = vpop.f32.mrf.mxu0
  %v801 = vadd.f32 %v632, %v800
  %802 = vmatmul.bf16.gmra.mxu0 %v496
  %v803 = vpop.f32.mrf.mxu0
  %v804 = vadd.f32 %v635, %v803
  %v805 = vpop.f32.mrf.mxu0
  %v806 = vadd.f32 %v637, %v805
  %807 = vmatmul.bf16.gmra.mxu0 %v499
  %v808 = vpop.f32.mrf.mxu0
  %v809 = vadd.f32 %v640, %v808
  %v810 = vpop.f32.mrf.mxu0
  %v811 = vadd.f32 %v642, %v810
  %812 = vmatmul.bf16.gmra.mxu0 %v502
  %v813 = vpop.f32.mrf.mxu0
  %v814 = vadd.f32 %v645, %v813
  %v815 = vpop.f32.mrf.mxu0
  %v816 = vadd.f32 %v647, %v815
  %817 = vmatmul.bf16.gmra.mxu0 %v505
  %v818 = vpop.f32.mrf.mxu0
  %v819 = vadd.f32 %v650, %v818
  %v820 = vpop.f32.mrf.mxu0
  %v821 = vadd.f32 %v652, %v820
  %822 = vmatmul.bf16.gmra.mxu0 %v508
  %v823 = vpop.f32.mrf.mxu0
  %v824 = vadd.f32 %v655, %v823
  %v825 = vpop.f32.mrf.mxu0
  %v826 = vadd.f32 %v657, %v825
  %827 = vmatmul.bf16.gmra.mxu0 %v511
  %v828 = vpop.f32.mrf.mxu0
  %v829 = vadd.f32 %v660, %v828
  %v830 = vpop.f32.mrf.mxu0
  %v831 = vadd.f32 %v662, %v830
  %832 = vmatmul.bf16.gmra.mxu0 %v514
  %v833 = vpop.f32.mrf.mxu0
  %v834 = vadd.f32 %v665, %v833
  %v835 = vpop.f32.mrf.mxu0
  %v836 = vadd.f32 %v667, %v835
  %837 = vmatmul.bf16.gmra.mxu0 %v517
  %v838 = vpop.f32.mrf.mxu0
  %v839 = vadd.f32 %v670, %v838
  %v840 = vpop.f32.mrf.mxu0
  %v841 = vadd.f32 %v672, %v840
  %842 = vmatmul.bf16.gmra.mxu0 %v520
  %v843 = vpop.f32.mrf.mxu0
  %v844 = vadd.f32 %v675, %v843
  %v845 = vpop.f32.mrf.mxu0
  %v846 = vadd.f32 %v677, %v845
  %847 = vmatmul.bf16.gmra.mxu0 %v523
  %v848 = vpop.f32.mrf.mxu0
  %v849 = vadd.f32 %v680, %v848
  %v850 = vpop.f32.mrf.mxu0
  %v851 = vadd.f32 %v682, %v850
  %852 = vmatmul.bf16.gmra.mxu0 %v526
  %v853 = vpop.f32.mrf.mxu0
  %v854 = vadd.f32 %v685, %v853
  %v855 = vpop.f32.mrf.mxu0
  %v856 = vadd.f32 %v687, %v855
  %857 = vmatmul.bf16.gmra.mxu0 %v529
  %v858 = vpop.f32.mrf.mxu0
  %v859 = vadd.f32 %v690, %v858
  %v860 = vpop.f32.mrf.mxu0
  %v861 = vadd.f32 %v692, %v860
  %862 = vmatmul.bf16.gmra.mxu0 %v532
  %v863 = vpop.f32.mrf.mxu0
  %v864 = vadd.f32 %v695, %v863
  %v865 = vpop.f32.mrf.mxu0
  %v866 = vadd.f32 %v697, %v865
  %867 = vmatmul.bf16.gmra.mxu0 %v535
  %v868 = vpop.f32.mrf.mxu0
  %v869 = vadd.f32 %v700, %v868
  %v870 = vpop.f32.mrf.mxu0
  %v871 = vadd.f32 %v702, %v870
  %872 = vmatmul.bf16.gmra.mxu0 %v538
  %v873 = vpop.f32.mrf.mxu0
  %v874 = vadd.f32 %v705, %v873
  %v875 = vpop.f32.mrf.mxu0
  %v876 = vadd.f32 %v707, %v875
  %877 = vdwg.mxu0
  %vm878 = vcmask 15360
  %879 = vst.msk [vmem:[%s3] sm:$0xff] %vm878, %v719
  %880 = vst.msk [vmem:[%s3 + $0x8] sm:$0xff] %vm878, %v721
  %881 = vst.msk [vmem:[%s3 + $0x10] sm:$0xff] %vm878, %v724
  %882 = vst.msk [vmem:[%s3 + $0x18] sm:$0xff] %vm878, %v726
  %883 = vst.msk [vmem:[%s3 + $0x20] sm:$0xff] %vm878, %v729
  %884 = vst.msk [vmem:[%s3 + $0x28] sm:$0xff] %vm878, %v731
  %885 = vst.msk [vmem:[%s3 + $0x30] sm:$0xff] %vm878, %v734
  %886 = vst.msk [vmem:[%s3 + $0x38] sm:$0xff] %vm878, %v736
  %887 = vst.msk [vmem:[%s3 + $0x40] sm:$0xff] %vm878, %v739
  %888 = vst.msk [vmem:[%s3 + $0x48] sm:$0xff] %vm878, %v741
  %889 = vst.msk [vmem:[%s3 + $0x50] sm:$0xff] %vm878, %v744
  %890 = vst.msk [vmem:[%s3 + $0x58] sm:$0xff] %vm878, %v746
  %891 = vst.msk [vmem:[%s3 + $0x60] sm:$0xff] %vm878, %v749
  %892 = vst.msk [vmem:[%s3 + $0x68] sm:$0xff] %vm878, %v751
  %893 = vst.msk [vmem:[%s3 + $0x70] sm:$0xff] %vm878, %v754
  %894 = vst.msk [vmem:[%s3 + $0x78] sm:$0xff] %vm878, %v756
  %895 = vst.msk [vmem:[%s3 + $0x80] sm:$0xff] %vm878, %v759
  %896 = vst.msk [vmem:[%s3 + $0x88] sm:$0xff] %vm878, %v761
  %897 = vst.msk [vmem:[%s3 + $0x90] sm:$0xff] %vm878, %v764
  %898 = vst.msk [vmem:[%s3 + $0x98] sm:$0xff] %vm878, %v766
  %899 = vst.msk [vmem:[%s3 + $0xa0] sm:$0xff] %vm878, %v769
  %900 = vst.msk [vmem:[%s3 + $0xa8] sm:$0xff] %vm878, %v771
  %901 = vst.msk [vmem:[%s3 + $0xb0] sm:$0xff] %vm878, %v774
  %902 = vst.msk [vmem:[%s3 + $0xb8] sm:$0xff] %vm878, %v776
  %903 = vst.msk [vmem:[%s3 + $0xc0] sm:$0xff] %vm878, %v779
  %904 = vst.msk [vmem:[%s3 + $0xc8] sm:$0xff] %vm878, %v781
  %905 = vst.msk [vmem:[%s3 + $0xd0] sm:$0xff] %vm878, %v784
  %906 = vst.msk [vmem:[%s3 + $0xd8] sm:$0xff] %vm878, %v786
  %907 = vst.msk [vmem:[%s3 + $0xe0] sm:$0xff] %vm878, %v789
  %908 = vst.msk [vmem:[%s3 + $0xe8] sm:$0xff] %vm878, %v791
  %909 = vst.msk [vmem:[%s3 + $0xf0] sm:$0xff] %vm878, %v794
  %910 = vst.msk [vmem:[%s3 + $0xf8] sm:$0xff] %vm878, %v796
  %911 = vst.msk [vmem:[%s3 + $0x100] sm:$0xff] %vm878, %v799
  %912 = vst.msk [vmem:[%s3 + $0x108] sm:$0xff] %vm878, %v801
  %913 = vst.msk [vmem:[%s3 + $0x110] sm:$0xff] %vm878, %v804
  %914 = vst.msk [vmem:[%s3 + $0x118] sm:$0xff] %vm878, %v806
  %915 = vst.msk [vmem:[%s3 + $0x120] sm:$0xff] %vm878, %v809
  %916 = vst.msk [vmem:[%s3 + $0x128] sm:$0xff] %vm878, %v811
  %917 = vst.msk [vmem:[%s3 + $0x130] sm:$0xff] %vm878, %v814
  %918 = vst.msk [vmem:[%s3 + $0x138] sm:$0xff] %vm878, %v816
  %919 = vst.msk [vmem:[%s3 + $0x140] sm:$0xff] %vm878, %v819
  %920 = vst.msk [vmem:[%s3 + $0x148] sm:$0xff] %vm878, %v821
  %921 = vst.msk [vmem:[%s3 + $0x150] sm:$0xff] %vm878, %v824
  %922 = vst.msk [vmem:[%s3 + $0x158] sm:$0xff] %vm878, %v826
  %923 = vst.msk [vmem:[%s3 + $0x160] sm:$0xff] %vm878, %v829
  %924 = vst.msk [vmem:[%s3 + $0x168] sm:$0xff] %vm878, %v831
  %925 = vst.msk [vmem:[%s3 + $0x170] sm:$0xff] %vm878, %v834
  %926 = vst.msk [vmem:[%s3 + $0x178] sm:$0xff] %vm878, %v836
  %927 = vst.msk [vmem:[%s3 + $0x180] sm:$0xff] %vm878, %v839
  %928 = vst.msk [vmem:[%s3 + $0x188] sm:$0xff] %vm878, %v841
  %929 = vst.msk [vmem:[%s3 + $0x190] sm:$0xff] %vm878, %v844
  %930 = vst.msk [vmem:[%s3 + $0x198] sm:$0xff] %vm878, %v846
  %931 = vst.msk [vmem:[%s3 + $0x1a0] sm:$0xff] %vm878, %v849
  %932 = vst.msk [vmem:[%s3 + $0x1a8] sm:$0xff] %vm878, %v851
  %933 = vst.msk [vmem:[%s3 + $0x1b0] sm:$0xff] %vm878, %v854
  %934 = vst.msk [vmem:[%s3 + $0x1b8] sm:$0xff] %vm878, %v856
  %935 = vst.msk [vmem:[%s3 + $0x1c0] sm:$0xff] %vm878, %v859
  %936 = vst.msk [vmem:[%s3 + $0x1c8] sm:$0xff] %vm878, %v861
  %937 = vst.msk [vmem:[%s3 + $0x1d0] sm:$0xff] %vm878, %v864
  %938 = vst.msk [vmem:[%s3 + $0x1d8] sm:$0xff] %vm878, %v866
  %939 = vst.msk [vmem:[%s3 + $0x1e0] sm:$0xff] %vm878, %v869
  %940 = vst.msk [vmem:[%s3 + $0x1e8] sm:$0xff] %vm878, %v871
  %941 = vst.msk [vmem:[%s3 + $0x1f0] sm:$0xff] %vm878, %v874
  %942 = vst.msk [vmem:[%s3 + $0x1f8] sm:$0xff] %vm878, %v876
  // Predicated region
  $region14: #{didn_forward.73} parent=0 // pred_check
    _
  $region15: #{didn_forward.73} parent=0 // pred_check_branch
    %944 = sbr.rel (0) target = $region17
  $region16: #{didn_forward.73} parent=0 // pred_region
    _
  $region17: #{didn_forward.73} parent=0 // pred_fallthru
    _
  // Predicated region
  $region18: #{didn_forward.73} parent=0 // pred_check
    _
  $region19: #{didn_forward.73} parent=0 // pred_check_branch
    %946 = sbr.rel (0) target = $region21
  $region20: #{didn_forward.73} parent=0 // pred_region
    _
  $region21: #{didn_forward.73} parent=0 // pred_fallthru
    _

</llo_original>
